<compile_context>
chip_gen: v7x
topology: tpu7x:2x2x1
jax: 0.10.0
libtpu: 0.0.40
codegen_flags: <defaults>
</compile_context>

<pallas_src>
import jax
import jax.numpy as jnp
from jax.experimental import pallas as pl
from jax.experimental.pallas import tpu as pltpu

# ---- module hyper-parameters (small deterministic config) ------------------
N = 128               # number of graph nodes
IN_C = 16             # in_channels
HID = 8               # hidden_channels
IN_HEAD = 4           # in_head
HDIM = HID * IN_HEAD  # hidden_channels * in_head = 32
OUT_C = 8             # out_channels
OUT_HEAD = 1          # out_head
OUT_DIM = OUT_C * OUT_HEAD
NUM_LAYERS = 4        # convs = [GAT(16,8,h4), GAT(32,8,h4), GAT(32,8,h4), GAT(32,8,h1)]
SKIP_COEF = 0.5
NEG_SLOPE = 0.2       # GATConv leaky_relu default
BN_EPS = 1e-5
E = 512               # number of random edges
NEG_INF = -1e30
AUG = HDIM + IN_HEAD  # 36 = HDIM feature lanes + IN_HEAD softmax-denominator lanes

# packed small-parameter slab `par` ([80, AUG] f32) row layout:
#   rows 16l   .. 16l+3  : a_srcT layer l  (head h at row 16l+h,  cols h*hid:(h+1)*hid)
#   rows 16l+8 .. 16l+11 : a_dstT layer l  (head h at row 16l+8+h, same cols)
#   rows 64..67          : head lane-masks (head h: ones in 8h:8h+8 and lane HDIM+h)
#   row  68              : aug row (ones in lanes HDIM:AUG)
#   rows 69..74          : BN-folded (scale, shift) pairs for layers 0..2
#   row  75              : final GATConv bias (cols 0:OUT_DIM)
VEC_BASE = 64
# packed weights `w_all` ([112, AUG] bf16): W_l padded to AUG cols, rows 0:16 / 16:48 / 48:80 / 80:112


# ---------------------------- fused Pallas kernel ----------------------------
def fused_gat_kernel(x_ref, adjb_ref, w_ref, par_ref, o_ref, acc_ref):
    adj_bias = adjb_ref[...]                        # [N, N] additive mask (0 / -1e30)
    vec = par_ref[VEC_BASE:VEC_BASE + 16, :]        # [16, AUG] small row-params (hoisted)
    masks = vec[0:IN_HEAD, :]                       # [IN_HEAD, AUG] head lane masks
    aug_row = vec[IN_HEAD:IN_HEAD + 1, :]           # [1, AUG]  ones in denominator lanes

    def gat_conv(h, w_r0, w_r1, att_base, heads):
        # h: [N, in_dim] f32 -> [N, HDIM] f32 (unused lanes stay zero for heads*hid < HDIM)
        hb = h.astype(jnp.bfloat16)
        w = w_ref[w_r0:w_r1, :]                                          # [in_dim, AUG] bf16
        # xp[:, :HDIM] = projected per-head features ; xp[:, HDIM:] = 1.0 (denominator lanes)
        xp = jnp.dot(hb, w, preferred_element_type=jnp.float32) + aug_row
        a_srcT = par_ref[att_base:att_base + 8, :]                       # [8, AUG]
        a_dstT = par_ref[att_base + 8:att_base + 16, :]                  # [8, AUG]
        src_rows = jax.lax.dot_general(a_srcT, xp, (((1,), (1,)), ((), ())),
                                       preferred_element_type=jnp.float32)   # [8, N]
        dst_cols = jax.lax.dot_general(xp, a_dstT, (((1,), (1,)), ((), ())),
                                       preferred_element_type=jnp.float32)   # [N, 8]
        for hh in range(heads):
            # e[i, j] = leaky_relu(alpha_dst[i] + alpha_src[j]) + mask
            logit = dst_cols[:, hh:hh + 1] + src_rows[hh:hh + 1, :]      # [N, N]
            e = jnp.maximum(logit, NEG_SLOPE * logit) + adj_bias
            p = jnp.exp(e - jnp.max(e, axis=1, keepdims=True))           # unnormalized softmax
            # head-masked full-width operand; lane HDIM+hh carries the ones column
            op = (xp * masks[hh:hh + 1, :]).astype(jnp.bfloat16)         # [N, AUG] bf16
            contrib = jnp.dot(p.astype(jnp.bfloat16), op,
                              preferred_element_type=jnp.float32)        # [N, AUG]
            # deferred normalization: divide the narrow result, not the [N,N] matrix
            inv = pl.reciprocal(contrib[:, HDIM + hh:HDIM + hh + 1], approx=True)
            val = contrib[:, :HDIM] * inv                                # only head-hh lanes nonzero
            if hh == 0:
                acc_ref[...] = val
            else:
                acc_ref[...] = acc_ref[...] + val
        return acc_ref[...]

    def affine(r):                                   # BN-folded row params
        return vec[r:r + 1, :HDIM]

    # convs[0] + bns[0] + relu          (dropout = identity in eval mode)
    h = gat_conv(x_ref[...], 0, 16, 0, IN_HEAD)
    h = jnp.maximum(h * affine(5) + affine(6), 0.0)
    x_skip = h
    # i = 1 (no skip)
    h = gat_conv(h, 16, 48, 16, IN_HEAD)
    h = jnp.maximum(h * affine(7) + affine(8), 0.0)
    # i = 2 (skip connection fires)
    h = gat_conv(h, 48, 80, 32, IN_HEAD)
    h = jnp.maximum(h * affine(9) + affine(10) + SKIP_COEF * x_skip, 0.0)
    # convs[-1]: final GATConv (single head), add its bias
    h = gat_conv(h, 80, 112, 48, OUT_HEAD)
    o_ref[...] = h[:, :OUT_DIM] + vec[11:12, :OUT_DIM]


# ---------------------------- wrapper -----------------------------------------
@jax.jit
def forward(w_all, par, x, adj_bias):
    vmem = pl.BlockSpec(memory_space=pltpu.MemorySpace.VMEM)
    return pl.pallas_call(
        fused_gat_kernel,
        out_shape=jax.ShapeDtypeStruct((N, OUT_DIM), jnp.float32),
        in_specs=[vmem, vmem, vmem, vmem],
        out_specs=vmem,
        scratch_shapes=[pltpu.VMEM((N, HDIM), jnp.float32)],
        compiler_params=pltpu.CompilerParams(vmem_limit_bytes=16 * 1024 * 1024),
        cost_estimate=pl.CostEstimate(flops=17_500_000, transcendentals=220_000,
                                      bytes_accessed=96_000),
    )(x, adj_bias, w_all, par)


# ---------------------------- parameters ---------------------------------------
def init_params(key):
    in_dims = [IN_C, HDIM, HDIM, HDIM]
    heads_l = [IN_HEAD, IN_HEAD, IN_HEAD, OUT_HEAD]
    hid_l = [HID, HID, HID, OUT_C]
    ks = jax.random.split(key, NUM_LAYERS)
    layers = []
    for li in range(NUM_LAYERS):
        kk = jax.random.split(ks[li], 8)
        d = dict(
            w=0.1 * jax.random.normal(kk[0], (in_dims[li], heads_l[li] * hid_l[li]), jnp.float32),
            att_src=0.1 * jax.random.normal(kk[1], (heads_l[li], hid_l[li]), jnp.float32),
            att_dst=0.1 * jax.random.normal(kk[2], (heads_l[li], hid_l[li]), jnp.float32),
            bias=0.1 * jax.random.normal(kk[3], (heads_l[li] * hid_l[li],), jnp.float32),
        )
        if li < NUM_LAYERS - 1:
            d.update(
                gamma=1.0 + 0.1 * jax.random.normal(kk[4], (HDIM,), jnp.float32),
                beta=0.1 * jax.random.normal(kk[5], (HDIM,), jnp.float32),
                rm=0.1 * jax.random.normal(kk[6], (HDIM,), jnp.float32),
                rv=1.0 + 0.1 * jax.random.uniform(kk[7], (HDIM,), jnp.float32),
            )
        layers.append(d)
    return layers


def pack_params(layers):
    # projection weights, padded to AUG columns, stacked along rows, bf16 for the MXU
    w_all = jnp.zeros((112, AUG), jnp.float32)
    row0 = [0, 16, 48, 80]
    for li, lp in enumerate(layers):
        w = lp["w"]
        w_all = w_all.at[row0[li]:row0[li] + w.shape[0], :w.shape[1]].set(w)
    w_all = w_all.astype(jnp.bfloat16)

    # small-parameter slab
    par = jnp.zeros((80, AUG), jnp.float32)
    for li, lp in enumerate(layers):
        heads, hid = lp["att_src"].shape
        for h in range(heads):
            par = par.at[16 * li + h, h * hid:(h + 1) * hid].set(lp["att_src"][h])
            par = par.at[16 * li + 8 + h, h * hid:(h + 1) * hid].set(lp["att_dst"][h])
    # head lane masks (layer-3 single head uses mask 0 since OUT_C == HID)
    for h in range(IN_HEAD):
        par = par.at[VEC_BASE + h, h * HID:(h + 1) * HID].set(1.0)
        par = par.at[VEC_BASE + h, HDIM + h].set(1.0)
    par = par.at[VEC_BASE + IN_HEAD, HDIM:AUG].set(1.0)          # aug ones row
    # fold BatchNorm (running stats) and GATConv bias into scale / shift
    for li in range(NUM_LAYERS - 1):
        lp = layers[li]
        scale = lp["gamma"] / jnp.sqrt(lp["rv"] + BN_EPS)
        shift = lp["beta"] - lp["rm"] * scale + lp["bias"] * scale
        par = par.at[VEC_BASE + 5 + 2 * li, :HDIM].set(scale)
        par = par.at[VEC_BASE + 6 + 2 * li, :HDIM].set(shift)
    par = par.at[VEC_BASE + 11, :OUT_DIM].set(layers[-1]["bias"])
    return w_all, par


if __name__ == "__main__":
    key = jax.random.PRNGKey(0)
    k_param, k_x, k_src, k_dst = jax.random.split(key, 4)

    layers = init_params(k_param)
    w_all, par = pack_params(layers)
    x = jax.random.normal(k_x, (N, IN_C), jnp.float32)

    # edge_index: row 0 = source nodes, row 1 = destination nodes
    src = jax.random.randint(k_src, (E,), 0, N)
    dst = jax.random.randint(k_dst, (E,), 0, N)
    adj = jnp.zeros((N, N), jnp.float32).at[dst, src].set(1.0)
    adj = jnp.maximum(adj, jnp.eye(N, dtype=jnp.float32))        # add_self_loops=True
    # additive attention mask precomputed once (wrapper-side preprocessing)
    adj_bias = jnp.where(adj > 0.0, jnp.float32(0.0), jnp.float32(NEG_INF))

    out = forward(w_all, par, x, adj_bias)
    out = jax.block_until_ready(out)
    assert out.shape == (N, OUT_DIM)
    print("KERNEL_OK")
</pallas_src>

<mosaic_0001>
module attributes {stable_mosaic.version = 11 : i64} {
  func.func @fused_gat_kernel(%arg0: memref<128x16xf32, #tpu.memory_space<vmem>>, %arg1: memref<128x128xf32, #tpu.memory_space<vmem>>, %arg2: memref<112x36xbf16, #tpu.memory_space<vmem>>, %arg3: memref<80x36xf32, #tpu.memory_space<vmem>>, %arg4: memref<128x8xf32, #tpu.memory_space<vmem>>, %arg5: memref<128x32xf32, #tpu.memory_space<vmem>>) attributes {dimension_semantics = [], scalar_prefetch = 0 : i64, scratch_operands = 1 : i64, tpu.core_type = #tpu.core_type<tc>} {
    %c0 = arith.constant 0 : index
    %c0_0 = arith.constant 0 : index
    %0 = vector.load %arg1[%c0, %c0_0] : memref<128x128xf32, #tpu.memory_space<vmem>>, vector<128x128xf32>
    %c64 = arith.constant 64 : index
    %c0_1 = arith.constant 0 : index
    %1 = vector.load %arg3[%c64, %c0_1] : memref<80x36xf32, #tpu.memory_space<vmem>>, vector<16x36xf32>
    %2 = vector.extract_strided_slice %1 {offsets = [0, 0], sizes = [4, 36], strides = [1, 1]} : vector<16x36xf32> to vector<4x36xf32>
    %3 = vector.extract_strided_slice %1 {offsets = [4, 0], sizes = [1, 36], strides = [1, 1]} : vector<16x36xf32> to vector<1x36xf32>
    %c0_2 = arith.constant 0 : index
    %c0_3 = arith.constant 0 : index
    %4 = vector.load %arg0[%c0_2, %c0_3] : memref<128x16xf32, #tpu.memory_space<vmem>>, vector<128x16xf32>
    %5 = arith.truncf %4 : vector<128x16xf32> to vector<128x16xbf16>
    %c0_4 = arith.constant 0 : index
    %c0_5 = arith.constant 0 : index
    %6 = vector.load %arg2[%c0_4, %c0_5] : memref<112x36xbf16, #tpu.memory_space<vmem>>, vector<16x36xbf16>
    %cst = arith.constant dense<0.000000e+00> : vector<128x36xf32>
    %7 = tpu.matmul %5, %6, %cst {dimension_numbers = #tpu.dot_dimension_numbers<[1], [0], [0], [1], [0, 0, 1, 1], [], []>} : vector<128x16xbf16>, vector<16x36xbf16>, vector<128x36xf32> -> vector<128x36xf32>
    %8 = vector.broadcast %3 : vector<1x36xf32> to vector<128x36xf32>
    %9 = arith.addf %7, %8 : vector<128x36xf32>
    %c0_6 = arith.constant 0 : index
    %c0_7 = arith.constant 0 : index
    %10 = vector.load %arg3[%c0_6, %c0_7] : memref<80x36xf32, #tpu.memory_space<vmem>>, vector<8x36xf32>
    %c8 = arith.constant 8 : index
    %c0_8 = arith.constant 0 : index
    %11 = vector.load %arg3[%c8, %c0_8] : memref<80x36xf32, #tpu.memory_space<vmem>>, vector<8x36xf32>
    %cst_9 = arith.constant dense<0.000000e+00> : vector<8x128xf32>
    %12 = tpu.matmul %10, %9, %cst_9 {dimension_numbers = #tpu.dot_dimension_numbers<[1], [1], [0], [0], [0, 0, 1, 0], [], []>} : vector<8x36xf32>, vector<128x36xf32>, vector<8x128xf32> -> vector<8x128xf32>
    %cst_10 = arith.constant dense<0.000000e+00> : vector<128x8xf32>
    %13 = tpu.matmul %9, %11, %cst_10 {dimension_numbers = #tpu.dot_dimension_numbers<[1], [1], [0], [0], [0, 0, 1, 0], [], []>} : vector<128x36xf32>, vector<8x36xf32>, vector<128x8xf32> -> vector<128x8xf32>
    %14 = vector.extract_strided_slice %13 {offsets = [0, 0], sizes = [128, 1], strides = [1, 1]} : vector<128x8xf32> to vector<128x1xf32>
    %15 = vector.extract_strided_slice %12 {offsets = [0, 0], sizes = [1, 128], strides = [1, 1]} : vector<8x128xf32> to vector<1x128xf32>
    %16 = vector.broadcast %14 : vector<128x1xf32> to vector<128x128xf32>
    %17 = vector.broadcast %15 : vector<1x128xf32> to vector<128x128xf32>
    %18 = arith.addf %16, %17 : vector<128x128xf32>
    %cst_11 = arith.constant 2.000000e-01 : f32
    %19 = vector.broadcast %cst_11 : f32 to vector<128x128xf32>
    %20 = arith.mulf %19, %18 : vector<128x128xf32>
    %21 = arith.maximumf %18, %20 : vector<128x128xf32>
    %22 = arith.addf %21, %0 : vector<128x128xf32>
    %cst_12 = arith.constant dense<0xFF800000> : vector<128xf32>
    %23 = vector.multi_reduction <maximumf>, %22, %cst_12 [1] : vector<128x128xf32> to vector<128xf32>
    %24 = vector.shape_cast %23 : vector<128xf32> to vector<128x1xf32>
    %25 = vector.broadcast %24 : vector<128x1xf32> to vector<128x128xf32>
    %26 = arith.subf %22, %25 : vector<128x128xf32>
    %27 = math.exp %26 : vector<128x128xf32>
    %28 = vector.extract_strided_slice %2 {offsets = [0, 0], sizes = [1, 36], strides = [1, 1]} : vector<4x36xf32> to vector<1x36xf32>
    %29 = vector.broadcast %28 : vector<1x36xf32> to vector<128x36xf32>
    %30 = arith.mulf %9, %29 : vector<128x36xf32>
    %31 = arith.truncf %30 : vector<128x36xf32> to vector<128x36xbf16>
    %32 = arith.truncf %27 : vector<128x128xf32> to vector<128x128xbf16>
    %cst_13 = arith.constant dense<0.000000e+00> : vector<128x36xf32>
    %33 = tpu.matmul %32, %31, %cst_13 {dimension_numbers = #tpu.dot_dimension_numbers<[1], [0], [0], [1], [0, 0, 1, 1], [], []>} : vector<128x128xbf16>, vector<128x36xbf16>, vector<128x36xf32> -> vector<128x36xf32>
    %34 = vector.extract_strided_slice %33 {offsets = [0, 32], sizes = [128, 1], strides = [1, 1]} : vector<128x36xf32> to vector<128x1xf32>
    %35 = tpu.reciprocal %34 {approx = true} : vector<128x1xf32> -> vector<128x1xf32>
    %36 = vector.extract_strided_slice %33 {offsets = [0, 0], sizes = [128, 32], strides = [1, 1]} : vector<128x36xf32> to vector<128x32xf32>
    %37 = vector.broadcast %35 : vector<128x1xf32> to vector<128x32xf32>
    %38 = arith.mulf %36, %37 : vector<128x32xf32>
    %c0_14 = arith.constant 0 : index
    %c0_15 = arith.constant 0 : index
    %39 = vector.load %arg5[%c0_14, %c0_15] : memref<128x32xf32, #tpu.memory_space<vmem>>, vector<128x32xf32>
    tpu.vector_store %arg5[%c0_14, %c0_15], %38 {strides = array<i32>} : memref<128x32xf32, #tpu.memory_space<vmem>>, vector<128x32xf32>,
    %40 = vector.extract_strided_slice %13 {offsets = [0, 1], sizes = [128, 1], strides = [1, 1]} : vector<128x8xf32> to vector<128x1xf32>
    %41 = vector.extract_strided_slice %12 {offsets = [1, 0], sizes = [1, 128], strides = [1, 1]} : vector<8x128xf32> to vector<1x128xf32>
    %42 = vector.broadcast %40 : vector<128x1xf32> to vector<128x128xf32>
    %43 = vector.broadcast %41 : vector<1x128xf32> to vector<128x128xf32>
    %44 = arith.addf %42, %43 : vector<128x128xf32>
    %cst_16 = arith.constant 2.000000e-01 : f32
    %45 = vector.broadcast %cst_16 : f32 to vector<128x128xf32>
    %46 = arith.mulf %45, %44 : vector<128x128xf32>
    %47 = arith.maximumf %44, %46 : vector<128x128xf32>
    %48 = arith.addf %47, %0 : vector<128x128xf32>
    %cst_17 = arith.constant dense<0xFF800000> : vector<128xf32>
    %49 = vector.multi_reduction <maximumf>, %48, %cst_17 [1] : vector<128x128xf32> to vector<128xf32>
    %50 = vector.shape_cast %49 : vector<128xf32> to vector<128x1xf32>
    %51 = vector.broadcast %50 : vector<128x1xf32> to vector<128x128xf32>
    %52 = arith.subf %48, %51 : vector<128x128xf32>
    %53 = math.exp %52 : vector<128x128xf32>
    %54 = vector.extract_strided_slice %2 {offsets = [1, 0], sizes = [1, 36], strides = [1, 1]} : vector<4x36xf32> to vector<1x36xf32>
    %55 = vector.broadcast %54 : vector<1x36xf32> to vector<128x36xf32>
    %56 = arith.mulf %9, %55 : vector<128x36xf32>
    %57 = arith.truncf %56 : vector<128x36xf32> to vector<128x36xbf16>
    %58 = arith.truncf %53 : vector<128x128xf32> to vector<128x128xbf16>
    %cst_18 = arith.constant dense<0.000000e+00> : vector<128x36xf32>
    %59 = tpu.matmul %58, %57, %cst_18 {dimension_numbers = #tpu.dot_dimension_numbers<[1], [0], [0], [1], [0, 0, 1, 1], [], []>} : vector<128x128xbf16>, vector<128x36xbf16>, vector<128x36xf32> -> vector<128x36xf32>
    %60 = vector.extract_strided_slice %59 {offsets = [0, 33], sizes = [128, 1], strides = [1, 1]} : vector<128x36xf32> to vector<128x1xf32>
    %61 = tpu.reciprocal %60 {approx = true} : vector<128x1xf32> -> vector<128x1xf32>
    %62 = vector.extract_strided_slice %59 {offsets = [0, 0], sizes = [128, 32], strides = [1, 1]} : vector<128x36xf32> to vector<128x32xf32>
    %63 = vector.broadcast %61 : vector<128x1xf32> to vector<128x32xf32>
    %64 = arith.mulf %62, %63 : vector<128x32xf32>
    %c0_19 = arith.constant 0 : index
    %c0_20 = arith.constant 0 : index
    %65 = vector.load %arg5[%c0_19, %c0_20] : memref<128x32xf32, #tpu.memory_space<vmem>>, vector<128x32xf32>
    %66 = arith.addf %65, %64 : vector<128x32xf32>
    %c0_21 = arith.constant 0 : index
    %c0_22 = arith.constant 0 : index
    %67 = vector.load %arg5[%c0_21, %c0_22] : memref<128x32xf32, #tpu.memory_space<vmem>>, vector<128x32xf32>
    tpu.vector_store %arg5[%c0_21, %c0_22], %66 {strides = array<i32>} : memref<128x32xf32, #tpu.memory_space<vmem>>, vector<128x32xf32>,
    %68 = vector.extract_strided_slice %13 {offsets = [0, 2], sizes = [128, 1], strides = [1, 1]} : vector<128x8xf32> to vector<128x1xf32>
    %69 = vector.extract_strided_slice %12 {offsets = [2, 0], sizes = [1, 128], strides = [1, 1]} : vector<8x128xf32> to vector<1x128xf32>
    %70 = vector.broadcast %68 : vector<128x1xf32> to vector<128x128xf32>
    %71 = vector.broadcast %69 : vector<1x128xf32> to vector<128x128xf32>
    %72 = arith.addf %70, %71 : vector<128x128xf32>
    %cst_23 = arith.constant 2.000000e-01 : f32
    %73 = vector.broadcast %cst_23 : f32 to vector<128x128xf32>
    %74 = arith.mulf %73, %72 : vector<128x128xf32>
    %75 = arith.maximumf %72, %74 : vector<128x128xf32>
    %76 = arith.addf %75, %0 : vector<128x128xf32>
    %cst_24 = arith.constant dense<0xFF800000> : vector<128xf32>
    %77 = vector.multi_reduction <maximumf>, %76, %cst_24 [1] : vector<128x128xf32> to vector<128xf32>
    %78 = vector.shape_cast %77 : vector<128xf32> to vector<128x1xf32>
    %79 = vector.broadcast %78 : vector<128x1xf32> to vector<128x128xf32>
    %80 = arith.subf %76, %79 : vector<128x128xf32>
    %81 = math.exp %80 : vector<128x128xf32>
    %82 = vector.extract_strided_slice %2 {offsets = [2, 0], sizes = [1, 36], strides = [1, 1]} : vector<4x36xf32> to vector<1x36xf32>
    %83 = vector.broadcast %82 : vector<1x36xf32> to vector<128x36xf32>
    %84 = arith.mulf %9, %83 : vector<128x36xf32>
    %85 = arith.truncf %84 : vector<128x36xf32> to vector<128x36xbf16>
    %86 = arith.truncf %81 : vector<128x128xf32> to vector<128x128xbf16>
    %cst_25 = arith.constant dense<0.000000e+00> : vector<128x36xf32>
    %87 = tpu.matmul %86, %85, %cst_25 {dimension_numbers = #tpu.dot_dimension_numbers<[1], [0], [0], [1], [0, 0, 1, 1], [], []>} : vector<128x128xbf16>, vector<128x36xbf16>, vector<128x36xf32> -> vector<128x36xf32>
    %88 = vector.extract_strided_slice %87 {offsets = [0, 34], sizes = [128, 1], strides = [1, 1]} : vector<128x36xf32> to vector<128x1xf32>
    %89 = tpu.reciprocal %88 {approx = true} : vector<128x1xf32> -> vector<128x1xf32>
    %90 = vector.extract_strided_slice %87 {offsets = [0, 0], sizes = [128, 32], strides = [1, 1]} : vector<128x36xf32> to vector<128x32xf32>
    %91 = vector.broadcast %89 : vector<128x1xf32> to vector<128x32xf32>
    %92 = arith.mulf %90, %91 : vector<128x32xf32>
    %c0_26 = arith.constant 0 : index
    %c0_27 = arith.constant 0 : index
    %93 = vector.load %arg5[%c0_26, %c0_27] : memref<128x32xf32, #tpu.memory_space<vmem>>, vector<128x32xf32>
    %94 = arith.addf %93, %92 : vector<128x32xf32>
    %c0_28 = arith.constant 0 : index
    %c0_29 = arith.constant 0 : index
    %95 = vector.load %arg5[%c0_28, %c0_29] : memref<128x32xf32, #tpu.memory_space<vmem>>, vector<128x32xf32>
    tpu.vector_store %arg5[%c0_28, %c0_29], %94 {strides = array<i32>} : memref<128x32xf32, #tpu.memory_space<vmem>>, vector<128x32xf32>,
    %96 = vector.extract_strided_slice %13 {offsets = [0, 3], sizes = [128, 1], strides = [1, 1]} : vector<128x8xf32> to vector<128x1xf32>
    %97 = vector.extract_strided_slice %12 {offsets = [3, 0], sizes = [1, 128], strides = [1, 1]} : vector<8x128xf32> to vector<1x128xf32>
    %98 = vector.broadcast %96 : vector<128x1xf32> to vector<128x128xf32>
    %99 = vector.broadcast %97 : vector<1x128xf32> to vector<128x128xf32>
    %100 = arith.addf %98, %99 : vector<128x128xf32>
    %cst_30 = arith.constant 2.000000e-01 : f32
    %101 = vector.broadcast %cst_30 : f32 to vector<128x128xf32>
    %102 = arith.mulf %101, %100 : vector<128x128xf32>
    %103 = arith.maximumf %100, %102 : vector<128x128xf32>
    %104 = arith.addf %103, %0 : vector<128x128xf32>
    %cst_31 = arith.constant dense<0xFF800000> : vector<128xf32>
    %105 = vector.multi_reduction <maximumf>, %104, %cst_31 [1] : vector<128x128xf32> to vector<128xf32>
    %106 = vector.shape_cast %105 : vector<128xf32> to vector<128x1xf32>
    %107 = vector.broadcast %106 : vector<128x1xf32> to vector<128x128xf32>
    %108 = arith.subf %104, %107 : vector<128x128xf32>
    %109 = math.exp %108 : vector<128x128xf32>
    %110 = vector.extract_strided_slice %2 {offsets = [3, 0], sizes = [1, 36], strides = [1, 1]} : vector<4x36xf32> to vector<1x36xf32>
    %111 = vector.broadcast %110 : vector<1x36xf32> to vector<128x36xf32>
    %112 = arith.mulf %9, %111 : vector<128x36xf32>
    %113 = arith.truncf %112 : vector<128x36xf32> to vector<128x36xbf16>
    %114 = arith.truncf %109 : vector<128x128xf32> to vector<128x128xbf16>
    %cst_32 = arith.constant dense<0.000000e+00> : vector<128x36xf32>
    %115 = tpu.matmul %114, %113, %cst_32 {dimension_numbers = #tpu.dot_dimension_numbers<[1], [0], [0], [1], [0, 0, 1, 1], [], []>} : vector<128x128xbf16>, vector<128x36xbf16>, vector<128x36xf32> -> vector<128x36xf32>
    %116 = vector.extract_strided_slice %115 {offsets = [0, 35], sizes = [128, 1], strides = [1, 1]} : vector<128x36xf32> to vector<128x1xf32>
    %117 = tpu.reciprocal %116 {approx = true} : vector<128x1xf32> -> vector<128x1xf32>
    %118 = vector.extract_strided_slice %115 {offsets = [0, 0], sizes = [128, 32], strides = [1, 1]} : vector<128x36xf32> to vector<128x32xf32>
    %119 = vector.broadcast %117 : vector<128x1xf32> to vector<128x32xf32>
    %120 = arith.mulf %118, %119 : vector<128x32xf32>
    %c0_33 = arith.constant 0 : index
    %c0_34 = arith.constant 0 : index
    %121 = vector.load %arg5[%c0_33, %c0_34] : memref<128x32xf32, #tpu.memory_space<vmem>>, vector<128x32xf32>
    %122 = arith.addf %121, %120 : vector<128x32xf32>
    %c0_35 = arith.constant 0 : index
    %c0_36 = arith.constant 0 : index
    %123 = vector.load %arg5[%c0_35, %c0_36] : memref<128x32xf32, #tpu.memory_space<vmem>>, vector<128x32xf32>
    tpu.vector_store %arg5[%c0_35, %c0_36], %122 {strides = array<i32>} : memref<128x32xf32, #tpu.memory_space<vmem>>, vector<128x32xf32>,
    %c0_37 = arith.constant 0 : index
    %c0_38 = arith.constant 0 : index
    %124 = vector.load %arg5[%c0_37, %c0_38] : memref<128x32xf32, #tpu.memory_space<vmem>>, vector<128x32xf32>
    %125 = vector.extract_strided_slice %1 {offsets = [5, 0], sizes = [1, 32], strides = [1, 1]} : vector<16x36xf32> to vector<1x32xf32>
    %126 = vector.broadcast %125 : vector<1x32xf32> to vector<128x32xf32>
    %127 = arith.mulf %124, %126 : vector<128x32xf32>
    %128 = vector.extract_strided_slice %1 {offsets = [6, 0], sizes = [1, 32], strides = [1, 1]} : vector<16x36xf32> to vector<1x32xf32>
    %129 = vector.broadcast %128 : vector<1x32xf32> to vector<128x32xf32>
    %130 = arith.addf %127, %129 : vector<128x32xf32>
    %cst_39 = arith.constant 0.000000e+00 : f32
    %131 = vector.broadcast %cst_39 : f32 to vector<128x32xf32>
    %132 = arith.maximumf %130, %131 : vector<128x32xf32>
    %133 = arith.truncf %132 : vector<128x32xf32> to vector<128x32xbf16>
    %c16 = arith.constant 16 : index
    %c0_40 = arith.constant 0 : index
    %134 = vector.load %arg2[%c16, %c0_40] : memref<112x36xbf16, #tpu.memory_space<vmem>>, vector<32x36xbf16>
    %cst_41 = arith.constant dense<0.000000e+00> : vector<128x36xf32>
    %135 = tpu.matmul %133, %134, %cst_41 {dimension_numbers = #tpu.dot_dimension_numbers<[1], [0], [0], [1], [0, 0, 1, 1], [], []>} : vector<128x32xbf16>, vector<32x36xbf16>, vector<128x36xf32> -> vector<128x36xf32>
    %136 = vector.broadcast %3 : vector<1x36xf32> to vector<128x36xf32>
    %137 = arith.addf %135, %136 : vector<128x36xf32>
    %c16_42 = arith.constant 16 : index
    %c0_43 = arith.constant 0 : index
    %138 = vector.load %arg3[%c16_42, %c0_43] : memref<80x36xf32, #tpu.memory_space<vmem>>, vector<8x36xf32>
    %c24 = arith.constant 24 : index
    %c0_44 = arith.constant 0 : index
    %139 = vector.load %arg3[%c24, %c0_44] : memref<80x36xf32, #tpu.memory_space<vmem>>, vector<8x36xf32>
    %cst_45 = arith.constant dense<0.000000e+00> : vector<8x128xf32>
    %140 = tpu.matmul %138, %137, %cst_45 {dimension_numbers = #tpu.dot_dimension_numbers<[1], [1], [0], [0], [0, 0, 1, 0], [], []>} : vector<8x36xf32>, vector<128x36xf32>, vector<8x128xf32> -> vector<8x128xf32>
    %cst_46 = arith.constant dense<0.000000e+00> : vector<128x8xf32>
    %141 = tpu.matmul %137, %139, %cst_46 {dimension_numbers = #tpu.dot_dimension_numbers<[1], [1], [0], [0], [0, 0, 1, 0], [], []>} : vector<128x36xf32>, vector<8x36xf32>, vector<128x8xf32> -> vector<128x8xf32>
    %142 = vector.extract_strided_slice %141 {offsets = [0, 0], sizes = [128, 1], strides = [1, 1]} : vector<128x8xf32> to vector<128x1xf32>
    %143 = vector.extract_strided_slice %140 {offsets = [0, 0], sizes = [1, 128], strides = [1, 1]} : vector<8x128xf32> to vector<1x128xf32>
    %144 = vector.broadcast %142 : vector<128x1xf32> to vector<128x128xf32>
    %145 = vector.broadcast %143 : vector<1x128xf32> to vector<128x128xf32>
    %146 = arith.addf %144, %145 : vector<128x128xf32>
    %cst_47 = arith.constant 2.000000e-01 : f32
    %147 = vector.broadcast %cst_47 : f32 to vector<128x128xf32>
    %148 = arith.mulf %147, %146 : vector<128x128xf32>
    %149 = arith.maximumf %146, %148 : vector<128x128xf32>
    %150 = arith.addf %149, %0 : vector<128x128xf32>
    %cst_48 = arith.constant dense<0xFF800000> : vector<128xf32>
    %151 = vector.multi_reduction <maximumf>, %150, %cst_48 [1] : vector<128x128xf32> to vector<128xf32>
    %152 = vector.shape_cast %151 : vector<128xf32> to vector<128x1xf32>
    %153 = vector.broadcast %152 : vector<128x1xf32> to vector<128x128xf32>
    %154 = arith.subf %150, %153 : vector<128x128xf32>
    %155 = math.exp %154 : vector<128x128xf32>
    %156 = vector.extract_strided_slice %2 {offsets = [0, 0], sizes = [1, 36], strides = [1, 1]} : vector<4x36xf32> to vector<1x36xf32>
    %157 = vector.broadcast %156 : vector<1x36xf32> to vector<128x36xf32>
    %158 = arith.mulf %137, %157 : vector<128x36xf32>
    %159 = arith.truncf %158 : vector<128x36xf32> to vector<128x36xbf16>
    %160 = arith.truncf %155 : vector<128x128xf32> to vector<128x128xbf16>
    %cst_49 = arith.constant dense<0.000000e+00> : vector<128x36xf32>
    %161 = tpu.matmul %160, %159, %cst_49 {dimension_numbers = #tpu.dot_dimension_numbers<[1], [0], [0], [1], [0, 0, 1, 1], [], []>} : vector<128x128xbf16>, vector<128x36xbf16>, vector<128x36xf32> -> vector<128x36xf32>
    %162 = vector.extract_strided_slice %161 {offsets = [0, 32], sizes = [128, 1], strides = [1, 1]} : vector<128x36xf32> to vector<128x1xf32>
    %163 = tpu.reciprocal %162 {approx = true} : vector<128x1xf32> -> vector<128x1xf32>
    %164 = vector.extract_strided_slice %161 {offsets = [0, 0], sizes = [128, 32], strides = [1, 1]} : vector<128x36xf32> to vector<128x32xf32>
    %165 = vector.broadcast %163 : vector<128x1xf32> to vector<128x32xf32>
    %166 = arith.mulf %164, %165 : vector<128x32xf32>
    %c0_50 = arith.constant 0 : index
    %c0_51 = arith.constant 0 : index
    %167 = vector.load %arg5[%c0_50, %c0_51] : memref<128x32xf32, #tpu.memory_space<vmem>>, vector<128x32xf32>
    tpu.vector_store %arg5[%c0_50, %c0_51], %166 {strides = array<i32>} : memref<128x32xf32, #tpu.memory_space<vmem>>, vector<128x32xf32>,
    %168 = vector.extract_strided_slice %141 {offsets = [0, 1], sizes = [128, 1], strides = [1, 1]} : vector<128x8xf32> to vector<128x1xf32>
    %169 = vector.extract_strided_slice %140 {offsets = [1, 0], sizes = [1, 128], strides = [1, 1]} : vector<8x128xf32> to vector<1x128xf32>
    %170 = vector.broadcast %168 : vector<128x1xf32> to vector<128x128xf32>
    %171 = vector.broadcast %169 : vector<1x128xf32> to vector<128x128xf32>
    %172 = arith.addf %170, %171 : vector<128x128xf32>
    %cst_52 = arith.constant 2.000000e-01 : f32
    %173 = vector.broadcast %cst_52 : f32 to vector<128x128xf32>
    %174 = arith.mulf %173, %172 : vector<128x128xf32>
    %175 = arith.maximumf %172, %174 : vector<128x128xf32>
    %176 = arith.addf %175, %0 : vector<128x128xf32>
    %cst_53 = arith.constant dense<0xFF800000> : vector<128xf32>
    %177 = vector.multi_reduction <maximumf>, %176, %cst_53 [1] : vector<128x128xf32> to vector<128xf32>
    %178 = vector.shape_cast %177 : vector<128xf32> to vector<128x1xf32>
    %179 = vector.broadcast %178 : vector<128x1xf32> to vector<128x128xf32>
    %180 = arith.subf %176, %179 : vector<128x128xf32>
    %181 = math.exp %180 : vector<128x128xf32>
    %182 = vector.extract_strided_slice %2 {offsets = [1, 0], sizes = [1, 36], strides = [1, 1]} : vector<4x36xf32> to vector<1x36xf32>
    %183 = vector.broadcast %182 : vector<1x36xf32> to vector<128x36xf32>
    %184 = arith.mulf %137, %183 : vector<128x36xf32>
    %185 = arith.truncf %184 : vector<128x36xf32> to vector<128x36xbf16>
    %186 = arith.truncf %181 : vector<128x128xf32> to vector<128x128xbf16>
    %cst_54 = arith.constant dense<0.000000e+00> : vector<128x36xf32>
    %187 = tpu.matmul %186, %185, %cst_54 {dimension_numbers = #tpu.dot_dimension_numbers<[1], [0], [0], [1], [0, 0, 1, 1], [], []>} : vector<128x128xbf16>, vector<128x36xbf16>, vector<128x36xf32> -> vector<128x36xf32>
    %188 = vector.extract_strided_slice %187 {offsets = [0, 33], sizes = [128, 1], strides = [1, 1]} : vector<128x36xf32> to vector<128x1xf32>
    %189 = tpu.reciprocal %188 {approx = true} : vector<128x1xf32> -> vector<128x1xf32>
    %190 = vector.extract_strided_slice %187 {offsets = [0, 0], sizes = [128, 32], strides = [1, 1]} : vector<128x36xf32> to vector<128x32xf32>
    %191 = vector.broadcast %189 : vector<128x1xf32> to vector<128x32xf32>
    %192 = arith.mulf %190, %191 : vector<128x32xf32>
    %c0_55 = arith.constant 0 : index
    %c0_56 = arith.constant 0 : index
    %193 = vector.load %arg5[%c0_55, %c0_56] : memref<128x32xf32, #tpu.memory_space<vmem>>, vector<128x32xf32>
    %194 = arith.addf %193, %192 : vector<128x32xf32>
    %c0_57 = arith.constant 0 : index
    %c0_58 = arith.constant 0 : index
    %195 = vector.load %arg5[%c0_57, %c0_58] : memref<128x32xf32, #tpu.memory_space<vmem>>, vector<128x32xf32>
    tpu.vector_store %arg5[%c0_57, %c0_58], %194 {strides = array<i32>} : memref<128x32xf32, #tpu.memory_space<vmem>>, vector<128x32xf32>,
    %196 = vector.extract_strided_slice %141 {offsets = [0, 2], sizes = [128, 1], strides = [1, 1]} : vector<128x8xf32> to vector<128x1xf32>
    %197 = vector.extract_strided_slice %140 {offsets = [2, 0], sizes = [1, 128], strides = [1, 1]} : vector<8x128xf32> to vector<1x128xf32>
    %198 = vector.broadcast %196 : vector<128x1xf32> to vector<128x128xf32>
    %199 = vector.broadcast %197 : vector<1x128xf32> to vector<128x128xf32>
    %200 = arith.addf %198, %199 : vector<128x128xf32>
    %cst_59 = arith.constant 2.000000e-01 : f32
    %201 = vector.broadcast %cst_59 : f32 to vector<128x128xf32>
    %202 = arith.mulf %201, %200 : vector<128x128xf32>
    %203 = arith.maximumf %200, %202 : vector<128x128xf32>
    %204 = arith.addf %203, %0 : vector<128x128xf32>
    %cst_60 = arith.constant dense<0xFF800000> : vector<128xf32>
    %205 = vector.multi_reduction <maximumf>, %204, %cst_60 [1] : vector<128x128xf32> to vector<128xf32>
    %206 = vector.shape_cast %205 : vector<128xf32> to vector<128x1xf32>
    %207 = vector.broadcast %206 : vector<128x1xf32> to vector<128x128xf32>
    %208 = arith.subf %204, %207 : vector<128x128xf32>
    %209 = math.exp %208 : vector<128x128xf32>
    %210 = vector.extract_strided_slice %2 {offsets = [2, 0], sizes = [1, 36], strides = [1, 1]} : vector<4x36xf32> to vector<1x36xf32>
    %211 = vector.broadcast %210 : vector<1x36xf32> to vector<128x36xf32>
    %212 = arith.mulf %137, %211 : vector<128x36xf32>
    %213 = arith.truncf %212 : vector<128x36xf32> to vector<128x36xbf16>
    %214 = arith.truncf %209 : vector<128x128xf32> to vector<128x128xbf16>
    %cst_61 = arith.constant dense<0.000000e+00> : vector<128x36xf32>
    %215 = tpu.matmul %214, %213, %cst_61 {dimension_numbers = #tpu.dot_dimension_numbers<[1], [0], [0], [1], [0, 0, 1, 1], [], []>} : vector<128x128xbf16>, vector<128x36xbf16>, vector<128x36xf32> -> vector<128x36xf32>
    %216 = vector.extract_strided_slice %215 {offsets = [0, 34], sizes = [128, 1], strides = [1, 1]} : vector<128x36xf32> to vector<128x1xf32>
    %217 = tpu.reciprocal %216 {approx = true} : vector<128x1xf32> -> vector<128x1xf32>
    %218 = vector.extract_strided_slice %215 {offsets = [0, 0], sizes = [128, 32], strides = [1, 1]} : vector<128x36xf32> to vector<128x32xf32>
    %219 = vector.broadcast %217 : vector<128x1xf32> to vector<128x32xf32>
    %220 = arith.mulf %218, %219 : vector<128x32xf32>
    %c0_62 = arith.constant 0 : index
    %c0_63 = arith.constant 0 : index
    %221 = vector.load %arg5[%c0_62, %c0_63] : memref<128x32xf32, #tpu.memory_space<vmem>>, vector<128x32xf32>
    %222 = arith.addf %221, %220 : vector<128x32xf32>
    %c0_64 = arith.constant 0 : index
    %c0_65 = arith.constant 0 : index
    %223 = vector.load %arg5[%c0_64, %c0_65] : memref<128x32xf32, #tpu.memory_space<vmem>>, vector<128x32xf32>
    tpu.vector_store %arg5[%c0_64, %c0_65], %222 {strides = array<i32>} : memref<128x32xf32, #tpu.memory_space<vmem>>, vector<128x32xf32>,
    %224 = vector.extract_strided_slice %141 {offsets = [0, 3], sizes = [128, 1], strides = [1, 1]} : vector<128x8xf32> to vector<128x1xf32>
    %225 = vector.extract_strided_slice %140 {offsets = [3, 0], sizes = [1, 128], strides = [1, 1]} : vector<8x128xf32> to vector<1x128xf32>
    %226 = vector.broadcast %224 : vector<128x1xf32> to vector<128x128xf32>
    %227 = vector.broadcast %225 : vector<1x128xf32> to vector<128x128xf32>
    %228 = arith.addf %226, %227 : vector<128x128xf32>
    %cst_66 = arith.constant 2.000000e-01 : f32
    %229 = vector.broadcast %cst_66 : f32 to vector<128x128xf32>
    %230 = arith.mulf %229, %228 : vector<128x128xf32>
    %231 = arith.maximumf %228, %230 : vector<128x128xf32>
    %232 = arith.addf %231, %0 : vector<128x128xf32>
    %cst_67 = arith.constant dense<0xFF800000> : vector<128xf32>
    %233 = vector.multi_reduction <maximumf>, %232, %cst_67 [1] : vector<128x128xf32> to vector<128xf32>
    %234 = vector.shape_cast %233 : vector<128xf32> to vector<128x1xf32>
    %235 = vector.broadcast %234 : vector<128x1xf32> to vector<128x128xf32>
    %236 = arith.subf %232, %235 : vector<128x128xf32>
    %237 = math.exp %236 : vector<128x128xf32>
    %238 = vector.extract_strided_slice %2 {offsets = [3, 0], sizes = [1, 36], strides = [1, 1]} : vector<4x36xf32> to vector<1x36xf32>
    %239 = vector.broadcast %238 : vector<1x36xf32> to vector<128x36xf32>
    %240 = arith.mulf %137, %239 : vector<128x36xf32>
    %241 = arith.truncf %240 : vector<128x36xf32> to vector<128x36xbf16>
    %242 = arith.truncf %237 : vector<128x128xf32> to vector<128x128xbf16>
    %cst_68 = arith.constant dense<0.000000e+00> : vector<128x36xf32>
    %243 = tpu.matmul %242, %241, %cst_68 {dimension_numbers = #tpu.dot_dimension_numbers<[1], [0], [0], [1], [0, 0, 1, 1], [], []>} : vector<128x128xbf16>, vector<128x36xbf16>, vector<128x36xf32> -> vector<128x36xf32>
    %244 = vector.extract_strided_slice %243 {offsets = [0, 35], sizes = [128, 1], strides = [1, 1]} : vector<128x36xf32> to vector<128x1xf32>
    %245 = tpu.reciprocal %244 {approx = true} : vector<128x1xf32> -> vector<128x1xf32>
    %246 = vector.extract_strided_slice %243 {offsets = [0, 0], sizes = [128, 32], strides = [1, 1]} : vector<128x36xf32> to vector<128x32xf32>
    %247 = vector.broadcast %245 : vector<128x1xf32> to vector<128x32xf32>
    %248 = arith.mulf %246, %247 : vector<128x32xf32>
    %c0_69 = arith.constant 0 : index
    %c0_70 = arith.constant 0 : index
    %249 = vector.load %arg5[%c0_69, %c0_70] : memref<128x32xf32, #tpu.memory_space<vmem>>, vector<128x32xf32>
    %250 = arith.addf %249, %248 : vector<128x32xf32>
    %c0_71 = arith.constant 0 : index
    %c0_72 = arith.constant 0 : index
    %251 = vector.load %arg5[%c0_71, %c0_72] : memref<128x32xf32, #tpu.memory_space<vmem>>, vector<128x32xf32>
    tpu.vector_store %arg5[%c0_71, %c0_72], %250 {strides = array<i32>} : memref<128x32xf32, #tpu.memory_space<vmem>>, vector<128x32xf32>,
    %c0_73 = arith.constant 0 : index
    %c0_74 = arith.constant 0 : index
    %252 = vector.load %arg5[%c0_73, %c0_74] : memref<128x32xf32, #tpu.memory_space<vmem>>, vector<128x32xf32>
    %253 = vector.extract_strided_slice %1 {offsets = [7, 0], sizes = [1, 32], strides = [1, 1]} : vector<16x36xf32> to vector<1x32xf32>
    %254 = vector.broadcast %253 : vector<1x32xf32> to vector<128x32xf32>
    %255 = arith.mulf %252, %254 : vector<128x32xf32>
    %256 = vector.extract_strided_slice %1 {offsets = [8, 0], sizes = [1, 32], strides = [1, 1]} : vector<16x36xf32> to vector<1x32xf32>
    %257 = vector.broadcast %256 : vector<1x32xf32> to vector<128x32xf32>
    %258 = arith.addf %255, %257 : vector<128x32xf32>
    %cst_75 = arith.constant 0.000000e+00 : f32
    %259 = vector.broadcast %cst_75 : f32 to vector<128x32xf32>
    %260 = arith.maximumf %258, %259 : vector<128x32xf32>
    %261 = arith.truncf %260 : vector<128x32xf32> to vector<128x32xbf16>
    %c48 = arith.constant 48 : index
    %c0_76 = arith.constant 0 : index
    %262 = vector.load %arg2[%c48, %c0_76] : memref<112x36xbf16, #tpu.memory_space<vmem>>, vector<32x36xbf16>
    %cst_77 = arith.constant dense<0.000000e+00> : vector<128x36xf32>
    %263 = tpu.matmul %261, %262, %cst_77 {dimension_numbers = #tpu.dot_dimension_numbers<[1], [0], [0], [1], [0, 0, 1, 1], [], []>} : vector<128x32xbf16>, vector<32x36xbf16>, vector<128x36xf32> -> vector<128x36xf32>
    %264 = vector.broadcast %3 : vector<1x36xf32> to vector<128x36xf32>
    %265 = arith.addf %263, %264 : vector<128x36xf32>
    %c32 = arith.constant 32 : index
    %c0_78 = arith.constant 0 : index
    %266 = vector.load %arg3[%c32, %c0_78] : memref<80x36xf32, #tpu.memory_space<vmem>>, vector<8x36xf32>
    %c40 = arith.constant 40 : index
    %c0_79 = arith.constant 0 : index
    %267 = vector.load %arg3[%c40, %c0_79] : memref<80x36xf32, #tpu.memory_space<vmem>>, vector<8x36xf32>
    %cst_80 = arith.constant dense<0.000000e+00> : vector<8x128xf32>
    %268 = tpu.matmul %266, %265, %cst_80 {dimension_numbers = #tpu.dot_dimension_numbers<[1], [1], [0], [0], [0, 0, 1, 0], [], []>} : vector<8x36xf32>, vector<128x36xf32>, vector<8x128xf32> -> vector<8x128xf32>
    %cst_81 = arith.constant dense<0.000000e+00> : vector<128x8xf32>
    %269 = tpu.matmul %265, %267, %cst_81 {dimension_numbers = #tpu.dot_dimension_numbers<[1], [1], [0], [0], [0, 0, 1, 0], [], []>} : vector<128x36xf32>, vector<8x36xf32>, vector<128x8xf32> -> vector<128x8xf32>
    %270 = vector.extract_strided_slice %269 {offsets = [0, 0], sizes = [128, 1], strides = [1, 1]} : vector<128x8xf32> to vector<128x1xf32>
    %271 = vector.extract_strided_slice %268 {offsets = [0, 0], sizes = [1, 128], strides = [1, 1]} : vector<8x128xf32> to vector<1x128xf32>
    %272 = vector.broadcast %270 : vector<128x1xf32> to vector<128x128xf32>
    %273 = vector.broadcast %271 : vector<1x128xf32> to vector<128x128xf32>
    %274 = arith.addf %272, %273 : vector<128x128xf32>
    %cst_82 = arith.constant 2.000000e-01 : f32
    %275 = vector.broadcast %cst_82 : f32 to vector<128x128xf32>
    %276 = arith.mulf %275, %274 : vector<128x128xf32>
    %277 = arith.maximumf %274, %276 : vector<128x128xf32>
    %278 = arith.addf %277, %0 : vector<128x128xf32>
    %cst_83 = arith.constant dense<0xFF800000> : vector<128xf32>
    %279 = vector.multi_reduction <maximumf>, %278, %cst_83 [1] : vector<128x128xf32> to vector<128xf32>
    %280 = vector.shape_cast %279 : vector<128xf32> to vector<128x1xf32>
    %281 = vector.broadcast %280 : vector<128x1xf32> to vector<128x128xf32>
    %282 = arith.subf %278, %281 : vector<128x128xf32>
    %283 = math.exp %282 : vector<128x128xf32>
    %284 = vector.extract_strided_slice %2 {offsets = [0, 0], sizes = [1, 36], strides = [1, 1]} : vector<4x36xf32> to vector<1x36xf32>
    %285 = vector.broadcast %284 : vector<1x36xf32> to vector<128x36xf32>
    %286 = arith.mulf %265, %285 : vector<128x36xf32>
    %287 = arith.truncf %286 : vector<128x36xf32> to vector<128x36xbf16>
    %288 = arith.truncf %283 : vector<128x128xf32> to vector<128x128xbf16>
    %cst_84 = arith.constant dense<0.000000e+00> : vector<128x36xf32>
    %289 = tpu.matmul %288, %287, %cst_84 {dimension_numbers = #tpu.dot_dimension_numbers<[1], [0], [0], [1], [0, 0, 1, 1], [], []>} : vector<128x128xbf16>, vector<128x36xbf16>, vector<128x36xf32> -> vector<128x36xf32>
    %290 = vector.extract_strided_slice %289 {offsets = [0, 32], sizes = [128, 1], strides = [1, 1]} : vector<128x36xf32> to vector<128x1xf32>
    %291 = tpu.reciprocal %290 {approx = true} : vector<128x1xf32> -> vector<128x1xf32>
    %292 = vector.extract_strided_slice %289 {offsets = [0, 0], sizes = [128, 32], strides = [1, 1]} : vector<128x36xf32> to vector<128x32xf32>
    %293 = vector.broadcast %291 : vector<128x1xf32> to vector<128x32xf32>
    %294 = arith.mulf %292, %293 : vector<128x32xf32>
    %c0_85 = arith.constant 0 : index
    %c0_86 = arith.constant 0 : index
    %295 = vector.load %arg5[%c0_85, %c0_86] : memref<128x32xf32, #tpu.memory_space<vmem>>, vector<128x32xf32>
    tpu.vector_store %arg5[%c0_85, %c0_86], %294 {strides = array<i32>} : memref<128x32xf32, #tpu.memory_space<vmem>>, vector<128x32xf32>,
    %296 = vector.extract_strided_slice %269 {offsets = [0, 1], sizes = [128, 1], strides = [1, 1]} : vector<128x8xf32> to vector<128x1xf32>
    %297 = vector.extract_strided_slice %268 {offsets = [1, 0], sizes = [1, 128], strides = [1, 1]} : vector<8x128xf32> to vector<1x128xf32>
    %298 = vector.broadcast %296 : vector<128x1xf32> to vector<128x128xf32>
    %299 = vector.broadcast %297 : vector<1x128xf32> to vector<128x128xf32>
    %300 = arith.addf %298, %299 : vector<128x128xf32>
    %cst_87 = arith.constant 2.000000e-01 : f32
    %301 = vector.broadcast %cst_87 : f32 to vector<128x128xf32>
    %302 = arith.mulf %301, %300 : vector<128x128xf32>
    %303 = arith.maximumf %300, %302 : vector<128x128xf32>
    %304 = arith.addf %303, %0 : vector<128x128xf32>
    %cst_88 = arith.constant dense<0xFF800000> : vector<128xf32>
    %305 = vector.multi_reduction <maximumf>, %304, %cst_88 [1] : vector<128x128xf32> to vector<128xf32>
    %306 = vector.shape_cast %305 : vector<128xf32> to vector<128x1xf32>
    %307 = vector.broadcast %306 : vector<128x1xf32> to vector<128x128xf32>
    %308 = arith.subf %304, %307 : vector<128x128xf32>
    %309 = math.exp %308 : vector<128x128xf32>
    %310 = vector.extract_strided_slice %2 {offsets = [1, 0], sizes = [1, 36], strides = [1, 1]} : vector<4x36xf32> to vector<1x36xf32>
    %311 = vector.broadcast %310 : vector<1x36xf32> to vector<128x36xf32>
    %312 = arith.mulf %265, %311 : vector<128x36xf32>
    %313 = arith.truncf %312 : vector<128x36xf32> to vector<128x36xbf16>
    %314 = arith.truncf %309 : vector<128x128xf32> to vector<128x128xbf16>
    %cst_89 = arith.constant dense<0.000000e+00> : vector<128x36xf32>
    %315 = tpu.matmul %314, %313, %cst_89 {dimension_numbers = #tpu.dot_dimension_numbers<[1], [0], [0], [1], [0, 0, 1, 1], [], []>} : vector<128x128xbf16>, vector<128x36xbf16>, vector<128x36xf32> -> vector<128x36xf32>
    %316 = vector.extract_strided_slice %315 {offsets = [0, 33], sizes = [128, 1], strides = [1, 1]} : vector<128x36xf32> to vector<128x1xf32>
    %317 = tpu.reciprocal %316 {approx = true} : vector<128x1xf32> -> vector<128x1xf32>
    %318 = vector.extract_strided_slice %315 {offsets = [0, 0], sizes = [128, 32], strides = [1, 1]} : vector<128x36xf32> to vector<128x32xf32>
    %319 = vector.broadcast %317 : vector<128x1xf32> to vector<128x32xf32>
    %320 = arith.mulf %318, %319 : vector<128x32xf32>
    %c0_90 = arith.constant 0 : index
    %c0_91 = arith.constant 0 : index
    %321 = vector.load %arg5[%c0_90, %c0_91] : memref<128x32xf32, #tpu.memory_space<vmem>>, vector<128x32xf32>
    %322 = arith.addf %321, %320 : vector<128x32xf32>
    %c0_92 = arith.constant 0 : index
    %c0_93 = arith.constant 0 : index
    %323 = vector.load %arg5[%c0_92, %c0_93] : memref<128x32xf32, #tpu.memory_space<vmem>>, vector<128x32xf32>
    tpu.vector_store %arg5[%c0_92, %c0_93], %322 {strides = array<i32>} : memref<128x32xf32, #tpu.memory_space<vmem>>, vector<128x32xf32>,
    %324 = vector.extract_strided_slice %269 {offsets = [0, 2], sizes = [128, 1], strides = [1, 1]} : vector<128x8xf32> to vector<128x1xf32>
    %325 = vector.extract_strided_slice %268 {offsets = [2, 0], sizes = [1, 128], strides = [1, 1]} : vector<8x128xf32> to vector<1x128xf32>
    %326 = vector.broadcast %324 : vector<128x1xf32> to vector<128x128xf32>
    %327 = vector.broadcast %325 : vector<1x128xf32> to vector<128x128xf32>
    %328 = arith.addf %326, %327 : vector<128x128xf32>
    %cst_94 = arith.constant 2.000000e-01 : f32
    %329 = vector.broadcast %cst_94 : f32 to vector<128x128xf32>
    %330 = arith.mulf %329, %328 : vector<128x128xf32>
    %331 = arith.maximumf %328, %330 : vector<128x128xf32>
    %332 = arith.addf %331, %0 : vector<128x128xf32>
    %cst_95 = arith.constant dense<0xFF800000> : vector<128xf32>
    %333 = vector.multi_reduction <maximumf>, %332, %cst_95 [1] : vector<128x128xf32> to vector<128xf32>
    %334 = vector.shape_cast %333 : vector<128xf32> to vector<128x1xf32>
    %335 = vector.broadcast %334 : vector<128x1xf32> to vector<128x128xf32>
    %336 = arith.subf %332, %335 : vector<128x128xf32>
    %337 = math.exp %336 : vector<128x128xf32>
    %338 = vector.extract_strided_slice %2 {offsets = [2, 0], sizes = [1, 36], strides = [1, 1]} : vector<4x36xf32> to vector<1x36xf32>
    %339 = vector.broadcast %338 : vector<1x36xf32> to vector<128x36xf32>
    %340 = arith.mulf %265, %339 : vector<128x36xf32>
    %341 = arith.truncf %340 : vector<128x36xf32> to vector<128x36xbf16>
    %342 = arith.truncf %337 : vector<128x128xf32> to vector<128x128xbf16>
    %cst_96 = arith.constant dense<0.000000e+00> : vector<128x36xf32>
    %343 = tpu.matmul %342, %341, %cst_96 {dimension_numbers = #tpu.dot_dimension_numbers<[1], [0], [0], [1], [0, 0, 1, 1], [], []>} : vector<128x128xbf16>, vector<128x36xbf16>, vector<128x36xf32> -> vector<128x36xf32>
    %344 = vector.extract_strided_slice %343 {offsets = [0, 34], sizes = [128, 1], strides = [1, 1]} : vector<128x36xf32> to vector<128x1xf32>
    %345 = tpu.reciprocal %344 {approx = true} : vector<128x1xf32> -> vector<128x1xf32>
    %346 = vector.extract_strided_slice %343 {offsets = [0, 0], sizes = [128, 32], strides = [1, 1]} : vector<128x36xf32> to vector<128x32xf32>
    %347 = vector.broadcast %345 : vector<128x1xf32> to vector<128x32xf32>
    %348 = arith.mulf %346, %347 : vector<128x32xf32>
    %c0_97 = arith.constant 0 : index
    %c0_98 = arith.constant 0 : index
    %349 = vector.load %arg5[%c0_97, %c0_98] : memref<128x32xf32, #tpu.memory_space<vmem>>, vector<128x32xf32>
    %350 = arith.addf %349, %348 : vector<128x32xf32>
    %c0_99 = arith.constant 0 : index
    %c0_100 = arith.constant 0 : index
    %351 = vector.load %arg5[%c0_99, %c0_100] : memref<128x32xf32, #tpu.memory_space<vmem>>, vector<128x32xf32>
    tpu.vector_store %arg5[%c0_99, %c0_100], %350 {strides = array<i32>} : memref<128x32xf32, #tpu.memory_space<vmem>>, vector<128x32xf32>,
    %352 = vector.extract_strided_slice %269 {offsets = [0, 3], sizes = [128, 1], strides = [1, 1]} : vector<128x8xf32> to vector<128x1xf32>
    %353 = vector.extract_strided_slice %268 {offsets = [3, 0], sizes = [1, 128], strides = [1, 1]} : vector<8x128xf32> to vector<1x128xf32>
    %354 = vector.broadcast %352 : vector<128x1xf32> to vector<128x128xf32>
    %355 = vector.broadcast %353 : vector<1x128xf32> to vector<128x128xf32>
    %356 = arith.addf %354, %355 : vector<128x128xf32>
    %cst_101 = arith.constant 2.000000e-01 : f32
    %357 = vector.broadcast %cst_101 : f32 to vector<128x128xf32>
    %358 = arith.mulf %357, %356 : vector<128x128xf32>
    %359 = arith.maximumf %356, %358 : vector<128x128xf32>
    %360 = arith.addf %359, %0 : vector<128x128xf32>
    %cst_102 = arith.constant dense<0xFF800000> : vector<128xf32>
    %361 = vector.multi_reduction <maximumf>, %360, %cst_102 [1] : vector<128x128xf32> to vector<128xf32>
    %362 = vector.shape_cast %361 : vector<128xf32> to vector<128x1xf32>
    %363 = vector.broadcast %362 : vector<128x1xf32> to vector<128x128xf32>
    %364 = arith.subf %360, %363 : vector<128x128xf32>
    %365 = math.exp %364 : vector<128x128xf32>
    %366 = vector.extract_strided_slice %2 {offsets = [3, 0], sizes = [1, 36], strides = [1, 1]} : vector<4x36xf32> to vector<1x36xf32>
    %367 = vector.broadcast %366 : vector<1x36xf32> to vector<128x36xf32>
    %368 = arith.mulf %265, %367 : vector<128x36xf32>
    %369 = arith.truncf %368 : vector<128x36xf32> to vector<128x36xbf16>
    %370 = arith.truncf %365 : vector<128x128xf32> to vector<128x128xbf16>
    %cst_103 = arith.constant dense<0.000000e+00> : vector<128x36xf32>
    %371 = tpu.matmul %370, %369, %cst_103 {dimension_numbers = #tpu.dot_dimension_numbers<[1], [0], [0], [1], [0, 0, 1, 1], [], []>} : vector<128x128xbf16>, vector<128x36xbf16>, vector<128x36xf32> -> vector<128x36xf32>
    %372 = vector.extract_strided_slice %371 {offsets = [0, 35], sizes = [128, 1], strides = [1, 1]} : vector<128x36xf32> to vector<128x1xf32>
    %373 = tpu.reciprocal %372 {approx = true} : vector<128x1xf32> -> vector<128x1xf32>
    %374 = vector.extract_strided_slice %371 {offsets = [0, 0], sizes = [128, 32], strides = [1, 1]} : vector<128x36xf32> to vector<128x32xf32>
    %375 = vector.broadcast %373 : vector<128x1xf32> to vector<128x32xf32>
    %376 = arith.mulf %374, %375 : vector<128x32xf32>
    %c0_104 = arith.constant 0 : index
    %c0_105 = arith.constant 0 : index
    %377 = vector.load %arg5[%c0_104, %c0_105] : memref<128x32xf32, #tpu.memory_space<vmem>>, vector<128x32xf32>
    %378 = arith.addf %377, %376 : vector<128x32xf32>
    %c0_106 = arith.constant 0 : index
    %c0_107 = arith.constant 0 : index
    %379 = vector.load %arg5[%c0_106, %c0_107] : memref<128x32xf32, #tpu.memory_space<vmem>>, vector<128x32xf32>
    tpu.vector_store %arg5[%c0_106, %c0_107], %378 {strides = array<i32>} : memref<128x32xf32, #tpu.memory_space<vmem>>, vector<128x32xf32>,
    %c0_108 = arith.constant 0 : index
    %c0_109 = arith.constant 0 : index
    %380 = vector.load %arg5[%c0_108, %c0_109] : memref<128x32xf32, #tpu.memory_space<vmem>>, vector<128x32xf32>
    %381 = vector.extract_strided_slice %1 {offsets = [9, 0], sizes = [1, 32], strides = [1, 1]} : vector<16x36xf32> to vector<1x32xf32>
    %382 = vector.broadcast %381 : vector<1x32xf32> to vector<128x32xf32>
    %383 = arith.mulf %380, %382 : vector<128x32xf32>
    %384 = vector.extract_strided_slice %1 {offsets = [10, 0], sizes = [1, 32], strides = [1, 1]} : vector<16x36xf32> to vector<1x32xf32>
    %385 = vector.broadcast %384 : vector<1x32xf32> to vector<128x32xf32>
    %386 = arith.addf %383, %385 : vector<128x32xf32>
    %cst_110 = arith.constant 5.000000e-01 : f32
    %387 = vector.broadcast %cst_110 : f32 to vector<128x32xf32>
    %388 = arith.mulf %387, %132 : vector<128x32xf32>
    %389 = arith.addf %386, %388 : vector<128x32xf32>
    %cst_111 = arith.constant 0.000000e+00 : f32
    %390 = vector.broadcast %cst_111 : f32 to vector<128x32xf32>
    %391 = arith.maximumf %389, %390 : vector<128x32xf32>
    %392 = arith.truncf %391 : vector<128x32xf32> to vector<128x32xbf16>
    %c80 = arith.constant 80 : index
    %c0_112 = arith.constant 0 : index
    %393 = vector.load %arg2[%c80, %c0_112] : memref<112x36xbf16, #tpu.memory_space<vmem>>, vector<32x36xbf16>
    %cst_113 = arith.constant dense<0.000000e+00> : vector<128x36xf32>
    %394 = tpu.matmul %392, %393, %cst_113 {dimension_numbers = #tpu.dot_dimension_numbers<[1], [0], [0], [1], [0, 0, 1, 1], [], []>} : vector<128x32xbf16>, vector<32x36xbf16>, vector<128x36xf32> -> vector<128x36xf32>
    %395 = vector.broadcast %3 : vector<1x36xf32> to vector<128x36xf32>
    %396 = arith.addf %394, %395 : vector<128x36xf32>
    %c48_114 = arith.constant 48 : index
    %c0_115 = arith.constant 0 : index
    %397 = vector.load %arg3[%c48_114, %c0_115] : memref<80x36xf32, #tpu.memory_space<vmem>>, vector<8x36xf32>
    %c56 = arith.constant 56 : index
    %c0_116 = arith.constant 0 : index
    %398 = vector.load %arg3[%c56, %c0_116] : memref<80x36xf32, #tpu.memory_space<vmem>>, vector<8x36xf32>
    %cst_117 = arith.constant dense<0.000000e+00> : vector<8x128xf32>
    %399 = tpu.matmul %397, %396, %cst_117 {dimension_numbers = #tpu.dot_dimension_numbers<[1], [1], [0], [0], [0, 0, 1, 0], [], []>} : vector<8x36xf32>, vector<128x36xf32>, vector<8x128xf32> -> vector<8x128xf32>
    %cst_118 = arith.constant dense<0.000000e+00> : vector<128x8xf32>
    %400 = tpu.matmul %396, %398, %cst_118 {dimension_numbers = #tpu.dot_dimension_numbers<[1], [1], [0], [0], [0, 0, 1, 0], [], []>} : vector<128x36xf32>, vector<8x36xf32>, vector<128x8xf32> -> vector<128x8xf32>
    %401 = vector.extract_strided_slice %400 {offsets = [0, 0], sizes = [128, 1], strides = [1, 1]} : vector<128x8xf32> to vector<128x1xf32>
    %402 = vector.extract_strided_slice %399 {offsets = [0, 0], sizes = [1, 128], strides = [1, 1]} : vector<8x128xf32> to vector<1x128xf32>
    %403 = vector.broadcast %401 : vector<128x1xf32> to vector<128x128xf32>
    %404 = vector.broadcast %402 : vector<1x128xf32> to vector<128x128xf32>
    %405 = arith.addf %403, %404 : vector<128x128xf32>
    %cst_119 = arith.constant 2.000000e-01 : f32
    %406 = vector.broadcast %cst_119 : f32 to vector<128x128xf32>
    %407 = arith.mulf %406, %405 : vector<128x128xf32>
    %408 = arith.maximumf %405, %407 : vector<128x128xf32>
    %409 = arith.addf %408, %0 : vector<128x128xf32>
    %cst_120 = arith.constant dense<0xFF800000> : vector<128xf32>
    %410 = vector.multi_reduction <maximumf>, %409, %cst_120 [1] : vector<128x128xf32> to vector<128xf32>
    %411 = vector.shape_cast %410 : vector<128xf32> to vector<128x1xf32>
    %412 = vector.broadcast %411 : vector<128x1xf32> to vector<128x128xf32>
    %413 = arith.subf %409, %412 : vector<128x128xf32>
    %414 = math.exp %413 : vector<128x128xf32>
    %415 = vector.extract_strided_slice %2 {offsets = [0, 0], sizes = [1, 36], strides = [1, 1]} : vector<4x36xf32> to vector<1x36xf32>
    %416 = vector.broadcast %415 : vector<1x36xf32> to vector<128x36xf32>
    %417 = arith.mulf %396, %416 : vector<128x36xf32>
    %418 = arith.truncf %417 : vector<128x36xf32> to vector<128x36xbf16>
    %419 = arith.truncf %414 : vector<128x128xf32> to vector<128x128xbf16>
    %cst_121 = arith.constant dense<0.000000e+00> : vector<128x36xf32>
    %420 = tpu.matmul %419, %418, %cst_121 {dimension_numbers = #tpu.dot_dimension_numbers<[1], [0], [0], [1], [0, 0, 1, 1], [], []>} : vector<128x128xbf16>, vector<128x36xbf16>, vector<128x36xf32> -> vector<128x36xf32>
    %421 = vector.extract_strided_slice %420 {offsets = [0, 32], sizes = [128, 1], strides = [1, 1]} : vector<128x36xf32> to vector<128x1xf32>
    %422 = tpu.reciprocal %421 {approx = true} : vector<128x1xf32> -> vector<128x1xf32>
    %423 = vector.extract_strided_slice %420 {offsets = [0, 0], sizes = [128, 32], strides = [1, 1]} : vector<128x36xf32> to vector<128x32xf32>
    %424 = vector.broadcast %422 : vector<128x1xf32> to vector<128x32xf32>
    %425 = arith.mulf %423, %424 : vector<128x32xf32>
    %c0_122 = arith.constant 0 : index
    %c0_123 = arith.constant 0 : index
    %426 = vector.load %arg5[%c0_122, %c0_123] : memref<128x32xf32, #tpu.memory_space<vmem>>, vector<128x32xf32>
    tpu.vector_store %arg5[%c0_122, %c0_123], %425 {strides = array<i32>} : memref<128x32xf32, #tpu.memory_space<vmem>>, vector<128x32xf32>,
    %c0_124 = arith.constant 0 : index
    %c0_125 = arith.constant 0 : index
    %427 = vector.load %arg5[%c0_124, %c0_125] : memref<128x32xf32, #tpu.memory_space<vmem>>, vector<128x32xf32>
    %428 = vector.extract_strided_slice %427 {offsets = [0, 0], sizes = [128, 8], strides = [1, 1]} : vector<128x32xf32> to vector<128x8xf32>
    %429 = vector.extract_strided_slice %1 {offsets = [11, 0], sizes = [1, 8], strides = [1, 1]} : vector<16x36xf32> to vector<1x8xf32>
    %430 = vector.broadcast %429 : vector<1x8xf32> to vector<128x8xf32>
    %431 = arith.addf %428, %430 : vector<128x8xf32>
    %c0_126 = arith.constant 0 : index
    %c0_127 = arith.constant 0 : index
    %432 = vector.load %arg4[%c0_126, %c0_127] : memref<128x8xf32, #tpu.memory_space<vmem>>, vector<128x8xf32>
    tpu.vector_store %arg4[%c0_126, %c0_127], %431 {strides = array<i32>} : memref<128x8xf32, #tpu.memory_space<vmem>>, vector<128x8xf32>,
    return
  }
}

</mosaic_0001>

<llo_original>
// kernel: forward.1
$region0: #{forward.1}
  #allocation0 [shape = 'u32[]', space=smem, size = 0x4, offset = 0x4, fixed_abs, tag = 'smem constant byte address 0x4 - core index']
  #allocation1 [shape = 'u32[144,128]{1,0:T(1,128)}', space=vmem, size = 0x12000, scoped, tag = 'internal scratch']
  #allocation2 [shape = 'f32[128,32]{1,0:T(8,128)}', space=vmem, size = 0x10000, scoped, tag = 'scratch operand']
  %s0 = inlined_call_operand.vmem [shape: f32[128,16], index: 0, kind: input, shape index: {}]
  %s1 = inlined_call_operand.vmem [shape: f32[128,128], index: 1, kind: input, shape index: {}]
  %s2 = inlined_call_operand.vmem [shape: bf16[112,36], index: 2, kind: input, shape index: {}]
  %s3 = inlined_call_operand.vmem [shape: f32[80,36], index: 3, kind: input, shape index: {}]
  %s4 = inlined_call_operand.vmem [shape: f32[128,8], index: 4, kind: output, shape index: {}]
  %s5 = sld [smem:[#allocation0]]
  $region26: #{forward.1} parent=0
    _
  %s7 = ssub.s32 1, %s5
  %s8 = scalar_select 0, %s7, %s5
  // Predicated region
  $region2: #{forward.1} parent=0 // pred_check
    _
  $region3: #{forward.1} parent=0 // pred_check_branch
    %10 = sbr.rel (0) target = $region5
  $region4: #{forward.1} parent=0 // pred_region
    _
  $region5: #{forward.1} parent=0 // pred_fallthru
    _
  // Predicated region
  $region6: #{forward.1} parent=0 // pred_check
    _
  $region7: #{forward.1} parent=0 // pred_check_branch
    %12 = sbr.rel (0) target = $region9
  $region8: #{forward.1} parent=0 // pred_region
    _
  $region9: #{forward.1} parent=0 // pred_fallthru
    _
  // Predicated region
  $region10: #{forward.1} parent=0 // pred_check
    _
  $region11: #{forward.1} parent=0 // pred_check_branch
    %14 = sbr.rel (0) target = $region13
  $region12: #{forward.1} parent=0 // pred_region
    _
  $region13: #{forward.1} parent=0 // pred_fallthru
    _
  // Predicated region
  $region14: #{forward.1} parent=0 // pred_check
    _
  $region15: #{forward.1} parent=0 // pred_check_branch
    %16 = sbr.rel (0) target = $region17
  $region16: #{forward.1} parent=0 // pred_region
    _
  $region17: #{forward.1} parent=0 // pred_fallthru
    _
  %v18 = vld [vmem:[%s1] sm:$0xff]
  %v19 = vld [vmem:[%s1 + $0x8] sm:$0xff]
  %v20 = vld [vmem:[%s1 + $0x10] sm:$0xff]
  %v21 = vld [vmem:[%s1 + $0x18] sm:$0xff]
  %v22 = vld [vmem:[%s1 + $0x20] sm:$0xff]
  %v23 = vld [vmem:[%s1 + $0x28] sm:$0xff]
  %v24 = vld [vmem:[%s1 + $0x30] sm:$0xff]
  %v25 = vld [vmem:[%s1 + $0x38] sm:$0xff]
  %v26 = vld [vmem:[%s1 + $0x40] sm:$0xff]
  %v27 = vld [vmem:[%s1 + $0x48] sm:$0xff]
  %v28 = vld [vmem:[%s1 + $0x50] sm:$0xff]
  %v29 = vld [vmem:[%s1 + $0x58] sm:$0xff]
  %v30 = vld [vmem:[%s1 + $0x60] sm:$0xff]
  %v31 = vld [vmem:[%s1 + $0x68] sm:$0xff]
  %v32 = vld [vmem:[%s1 + $0x70] sm:$0xff]
  %v33 = vld [vmem:[%s1 + $0x78] sm:$0xff]
  %v34 = vld [vmem:[%s3 + $0x40] sm:$0xff]
  %v35 = vld [vmem:[%s3 + $0x48] sm:$0xff]
  %v36 = vld [vmem:[%s0] sm:$0xff]
  %v37 = vld [vmem:[%s0 + $0x8] sm:$0xff]
  %v38 = vld [vmem:[%s0 + $0x10] sm:$0xff]
  %v39 = vld [vmem:[%s0 + $0x18] sm:$0xff]
  %v40 = vld [vmem:[%s0 + $0x20] sm:$0xff]
  %v41 = vld [vmem:[%s0 + $0x28] sm:$0xff]
  %v42 = vld [vmem:[%s0 + $0x30] sm:$0xff]
  %v43 = vld [vmem:[%s0 + $0x38] sm:$0xff]
  %v44 = vld [vmem:[%s0 + $0x40] sm:$0xff]
  %v45 = vld [vmem:[%s0 + $0x48] sm:$0xff]
  %v46 = vld [vmem:[%s0 + $0x50] sm:$0xff]
  %v47 = vld [vmem:[%s0 + $0x58] sm:$0xff]
  %v48 = vld [vmem:[%s0 + $0x60] sm:$0xff]
  %v49 = vld [vmem:[%s0 + $0x68] sm:$0xff]
  %v50 = vld [vmem:[%s0 + $0x70] sm:$0xff]
  %v51 = vld [vmem:[%s0 + $0x78] sm:$0xff]
  %v52 = vpack.c.bf16 %v37, %v36
  %v53 = vpack.c.bf16 %v39, %v38
  %v54 = vpack.c.bf16 %v41, %v40
  %v55 = vpack.c.bf16 %v43, %v42
  %v56 = vpack.c.bf16 %v45, %v44
  %v57 = vpack.c.bf16 %v47, %v46
  %v58 = vpack.c.bf16 %v49, %v48
  %v59 = vpack.c.bf16 %v51, %v50
  %v60 = vld [vmem:[%s2] sm:$0xf]
  %v61 = vld [vmem:[%s2 + $0x4] sm:$0xf]
  %v62 = vlaneseq
  %v63 = vshrl.u32 %v62, 7
  %v64 = vsub.s32 4, %v63
  %v65 = vrot.slane %v34, %v64
  %v68 = vunpack.c.l.b16 %v60
  %v69 = vunpack.c.l.b16 %v61
  %v70 = vpack.c.b16 %v69, %v68
  %vm72 = vcmask 130048
  %v74 = vsel %vm72, %v52, 0
  %v77 = vsel %vm72, %v53, 0
  %v80 = vsel %vm72, %v54, 0
  %v83 = vsel %vm72, %v55, 0
  %v86 = vsel %vm72, %v56, 0
  %v89 = vsel %vm72, %v57, 0
  %v92 = vsel %vm72, %v58, 0
  %v95 = vsel %vm72, %v59, 0
  %97 = vmatprep.subr.bf16.mxu0 0
  %98 = vmatpush1.bf16.msra.mxu0 %v70
  %99 = vmatprep.subr.bf16.mxu0 0
  %100 = vmatpush1.bf16.msra.mxu0 0
  %101 = vmatprep.subr.bf16.mxu0 0
  %102 = vmatpush1.bf16.msra.mxu0 0
  %103 = vmatprep.subr.bf16.mxu0 0
  %104 = vmatpush1.bf16.msra.mxu0 0
  %105 = vmatprep.subr.bf16.mxu0 0
  %106 = vmatpush1.bf16.msra.mxu0 0
  %107 = vmatprep.subr.bf16.mxu0 0
  %108 = vmatpush1.bf16.msra.mxu0 0
  %109 = vmatprep.subr.bf16.mxu0 0
  %110 = vmatpush1.bf16.msra.mxu0 0
  %111 = vmatprep.subr.bf16.mxu0 0
  %112 = vmatpush1.bf16.msra.mxu0 0
  %113 = vmatprep.subr.bf16.mxu0 0
  %114 = vmatpush1.bf16.msra.mxu0 0
  %115 = vmatprep.subr.bf16.mxu0 0
  %116 = vmatpush1.bf16.msra.mxu0 0
  %117 = vmatprep.subr.bf16.mxu0 0
  %118 = vmatpush1.bf16.msra.mxu0 0
  %119 = vmatprep.subr.bf16.mxu0 0
  %120 = vmatpush1.bf16.msra.mxu0 0
  %121 = vmatprep.subr.bf16.mxu0 0
  %122 = vmatpush1.bf16.msra.mxu0 0
  %123 = vmatprep.subr.bf16.mxu0 0
  %124 = vmatpush1.bf16.msra.mxu0 0
  %125 = vmatprep.subr.bf16.mxu0 0
  %126 = vmatpush1.bf16.msra.mxu0 0
  %127 = vmatprep.subr.bf16.mxu0 0
  %128 = vmatpush1.bf16.msra.mxu0 0
  %129 = vmatprep.mubr.bf16.mxu0 0
  %130 = vmatmul.mubr.bf16.gmra.mrb[0].mxu0 %v74
  %v131 = vpop.f32.mrb[0].mxu0
  %v132 = vadd.f32 %v65, %v131
  %v133 = vpop.f32.mrb[0].mxu0
  %v134 = vpop.f32.mrb[0].mxu0
  %v135 = vadd.f32 %v65, %v134
  %v136 = vpop.f32.mrb[0].mxu0
  %137 = vmatprep.mubr.bf16.mxu0 0
  %138 = vmatmul.mubr.bf16.gmra.mrb[0].mxu0 %v77
  %v139 = vpop.f32.mrb[0].mxu0
  %v140 = vadd.f32 %v65, %v139
  %v141 = vpop.f32.mrb[0].mxu0
  %v142 = vpop.f32.mrb[0].mxu0
  %v143 = vadd.f32 %v65, %v142
  %v144 = vpop.f32.mrb[0].mxu0
  %145 = vmatprep.mubr.bf16.mxu0 0
  %146 = vmatmul.mubr.bf16.gmra.mrb[0].mxu0 %v80
  %v147 = vpop.f32.mrb[0].mxu0
  %v148 = vadd.f32 %v65, %v147
  %v149 = vpop.f32.mrb[0].mxu0
  %v150 = vpop.f32.mrb[0].mxu0
  %v151 = vadd.f32 %v65, %v150
  %v152 = vpop.f32.mrb[0].mxu0
  %153 = vmatprep.mubr.bf16.mxu0 0
  %154 = vmatmul.mubr.bf16.gmra.mrb[0].mxu0 %v83
  %v155 = vpop.f32.mrb[0].mxu0
  %v156 = vadd.f32 %v65, %v155
  %v157 = vpop.f32.mrb[0].mxu0
  %v158 = vpop.f32.mrb[0].mxu0
  %v159 = vadd.f32 %v65, %v158
  %v160 = vpop.f32.mrb[0].mxu0
  %161 = vmatprep.mubr.bf16.mxu0 0
  %162 = vmatmul.mubr.bf16.gmra.mrb[0].mxu0 %v86
  %v163 = vpop.f32.mrb[0].mxu0
  %v164 = vadd.f32 %v65, %v163
  %v165 = vpop.f32.mrb[0].mxu0
  %v166 = vpop.f32.mrb[0].mxu0
  %v167 = vadd.f32 %v65, %v166
  %v168 = vpop.f32.mrb[0].mxu0
  %169 = vmatprep.mubr.bf16.mxu0 0
  %170 = vmatmul.mubr.bf16.gmra.mrb[0].mxu0 %v89
  %v171 = vpop.f32.mrb[0].mxu0
  %v172 = vadd.f32 %v65, %v171
  %v173 = vpop.f32.mrb[0].mxu0
  %v174 = vpop.f32.mrb[0].mxu0
  %v175 = vadd.f32 %v65, %v174
  %v176 = vpop.f32.mrb[0].mxu0
  %177 = vmatprep.mubr.bf16.mxu0 0
  %178 = vmatmul.mubr.bf16.gmra.mrb[0].mxu0 %v92
  %v179 = vpop.f32.mrb[0].mxu0
  %v180 = vadd.f32 %v65, %v179
  %v181 = vpop.f32.mrb[0].mxu0
  %v182 = vpop.f32.mrb[0].mxu0
  %v183 = vadd.f32 %v65, %v182
  %v184 = vpop.f32.mrb[0].mxu0
  %185 = vmatprep.mubr.bf16.mxu0 0
  %186 = vmatmul.mubr.bf16.gmra.mrb[0].mxu0 %v95
  %v187 = vpop.f32.mrb[0].mxu0
  %v188 = vadd.f32 %v65, %v187
  %v189 = vpop.f32.mrb[0].mxu0
  %v190 = vpop.f32.mrb[0].mxu0
  %v191 = vadd.f32 %v65, %v190
  %v192 = vpop.f32.mrb[0].mxu0
  %193 = vdwg.mxu0
  %v194 = vld [vmem:[%s3] sm:$0xff]
  %v195 = vld [vmem:[%s3 + $0x8] sm:$0xff]
  %vm196 = vcmask 293888
  %v198 = vsel %vm196, %v194, 0
  %v201 = vsel %vm196, %v132, 0
  %v204 = vsel %vm196, %v135, 0
  %v207 = vsel %vm196, %v140, 0
  %v210 = vsel %vm196, %v143, 0
  %v213 = vsel %vm196, %v148, 0
  %v216 = vsel %vm196, %v151, 0
  %v219 = vsel %vm196, %v156, 0
  %v222 = vsel %vm196, %v159, 0
  %v225 = vsel %vm196, %v164, 0
  %v228 = vsel %vm196, %v167, 0
  %v231 = vsel %vm196, %v172, 0
  %v234 = vsel %vm196, %v175, 0
  %v237 = vsel %vm196, %v180, 0
  %v240 = vsel %vm196, %v183, 0
  %v243 = vsel %vm196, %v188, 0
  %v246 = vsel %vm196, %v191, 0
  %248 = vmatprep.subr.mxu0 0.0
  %249 = vmatpush1.xpose.msra.mxu0 %v201
  %250 = vmatprep.subr.mxu0 0.0
  %251 = vmatpush1.xpose.msra.mxu0 %v204
  %252 = vmatprep.subr.mxu0 0.0
  %253 = vmatpush1.xpose.msra.mxu0 %v207
  %254 = vmatprep.subr.mxu0 0.0
  %255 = vmatpush1.xpose.msra.mxu0 %v210
  %256 = vmatprep.subr.mxu0 0.0
  %257 = vmatpush1.xpose.msra.mxu0 %v213
  %258 = vmatprep.subr.mxu0 0.0
  %259 = vmatpush1.xpose.msra.mxu0 %v216
  %260 = vmatprep.subr.mxu0 0.0
  %261 = vmatpush1.xpose.msra.mxu0 %v219
  %262 = vmatprep.subr.mxu0 0.0
  %263 = vmatpush1.xpose.msra.mxu0 %v222
  %264 = vmatprep.subr.mxu0 0.0
  %265 = vmatpush1.xpose.msra.mxu0 %v225
  %266 = vmatprep.subr.mxu0 0.0
  %267 = vmatpush1.xpose.msra.mxu0 %v228
  %268 = vmatprep.subr.mxu0 0.0
  %269 = vmatpush1.xpose.msra.mxu0 %v231
  %270 = vmatprep.subr.mxu0 0.0
  %271 = vmatpush1.xpose.msra.mxu0 %v234
  %272 = vmatprep.subr.mxu0 0.0
  %273 = vmatpush1.xpose.msra.mxu0 %v237
  %274 = vmatprep.subr.mxu0 0.0
  %275 = vmatpush1.xpose.msra.mxu0 %v240
  %276 = vmatprep.subr.mxu0 0.0
  %277 = vmatpush1.xpose.msra.mxu0 %v243
  %278 = vmatprep.subr.mxu0 0.0
  %279 = vmatpush1.xpose.msra.mxu0 %v246
  %280 = vmatprep.subr.mxu0 0.0
  %281 = vmatpush1.xpose.msra.mxu0 0.0
  %282 = vmatprep.subr.mxu0 0.0
  %283 = vmatpush1.xpose.msra.mxu0 0.0
  %284 = vmatprep.subr.mxu0 0.0
  %285 = vmatpush1.xpose.msra.mxu0 0.0
  %286 = vmatprep.subr.mxu0 0.0
  %287 = vmatpush1.xpose.msra.mxu0 0.0
  %288 = vmatprep.subr.mxu0 0.0
  %289 = vmatpush1.xpose.msra.mxu0 0.0
  %290 = vmatprep.subr.mxu0 0.0
  %291 = vmatpush1.xpose.msra.mxu0 0.0
  %292 = vmatprep.subr.mxu0 0.0
  %293 = vmatpush1.xpose.msra.mxu0 0.0
  %294 = vmatprep.subr.mxu0 0.0
  %295 = vmatpush1.xpose.msra.mxu0 0.0
  %296 = vmatprep.subr.mxu0 0.0
  %297 = vmatpush1.xpose.msra.mxu0 0.0
  %298 = vmatprep.subr.mxu0 0.0
  %299 = vmatpush1.xpose.msra.mxu0 0.0
  %300 = vmatprep.subr.mxu0 0.0
  %301 = vmatpush1.xpose.msra.mxu0 0.0
  %302 = vmatprep.subr.mxu0 0.0
  %303 = vmatpush1.xpose.msra.mxu0 0.0
  %304 = vmatprep.subr.mxu0 0.0
  %305 = vmatpush1.xpose.msra.mxu0 0.0
  %306 = vmatprep.subr.mxu0 0.0
  %307 = vmatpush1.xpose.msra.mxu0 0.0
  %308 = vmatprep.subr.mxu0 0.0
  %309 = vmatpush1.xpose.msra.mxu0 0.0
  %310 = vmatprep.subr.mxu0 0.0
  %311 = vmatpush1.xpose.msra.mxu0 0.0
  %312 = vmatprep.mubr.f32.mxu0 0.0
  %313 = vmatmul.mubr.f32.gmra.mrb[0].mxu0 %v198
  %v314 = vpop.f32.mrb[0].mxu0
  %v315 = vadd.f32 0.0, %v314
  %v316 = vpop.f32.mrb[0].mxu0
  %317 = vdwg.mxu0
  %v319 = vsel %vm196, %v195, 0
  %321 = vmatprep.subr.mxu0 0.0
  %322 = vmatpush1.xpose.msra.mxu0 %v319
  %323 = vmatprep.subr.mxu0 0.0
  %324 = vmatpush1.xpose.msra.mxu0 0.0
  %325 = vmatprep.subr.mxu0 0.0
  %326 = vmatpush1.xpose.msra.mxu0 0.0
  %327 = vmatprep.subr.mxu0 0.0
  %328 = vmatpush1.xpose.msra.mxu0 0.0
  %329 = vmatprep.subr.mxu0 0.0
  %330 = vmatpush1.xpose.msra.mxu0 0.0
  %331 = vmatprep.subr.mxu0 0.0
  %332 = vmatpush1.xpose.msra.mxu0 0.0
  %333 = vmatprep.subr.mxu0 0.0
  %334 = vmatpush1.xpose.msra.mxu0 0.0
  %335 = vmatprep.subr.mxu0 0.0
  %336 = vmatpush1.xpose.msra.mxu0 0.0
  %337 = vmatprep.subr.mxu0 0.0
  %338 = vmatpush1.xpose.msra.mxu0 0.0
  %339 = vmatprep.subr.mxu0 0.0
  %340 = vmatpush1.xpose.msra.mxu0 0.0
  %341 = vmatprep.subr.mxu0 0.0
  %342 = vmatpush1.xpose.msra.mxu0 0.0
  %343 = vmatprep.subr.mxu0 0.0
  %344 = vmatpush1.xpose.msra.mxu0 0.0
  %345 = vmatprep.subr.mxu0 0.0
  %346 = vmatpush1.xpose.msra.mxu0 0.0
  %347 = vmatprep.subr.mxu0 0.0
  %348 = vmatpush1.xpose.msra.mxu0 0.0
  %349 = vmatprep.subr.mxu0 0.0
  %350 = vmatpush1.xpose.msra.mxu0 0.0
  %351 = vmatprep.subr.mxu0 0.0
  %352 = vmatpush1.xpose.msra.mxu0 0.0
  %353 = vmatprep.subr.mxu0 0.0
  %354 = vmatpush1.xpose.msra.mxu0 0.0
  %355 = vmatprep.subr.mxu0 0.0
  %356 = vmatpush1.xpose.msra.mxu0 0.0
  %357 = vmatprep.subr.mxu0 0.0
  %358 = vmatpush1.xpose.msra.mxu0 0.0
  %359 = vmatprep.subr.mxu0 0.0
  %360 = vmatpush1.xpose.msra.mxu0 0.0
  %361 = vmatprep.subr.mxu0 0.0
  %362 = vmatpush1.xpose.msra.mxu0 0.0
  %363 = vmatprep.subr.mxu0 0.0
  %364 = vmatpush1.xpose.msra.mxu0 0.0
  %365 = vmatprep.subr.mxu0 0.0
  %366 = vmatpush1.xpose.msra.mxu0 0.0
  %367 = vmatprep.subr.mxu0 0.0
  %368 = vmatpush1.xpose.msra.mxu0 0.0
  %369 = vmatprep.subr.mxu0 0.0
  %370 = vmatpush1.xpose.msra.mxu0 0.0
  %371 = vmatprep.subr.mxu0 0.0
  %372 = vmatpush1.xpose.msra.mxu0 0.0
  %373 = vmatprep.subr.mxu0 0.0
  %374 = vmatpush1.xpose.msra.mxu0 0.0
  %375 = vmatprep.subr.mxu0 0.0
  %376 = vmatpush1.xpose.msra.mxu0 0.0
  %377 = vmatprep.subr.mxu0 0.0
  %378 = vmatpush1.xpose.msra.mxu0 0.0
  %379 = vmatprep.subr.mxu0 0.0
  %380 = vmatpush1.xpose.msra.mxu0 0.0
  %381 = vmatprep.subr.mxu0 0.0
  %382 = vmatpush1.xpose.msra.mxu0 0.0
  %383 = vmatprep.subr.mxu0 0.0
  %384 = vmatpush1.xpose.msra.mxu0 0.0
  %385 = vmatprep.mubr.f32.mxu0 0.0
  %386 = vmatmul.mubr.f32.gmra.mrb[0].mxu0 %v201
  %v387 = vpop.f32.mrb[0].mxu0
  %v388 = vadd.f32 0.0, %v387
  %v389 = vpop.f32.mrb[0].mxu0
  %390 = vmatprep.mubr.f32.mxu0 0.0
  %391 = vmatmul.mubr.f32.gmra.mrb[0].mxu0 %v204
  %v392 = vpop.f32.mrb[0].mxu0
  %v393 = vadd.f32 0.0, %v392
  %v394 = vpop.f32.mrb[0].mxu0
  %395 = vmatprep.mubr.f32.mxu0 0.0
  %396 = vmatmul.mubr.f32.gmra.mrb[0].mxu0 %v207
  %v397 = vpop.f32.mrb[0].mxu0
  %v398 = vadd.f32 0.0, %v397
  %v399 = vpop.f32.mrb[0].mxu0
  %400 = vmatprep.mubr.f32.mxu0 0.0
  %401 = vmatmul.mubr.f32.gmra.mrb[0].mxu0 %v210
  %v402 = vpop.f32.mrb[0].mxu0
  %v403 = vadd.f32 0.0, %v402
  %v404 = vpop.f32.mrb[0].mxu0
  %405 = vmatprep.mubr.f32.mxu0 0.0
  %406 = vmatmul.mubr.f32.gmra.mrb[0].mxu0 %v213
  %v407 = vpop.f32.mrb[0].mxu0
  %v408 = vadd.f32 0.0, %v407
  %v409 = vpop.f32.mrb[0].mxu0
  %410 = vmatprep.mubr.f32.mxu0 0.0
  %411 = vmatmul.mubr.f32.gmra.mrb[0].mxu0 %v216
  %v412 = vpop.f32.mrb[0].mxu0
  %v413 = vadd.f32 0.0, %v412
  %v414 = vpop.f32.mrb[0].mxu0
  %415 = vmatprep.mubr.f32.mxu0 0.0
  %416 = vmatmul.mubr.f32.gmra.mrb[0].mxu0 %v219
  %v417 = vpop.f32.mrb[0].mxu0
  %v418 = vadd.f32 0.0, %v417
  %v419 = vpop.f32.mrb[0].mxu0
  %420 = vmatprep.mubr.f32.mxu0 0.0
  %421 = vmatmul.mubr.f32.gmra.mrb[0].mxu0 %v222
  %v422 = vpop.f32.mrb[0].mxu0
  %v423 = vadd.f32 0.0, %v422
  %v424 = vpop.f32.mrb[0].mxu0
  %425 = vmatprep.mubr.f32.mxu0 0.0
  %426 = vmatmul.mubr.f32.gmra.mrb[0].mxu0 %v225
  %v427 = vpop.f32.mrb[0].mxu0
  %v428 = vadd.f32 0.0, %v427
  %v429 = vpop.f32.mrb[0].mxu0
  %430 = vmatprep.mubr.f32.mxu0 0.0
  %431 = vmatmul.mubr.f32.gmra.mrb[0].mxu0 %v228
  %v432 = vpop.f32.mrb[0].mxu0
  %v433 = vadd.f32 0.0, %v432
  %v434 = vpop.f32.mrb[0].mxu0
  %435 = vmatprep.mubr.f32.mxu0 0.0
  %436 = vmatmul.mubr.f32.gmra.mrb[0].mxu0 %v231
  %v437 = vpop.f32.mrb[0].mxu0
  %v438 = vadd.f32 0.0, %v437
  %v439 = vpop.f32.mrb[0].mxu0
  %440 = vmatprep.mubr.f32.mxu0 0.0
  %441 = vmatmul.mubr.f32.gmra.mrb[0].mxu0 %v234
  %v442 = vpop.f32.mrb[0].mxu0
  %v443 = vadd.f32 0.0, %v442
  %v444 = vpop.f32.mrb[0].mxu0
  %445 = vmatprep.mubr.f32.mxu0 0.0
  %446 = vmatmul.mubr.f32.gmra.mrb[0].mxu0 %v237
  %v447 = vpop.f32.mrb[0].mxu0
  %v448 = vadd.f32 0.0, %v447
  %v449 = vpop.f32.mrb[0].mxu0
  %450 = vmatprep.mubr.f32.mxu0 0.0
  %451 = vmatmul.mubr.f32.gmra.mrb[0].mxu0 %v240
  %v452 = vpop.f32.mrb[0].mxu0
  %v453 = vadd.f32 0.0, %v452
  %v454 = vpop.f32.mrb[0].mxu0
  %455 = vmatprep.mubr.f32.mxu0 0.0
  %456 = vmatmul.mubr.f32.gmra.mrb[0].mxu0 %v243
  %v457 = vpop.f32.mrb[0].mxu0
  %v458 = vadd.f32 0.0, %v457
  %v459 = vpop.f32.mrb[0].mxu0
  %460 = vmatprep.mubr.f32.mxu0 0.0
  %461 = vmatmul.mubr.f32.gmra.mrb[0].mxu0 %v246
  %v462 = vpop.f32.mrb[0].mxu0
  %v463 = vadd.f32 0.0, %v462
  %v464 = vpop.f32.mrb[0].mxu0
  %465 = vdwg.mxu0
  %467 = vset.pattern.permute.xlu0 0
  %468 = vperm.xlu0 %467, %v388
  %v469 = vpop.permute.xlu0 %468
  %472 = vset.pattern.permute.xlu0 0
  %473 = vperm.xlu0 %472, %v393
  %v474 = vpop.permute.xlu0 %473
  %477 = vset.pattern.permute.xlu0 0
  %478 = vperm.xlu0 %477, %v398
  %v479 = vpop.permute.xlu0 %478
  %482 = vset.pattern.permute.xlu0 0
  %483 = vperm.xlu0 %482, %v403
  %v484 = vpop.permute.xlu0 %483
  %487 = vset.pattern.permute.xlu0 0
  %488 = vperm.xlu0 %487, %v408
  %v489 = vpop.permute.xlu0 %488
  %492 = vset.pattern.permute.xlu0 0
  %493 = vperm.xlu0 %492, %v413
  %v494 = vpop.permute.xlu0 %493
  %497 = vset.pattern.permute.xlu0 0
  %498 = vperm.xlu0 %497, %v418
  %v499 = vpop.permute.xlu0 %498
  %502 = vset.pattern.permute.xlu0 0
  %503 = vperm.xlu0 %502, %v423
  %v504 = vpop.permute.xlu0 %503
  %507 = vset.pattern.permute.xlu0 0
  %508 = vperm.xlu0 %507, %v428
  %v509 = vpop.permute.xlu0 %508
  %512 = vset.pattern.permute.xlu0 0
  %513 = vperm.xlu0 %512, %v433
  %v514 = vpop.permute.xlu0 %513
  %517 = vset.pattern.permute.xlu0 0
  %518 = vperm.xlu0 %517, %v438
  %v519 = vpop.permute.xlu0 %518
  %522 = vset.pattern.permute.xlu0 0
  %523 = vperm.xlu0 %522, %v443
  %v524 = vpop.permute.xlu0 %523
  %527 = vset.pattern.permute.xlu0 0
  %528 = vperm.xlu0 %527, %v448
  %v529 = vpop.permute.xlu0 %528
  %532 = vset.pattern.permute.xlu0 0
  %533 = vperm.xlu0 %532, %v453
  %v534 = vpop.permute.xlu0 %533
  %537 = vset.pattern.permute.xlu0 0
  %538 = vperm.xlu0 %537, %v458
  %v539 = vpop.permute.xlu0 %538
  %542 = vset.pattern.permute.xlu0 0
  %543 = vperm.xlu0 %542, %v463
  %v544 = vpop.permute.xlu0 %543
  %v546 = vlaneseq
  %v547 = vshrl.u32 %v546, 7
  %v548 = vsub.s32 0, %v547
  %v549 = vrot.slane %v315, %v548
  %v550 = vadd.f32 %v469, %v549
  %v551 = vadd.f32 %v474, %v549
  %v552 = vadd.f32 %v479, %v549
  %v553 = vadd.f32 %v484, %v549
  %v554 = vadd.f32 %v489, %v549
  %v555 = vadd.f32 %v494, %v549
  %v556 = vadd.f32 %v499, %v549
  %v557 = vadd.f32 %v504, %v549
  %v558 = vadd.f32 %v509, %v549
  %v559 = vadd.f32 %v514, %v549
  %v560 = vadd.f32 %v519, %v549
  %v561 = vadd.f32 %v524, %v549
  %v562 = vadd.f32 %v529, %v549
  %v563 = vadd.f32 %v534, %v549
  %v564 = vadd.f32 %v539, %v549
  %v565 = vadd.f32 %v544, %v549
  %v566 = vmul.f32 %v550, 0.2
  %v567 = vmul.f32 %v551, 0.2
  %v568 = vmul.f32 %v552, 0.2
  %v569 = vmul.f32 %v553, 0.2
  %v570 = vmul.f32 %v554, 0.2
  %v571 = vmul.f32 %v555, 0.2
  %v572 = vmul.f32 %v556, 0.2
  %v573 = vmul.f32 %v557, 0.2
  %v574 = vmul.f32 %v558, 0.2
  %v575 = vmul.f32 %v559, 0.2
  %v576 = vmul.f32 %v560, 0.2
  %v577 = vmul.f32 %v561, 0.2
  %v578 = vmul.f32 %v562, 0.2
  %v579 = vmul.f32 %v563, 0.2
  %v580 = vmul.f32 %v564, 0.2
  %v581 = vmul.f32 %v565, 0.2
  %v582 = vmax.f32 %v550, %v566
  %v583 = vmax.f32 %v551, %v567
  %v584 = vmax.f32 %v552, %v568
  %v585 = vmax.f32 %v553, %v569
  %v586 = vmax.f32 %v554, %v570
  %v587 = vmax.f32 %v555, %v571
  %v588 = vmax.f32 %v556, %v572
  %v589 = vmax.f32 %v557, %v573
  %v590 = vmax.f32 %v558, %v574
  %v591 = vmax.f32 %v559, %v575
  %v592 = vmax.f32 %v560, %v576
  %v593 = vmax.f32 %v561, %v577
  %v594 = vmax.f32 %v562, %v578
  %v595 = vmax.f32 %v563, %v579
  %v596 = vmax.f32 %v564, %v580
  %v597 = vmax.f32 %v565, %v581
  %v598 = vadd.f32 %v582, %v18
  %v599 = vadd.f32 %v583, %v19
  %v600 = vadd.f32 %v584, %v20
  %v601 = vadd.f32 %v585, %v21
  %v602 = vadd.f32 %v586, %v22
  %v603 = vadd.f32 %v587, %v23
  %v604 = vadd.f32 %v588, %v24
  %v605 = vadd.f32 %v589, %v25
  %v606 = vadd.f32 %v590, %v26
  %v607 = vadd.f32 %v591, %v27
  %v608 = vadd.f32 %v592, %v28
  %v609 = vadd.f32 %v593, %v29
  %v610 = vadd.f32 %v594, %v30
  %v611 = vadd.f32 %v595, %v31
  %v612 = vadd.f32 %v596, %v32
  %v613 = vadd.f32 %v597, %v33
  %614 = vmax.xlane.f32.xlu0 %v598
  %v615 = vpop.xlane.xlu0 %614
  %616 = vmax.xlane.f32.xlu0 %v599
  %v617 = vpop.xlane.xlu0 %616
  %618 = vmax.xlane.f32.xlu0 %v600
  %v619 = vpop.xlane.xlu0 %618
  %620 = vmax.xlane.f32.xlu0 %v601
  %v621 = vpop.xlane.xlu0 %620
  %622 = vmax.xlane.f32.xlu0 %v602
  %v623 = vpop.xlane.xlu0 %622
  %624 = vmax.xlane.f32.xlu0 %v603
  %v625 = vpop.xlane.xlu0 %624
  %626 = vmax.xlane.f32.xlu0 %v604
  %v627 = vpop.xlane.xlu0 %626
  %628 = vmax.xlane.f32.xlu0 %v605
  %v629 = vpop.xlane.xlu0 %628
  %630 = vmax.xlane.f32.xlu0 %v606
  %v631 = vpop.xlane.xlu0 %630
  %632 = vmax.xlane.f32.xlu0 %v607
  %v633 = vpop.xlane.xlu0 %632
  %634 = vmax.xlane.f32.xlu0 %v608
  %v635 = vpop.xlane.xlu0 %634
  %636 = vmax.xlane.f32.xlu0 %v609
  %v637 = vpop.xlane.xlu0 %636
  %638 = vmax.xlane.f32.xlu0 %v610
  %v639 = vpop.xlane.xlu0 %638
  %640 = vmax.xlane.f32.xlu0 %v611
  %v641 = vpop.xlane.xlu0 %640
  %642 = vmax.xlane.f32.xlu0 %v612
  %v643 = vpop.xlane.xlu0 %642
  %644 = vmax.xlane.f32.xlu0 %v613
  %v645 = vpop.xlane.xlu0 %644
  %v646 = vsub.f32 %v598, %v615
  %v647 = vsub.f32 %v599, %v617
  %v648 = vsub.f32 %v600, %v619
  %v649 = vsub.f32 %v601, %v621
  %v650 = vsub.f32 %v602, %v623
  %v651 = vsub.f32 %v603, %v625
  %v652 = vsub.f32 %v604, %v627
  %v653 = vsub.f32 %v605, %v629
  %v654 = vsub.f32 %v606, %v631
  %v655 = vsub.f32 %v607, %v633
  %v656 = vsub.f32 %v608, %v635
  %v657 = vsub.f32 %v609, %v637
  %v658 = vsub.f32 %v610, %v639
  %v659 = vsub.f32 %v611, %v641
  %v660 = vsub.f32 %v612, %v643
  %v661 = vsub.f32 %v613, %v645
  %v662 = vmul.f32 %v646, 1.442695
  %v663 = vpow.pop %v662
  %v664 = vmul.f32 %v647, 1.442695
  %v665 = vpow.pop %v664
  %v666 = vmul.f32 %v648, 1.442695
  %v667 = vpow.pop %v666
  %v668 = vmul.f32 %v649, 1.442695
  %v669 = vpow.pop %v668
  %v670 = vmul.f32 %v650, 1.442695
  %v671 = vpow.pop %v670
  %v672 = vmul.f32 %v651, 1.442695
  %v673 = vpow.pop %v672
  %v674 = vmul.f32 %v652, 1.442695
  %v675 = vpow.pop %v674
  %v676 = vmul.f32 %v653, 1.442695
  %v677 = vpow.pop %v676
  %v678 = vmul.f32 %v654, 1.442695
  %v679 = vpow.pop %v678
  %v680 = vmul.f32 %v655, 1.442695
  %v681 = vpow.pop %v680
  %v682 = vmul.f32 %v656, 1.442695
  %v683 = vpow.pop %v682
  %v684 = vmul.f32 %v657, 1.442695
  %v685 = vpow.pop %v684
  %v686 = vmul.f32 %v658, 1.442695
  %v687 = vpow.pop %v686
  %v688 = vmul.f32 %v659, 1.442695
  %v689 = vpow.pop %v688
  %v690 = vmul.f32 %v660, 1.442695
  %v691 = vpow.pop %v690
  %v692 = vmul.f32 %v661, 1.442695
  %v693 = vpow.pop %v692
  %v694 = vlaneseq
  %v695 = vshrl.u32 %v694, 7
  %v696 = vsub.s32 0, %v695
  %v697 = vrot.slane %v34, %v696
  %v698 = vmul.f32 %v132, %v697
  %v699 = vmul.f32 %v135, %v697
  %v700 = vmul.f32 %v140, %v697
  %v701 = vmul.f32 %v143, %v697
  %v702 = vmul.f32 %v148, %v697
  %v703 = vmul.f32 %v151, %v697
  %v704 = vmul.f32 %v156, %v697
  %v705 = vmul.f32 %v159, %v697
  %v706 = vmul.f32 %v164, %v697
  %v707 = vmul.f32 %v167, %v697
  %v708 = vmul.f32 %v172, %v697
  %v709 = vmul.f32 %v175, %v697
  %v710 = vmul.f32 %v180, %v697
  %v711 = vmul.f32 %v183, %v697
  %v712 = vmul.f32 %v188, %v697
  %v713 = vmul.f32 %v191, %v697
  %v714 = vpack.c.bf16 %v699, %v698
  %v715 = vpack.c.bf16 %v701, %v700
  %v716 = vpack.c.bf16 %v703, %v702
  %v717 = vpack.c.bf16 %v705, %v704
  %v718 = vpack.c.bf16 %v707, %v706
  %v719 = vpack.c.bf16 %v709, %v708
  %v720 = vpack.c.bf16 %v711, %v710
  %v721 = vpack.c.bf16 %v713, %v712
  %v722 = vpack.c.bf16 %v665, %v663
  %v723 = vpack.c.bf16 %v669, %v667
  %v724 = vpack.c.bf16 %v673, %v671
  %v725 = vpack.c.bf16 %v677, %v675
  %v726 = vpack.c.bf16 %v681, %v679
  %v727 = vpack.c.bf16 %v685, %v683
  %v728 = vpack.c.bf16 %v689, %v687
  %v729 = vpack.c.bf16 %v693, %v691
  %730 = vmatprep.subr.bf16.mxu0 0
  %731 = vmatpush1.bf16.msra.mxu0 %v714
  %732 = vmatprep.subr.bf16.mxu0 0
  %733 = vmatpush1.bf16.msra.mxu0 %v715
  %734 = vmatprep.subr.bf16.mxu0 0
  %735 = vmatpush1.bf16.msra.mxu0 %v716
  %736 = vmatprep.subr.bf16.mxu0 0
  %737 = vmatpush1.bf16.msra.mxu0 %v717
  %738 = vmatprep.subr.bf16.mxu0 0
  %739 = vmatpush1.bf16.msra.mxu0 %v718
  %740 = vmatprep.subr.bf16.mxu0 0
  %741 = vmatpush1.bf16.msra.mxu0 %v719
  %742 = vmatprep.subr.bf16.mxu0 0
  %743 = vmatpush1.bf16.msra.mxu0 %v720
  %744 = vmatprep.subr.bf16.mxu0 0
  %745 = vmatpush1.bf16.msra.mxu0 %v721
  %746 = vmatprep.subr.bf16.mxu0 0
  %747 = vmatpush1.bf16.msra.mxu0 0
  %748 = vmatprep.subr.bf16.mxu0 0
  %749 = vmatpush1.bf16.msra.mxu0 0
  %750 = vmatprep.subr.bf16.mxu0 0
  %751 = vmatpush1.bf16.msra.mxu0 0
  %752 = vmatprep.subr.bf16.mxu0 0
  %753 = vmatpush1.bf16.msra.mxu0 0
  %754 = vmatprep.subr.bf16.mxu0 0
  %755 = vmatpush1.bf16.msra.mxu0 0
  %756 = vmatprep.subr.bf16.mxu0 0
  %757 = vmatpush1.bf16.msra.mxu0 0
  %758 = vmatprep.subr.bf16.mxu0 0
  %759 = vmatpush1.bf16.msra.mxu0 0
  %760 = vmatprep.subr.bf16.mxu0 0
  %761 = vmatpush1.bf16.msra.mxu0 0
  %762 = vmatprep.mubr.bf16.mxu0 0
  %763 = vmatmul.mubr.bf16.gmra.mrb[0].mxu0 %v722
  %v764 = vpop.f32.mrb[0].mxu0
  %v765 = vadd.f32 0.0, %v764
  %v766 = vpop.f32.mrb[0].mxu0
  %v767 = vpop.f32.mrb[0].mxu0
  %v768 = vadd.f32 0.0, %v767
  %v769 = vpop.f32.mrb[0].mxu0
  %770 = vmatprep.mubr.bf16.mxu0 0
  %771 = vmatmul.mubr.bf16.gmra.mrb[0].mxu0 %v723
  %v772 = vpop.f32.mrb[0].mxu0
  %v773 = vadd.f32 0.0, %v772
  %v774 = vpop.f32.mrb[0].mxu0
  %v775 = vpop.f32.mrb[0].mxu0
  %v776 = vadd.f32 0.0, %v775
  %v777 = vpop.f32.mrb[0].mxu0
  %778 = vmatprep.mubr.bf16.mxu0 0
  %779 = vmatmul.mubr.bf16.gmra.mrb[0].mxu0 %v724
  %v780 = vpop.f32.mrb[0].mxu0
  %v781 = vadd.f32 0.0, %v780
  %v782 = vpop.f32.mrb[0].mxu0
  %v783 = vpop.f32.mrb[0].mxu0
  %v784 = vadd.f32 0.0, %v783
  %v785 = vpop.f32.mrb[0].mxu0
  %786 = vmatprep.mubr.bf16.mxu0 0
  %787 = vmatmul.mubr.bf16.gmra.mrb[0].mxu0 %v725
  %v788 = vpop.f32.mrb[0].mxu0
  %v789 = vadd.f32 0.0, %v788
  %v790 = vpop.f32.mrb[0].mxu0
  %v791 = vpop.f32.mrb[0].mxu0
  %v792 = vadd.f32 0.0, %v791
  %v793 = vpop.f32.mrb[0].mxu0
  %794 = vmatprep.mubr.bf16.mxu0 0
  %795 = vmatmul.mubr.bf16.gmra.mrb[0].mxu0 %v726
  %v796 = vpop.f32.mrb[0].mxu0
  %v797 = vadd.f32 0.0, %v796
  %v798 = vpop.f32.mrb[0].mxu0
  %v799 = vpop.f32.mrb[0].mxu0
  %v800 = vadd.f32 0.0, %v799
  %v801 = vpop.f32.mrb[0].mxu0
  %802 = vmatprep.mubr.bf16.mxu0 0
  %803 = vmatmul.mubr.bf16.gmra.mrb[0].mxu0 %v727
  %v804 = vpop.f32.mrb[0].mxu0
  %v805 = vadd.f32 0.0, %v804
  %v806 = vpop.f32.mrb[0].mxu0
  %v807 = vpop.f32.mrb[0].mxu0
  %v808 = vadd.f32 0.0, %v807
  %v809 = vpop.f32.mrb[0].mxu0
  %810 = vmatprep.mubr.bf16.mxu0 0
  %811 = vmatmul.mubr.bf16.gmra.mrb[0].mxu0 %v728
  %v812 = vpop.f32.mrb[0].mxu0
  %v813 = vadd.f32 0.0, %v812
  %v814 = vpop.f32.mrb[0].mxu0
  %v815 = vpop.f32.mrb[0].mxu0
  %v816 = vadd.f32 0.0, %v815
  %v817 = vpop.f32.mrb[0].mxu0
  %818 = vmatprep.mubr.bf16.mxu0 0
  %819 = vmatmul.mubr.bf16.gmra.mrb[0].mxu0 %v729
  %v820 = vpop.f32.mrb[0].mxu0
  %v821 = vadd.f32 0.0, %v820
  %v822 = vpop.f32.mrb[0].mxu0
  %v823 = vpop.f32.mrb[0].mxu0
  %v824 = vadd.f32 0.0, %v823
  %v825 = vpop.f32.mrb[0].mxu0
  %826 = vdwg.mxu0
  %v827 = vrcp.pop %v765
  %v828 = vrcp.pop %v768
  %v829 = vrcp.pop %v773
  %v830 = vrcp.pop %v776
  %v831 = vrcp.pop %v781
  %v832 = vrcp.pop %v784
  %v833 = vrcp.pop %v789
  %v834 = vrcp.pop %v792
  %v835 = vrcp.pop %v797
  %v836 = vrcp.pop %v800
  %v837 = vrcp.pop %v805
  %v838 = vrcp.pop %v808
  %v839 = vrcp.pop %v813
  %v840 = vrcp.pop %v816
  %v841 = vrcp.pop %v821
  %v842 = vrcp.pop %v824
  %844 = vset.pattern.permute.xlu0 32
  %845 = vperm.xlu0 %844, %v827
  %v846 = vpop.permute.xlu0 %845
  %849 = vset.pattern.permute.xlu0 32
  %850 = vperm.xlu0 %849, %v828
  %v851 = vpop.permute.xlu0 %850
  %854 = vset.pattern.permute.xlu0 32
  %855 = vperm.xlu0 %854, %v829
  %v856 = vpop.permute.xlu0 %855
  %859 = vset.pattern.permute.xlu0 32
  %860 = vperm.xlu0 %859, %v830
  %v861 = vpop.permute.xlu0 %860
  %864 = vset.pattern.permute.xlu0 32
  %865 = vperm.xlu0 %864, %v831
  %v866 = vpop.permute.xlu0 %865
  %869 = vset.pattern.permute.xlu0 32
  %870 = vperm.xlu0 %869, %v832
  %v871 = vpop.permute.xlu0 %870
  %874 = vset.pattern.permute.xlu0 32
  %875 = vperm.xlu0 %874, %v833
  %v876 = vpop.permute.xlu0 %875
  %879 = vset.pattern.permute.xlu0 32
  %880 = vperm.xlu0 %879, %v834
  %v881 = vpop.permute.xlu0 %880
  %884 = vset.pattern.permute.xlu0 32
  %885 = vperm.xlu0 %884, %v835
  %v886 = vpop.permute.xlu0 %885
  %889 = vset.pattern.permute.xlu0 32
  %890 = vperm.xlu0 %889, %v836
  %v891 = vpop.permute.xlu0 %890
  %894 = vset.pattern.permute.xlu0 32
  %895 = vperm.xlu0 %894, %v837
  %v896 = vpop.permute.xlu0 %895
  %899 = vset.pattern.permute.xlu0 32
  %900 = vperm.xlu0 %899, %v838
  %v901 = vpop.permute.xlu0 %900
  %904 = vset.pattern.permute.xlu0 32
  %905 = vperm.xlu0 %904, %v839
  %v906 = vpop.permute.xlu0 %905
  %909 = vset.pattern.permute.xlu0 32
  %910 = vperm.xlu0 %909, %v840
  %v911 = vpop.permute.xlu0 %910
  %914 = vset.pattern.permute.xlu0 32
  %915 = vperm.xlu0 %914, %v841
  %v916 = vpop.permute.xlu0 %915
  %919 = vset.pattern.permute.xlu0 32
  %920 = vperm.xlu0 %919, %v842
  %v921 = vpop.permute.xlu0 %920
  %v923 = vmul.f32 %v765, %v846
  %v924 = vmul.f32 %v768, %v851
  %v925 = vmul.f32 %v773, %v856
  %v926 = vmul.f32 %v776, %v861
  %v927 = vmul.f32 %v781, %v866
  %v928 = vmul.f32 %v784, %v871
  %v929 = vmul.f32 %v789, %v876
  %v930 = vmul.f32 %v792, %v881
  %v931 = vmul.f32 %v797, %v886
  %v932 = vmul.f32 %v800, %v891
  %v933 = vmul.f32 %v805, %v896
  %v934 = vmul.f32 %v808, %v901
  %v935 = vmul.f32 %v813, %v906
  %v936 = vmul.f32 %v816, %v911
  %v937 = vmul.f32 %v821, %v916
  %v938 = vmul.f32 %v824, %v921
  %vm939 = vcmask 261120
  %940 = vst.msk [vmem:[#allocation2] sm:$0xff] %vm939, %v923
  %941 = vst.msk [vmem:[#allocation2 + $0x8] sm:$0xff] %vm939, %v924
  %942 = vst.msk [vmem:[#allocation2 + $0x10] sm:$0xff] %vm939, %v925
  %943 = vst.msk [vmem:[#allocation2 + $0x18] sm:$0xff] %vm939, %v926
  %944 = vst.msk [vmem:[#allocation2 + $0x20] sm:$0xff] %vm939, %v927
  %945 = vst.msk [vmem:[#allocation2 + $0x28] sm:$0xff] %vm939, %v928
  %946 = vst.msk [vmem:[#allocation2 + $0x30] sm:$0xff] %vm939, %v929
  %947 = vst.msk [vmem:[#allocation2 + $0x38] sm:$0xff] %vm939, %v930
  %948 = vst.msk [vmem:[#allocation2 + $0x40] sm:$0xff] %vm939, %v931
  %949 = vst.msk [vmem:[#allocation2 + $0x48] sm:$0xff] %vm939, %v932
  %950 = vst.msk [vmem:[#allocation2 + $0x50] sm:$0xff] %vm939, %v933
  %951 = vst.msk [vmem:[#allocation2 + $0x58] sm:$0xff] %vm939, %v934
  %952 = vst.msk [vmem:[#allocation2 + $0x60] sm:$0xff] %vm939, %v935
  %953 = vst.msk [vmem:[#allocation2 + $0x68] sm:$0xff] %vm939, %v936
  %954 = vst.msk [vmem:[#allocation2 + $0x70] sm:$0xff] %vm939, %v937
  %955 = vst.msk [vmem:[#allocation2 + $0x78] sm:$0xff] %vm939, %v938
  %956 = vset.pattern.permute.xlu0 1
  %957 = vperm.xlu0 %956, %v388
  %v958 = vpop.permute.xlu0 %957
  %960 = vset.pattern.permute.xlu0 1
  %961 = vperm.xlu0 %960, %v393
  %v962 = vpop.permute.xlu0 %961
  %964 = vset.pattern.permute.xlu0 1
  %965 = vperm.xlu0 %964, %v398
  %v966 = vpop.permute.xlu0 %965
  %968 = vset.pattern.permute.xlu0 1
  %969 = vperm.xlu0 %968, %v403
  %v970 = vpop.permute.xlu0 %969
  %972 = vset.pattern.permute.xlu0 1
  %973 = vperm.xlu0 %972, %v408
  %v974 = vpop.permute.xlu0 %973
  %976 = vset.pattern.permute.xlu0 1
  %977 = vperm.xlu0 %976, %v413
  %v978 = vpop.permute.xlu0 %977
  %980 = vset.pattern.permute.xlu0 1
  %981 = vperm.xlu0 %980, %v418
  %v982 = vpop.permute.xlu0 %981
  %984 = vset.pattern.permute.xlu0 1
  %985 = vperm.xlu0 %984, %v423
  %v986 = vpop.permute.xlu0 %985
  %988 = vset.pattern.permute.xlu0 1
  %989 = vperm.xlu0 %988, %v428
  %v990 = vpop.permute.xlu0 %989
  %992 = vset.pattern.permute.xlu0 1
  %993 = vperm.xlu0 %992, %v433
  %v994 = vpop.permute.xlu0 %993
  %996 = vset.pattern.permute.xlu0 1
  %997 = vperm.xlu0 %996, %v438
  %v998 = vpop.permute.xlu0 %997
  %1000 = vset.pattern.permute.xlu0 1
  %1001 = vperm.xlu0 %1000, %v443
  %v1002 = vpop.permute.xlu0 %1001
  %1004 = vset.pattern.permute.xlu0 1
  %1005 = vperm.xlu0 %1004, %v448
  %v1006 = vpop.permute.xlu0 %1005
  %1008 = vset.pattern.permute.xlu0 1
  %1009 = vperm.xlu0 %1008, %v453
  %v1010 = vpop.permute.xlu0 %1009
  %1012 = vset.pattern.permute.xlu0 1
  %1013 = vperm.xlu0 %1012, %v458
  %v1014 = vpop.permute.xlu0 %1013
  %1016 = vset.pattern.permute.xlu0 1
  %1017 = vperm.xlu0 %1016, %v463
  %v1018 = vpop.permute.xlu0 %1017
  %v1020 = vlaneseq
  %v1021 = vshrl.u32 %v1020, 7
  %v1022 = vsub.s32 1, %v1021
  %v1023 = vrot.slane %v315, %v1022
  %v1024 = vadd.f32 %v958, %v1023
  %v1025 = vadd.f32 %v962, %v1023
  %v1026 = vadd.f32 %v966, %v1023
  %v1027 = vadd.f32 %v970, %v1023
  %v1028 = vadd.f32 %v974, %v1023
  %v1029 = vadd.f32 %v978, %v1023
  %v1030 = vadd.f32 %v982, %v1023
  %v1031 = vadd.f32 %v986, %v1023
  %v1032 = vadd.f32 %v990, %v1023
  %v1033 = vadd.f32 %v994, %v1023
  %v1034 = vadd.f32 %v998, %v1023
  %v1035 = vadd.f32 %v1002, %v1023
  %v1036 = vadd.f32 %v1006, %v1023
  %v1037 = vadd.f32 %v1010, %v1023
  %v1038 = vadd.f32 %v1014, %v1023
  %v1039 = vadd.f32 %v1018, %v1023
  %v1040 = vmul.f32 %v1024, 0.2
  %v1041 = vmul.f32 %v1025, 0.2
  %v1042 = vmul.f32 %v1026, 0.2
  %v1043 = vmul.f32 %v1027, 0.2
  %v1044 = vmul.f32 %v1028, 0.2
  %v1045 = vmul.f32 %v1029, 0.2
  %v1046 = vmul.f32 %v1030, 0.2
  %v1047 = vmul.f32 %v1031, 0.2
  %v1048 = vmul.f32 %v1032, 0.2
  %v1049 = vmul.f32 %v1033, 0.2
  %v1050 = vmul.f32 %v1034, 0.2
  %v1051 = vmul.f32 %v1035, 0.2
  %v1052 = vmul.f32 %v1036, 0.2
  %v1053 = vmul.f32 %v1037, 0.2
  %v1054 = vmul.f32 %v1038, 0.2
  %v1055 = vmul.f32 %v1039, 0.2
  %v1056 = vmax.f32 %v1024, %v1040
  %v1057 = vmax.f32 %v1025, %v1041
  %v1058 = vmax.f32 %v1026, %v1042
  %v1059 = vmax.f32 %v1027, %v1043
  %v1060 = vmax.f32 %v1028, %v1044
  %v1061 = vmax.f32 %v1029, %v1045
  %v1062 = vmax.f32 %v1030, %v1046
  %v1063 = vmax.f32 %v1031, %v1047
  %v1064 = vmax.f32 %v1032, %v1048
  %v1065 = vmax.f32 %v1033, %v1049
  %v1066 = vmax.f32 %v1034, %v1050
  %v1067 = vmax.f32 %v1035, %v1051
  %v1068 = vmax.f32 %v1036, %v1052
  %v1069 = vmax.f32 %v1037, %v1053
  %v1070 = vmax.f32 %v1038, %v1054
  %v1071 = vmax.f32 %v1039, %v1055
  %v1072 = vadd.f32 %v1056, %v18
  %v1073 = vadd.f32 %v1057, %v19
  %v1074 = vadd.f32 %v1058, %v20
  %v1075 = vadd.f32 %v1059, %v21
  %v1076 = vadd.f32 %v1060, %v22
  %v1077 = vadd.f32 %v1061, %v23
  %v1078 = vadd.f32 %v1062, %v24
  %v1079 = vadd.f32 %v1063, %v25
  %v1080 = vadd.f32 %v1064, %v26
  %v1081 = vadd.f32 %v1065, %v27
  %v1082 = vadd.f32 %v1066, %v28
  %v1083 = vadd.f32 %v1067, %v29
  %v1084 = vadd.f32 %v1068, %v30
  %v1085 = vadd.f32 %v1069, %v31
  %v1086 = vadd.f32 %v1070, %v32
  %v1087 = vadd.f32 %v1071, %v33
  %1088 = vmax.xlane.f32.xlu0 %v1072
  %v1089 = vpop.xlane.xlu0 %1088
  %1090 = vmax.xlane.f32.xlu0 %v1073
  %v1091 = vpop.xlane.xlu0 %1090
  %1092 = vmax.xlane.f32.xlu0 %v1074
  %v1093 = vpop.xlane.xlu0 %1092
  %1094 = vmax.xlane.f32.xlu0 %v1075
  %v1095 = vpop.xlane.xlu0 %1094
  %1096 = vmax.xlane.f32.xlu0 %v1076
  %v1097 = vpop.xlane.xlu0 %1096
  %1098 = vmax.xlane.f32.xlu0 %v1077
  %v1099 = vpop.xlane.xlu0 %1098
  %1100 = vmax.xlane.f32.xlu0 %v1078
  %v1101 = vpop.xlane.xlu0 %1100
  %1102 = vmax.xlane.f32.xlu0 %v1079
  %v1103 = vpop.xlane.xlu0 %1102
  %1104 = vmax.xlane.f32.xlu0 %v1080
  %v1105 = vpop.xlane.xlu0 %1104
  %1106 = vmax.xlane.f32.xlu0 %v1081
  %v1107 = vpop.xlane.xlu0 %1106
  %1108 = vmax.xlane.f32.xlu0 %v1082
  %v1109 = vpop.xlane.xlu0 %1108
  %1110 = vmax.xlane.f32.xlu0 %v1083
  %v1111 = vpop.xlane.xlu0 %1110
  %1112 = vmax.xlane.f32.xlu0 %v1084
  %v1113 = vpop.xlane.xlu0 %1112
  %1114 = vmax.xlane.f32.xlu0 %v1085
  %v1115 = vpop.xlane.xlu0 %1114
  %1116 = vmax.xlane.f32.xlu0 %v1086
  %v1117 = vpop.xlane.xlu0 %1116
  %1118 = vmax.xlane.f32.xlu0 %v1087
  %v1119 = vpop.xlane.xlu0 %1118
  %v1120 = vsub.f32 %v1072, %v1089
  %v1121 = vsub.f32 %v1073, %v1091
  %v1122 = vsub.f32 %v1074, %v1093
  %v1123 = vsub.f32 %v1075, %v1095
  %v1124 = vsub.f32 %v1076, %v1097
  %v1125 = vsub.f32 %v1077, %v1099
  %v1126 = vsub.f32 %v1078, %v1101
  %v1127 = vsub.f32 %v1079, %v1103
  %v1128 = vsub.f32 %v1080, %v1105
  %v1129 = vsub.f32 %v1081, %v1107
  %v1130 = vsub.f32 %v1082, %v1109
  %v1131 = vsub.f32 %v1083, %v1111
  %v1132 = vsub.f32 %v1084, %v1113
  %v1133 = vsub.f32 %v1085, %v1115
  %v1134 = vsub.f32 %v1086, %v1117
  %v1135 = vsub.f32 %v1087, %v1119
  %v1136 = vmul.f32 %v1120, 1.442695
  %v1137 = vpow.pop %v1136
  %v1138 = vmul.f32 %v1121, 1.442695
  %v1139 = vpow.pop %v1138
  %v1140 = vmul.f32 %v1122, 1.442695
  %v1141 = vpow.pop %v1140
  %v1142 = vmul.f32 %v1123, 1.442695
  %v1143 = vpow.pop %v1142
  %v1144 = vmul.f32 %v1124, 1.442695
  %v1145 = vpow.pop %v1144
  %v1146 = vmul.f32 %v1125, 1.442695
  %v1147 = vpow.pop %v1146
  %v1148 = vmul.f32 %v1126, 1.442695
  %v1149 = vpow.pop %v1148
  %v1150 = vmul.f32 %v1127, 1.442695
  %v1151 = vpow.pop %v1150
  %v1152 = vmul.f32 %v1128, 1.442695
  %v1153 = vpow.pop %v1152
  %v1154 = vmul.f32 %v1129, 1.442695
  %v1155 = vpow.pop %v1154
  %v1156 = vmul.f32 %v1130, 1.442695
  %v1157 = vpow.pop %v1156
  %v1158 = vmul.f32 %v1131, 1.442695
  %v1159 = vpow.pop %v1158
  %v1160 = vmul.f32 %v1132, 1.442695
  %v1161 = vpow.pop %v1160
  %v1162 = vmul.f32 %v1133, 1.442695
  %v1163 = vpow.pop %v1162
  %v1164 = vmul.f32 %v1134, 1.442695
  %v1165 = vpow.pop %v1164
  %v1166 = vmul.f32 %v1135, 1.442695
  %v1167 = vpow.pop %v1166
  %v1168 = vlaneseq
  %v1169 = vshrl.u32 %v1168, 7
  %v1170 = vsub.s32 1, %v1169
  %v1171 = vrot.slane %v34, %v1170
  %v1172 = vmul.f32 %v132, %v1171
  %v1173 = vmul.f32 %v135, %v1171
  %v1174 = vmul.f32 %v140, %v1171
  %v1175 = vmul.f32 %v143, %v1171
  %v1176 = vmul.f32 %v148, %v1171
  %v1177 = vmul.f32 %v151, %v1171
  %v1178 = vmul.f32 %v156, %v1171
  %v1179 = vmul.f32 %v159, %v1171
  %v1180 = vmul.f32 %v164, %v1171
  %v1181 = vmul.f32 %v167, %v1171
  %v1182 = vmul.f32 %v172, %v1171
  %v1183 = vmul.f32 %v175, %v1171
  %v1184 = vmul.f32 %v180, %v1171
  %v1185 = vmul.f32 %v183, %v1171
  %v1186 = vmul.f32 %v188, %v1171
  %v1187 = vmul.f32 %v191, %v1171
  %v1188 = vpack.c.bf16 %v1173, %v1172
  %v1189 = vpack.c.bf16 %v1175, %v1174
  %v1190 = vpack.c.bf16 %v1177, %v1176
  %v1191 = vpack.c.bf16 %v1179, %v1178
  %v1192 = vpack.c.bf16 %v1181, %v1180
  %v1193 = vpack.c.bf16 %v1183, %v1182
  %v1194 = vpack.c.bf16 %v1185, %v1184
  %v1195 = vpack.c.bf16 %v1187, %v1186
  %v1196 = vpack.c.bf16 %v1139, %v1137
  %v1197 = vpack.c.bf16 %v1143, %v1141
  %v1198 = vpack.c.bf16 %v1147, %v1145
  %v1199 = vpack.c.bf16 %v1151, %v1149
  %v1200 = vpack.c.bf16 %v1155, %v1153
  %v1201 = vpack.c.bf16 %v1159, %v1157
  %v1202 = vpack.c.bf16 %v1163, %v1161
  %v1203 = vpack.c.bf16 %v1167, %v1165
  %1204 = vmatprep.subr.bf16.mxu0 0
  %1205 = vmatpush1.bf16.msra.mxu0 %v1188
  %1206 = vmatprep.subr.bf16.mxu0 0
  %1207 = vmatpush1.bf16.msra.mxu0 %v1189
  %1208 = vmatprep.subr.bf16.mxu0 0
  %1209 = vmatpush1.bf16.msra.mxu0 %v1190
  %1210 = vmatprep.subr.bf16.mxu0 0
  %1211 = vmatpush1.bf16.msra.mxu0 %v1191
  %1212 = vmatprep.subr.bf16.mxu0 0
  %1213 = vmatpush1.bf16.msra.mxu0 %v1192
  %1214 = vmatprep.subr.bf16.mxu0 0
  %1215 = vmatpush1.bf16.msra.mxu0 %v1193
  %1216 = vmatprep.subr.bf16.mxu0 0
  %1217 = vmatpush1.bf16.msra.mxu0 %v1194
  %1218 = vmatprep.subr.bf16.mxu0 0
  %1219 = vmatpush1.bf16.msra.mxu0 %v1195
  %1220 = vmatprep.subr.bf16.mxu0 0
  %1221 = vmatpush1.bf16.msra.mxu0 0
  %1222 = vmatprep.subr.bf16.mxu0 0
  %1223 = vmatpush1.bf16.msra.mxu0 0
  %1224 = vmatprep.subr.bf16.mxu0 0
  %1225 = vmatpush1.bf16.msra.mxu0 0
  %1226 = vmatprep.subr.bf16.mxu0 0
  %1227 = vmatpush1.bf16.msra.mxu0 0
  %1228 = vmatprep.subr.bf16.mxu0 0
  %1229 = vmatpush1.bf16.msra.mxu0 0
  %1230 = vmatprep.subr.bf16.mxu0 0
  %1231 = vmatpush1.bf16.msra.mxu0 0
  %1232 = vmatprep.subr.bf16.mxu0 0
  %1233 = vmatpush1.bf16.msra.mxu0 0
  %1234 = vmatprep.subr.bf16.mxu0 0
  %1235 = vmatpush1.bf16.msra.mxu0 0
  %1236 = vmatprep.mubr.bf16.mxu0 0
  %1237 = vmatmul.mubr.bf16.gmra.mrb[0].mxu0 %v1196
  %v1238 = vpop.f32.mrb[0].mxu0
  %v1239 = vadd.f32 0.0, %v1238
  %v1240 = vpop.f32.mrb[0].mxu0
  %v1241 = vpop.f32.mrb[0].mxu0
  %v1242 = vadd.f32 0.0, %v1241
  %v1243 = vpop.f32.mrb[0].mxu0
  %1244 = vmatprep.mubr.bf16.mxu0 0
  %1245 = vmatmul.mubr.bf16.gmra.mrb[0].mxu0 %v1197
  %v1246 = vpop.f32.mrb[0].mxu0
  %v1247 = vadd.f32 0.0, %v1246
  %v1248 = vpop.f32.mrb[0].mxu0
  %v1249 = vpop.f32.mrb[0].mxu0
  %v1250 = vadd.f32 0.0, %v1249
  %v1251 = vpop.f32.mrb[0].mxu0
  %1252 = vmatprep.mubr.bf16.mxu0 0
  %1253 = vmatmul.mubr.bf16.gmra.mrb[0].mxu0 %v1198
  %v1254 = vpop.f32.mrb[0].mxu0
  %v1255 = vadd.f32 0.0, %v1254
  %v1256 = vpop.f32.mrb[0].mxu0
  %v1257 = vpop.f32.mrb[0].mxu0
  %v1258 = vadd.f32 0.0, %v1257
  %v1259 = vpop.f32.mrb[0].mxu0
  %1260 = vmatprep.mubr.bf16.mxu0 0
  %1261 = vmatmul.mubr.bf16.gmra.mrb[0].mxu0 %v1199
  %v1262 = vpop.f32.mrb[0].mxu0
  %v1263 = vadd.f32 0.0, %v1262
  %v1264 = vpop.f32.mrb[0].mxu0
  %v1265 = vpop.f32.mrb[0].mxu0
  %v1266 = vadd.f32 0.0, %v1265
  %v1267 = vpop.f32.mrb[0].mxu0
  %1268 = vmatprep.mubr.bf16.mxu0 0
  %1269 = vmatmul.mubr.bf16.gmra.mrb[0].mxu0 %v1200
  %v1270 = vpop.f32.mrb[0].mxu0
  %v1271 = vadd.f32 0.0, %v1270
  %v1272 = vpop.f32.mrb[0].mxu0
  %v1273 = vpop.f32.mrb[0].mxu0
  %v1274 = vadd.f32 0.0, %v1273
  %v1275 = vpop.f32.mrb[0].mxu0
  %1276 = vmatprep.mubr.bf16.mxu0 0
  %1277 = vmatmul.mubr.bf16.gmra.mrb[0].mxu0 %v1201
  %v1278 = vpop.f32.mrb[0].mxu0
  %v1279 = vadd.f32 0.0, %v1278
  %v1280 = vpop.f32.mrb[0].mxu0
  %v1281 = vpop.f32.mrb[0].mxu0
  %v1282 = vadd.f32 0.0, %v1281
  %v1283 = vpop.f32.mrb[0].mxu0
  %1284 = vmatprep.mubr.bf16.mxu0 0
  %1285 = vmatmul.mubr.bf16.gmra.mrb[0].mxu0 %v1202
  %v1286 = vpop.f32.mrb[0].mxu0
  %v1287 = vadd.f32 0.0, %v1286
  %v1288 = vpop.f32.mrb[0].mxu0
  %v1289 = vpop.f32.mrb[0].mxu0
  %v1290 = vadd.f32 0.0, %v1289
  %v1291 = vpop.f32.mrb[0].mxu0
  %1292 = vmatprep.mubr.bf16.mxu0 0
  %1293 = vmatmul.mubr.bf16.gmra.mrb[0].mxu0 %v1203
  %v1294 = vpop.f32.mrb[0].mxu0
  %v1295 = vadd.f32 0.0, %v1294
  %v1296 = vpop.f32.mrb[0].mxu0
  %v1297 = vpop.f32.mrb[0].mxu0
  %v1298 = vadd.f32 0.0, %v1297
  %v1299 = vpop.f32.mrb[0].mxu0
  %1300 = vdwg.mxu0
  %v1301 = vrcp.pop %v1239
  %v1302 = vrcp.pop %v1242
  %v1303 = vrcp.pop %v1247
  %v1304 = vrcp.pop %v1250
  %v1305 = vrcp.pop %v1255
  %v1306 = vrcp.pop %v1258
  %v1307 = vrcp.pop %v1263
  %v1308 = vrcp.pop %v1266
  %v1309 = vrcp.pop %v1271
  %v1310 = vrcp.pop %v1274
  %v1311 = vrcp.pop %v1279
  %v1312 = vrcp.pop %v1282
  %v1313 = vrcp.pop %v1287
  %v1314 = vrcp.pop %v1290
  %v1315 = vrcp.pop %v1295
  %v1316 = vrcp.pop %v1298
  %1318 = vset.pattern.permute.xlu0 33
  %1319 = vperm.xlu0 %1318, %v1301
  %v1320 = vpop.permute.xlu0 %1319
  %1323 = vset.pattern.permute.xlu0 33
  %1324 = vperm.xlu0 %1323, %v1302
  %v1325 = vpop.permute.xlu0 %1324
  %1328 = vset.pattern.permute.xlu0 33
  %1329 = vperm.xlu0 %1328, %v1303
  %v1330 = vpop.permute.xlu0 %1329
  %1333 = vset.pattern.permute.xlu0 33
  %1334 = vperm.xlu0 %1333, %v1304
  %v1335 = vpop.permute.xlu0 %1334
  %1338 = vset.pattern.permute.xlu0 33
  %1339 = vperm.xlu0 %1338, %v1305
  %v1340 = vpop.permute.xlu0 %1339
  %1343 = vset.pattern.permute.xlu0 33
  %1344 = vperm.xlu0 %1343, %v1306
  %v1345 = vpop.permute.xlu0 %1344
  %1348 = vset.pattern.permute.xlu0 33
  %1349 = vperm.xlu0 %1348, %v1307
  %v1350 = vpop.permute.xlu0 %1349
  %1353 = vset.pattern.permute.xlu0 33
  %1354 = vperm.xlu0 %1353, %v1308
  %v1355 = vpop.permute.xlu0 %1354
  %1358 = vset.pattern.permute.xlu0 33
  %1359 = vperm.xlu0 %1358, %v1309
  %v1360 = vpop.permute.xlu0 %1359
  %1363 = vset.pattern.permute.xlu0 33
  %1364 = vperm.xlu0 %1363, %v1310
  %v1365 = vpop.permute.xlu0 %1364
  %1368 = vset.pattern.permute.xlu0 33
  %1369 = vperm.xlu0 %1368, %v1311
  %v1370 = vpop.permute.xlu0 %1369
  %1373 = vset.pattern.permute.xlu0 33
  %1374 = vperm.xlu0 %1373, %v1312
  %v1375 = vpop.permute.xlu0 %1374
  %1378 = vset.pattern.permute.xlu0 33
  %1379 = vperm.xlu0 %1378, %v1313
  %v1380 = vpop.permute.xlu0 %1379
  %1383 = vset.pattern.permute.xlu0 33
  %1384 = vperm.xlu0 %1383, %v1314
  %v1385 = vpop.permute.xlu0 %1384
  %1388 = vset.pattern.permute.xlu0 33
  %1389 = vperm.xlu0 %1388, %v1315
  %v1390 = vpop.permute.xlu0 %1389
  %1393 = vset.pattern.permute.xlu0 33
  %1394 = vperm.xlu0 %1393, %v1316
  %v1395 = vpop.permute.xlu0 %1394
  %v1397 = vmul.f32 %v1239, %v1320
  %v1398 = vmul.f32 %v1242, %v1325
  %v1399 = vmul.f32 %v1247, %v1330
  %v1400 = vmul.f32 %v1250, %v1335
  %v1401 = vmul.f32 %v1255, %v1340
  %v1402 = vmul.f32 %v1258, %v1345
  %v1403 = vmul.f32 %v1263, %v1350
  %v1404 = vmul.f32 %v1266, %v1355
  %v1405 = vmul.f32 %v1271, %v1360
  %v1406 = vmul.f32 %v1274, %v1365
  %v1407 = vmul.f32 %v1279, %v1370
  %v1408 = vmul.f32 %v1282, %v1375
  %v1409 = vmul.f32 %v1287, %v1380
  %v1410 = vmul.f32 %v1290, %v1385
  %v1411 = vmul.f32 %v1295, %v1390
  %v1412 = vmul.f32 %v1298, %v1395
  %v1413 = vld [vmem:[#allocation2] sm:$0xff]
  %v1414 = vld [vmem:[#allocation2 + $0x8] sm:$0xff]
  %v1415 = vld [vmem:[#allocation2 + $0x10] sm:$0xff]
  %v1416 = vld [vmem:[#allocation2 + $0x18] sm:$0xff]
  %v1417 = vld [vmem:[#allocation2 + $0x20] sm:$0xff]
  %v1418 = vld [vmem:[#allocation2 + $0x28] sm:$0xff]
  %v1419 = vld [vmem:[#allocation2 + $0x30] sm:$0xff]
  %v1420 = vld [vmem:[#allocation2 + $0x38] sm:$0xff]
  %v1421 = vld [vmem:[#allocation2 + $0x40] sm:$0xff]
  %v1422 = vld [vmem:[#allocation2 + $0x48] sm:$0xff]
  %v1423 = vld [vmem:[#allocation2 + $0x50] sm:$0xff]
  %v1424 = vld [vmem:[#allocation2 + $0x58] sm:$0xff]
  %v1425 = vld [vmem:[#allocation2 + $0x60] sm:$0xff]
  %v1426 = vld [vmem:[#allocation2 + $0x68] sm:$0xff]
  %v1427 = vld [vmem:[#allocation2 + $0x70] sm:$0xff]
  %v1428 = vld [vmem:[#allocation2 + $0x78] sm:$0xff]
  %v1429 = vadd.f32 %v1413, %v1397
  %v1430 = vadd.f32 %v1414, %v1398
  %v1431 = vadd.f32 %v1415, %v1399
  %v1432 = vadd.f32 %v1416, %v1400
  %v1433 = vadd.f32 %v1417, %v1401
  %v1434 = vadd.f32 %v1418, %v1402
  %v1435 = vadd.f32 %v1419, %v1403
  %v1436 = vadd.f32 %v1420, %v1404
  %v1437 = vadd.f32 %v1421, %v1405
  %v1438 = vadd.f32 %v1422, %v1406
  %v1439 = vadd.f32 %v1423, %v1407
  %v1440 = vadd.f32 %v1424, %v1408
  %v1441 = vadd.f32 %v1425, %v1409
  %v1442 = vadd.f32 %v1426, %v1410
  %v1443 = vadd.f32 %v1427, %v1411
  %v1444 = vadd.f32 %v1428, %v1412
  %1445 = vst.msk [vmem:[#allocation2] sm:$0xff] %vm939, %v1429
  %1446 = vst.msk [vmem:[#allocation2 + $0x8] sm:$0xff] %vm939, %v1430
  %1447 = vst.msk [vmem:[#allocation2 + $0x10] sm:$0xff] %vm939, %v1431
  %1448 = vst.msk [vmem:[#allocation2 + $0x18] sm:$0xff] %vm939, %v1432
  %1449 = vst.msk [vmem:[#allocation2 + $0x20] sm:$0xff] %vm939, %v1433
  %1450 = vst.msk [vmem:[#allocation2 + $0x28] sm:$0xff] %vm939, %v1434
  %1451 = vst.msk [vmem:[#allocation2 + $0x30] sm:$0xff] %vm939, %v1435
  %1452 = vst.msk [vmem:[#allocation2 + $0x38] sm:$0xff] %vm939, %v1436
  %1453 = vst.msk [vmem:[#allocation2 + $0x40] sm:$0xff] %vm939, %v1437
  %1454 = vst.msk [vmem:[#allocation2 + $0x48] sm:$0xff] %vm939, %v1438
  %1455 = vst.msk [vmem:[#allocation2 + $0x50] sm:$0xff] %vm939, %v1439
  %1456 = vst.msk [vmem:[#allocation2 + $0x58] sm:$0xff] %vm939, %v1440
  %1457 = vst.msk [vmem:[#allocation2 + $0x60] sm:$0xff] %vm939, %v1441
  %1458 = vst.msk [vmem:[#allocation2 + $0x68] sm:$0xff] %vm939, %v1442
  %1459 = vst.msk [vmem:[#allocation2 + $0x70] sm:$0xff] %vm939, %v1443
  %1460 = vst.msk [vmem:[#allocation2 + $0x78] sm:$0xff] %vm939, %v1444
  %1461 = vset.pattern.permute.xlu0 2
  %1462 = vperm.xlu0 %1461, %v388
  %v1463 = vpop.permute.xlu0 %1462
  %1465 = vset.pattern.permute.xlu0 2
  %1466 = vperm.xlu0 %1465, %v393
  %v1467 = vpop.permute.xlu0 %1466
  %1469 = vset.pattern.permute.xlu0 2
  %1470 = vperm.xlu0 %1469, %v398
  %v1471 = vpop.permute.xlu0 %1470
  %1473 = vset.pattern.permute.xlu0 2
  %1474 = vperm.xlu0 %1473, %v403
  %v1475 = vpop.permute.xlu0 %1474
  %1477 = vset.pattern.permute.xlu0 2
  %1478 = vperm.xlu0 %1477, %v408
  %v1479 = vpop.permute.xlu0 %1478
  %1481 = vset.pattern.permute.xlu0 2
  %1482 = vperm.xlu0 %1481, %v413
  %v1483 = vpop.permute.xlu0 %1482
  %1485 = vset.pattern.permute.xlu0 2
  %1486 = vperm.xlu0 %1485, %v418
  %v1487 = vpop.permute.xlu0 %1486
  %1489 = vset.pattern.permute.xlu0 2
  %1490 = vperm.xlu0 %1489, %v423
  %v1491 = vpop.permute.xlu0 %1490
  %1493 = vset.pattern.permute.xlu0 2
  %1494 = vperm.xlu0 %1493, %v428
  %v1495 = vpop.permute.xlu0 %1494
  %1497 = vset.pattern.permute.xlu0 2
  %1498 = vperm.xlu0 %1497, %v433
  %v1499 = vpop.permute.xlu0 %1498
  %1501 = vset.pattern.permute.xlu0 2
  %1502 = vperm.xlu0 %1501, %v438
  %v1503 = vpop.permute.xlu0 %1502
  %1505 = vset.pattern.permute.xlu0 2
  %1506 = vperm.xlu0 %1505, %v443
  %v1507 = vpop.permute.xlu0 %1506
  %1509 = vset.pattern.permute.xlu0 2
  %1510 = vperm.xlu0 %1509, %v448
  %v1511 = vpop.permute.xlu0 %1510
  %1513 = vset.pattern.permute.xlu0 2
  %1514 = vperm.xlu0 %1513, %v453
  %v1515 = vpop.permute.xlu0 %1514
  %1517 = vset.pattern.permute.xlu0 2
  %1518 = vperm.xlu0 %1517, %v458
  %v1519 = vpop.permute.xlu0 %1518
  %1521 = vset.pattern.permute.xlu0 2
  %1522 = vperm.xlu0 %1521, %v463
  %v1523 = vpop.permute.xlu0 %1522
  %v1525 = vlaneseq
  %v1526 = vshrl.u32 %v1525, 7
  %v1527 = vsub.s32 2, %v1526
  %v1528 = vrot.slane %v315, %v1527
  %v1529 = vadd.f32 %v1463, %v1528
  %v1530 = vadd.f32 %v1467, %v1528
  %v1531 = vadd.f32 %v1471, %v1528
  %v1532 = vadd.f32 %v1475, %v1528
  %v1533 = vadd.f32 %v1479, %v1528
  %v1534 = vadd.f32 %v1483, %v1528
  %v1535 = vadd.f32 %v1487, %v1528
  %v1536 = vadd.f32 %v1491, %v1528
  %v1537 = vadd.f32 %v1495, %v1528
  %v1538 = vadd.f32 %v1499, %v1528
  %v1539 = vadd.f32 %v1503, %v1528
  %v1540 = vadd.f32 %v1507, %v1528
  %v1541 = vadd.f32 %v1511, %v1528
  %v1542 = vadd.f32 %v1515, %v1528
  %v1543 = vadd.f32 %v1519, %v1528
  %v1544 = vadd.f32 %v1523, %v1528
  %v1545 = vmul.f32 %v1529, 0.2
  %v1546 = vmul.f32 %v1530, 0.2
  %v1547 = vmul.f32 %v1531, 0.2
  %v1548 = vmul.f32 %v1532, 0.2
  %v1549 = vmul.f32 %v1533, 0.2
  %v1550 = vmul.f32 %v1534, 0.2
  %v1551 = vmul.f32 %v1535, 0.2
  %v1552 = vmul.f32 %v1536, 0.2
  %v1553 = vmul.f32 %v1537, 0.2
  %v1554 = vmul.f32 %v1538, 0.2
  %v1555 = vmul.f32 %v1539, 0.2
  %v1556 = vmul.f32 %v1540, 0.2
  %v1557 = vmul.f32 %v1541, 0.2
  %v1558 = vmul.f32 %v1542, 0.2
  %v1559 = vmul.f32 %v1543, 0.2
  %v1560 = vmul.f32 %v1544, 0.2
  %v1561 = vmax.f32 %v1529, %v1545
  %v1562 = vmax.f32 %v1530, %v1546
  %v1563 = vmax.f32 %v1531, %v1547
  %v1564 = vmax.f32 %v1532, %v1548
  %v1565 = vmax.f32 %v1533, %v1549
  %v1566 = vmax.f32 %v1534, %v1550
  %v1567 = vmax.f32 %v1535, %v1551
  %v1568 = vmax.f32 %v1536, %v1552
  %v1569 = vmax.f32 %v1537, %v1553
  %v1570 = vmax.f32 %v1538, %v1554
  %v1571 = vmax.f32 %v1539, %v1555
  %v1572 = vmax.f32 %v1540, %v1556
  %v1573 = vmax.f32 %v1541, %v1557
  %v1574 = vmax.f32 %v1542, %v1558
  %v1575 = vmax.f32 %v1543, %v1559
  %v1576 = vmax.f32 %v1544, %v1560
  %v1577 = vadd.f32 %v1561, %v18
  %v1578 = vadd.f32 %v1562, %v19
  %v1579 = vadd.f32 %v1563, %v20
  %v1580 = vadd.f32 %v1564, %v21
  %v1581 = vadd.f32 %v1565, %v22
  %v1582 = vadd.f32 %v1566, %v23
  %v1583 = vadd.f32 %v1567, %v24
  %v1584 = vadd.f32 %v1568, %v25
  %v1585 = vadd.f32 %v1569, %v26
  %v1586 = vadd.f32 %v1570, %v27
  %v1587 = vadd.f32 %v1571, %v28
  %v1588 = vadd.f32 %v1572, %v29
  %v1589 = vadd.f32 %v1573, %v30
  %v1590 = vadd.f32 %v1574, %v31
  %v1591 = vadd.f32 %v1575, %v32
  %v1592 = vadd.f32 %v1576, %v33
  %1593 = vmax.xlane.f32.xlu0 %v1577
  %v1594 = vpop.xlane.xlu0 %1593
  %1595 = vmax.xlane.f32.xlu0 %v1578
  %v1596 = vpop.xlane.xlu0 %1595
  %1597 = vmax.xlane.f32.xlu0 %v1579
  %v1598 = vpop.xlane.xlu0 %1597
  %1599 = vmax.xlane.f32.xlu0 %v1580
  %v1600 = vpop.xlane.xlu0 %1599
  %1601 = vmax.xlane.f32.xlu0 %v1581
  %v1602 = vpop.xlane.xlu0 %1601
  %1603 = vmax.xlane.f32.xlu0 %v1582
  %v1604 = vpop.xlane.xlu0 %1603
  %1605 = vmax.xlane.f32.xlu0 %v1583
  %v1606 = vpop.xlane.xlu0 %1605
  %1607 = vmax.xlane.f32.xlu0 %v1584
  %v1608 = vpop.xlane.xlu0 %1607
  %1609 = vmax.xlane.f32.xlu0 %v1585
  %v1610 = vpop.xlane.xlu0 %1609
  %1611 = vmax.xlane.f32.xlu0 %v1586
  %v1612 = vpop.xlane.xlu0 %1611
  %1613 = vmax.xlane.f32.xlu0 %v1587
  %v1614 = vpop.xlane.xlu0 %1613
  %1615 = vmax.xlane.f32.xlu0 %v1588
  %v1616 = vpop.xlane.xlu0 %1615
  %1617 = vmax.xlane.f32.xlu0 %v1589
  %v1618 = vpop.xlane.xlu0 %1617
  %1619 = vmax.xlane.f32.xlu0 %v1590
  %v1620 = vpop.xlane.xlu0 %1619
  %1621 = vmax.xlane.f32.xlu0 %v1591
  %v1622 = vpop.xlane.xlu0 %1621
  %1623 = vmax.xlane.f32.xlu0 %v1592
  %v1624 = vpop.xlane.xlu0 %1623
  %v1625 = vsub.f32 %v1577, %v1594
  %v1626 = vsub.f32 %v1578, %v1596
  %v1627 = vsub.f32 %v1579, %v1598
  %v1628 = vsub.f32 %v1580, %v1600
  %v1629 = vsub.f32 %v1581, %v1602
  %v1630 = vsub.f32 %v1582, %v1604
  %v1631 = vsub.f32 %v1583, %v1606
  %v1632 = vsub.f32 %v1584, %v1608
  %v1633 = vsub.f32 %v1585, %v1610
  %v1634 = vsub.f32 %v1586, %v1612
  %v1635 = vsub.f32 %v1587, %v1614
  %v1636 = vsub.f32 %v1588, %v1616
  %v1637 = vsub.f32 %v1589, %v1618
  %v1638 = vsub.f32 %v1590, %v1620
  %v1639 = vsub.f32 %v1591, %v1622
  %v1640 = vsub.f32 %v1592, %v1624
  %v1641 = vmul.f32 %v1625, 1.442695
  %v1642 = vpow.pop %v1641
  %v1643 = vmul.f32 %v1626, 1.442695
  %v1644 = vpow.pop %v1643
  %v1645 = vmul.f32 %v1627, 1.442695
  %v1646 = vpow.pop %v1645
  %v1647 = vmul.f32 %v1628, 1.442695
  %v1648 = vpow.pop %v1647
  %v1649 = vmul.f32 %v1629, 1.442695
  %v1650 = vpow.pop %v1649
  %v1651 = vmul.f32 %v1630, 1.442695
  %v1652 = vpow.pop %v1651
  %v1653 = vmul.f32 %v1631, 1.442695
  %v1654 = vpow.pop %v1653
  %v1655 = vmul.f32 %v1632, 1.442695
  %v1656 = vpow.pop %v1655
  %v1657 = vmul.f32 %v1633, 1.442695
  %v1658 = vpow.pop %v1657
  %v1659 = vmul.f32 %v1634, 1.442695
  %v1660 = vpow.pop %v1659
  %v1661 = vmul.f32 %v1635, 1.442695
  %v1662 = vpow.pop %v1661
  %v1663 = vmul.f32 %v1636, 1.442695
  %v1664 = vpow.pop %v1663
  %v1665 = vmul.f32 %v1637, 1.442695
  %v1666 = vpow.pop %v1665
  %v1667 = vmul.f32 %v1638, 1.442695
  %v1668 = vpow.pop %v1667
  %v1669 = vmul.f32 %v1639, 1.442695
  %v1670 = vpow.pop %v1669
  %v1671 = vmul.f32 %v1640, 1.442695
  %v1672 = vpow.pop %v1671
  %v1673 = vlaneseq
  %v1674 = vshrl.u32 %v1673, 7
  %v1675 = vsub.s32 2, %v1674
  %v1676 = vrot.slane %v34, %v1675
  %v1677 = vmul.f32 %v132, %v1676
  %v1678 = vmul.f32 %v135, %v1676
  %v1679 = vmul.f32 %v140, %v1676
  %v1680 = vmul.f32 %v143, %v1676
  %v1681 = vmul.f32 %v148, %v1676
  %v1682 = vmul.f32 %v151, %v1676
  %v1683 = vmul.f32 %v156, %v1676
  %v1684 = vmul.f32 %v159, %v1676
  %v1685 = vmul.f32 %v164, %v1676
  %v1686 = vmul.f32 %v167, %v1676
  %v1687 = vmul.f32 %v172, %v1676
  %v1688 = vmul.f32 %v175, %v1676
  %v1689 = vmul.f32 %v180, %v1676
  %v1690 = vmul.f32 %v183, %v1676
  %v1691 = vmul.f32 %v188, %v1676
  %v1692 = vmul.f32 %v191, %v1676
  %v1693 = vpack.c.bf16 %v1678, %v1677
  %v1694 = vpack.c.bf16 %v1680, %v1679
  %v1695 = vpack.c.bf16 %v1682, %v1681
  %v1696 = vpack.c.bf16 %v1684, %v1683
  %v1697 = vpack.c.bf16 %v1686, %v1685
  %v1698 = vpack.c.bf16 %v1688, %v1687
  %v1699 = vpack.c.bf16 %v1690, %v1689
  %v1700 = vpack.c.bf16 %v1692, %v1691
  %v1701 = vpack.c.bf16 %v1644, %v1642
  %v1702 = vpack.c.bf16 %v1648, %v1646
  %v1703 = vpack.c.bf16 %v1652, %v1650
  %v1704 = vpack.c.bf16 %v1656, %v1654
  %v1705 = vpack.c.bf16 %v1660, %v1658
  %v1706 = vpack.c.bf16 %v1664, %v1662
  %v1707 = vpack.c.bf16 %v1668, %v1666
  %v1708 = vpack.c.bf16 %v1672, %v1670
  %1709 = vmatprep.subr.bf16.mxu0 0
  %1710 = vmatpush1.bf16.msra.mxu0 %v1693
  %1711 = vmatprep.subr.bf16.mxu0 0
  %1712 = vmatpush1.bf16.msra.mxu0 %v1694
  %1713 = vmatprep.subr.bf16.mxu0 0
  %1714 = vmatpush1.bf16.msra.mxu0 %v1695
  %1715 = vmatprep.subr.bf16.mxu0 0
  %1716 = vmatpush1.bf16.msra.mxu0 %v1696
  %1717 = vmatprep.subr.bf16.mxu0 0
  %1718 = vmatpush1.bf16.msra.mxu0 %v1697
  %1719 = vmatprep.subr.bf16.mxu0 0
  %1720 = vmatpush1.bf16.msra.mxu0 %v1698
  %1721 = vmatprep.subr.bf16.mxu0 0
  %1722 = vmatpush1.bf16.msra.mxu0 %v1699
  %1723 = vmatprep.subr.bf16.mxu0 0
  %1724 = vmatpush1.bf16.msra.mxu0 %v1700
  %1725 = vmatprep.subr.bf16.mxu0 0
  %1726 = vmatpush1.bf16.msra.mxu0 0
  %1727 = vmatprep.subr.bf16.mxu0 0
  %1728 = vmatpush1.bf16.msra.mxu0 0
  %1729 = vmatprep.subr.bf16.mxu0 0
  %1730 = vmatpush1.bf16.msra.mxu0 0
  %1731 = vmatprep.subr.bf16.mxu0 0
  %1732 = vmatpush1.bf16.msra.mxu0 0
  %1733 = vmatprep.subr.bf16.mxu0 0
  %1734 = vmatpush1.bf16.msra.mxu0 0
  %1735 = vmatprep.subr.bf16.mxu0 0
  %1736 = vmatpush1.bf16.msra.mxu0 0
  %1737 = vmatprep.subr.bf16.mxu0 0
  %1738 = vmatpush1.bf16.msra.mxu0 0
  %1739 = vmatprep.subr.bf16.mxu0 0
  %1740 = vmatpush1.bf16.msra.mxu0 0
  %1741 = vmatprep.mubr.bf16.mxu0 0
  %1742 = vmatmul.mubr.bf16.gmra.mrb[0].mxu0 %v1701
  %v1743 = vpop.f32.mrb[0].mxu0
  %v1744 = vadd.f32 0.0, %v1743
  %v1745 = vpop.f32.mrb[0].mxu0
  %v1746 = vpop.f32.mrb[0].mxu0
  %v1747 = vadd.f32 0.0, %v1746
  %v1748 = vpop.f32.mrb[0].mxu0
  %1749 = vmatprep.mubr.bf16.mxu0 0
  %1750 = vmatmul.mubr.bf16.gmra.mrb[0].mxu0 %v1702
  %v1751 = vpop.f32.mrb[0].mxu0
  %v1752 = vadd.f32 0.0, %v1751
  %v1753 = vpop.f32.mrb[0].mxu0
  %v1754 = vpop.f32.mrb[0].mxu0
  %v1755 = vadd.f32 0.0, %v1754
  %v1756 = vpop.f32.mrb[0].mxu0
  %1757 = vmatprep.mubr.bf16.mxu0 0
  %1758 = vmatmul.mubr.bf16.gmra.mrb[0].mxu0 %v1703
  %v1759 = vpop.f32.mrb[0].mxu0
  %v1760 = vadd.f32 0.0, %v1759
  %v1761 = vpop.f32.mrb[0].mxu0
  %v1762 = vpop.f32.mrb[0].mxu0
  %v1763 = vadd.f32 0.0, %v1762
  %v1764 = vpop.f32.mrb[0].mxu0
  %1765 = vmatprep.mubr.bf16.mxu0 0
  %1766 = vmatmul.mubr.bf16.gmra.mrb[0].mxu0 %v1704
  %v1767 = vpop.f32.mrb[0].mxu0
  %v1768 = vadd.f32 0.0, %v1767
  %v1769 = vpop.f32.mrb[0].mxu0
  %v1770 = vpop.f32.mrb[0].mxu0
  %v1771 = vadd.f32 0.0, %v1770
  %v1772 = vpop.f32.mrb[0].mxu0
  %1773 = vmatprep.mubr.bf16.mxu0 0
  %1774 = vmatmul.mubr.bf16.gmra.mrb[0].mxu0 %v1705
  %v1775 = vpop.f32.mrb[0].mxu0
  %v1776 = vadd.f32 0.0, %v1775
  %v1777 = vpop.f32.mrb[0].mxu0
  %v1778 = vpop.f32.mrb[0].mxu0
  %v1779 = vadd.f32 0.0, %v1778
  %v1780 = vpop.f32.mrb[0].mxu0
  %1781 = vmatprep.mubr.bf16.mxu0 0
  %1782 = vmatmul.mubr.bf16.gmra.mrb[0].mxu0 %v1706
  %v1783 = vpop.f32.mrb[0].mxu0
  %v1784 = vadd.f32 0.0, %v1783
  %v1785 = vpop.f32.mrb[0].mxu0
  %v1786 = vpop.f32.mrb[0].mxu0
  %v1787 = vadd.f32 0.0, %v1786
  %v1788 = vpop.f32.mrb[0].mxu0
  %1789 = vmatprep.mubr.bf16.mxu0 0
  %1790 = vmatmul.mubr.bf16.gmra.mrb[0].mxu0 %v1707
  %v1791 = vpop.f32.mrb[0].mxu0
  %v1792 = vadd.f32 0.0, %v1791
  %v1793 = vpop.f32.mrb[0].mxu0
  %v1794 = vpop.f32.mrb[0].mxu0
  %v1795 = vadd.f32 0.0, %v1794
  %v1796 = vpop.f32.mrb[0].mxu0
  %1797 = vmatprep.mubr.bf16.mxu0 0
  %1798 = vmatmul.mubr.bf16.gmra.mrb[0].mxu0 %v1708
  %v1799 = vpop.f32.mrb[0].mxu0
  %v1800 = vadd.f32 0.0, %v1799
  %v1801 = vpop.f32.mrb[0].mxu0
  %v1802 = vpop.f32.mrb[0].mxu0
  %v1803 = vadd.f32 0.0, %v1802
  %v1804 = vpop.f32.mrb[0].mxu0
  %1805 = vdwg.mxu0
  %v1806 = vrcp.pop %v1744
  %v1807 = vrcp.pop %v1747
  %v1808 = vrcp.pop %v1752
  %v1809 = vrcp.pop %v1755
  %v1810 = vrcp.pop %v1760
  %v1811 = vrcp.pop %v1763
  %v1812 = vrcp.pop %v1768
  %v1813 = vrcp.pop %v1771
  %v1814 = vrcp.pop %v1776
  %v1815 = vrcp.pop %v1779
  %v1816 = vrcp.pop %v1784
  %v1817 = vrcp.pop %v1787
  %v1818 = vrcp.pop %v1792
  %v1819 = vrcp.pop %v1795
  %v1820 = vrcp.pop %v1800
  %v1821 = vrcp.pop %v1803
  %1823 = vset.pattern.permute.xlu0 34
  %1824 = vperm.xlu0 %1823, %v1806
  %v1825 = vpop.permute.xlu0 %1824
  %1828 = vset.pattern.permute.xlu0 34
  %1829 = vperm.xlu0 %1828, %v1807
  %v1830 = vpop.permute.xlu0 %1829
  %1833 = vset.pattern.permute.xlu0 34
  %1834 = vperm.xlu0 %1833, %v1808
  %v1835 = vpop.permute.xlu0 %1834
  %1838 = vset.pattern.permute.xlu0 34
  %1839 = vperm.xlu0 %1838, %v1809
  %v1840 = vpop.permute.xlu0 %1839
  %1843 = vset.pattern.permute.xlu0 34
  %1844 = vperm.xlu0 %1843, %v1810
  %v1845 = vpop.permute.xlu0 %1844
  %1848 = vset.pattern.permute.xlu0 34
  %1849 = vperm.xlu0 %1848, %v1811
  %v1850 = vpop.permute.xlu0 %1849
  %1853 = vset.pattern.permute.xlu0 34
  %1854 = vperm.xlu0 %1853, %v1812
  %v1855 = vpop.permute.xlu0 %1854
  %1858 = vset.pattern.permute.xlu0 34
  %1859 = vperm.xlu0 %1858, %v1813
  %v1860 = vpop.permute.xlu0 %1859
  %1863 = vset.pattern.permute.xlu0 34
  %1864 = vperm.xlu0 %1863, %v1814
  %v1865 = vpop.permute.xlu0 %1864
  %1868 = vset.pattern.permute.xlu0 34
  %1869 = vperm.xlu0 %1868, %v1815
  %v1870 = vpop.permute.xlu0 %1869
  %1873 = vset.pattern.permute.xlu0 34
  %1874 = vperm.xlu0 %1873, %v1816
  %v1875 = vpop.permute.xlu0 %1874
  %1878 = vset.pattern.permute.xlu0 34
  %1879 = vperm.xlu0 %1878, %v1817
  %v1880 = vpop.permute.xlu0 %1879
  %1883 = vset.pattern.permute.xlu0 34
  %1884 = vperm.xlu0 %1883, %v1818
  %v1885 = vpop.permute.xlu0 %1884
  %1888 = vset.pattern.permute.xlu0 34
  %1889 = vperm.xlu0 %1888, %v1819
  %v1890 = vpop.permute.xlu0 %1889
  %1893 = vset.pattern.permute.xlu0 34
  %1894 = vperm.xlu0 %1893, %v1820
  %v1895 = vpop.permute.xlu0 %1894
  %1898 = vset.pattern.permute.xlu0 34
  %1899 = vperm.xlu0 %1898, %v1821
  %v1900 = vpop.permute.xlu0 %1899
  %v1902 = vmul.f32 %v1744, %v1825
  %v1903 = vmul.f32 %v1747, %v1830
  %v1904 = vmul.f32 %v1752, %v1835
  %v1905 = vmul.f32 %v1755, %v1840
  %v1906 = vmul.f32 %v1760, %v1845
  %v1907 = vmul.f32 %v1763, %v1850
  %v1908 = vmul.f32 %v1768, %v1855
  %v1909 = vmul.f32 %v1771, %v1860
  %v1910 = vmul.f32 %v1776, %v1865
  %v1911 = vmul.f32 %v1779, %v1870
  %v1912 = vmul.f32 %v1784, %v1875
  %v1913 = vmul.f32 %v1787, %v1880
  %v1914 = vmul.f32 %v1792, %v1885
  %v1915 = vmul.f32 %v1795, %v1890
  %v1916 = vmul.f32 %v1800, %v1895
  %v1917 = vmul.f32 %v1803, %v1900
  %v1918 = vld [vmem:[#allocation2] sm:$0xff]
  %v1919 = vld [vmem:[#allocation2 + $0x8] sm:$0xff]
  %v1920 = vld [vmem:[#allocation2 + $0x10] sm:$0xff]
  %v1921 = vld [vmem:[#allocation2 + $0x18] sm:$0xff]
  %v1922 = vld [vmem:[#allocation2 + $0x20] sm:$0xff]
  %v1923 = vld [vmem:[#allocation2 + $0x28] sm:$0xff]
  %v1924 = vld [vmem:[#allocation2 + $0x30] sm:$0xff]
  %v1925 = vld [vmem:[#allocation2 + $0x38] sm:$0xff]
  %v1926 = vld [vmem:[#allocation2 + $0x40] sm:$0xff]
  %v1927 = vld [vmem:[#allocation2 + $0x48] sm:$0xff]
  %v1928 = vld [vmem:[#allocation2 + $0x50] sm:$0xff]
  %v1929 = vld [vmem:[#allocation2 + $0x58] sm:$0xff]
  %v1930 = vld [vmem:[#allocation2 + $0x60] sm:$0xff]
  %v1931 = vld [vmem:[#allocation2 + $0x68] sm:$0xff]
  %v1932 = vld [vmem:[#allocation2 + $0x70] sm:$0xff]
  %v1933 = vld [vmem:[#allocation2 + $0x78] sm:$0xff]
  %v1934 = vadd.f32 %v1918, %v1902
  %v1935 = vadd.f32 %v1919, %v1903
  %v1936 = vadd.f32 %v1920, %v1904
  %v1937 = vadd.f32 %v1921, %v1905
  %v1938 = vadd.f32 %v1922, %v1906
  %v1939 = vadd.f32 %v1923, %v1907
  %v1940 = vadd.f32 %v1924, %v1908
  %v1941 = vadd.f32 %v1925, %v1909
  %v1942 = vadd.f32 %v1926, %v1910
  %v1943 = vadd.f32 %v1927, %v1911
  %v1944 = vadd.f32 %v1928, %v1912
  %v1945 = vadd.f32 %v1929, %v1913
  %v1946 = vadd.f32 %v1930, %v1914
  %v1947 = vadd.f32 %v1931, %v1915
  %v1948 = vadd.f32 %v1932, %v1916
  %v1949 = vadd.f32 %v1933, %v1917
  %1950 = vst.msk [vmem:[#allocation2] sm:$0xff] %vm939, %v1934
  %1951 = vst.msk [vmem:[#allocation2 + $0x8] sm:$0xff] %vm939, %v1935
  %1952 = vst.msk [vmem:[#allocation2 + $0x10] sm:$0xff] %vm939, %v1936
  %1953 = vst.msk [vmem:[#allocation2 + $0x18] sm:$0xff] %vm939, %v1937
  %1954 = vst.msk [vmem:[#allocation2 + $0x20] sm:$0xff] %vm939, %v1938
  %1955 = vst.msk [vmem:[#allocation2 + $0x28] sm:$0xff] %vm939, %v1939
  %1956 = vst.msk [vmem:[#allocation2 + $0x30] sm:$0xff] %vm939, %v1940
  %1957 = vst.msk [vmem:[#allocation2 + $0x38] sm:$0xff] %vm939, %v1941
  %1958 = vst.msk [vmem:[#allocation2 + $0x40] sm:$0xff] %vm939, %v1942
  %1959 = vst.msk [vmem:[#allocation2 + $0x48] sm:$0xff] %vm939, %v1943
  %1960 = vst.msk [vmem:[#allocation2 + $0x50] sm:$0xff] %vm939, %v1944
  %1961 = vst.msk [vmem:[#allocation2 + $0x58] sm:$0xff] %vm939, %v1945
  %1962 = vst.msk [vmem:[#allocation2 + $0x60] sm:$0xff] %vm939, %v1946
  %1963 = vst.msk [vmem:[#allocation2 + $0x68] sm:$0xff] %vm939, %v1947
  %1964 = vst.msk [vmem:[#allocation2 + $0x70] sm:$0xff] %vm939, %v1948
  %1965 = vst.msk [vmem:[#allocation2 + $0x78] sm:$0xff] %vm939, %v1949
  %1966 = vset.pattern.permute.xlu0 3
  %1967 = vperm.xlu0 %1966, %v388
  %v1968 = vpop.permute.xlu0 %1967
  %1970 = vset.pattern.permute.xlu0 3
  %1971 = vperm.xlu0 %1970, %v393
  %v1972 = vpop.permute.xlu0 %1971
  %1974 = vset.pattern.permute.xlu0 3
  %1975 = vperm.xlu0 %1974, %v398
  %v1976 = vpop.permute.xlu0 %1975
  %1978 = vset.pattern.permute.xlu0 3
  %1979 = vperm.xlu0 %1978, %v403
  %v1980 = vpop.permute.xlu0 %1979
  %1982 = vset.pattern.permute.xlu0 3
  %1983 = vperm.xlu0 %1982, %v408
  %v1984 = vpop.permute.xlu0 %1983
  %1986 = vset.pattern.permute.xlu0 3
  %1987 = vperm.xlu0 %1986, %v413
  %v1988 = vpop.permute.xlu0 %1987
  %1990 = vset.pattern.permute.xlu0 3
  %1991 = vperm.xlu0 %1990, %v418
  %v1992 = vpop.permute.xlu0 %1991
  %1994 = vset.pattern.permute.xlu0 3
  %1995 = vperm.xlu0 %1994, %v423
  %v1996 = vpop.permute.xlu0 %1995
  %1998 = vset.pattern.permute.xlu0 3
  %1999 = vperm.xlu0 %1998, %v428
  %v2000 = vpop.permute.xlu0 %1999
  %2002 = vset.pattern.permute.xlu0 3
  %2003 = vperm.xlu0 %2002, %v433
  %v2004 = vpop.permute.xlu0 %2003
  %2006 = vset.pattern.permute.xlu0 3
  %2007 = vperm.xlu0 %2006, %v438
  %v2008 = vpop.permute.xlu0 %2007
  %2010 = vset.pattern.permute.xlu0 3
  %2011 = vperm.xlu0 %2010, %v443
  %v2012 = vpop.permute.xlu0 %2011
  %2014 = vset.pattern.permute.xlu0 3
  %2015 = vperm.xlu0 %2014, %v448
  %v2016 = vpop.permute.xlu0 %2015
  %2018 = vset.pattern.permute.xlu0 3
  %2019 = vperm.xlu0 %2018, %v453
  %v2020 = vpop.permute.xlu0 %2019
  %2022 = vset.pattern.permute.xlu0 3
  %2023 = vperm.xlu0 %2022, %v458
  %v2024 = vpop.permute.xlu0 %2023
  %2026 = vset.pattern.permute.xlu0 3
  %2027 = vperm.xlu0 %2026, %v463
  %v2028 = vpop.permute.xlu0 %2027
  %v2030 = vlaneseq
  %v2031 = vshrl.u32 %v2030, 7
  %v2032 = vsub.s32 3, %v2031
  %v2033 = vrot.slane %v315, %v2032
  %v2034 = vadd.f32 %v1968, %v2033
  %v2035 = vadd.f32 %v1972, %v2033
  %v2036 = vadd.f32 %v1976, %v2033
  %v2037 = vadd.f32 %v1980, %v2033
  %v2038 = vadd.f32 %v1984, %v2033
  %v2039 = vadd.f32 %v1988, %v2033
  %v2040 = vadd.f32 %v1992, %v2033
  %v2041 = vadd.f32 %v1996, %v2033
  %v2042 = vadd.f32 %v2000, %v2033
  %v2043 = vadd.f32 %v2004, %v2033
  %v2044 = vadd.f32 %v2008, %v2033
  %v2045 = vadd.f32 %v2012, %v2033
  %v2046 = vadd.f32 %v2016, %v2033
  %v2047 = vadd.f32 %v2020, %v2033
  %v2048 = vadd.f32 %v2024, %v2033
  %v2049 = vadd.f32 %v2028, %v2033
  %v2050 = vmul.f32 %v2034, 0.2
  %v2051 = vmul.f32 %v2035, 0.2
  %v2052 = vmul.f32 %v2036, 0.2
  %v2053 = vmul.f32 %v2037, 0.2
  %v2054 = vmul.f32 %v2038, 0.2
  %v2055 = vmul.f32 %v2039, 0.2
  %v2056 = vmul.f32 %v2040, 0.2
  %v2057 = vmul.f32 %v2041, 0.2
  %v2058 = vmul.f32 %v2042, 0.2
  %v2059 = vmul.f32 %v2043, 0.2
  %v2060 = vmul.f32 %v2044, 0.2
  %v2061 = vmul.f32 %v2045, 0.2
  %v2062 = vmul.f32 %v2046, 0.2
  %v2063 = vmul.f32 %v2047, 0.2
  %v2064 = vmul.f32 %v2048, 0.2
  %v2065 = vmul.f32 %v2049, 0.2
  %v2066 = vmax.f32 %v2034, %v2050
  %v2067 = vmax.f32 %v2035, %v2051
  %v2068 = vmax.f32 %v2036, %v2052
  %v2069 = vmax.f32 %v2037, %v2053
  %v2070 = vmax.f32 %v2038, %v2054
  %v2071 = vmax.f32 %v2039, %v2055
  %v2072 = vmax.f32 %v2040, %v2056
  %v2073 = vmax.f32 %v2041, %v2057
  %v2074 = vmax.f32 %v2042, %v2058
  %v2075 = vmax.f32 %v2043, %v2059
  %v2076 = vmax.f32 %v2044, %v2060
  %v2077 = vmax.f32 %v2045, %v2061
  %v2078 = vmax.f32 %v2046, %v2062
  %v2079 = vmax.f32 %v2047, %v2063
  %v2080 = vmax.f32 %v2048, %v2064
  %v2081 = vmax.f32 %v2049, %v2065
  %v2082 = vadd.f32 %v2066, %v18
  %v2083 = vadd.f32 %v2067, %v19
  %v2084 = vadd.f32 %v2068, %v20
  %v2085 = vadd.f32 %v2069, %v21
  %v2086 = vadd.f32 %v2070, %v22
  %v2087 = vadd.f32 %v2071, %v23
  %v2088 = vadd.f32 %v2072, %v24
  %v2089 = vadd.f32 %v2073, %v25
  %v2090 = vadd.f32 %v2074, %v26
  %v2091 = vadd.f32 %v2075, %v27
  %v2092 = vadd.f32 %v2076, %v28
  %v2093 = vadd.f32 %v2077, %v29
  %v2094 = vadd.f32 %v2078, %v30
  %v2095 = vadd.f32 %v2079, %v31
  %v2096 = vadd.f32 %v2080, %v32
  %v2097 = vadd.f32 %v2081, %v33
  %2098 = vmax.xlane.f32.xlu0 %v2082
  %v2099 = vpop.xlane.xlu0 %2098
  %2100 = vmax.xlane.f32.xlu0 %v2083
  %v2101 = vpop.xlane.xlu0 %2100
  %2102 = vmax.xlane.f32.xlu0 %v2084
  %v2103 = vpop.xlane.xlu0 %2102
  %2104 = vmax.xlane.f32.xlu0 %v2085
  %v2105 = vpop.xlane.xlu0 %2104
  %2106 = vmax.xlane.f32.xlu0 %v2086
  %v2107 = vpop.xlane.xlu0 %2106
  %2108 = vmax.xlane.f32.xlu0 %v2087
  %v2109 = vpop.xlane.xlu0 %2108
  %2110 = vmax.xlane.f32.xlu0 %v2088
  %v2111 = vpop.xlane.xlu0 %2110
  %2112 = vmax.xlane.f32.xlu0 %v2089
  %v2113 = vpop.xlane.xlu0 %2112
  %2114 = vmax.xlane.f32.xlu0 %v2090
  %v2115 = vpop.xlane.xlu0 %2114
  %2116 = vmax.xlane.f32.xlu0 %v2091
  %v2117 = vpop.xlane.xlu0 %2116
  %2118 = vmax.xlane.f32.xlu0 %v2092
  %v2119 = vpop.xlane.xlu0 %2118
  %2120 = vmax.xlane.f32.xlu0 %v2093
  %v2121 = vpop.xlane.xlu0 %2120
  %2122 = vmax.xlane.f32.xlu0 %v2094
  %v2123 = vpop.xlane.xlu0 %2122
  %2124 = vmax.xlane.f32.xlu0 %v2095
  %v2125 = vpop.xlane.xlu0 %2124
  %2126 = vmax.xlane.f32.xlu0 %v2096
  %v2127 = vpop.xlane.xlu0 %2126
  %2128 = vmax.xlane.f32.xlu0 %v2097
  %v2129 = vpop.xlane.xlu0 %2128
  %v2130 = vsub.f32 %v2082, %v2099
  %v2131 = vsub.f32 %v2083, %v2101
  %v2132 = vsub.f32 %v2084, %v2103
  %v2133 = vsub.f32 %v2085, %v2105
  %v2134 = vsub.f32 %v2086, %v2107
  %v2135 = vsub.f32 %v2087, %v2109
  %v2136 = vsub.f32 %v2088, %v2111
  %v2137 = vsub.f32 %v2089, %v2113
  %v2138 = vsub.f32 %v2090, %v2115
  %v2139 = vsub.f32 %v2091, %v2117
  %v2140 = vsub.f32 %v2092, %v2119
  %v2141 = vsub.f32 %v2093, %v2121
  %v2142 = vsub.f32 %v2094, %v2123
  %v2143 = vsub.f32 %v2095, %v2125
  %v2144 = vsub.f32 %v2096, %v2127
  %v2145 = vsub.f32 %v2097, %v2129
  %v2146 = vmul.f32 %v2130, 1.442695
  %v2147 = vpow.pop %v2146
  %v2148 = vmul.f32 %v2131, 1.442695
  %v2149 = vpow.pop %v2148
  %v2150 = vmul.f32 %v2132, 1.442695
  %v2151 = vpow.pop %v2150
  %v2152 = vmul.f32 %v2133, 1.442695
  %v2153 = vpow.pop %v2152
  %v2154 = vmul.f32 %v2134, 1.442695
  %v2155 = vpow.pop %v2154
  %v2156 = vmul.f32 %v2135, 1.442695
  %v2157 = vpow.pop %v2156
  %v2158 = vmul.f32 %v2136, 1.442695
  %v2159 = vpow.pop %v2158
  %v2160 = vmul.f32 %v2137, 1.442695
  %v2161 = vpow.pop %v2160
  %v2162 = vmul.f32 %v2138, 1.442695
  %v2163 = vpow.pop %v2162
  %v2164 = vmul.f32 %v2139, 1.442695
  %v2165 = vpow.pop %v2164
  %v2166 = vmul.f32 %v2140, 1.442695
  %v2167 = vpow.pop %v2166
  %v2168 = vmul.f32 %v2141, 1.442695
  %v2169 = vpow.pop %v2168
  %v2170 = vmul.f32 %v2142, 1.442695
  %v2171 = vpow.pop %v2170
  %v2172 = vmul.f32 %v2143, 1.442695
  %v2173 = vpow.pop %v2172
  %v2174 = vmul.f32 %v2144, 1.442695
  %v2175 = vpow.pop %v2174
  %v2176 = vmul.f32 %v2145, 1.442695
  %v2177 = vpow.pop %v2176
  %v2178 = vlaneseq
  %v2179 = vshrl.u32 %v2178, 7
  %v2180 = vsub.s32 3, %v2179
  %v2181 = vrot.slane %v34, %v2180
  %v2182 = vmul.f32 %v132, %v2181
  %v2183 = vmul.f32 %v135, %v2181
  %v2184 = vmul.f32 %v140, %v2181
  %v2185 = vmul.f32 %v143, %v2181
  %v2186 = vmul.f32 %v148, %v2181
  %v2187 = vmul.f32 %v151, %v2181
  %v2188 = vmul.f32 %v156, %v2181
  %v2189 = vmul.f32 %v159, %v2181
  %v2190 = vmul.f32 %v164, %v2181
  %v2191 = vmul.f32 %v167, %v2181
  %v2192 = vmul.f32 %v172, %v2181
  %v2193 = vmul.f32 %v175, %v2181
  %v2194 = vmul.f32 %v180, %v2181
  %v2195 = vmul.f32 %v183, %v2181
  %v2196 = vmul.f32 %v188, %v2181
  %v2197 = vmul.f32 %v191, %v2181
  %v2198 = vpack.c.bf16 %v2183, %v2182
  %v2199 = vpack.c.bf16 %v2185, %v2184
  %v2200 = vpack.c.bf16 %v2187, %v2186
  %v2201 = vpack.c.bf16 %v2189, %v2188
  %v2202 = vpack.c.bf16 %v2191, %v2190
  %v2203 = vpack.c.bf16 %v2193, %v2192
  %v2204 = vpack.c.bf16 %v2195, %v2194
  %v2205 = vpack.c.bf16 %v2197, %v2196
  %v2206 = vpack.c.bf16 %v2149, %v2147
  %v2207 = vpack.c.bf16 %v2153, %v2151
  %v2208 = vpack.c.bf16 %v2157, %v2155
  %v2209 = vpack.c.bf16 %v2161, %v2159
  %v2210 = vpack.c.bf16 %v2165, %v2163
  %v2211 = vpack.c.bf16 %v2169, %v2167
  %v2212 = vpack.c.bf16 %v2173, %v2171
  %v2213 = vpack.c.bf16 %v2177, %v2175
  %2214 = vmatprep.subr.bf16.mxu0 0
  %2215 = vmatpush1.bf16.msra.mxu0 %v2198
  %2216 = vmatprep.subr.bf16.mxu0 0
  %2217 = vmatpush1.bf16.msra.mxu0 %v2199
  %2218 = vmatprep.subr.bf16.mxu0 0
  %2219 = vmatpush1.bf16.msra.mxu0 %v2200
  %2220 = vmatprep.subr.bf16.mxu0 0
  %2221 = vmatpush1.bf16.msra.mxu0 %v2201
  %2222 = vmatprep.subr.bf16.mxu0 0
  %2223 = vmatpush1.bf16.msra.mxu0 %v2202
  %2224 = vmatprep.subr.bf16.mxu0 0
  %2225 = vmatpush1.bf16.msra.mxu0 %v2203
  %2226 = vmatprep.subr.bf16.mxu0 0
  %2227 = vmatpush1.bf16.msra.mxu0 %v2204
  %2228 = vmatprep.subr.bf16.mxu0 0
  %2229 = vmatpush1.bf16.msra.mxu0 %v2205
  %2230 = vmatprep.subr.bf16.mxu0 0
  %2231 = vmatpush1.bf16.msra.mxu0 0
  %2232 = vmatprep.subr.bf16.mxu0 0
  %2233 = vmatpush1.bf16.msra.mxu0 0
  %2234 = vmatprep.subr.bf16.mxu0 0
  %2235 = vmatpush1.bf16.msra.mxu0 0
  %2236 = vmatprep.subr.bf16.mxu0 0
  %2237 = vmatpush1.bf16.msra.mxu0 0
  %2238 = vmatprep.subr.bf16.mxu0 0
  %2239 = vmatpush1.bf16.msra.mxu0 0
  %2240 = vmatprep.subr.bf16.mxu0 0
  %2241 = vmatpush1.bf16.msra.mxu0 0
  %2242 = vmatprep.subr.bf16.mxu0 0
  %2243 = vmatpush1.bf16.msra.mxu0 0
  %2244 = vmatprep.subr.bf16.mxu0 0
  %2245 = vmatpush1.bf16.msra.mxu0 0
  %2246 = vmatprep.mubr.bf16.mxu0 0
  %2247 = vmatmul.mubr.bf16.gmra.mrb[0].mxu0 %v2206
  %v2248 = vpop.f32.mrb[0].mxu0
  %v2249 = vadd.f32 0.0, %v2248
  %v2250 = vpop.f32.mrb[0].mxu0
  %v2251 = vpop.f32.mrb[0].mxu0
  %v2252 = vadd.f32 0.0, %v2251
  %v2253 = vpop.f32.mrb[0].mxu0
  %2254 = vmatprep.mubr.bf16.mxu0 0
  %2255 = vmatmul.mubr.bf16.gmra.mrb[0].mxu0 %v2207
  %v2256 = vpop.f32.mrb[0].mxu0
  %v2257 = vadd.f32 0.0, %v2256
  %v2258 = vpop.f32.mrb[0].mxu0
  %v2259 = vpop.f32.mrb[0].mxu0
  %v2260 = vadd.f32 0.0, %v2259
  %v2261 = vpop.f32.mrb[0].mxu0
  %2262 = vmatprep.mubr.bf16.mxu0 0
  %2263 = vmatmul.mubr.bf16.gmra.mrb[0].mxu0 %v2208
  %v2264 = vpop.f32.mrb[0].mxu0
  %v2265 = vadd.f32 0.0, %v2264
  %v2266 = vpop.f32.mrb[0].mxu0
  %v2267 = vpop.f32.mrb[0].mxu0
  %v2268 = vadd.f32 0.0, %v2267
  %v2269 = vpop.f32.mrb[0].mxu0
  %2270 = vmatprep.mubr.bf16.mxu0 0
  %2271 = vmatmul.mubr.bf16.gmra.mrb[0].mxu0 %v2209
  %v2272 = vpop.f32.mrb[0].mxu0
  %v2273 = vadd.f32 0.0, %v2272
  %v2274 = vpop.f32.mrb[0].mxu0
  %v2275 = vpop.f32.mrb[0].mxu0
  %v2276 = vadd.f32 0.0, %v2275
  %v2277 = vpop.f32.mrb[0].mxu0
  %2278 = vmatprep.mubr.bf16.mxu0 0
  %2279 = vmatmul.mubr.bf16.gmra.mrb[0].mxu0 %v2210
  %v2280 = vpop.f32.mrb[0].mxu0
  %v2281 = vadd.f32 0.0, %v2280
  %v2282 = vpop.f32.mrb[0].mxu0
  %v2283 = vpop.f32.mrb[0].mxu0
  %v2284 = vadd.f32 0.0, %v2283
  %v2285 = vpop.f32.mrb[0].mxu0
  %2286 = vmatprep.mubr.bf16.mxu0 0
  %2287 = vmatmul.mubr.bf16.gmra.mrb[0].mxu0 %v2211
  %v2288 = vpop.f32.mrb[0].mxu0
  %v2289 = vadd.f32 0.0, %v2288
  %v2290 = vpop.f32.mrb[0].mxu0
  %v2291 = vpop.f32.mrb[0].mxu0
  %v2292 = vadd.f32 0.0, %v2291
  %v2293 = vpop.f32.mrb[0].mxu0
  %2294 = vmatprep.mubr.bf16.mxu0 0
  %2295 = vmatmul.mubr.bf16.gmra.mrb[0].mxu0 %v2212
  %v2296 = vpop.f32.mrb[0].mxu0
  %v2297 = vadd.f32 0.0, %v2296
  %v2298 = vpop.f32.mrb[0].mxu0
  %v2299 = vpop.f32.mrb[0].mxu0
  %v2300 = vadd.f32 0.0, %v2299
  %v2301 = vpop.f32.mrb[0].mxu0
  %2302 = vmatprep.mubr.bf16.mxu0 0
  %2303 = vmatmul.mubr.bf16.gmra.mrb[0].mxu0 %v2213
  %v2304 = vpop.f32.mrb[0].mxu0
  %v2305 = vadd.f32 0.0, %v2304
  %v2306 = vpop.f32.mrb[0].mxu0
  %v2307 = vpop.f32.mrb[0].mxu0
  %v2308 = vadd.f32 0.0, %v2307
  %v2309 = vpop.f32.mrb[0].mxu0
  %2310 = vdwg.mxu0
  %v2311 = vrcp.pop %v2249
  %v2312 = vrcp.pop %v2252
  %v2313 = vrcp.pop %v2257
  %v2314 = vrcp.pop %v2260
  %v2315 = vrcp.pop %v2265
  %v2316 = vrcp.pop %v2268
  %v2317 = vrcp.pop %v2273
  %v2318 = vrcp.pop %v2276
  %v2319 = vrcp.pop %v2281
  %v2320 = vrcp.pop %v2284
  %v2321 = vrcp.pop %v2289
  %v2322 = vrcp.pop %v2292
  %v2323 = vrcp.pop %v2297
  %v2324 = vrcp.pop %v2300
  %v2325 = vrcp.pop %v2305
  %v2326 = vrcp.pop %v2308
  %2328 = vset.pattern.permute.xlu0 35
  %2329 = vperm.xlu0 %2328, %v2311
  %v2330 = vpop.permute.xlu0 %2329
  %2333 = vset.pattern.permute.xlu0 35
  %2334 = vperm.xlu0 %2333, %v2312
  %v2335 = vpop.permute.xlu0 %2334
  %2338 = vset.pattern.permute.xlu0 35
  %2339 = vperm.xlu0 %2338, %v2313
  %v2340 = vpop.permute.xlu0 %2339
  %2343 = vset.pattern.permute.xlu0 35
  %2344 = vperm.xlu0 %2343, %v2314
  %v2345 = vpop.permute.xlu0 %2344
  %2348 = vset.pattern.permute.xlu0 35
  %2349 = vperm.xlu0 %2348, %v2315
  %v2350 = vpop.permute.xlu0 %2349
  %2353 = vset.pattern.permute.xlu0 35
  %2354 = vperm.xlu0 %2353, %v2316
  %v2355 = vpop.permute.xlu0 %2354
  %2358 = vset.pattern.permute.xlu0 35
  %2359 = vperm.xlu0 %2358, %v2317
  %v2360 = vpop.permute.xlu0 %2359
  %2363 = vset.pattern.permute.xlu0 35
  %2364 = vperm.xlu0 %2363, %v2318
  %v2365 = vpop.permute.xlu0 %2364
  %2368 = vset.pattern.permute.xlu0 35
  %2369 = vperm.xlu0 %2368, %v2319
  %v2370 = vpop.permute.xlu0 %2369
  %2373 = vset.pattern.permute.xlu0 35
  %2374 = vperm.xlu0 %2373, %v2320
  %v2375 = vpop.permute.xlu0 %2374
  %2378 = vset.pattern.permute.xlu0 35
  %2379 = vperm.xlu0 %2378, %v2321
  %v2380 = vpop.permute.xlu0 %2379
  %2383 = vset.pattern.permute.xlu0 35
  %2384 = vperm.xlu0 %2383, %v2322
  %v2385 = vpop.permute.xlu0 %2384
  %2388 = vset.pattern.permute.xlu0 35
  %2389 = vperm.xlu0 %2388, %v2323
  %v2390 = vpop.permute.xlu0 %2389
  %2393 = vset.pattern.permute.xlu0 35
  %2394 = vperm.xlu0 %2393, %v2324
  %v2395 = vpop.permute.xlu0 %2394
  %2398 = vset.pattern.permute.xlu0 35
  %2399 = vperm.xlu0 %2398, %v2325
  %v2400 = vpop.permute.xlu0 %2399
  %2403 = vset.pattern.permute.xlu0 35
  %2404 = vperm.xlu0 %2403, %v2326
  %v2405 = vpop.permute.xlu0 %2404
  %v2407 = vmul.f32 %v2249, %v2330
  %v2408 = vmul.f32 %v2252, %v2335
  %v2409 = vmul.f32 %v2257, %v2340
  %v2410 = vmul.f32 %v2260, %v2345
  %v2411 = vmul.f32 %v2265, %v2350
  %v2412 = vmul.f32 %v2268, %v2355
  %v2413 = vmul.f32 %v2273, %v2360
  %v2414 = vmul.f32 %v2276, %v2365
  %v2415 = vmul.f32 %v2281, %v2370
  %v2416 = vmul.f32 %v2284, %v2375
  %v2417 = vmul.f32 %v2289, %v2380
  %v2418 = vmul.f32 %v2292, %v2385
  %v2419 = vmul.f32 %v2297, %v2390
  %v2420 = vmul.f32 %v2300, %v2395
  %v2421 = vmul.f32 %v2305, %v2400
  %v2422 = vmul.f32 %v2308, %v2405
  %v2423 = vld [vmem:[#allocation2] sm:$0xff]
  %v2424 = vld [vmem:[#allocation2 + $0x8] sm:$0xff]
  %v2425 = vld [vmem:[#allocation2 + $0x10] sm:$0xff]
  %v2426 = vld [vmem:[#allocation2 + $0x18] sm:$0xff]
  %v2427 = vld [vmem:[#allocation2 + $0x20] sm:$0xff]
  %v2428 = vld [vmem:[#allocation2 + $0x28] sm:$0xff]
  %v2429 = vld [vmem:[#allocation2 + $0x30] sm:$0xff]
  %v2430 = vld [vmem:[#allocation2 + $0x38] sm:$0xff]
  %v2431 = vld [vmem:[#allocation2 + $0x40] sm:$0xff]
  %v2432 = vld [vmem:[#allocation2 + $0x48] sm:$0xff]
  %v2433 = vld [vmem:[#allocation2 + $0x50] sm:$0xff]
  %v2434 = vld [vmem:[#allocation2 + $0x58] sm:$0xff]
  %v2435 = vld [vmem:[#allocation2 + $0x60] sm:$0xff]
  %v2436 = vld [vmem:[#allocation2 + $0x68] sm:$0xff]
  %v2437 = vld [vmem:[#allocation2 + $0x70] sm:$0xff]
  %v2438 = vld [vmem:[#allocation2 + $0x78] sm:$0xff]
  %v2439 = vadd.f32 %v2423, %v2407
  %v2440 = vadd.f32 %v2424, %v2408
  %v2441 = vadd.f32 %v2425, %v2409
  %v2442 = vadd.f32 %v2426, %v2410
  %v2443 = vadd.f32 %v2427, %v2411
  %v2444 = vadd.f32 %v2428, %v2412
  %v2445 = vadd.f32 %v2429, %v2413
  %v2446 = vadd.f32 %v2430, %v2414
  %v2447 = vadd.f32 %v2431, %v2415
  %v2448 = vadd.f32 %v2432, %v2416
  %v2449 = vadd.f32 %v2433, %v2417
  %v2450 = vadd.f32 %v2434, %v2418
  %v2451 = vadd.f32 %v2435, %v2419
  %v2452 = vadd.f32 %v2436, %v2420
  %v2453 = vadd.f32 %v2437, %v2421
  %v2454 = vadd.f32 %v2438, %v2422
  %2455 = vst.msk [vmem:[#allocation2] sm:$0xff] %vm939, %v2439
  %2456 = vst.msk [vmem:[#allocation2 + $0x8] sm:$0xff] %vm939, %v2440
  %2457 = vst.msk [vmem:[#allocation2 + $0x10] sm:$0xff] %vm939, %v2441
  %2458 = vst.msk [vmem:[#allocation2 + $0x18] sm:$0xff] %vm939, %v2442
  %2459 = vst.msk [vmem:[#allocation2 + $0x20] sm:$0xff] %vm939, %v2443
  %2460 = vst.msk [vmem:[#allocation2 + $0x28] sm:$0xff] %vm939, %v2444
  %2461 = vst.msk [vmem:[#allocation2 + $0x30] sm:$0xff] %vm939, %v2445
  %2462 = vst.msk [vmem:[#allocation2 + $0x38] sm:$0xff] %vm939, %v2446
  %2463 = vst.msk [vmem:[#allocation2 + $0x40] sm:$0xff] %vm939, %v2447
  %2464 = vst.msk [vmem:[#allocation2 + $0x48] sm:$0xff] %vm939, %v2448
  %2465 = vst.msk [vmem:[#allocation2 + $0x50] sm:$0xff] %vm939, %v2449
  %2466 = vst.msk [vmem:[#allocation2 + $0x58] sm:$0xff] %vm939, %v2450
  %2467 = vst.msk [vmem:[#allocation2 + $0x60] sm:$0xff] %vm939, %v2451
  %2468 = vst.msk [vmem:[#allocation2 + $0x68] sm:$0xff] %vm939, %v2452
  %2469 = vst.msk [vmem:[#allocation2 + $0x70] sm:$0xff] %vm939, %v2453
  %2470 = vst.msk [vmem:[#allocation2 + $0x78] sm:$0xff] %vm939, %v2454
  %v2471 = vld [vmem:[#allocation2] sm:$0xff]
  %v2472 = vld [vmem:[#allocation2 + $0x8] sm:$0xff]
  %v2473 = vld [vmem:[#allocation2 + $0x10] sm:$0xff]
  %v2474 = vld [vmem:[#allocation2 + $0x18] sm:$0xff]
  %v2475 = vld [vmem:[#allocation2 + $0x20] sm:$0xff]
  %v2476 = vld [vmem:[#allocation2 + $0x28] sm:$0xff]
  %v2477 = vld [vmem:[#allocation2 + $0x30] sm:$0xff]
  %v2478 = vld [vmem:[#allocation2 + $0x38] sm:$0xff]
  %v2479 = vld [vmem:[#allocation2 + $0x40] sm:$0xff]
  %v2480 = vld [vmem:[#allocation2 + $0x48] sm:$0xff]
  %v2481 = vld [vmem:[#allocation2 + $0x50] sm:$0xff]
  %v2482 = vld [vmem:[#allocation2 + $0x58] sm:$0xff]
  %v2483 = vld [vmem:[#allocation2 + $0x60] sm:$0xff]
  %v2484 = vld [vmem:[#allocation2 + $0x68] sm:$0xff]
  %v2485 = vld [vmem:[#allocation2 + $0x70] sm:$0xff]
  %v2486 = vld [vmem:[#allocation2 + $0x78] sm:$0xff]
  %v2487 = vlaneseq
  %v2488 = vshrl.u32 %v2487, 7
  %v2489 = vsub.s32 5, %v2488
  %v2490 = vrot.slane %v34, %v2489
  %v2491 = vmul.f32 %v2471, %v2490
  %v2492 = vmul.f32 %v2472, %v2490
  %v2493 = vmul.f32 %v2473, %v2490
  %v2494 = vmul.f32 %v2474, %v2490
  %v2495 = vmul.f32 %v2475, %v2490
  %v2496 = vmul.f32 %v2476, %v2490
  %v2497 = vmul.f32 %v2477, %v2490
  %v2498 = vmul.f32 %v2478, %v2490
  %v2499 = vmul.f32 %v2479, %v2490
  %v2500 = vmul.f32 %v2480, %v2490
  %v2501 = vmul.f32 %v2481, %v2490
  %v2502 = vmul.f32 %v2482, %v2490
  %v2503 = vmul.f32 %v2483, %v2490
  %v2504 = vmul.f32 %v2484, %v2490
  %v2505 = vmul.f32 %v2485, %v2490
  %v2506 = vmul.f32 %v2486, %v2490
  %v2507 = vlaneseq
  %v2508 = vshrl.u32 %v2507, 7
  %v2509 = vsub.s32 6, %v2508
  %v2510 = vrot.slane %v34, %v2509
  %v2511 = vadd.f32 %v2491, %v2510
  %v2512 = vadd.f32 %v2492, %v2510
  %v2513 = vadd.f32 %v2493, %v2510
  %v2514 = vadd.f32 %v2494, %v2510
  %v2515 = vadd.f32 %v2495, %v2510
  %v2516 = vadd.f32 %v2496, %v2510
  %v2517 = vadd.f32 %v2497, %v2510
  %v2518 = vadd.f32 %v2498, %v2510
  %v2519 = vadd.f32 %v2499, %v2510
  %v2520 = vadd.f32 %v2500, %v2510
  %v2521 = vadd.f32 %v2501, %v2510
  %v2522 = vadd.f32 %v2502, %v2510
  %v2523 = vadd.f32 %v2503, %v2510
  %v2524 = vadd.f32 %v2504, %v2510
  %v2525 = vadd.f32 %v2505, %v2510
  %v2526 = vadd.f32 %v2506, %v2510
  %v2527 = vmax.f32 %v2511, 0.0
  %v2528 = vmax.f32 %v2512, 0.0
  %v2529 = vmax.f32 %v2513, 0.0
  %v2530 = vmax.f32 %v2514, 0.0
  %v2531 = vmax.f32 %v2515, 0.0
  %v2532 = vmax.f32 %v2516, 0.0
  %v2533 = vmax.f32 %v2517, 0.0
  %v2534 = vmax.f32 %v2518, 0.0
  %v2535 = vmax.f32 %v2519, 0.0
  %v2536 = vmax.f32 %v2520, 0.0
  %v2537 = vmax.f32 %v2521, 0.0
  %v2538 = vmax.f32 %v2522, 0.0
  %v2539 = vmax.f32 %v2523, 0.0
  %v2540 = vmax.f32 %v2524, 0.0
  %v2541 = vmax.f32 %v2525, 0.0
  %v2542 = vmax.f32 %v2526, 0.0
  %v2543 = vpack.c.bf16 %v2528, %v2527
  %v2544 = vpack.c.bf16 %v2530, %v2529
  %v2545 = vpack.c.bf16 %v2532, %v2531
  %v2546 = vpack.c.bf16 %v2534, %v2533
  %v2547 = vpack.c.bf16 %v2536, %v2535
  %v2548 = vpack.c.bf16 %v2538, %v2537
  %v2549 = vpack.c.bf16 %v2540, %v2539
  %v2550 = vpack.c.bf16 %v2542, %v2541
  %v2551 = vld [vmem:[%s2 + $0x8] sm:$0xf]
  %v2552 = vld [vmem:[%s2 + $0xc] sm:$0xf]
  %v2553 = vld [vmem:[%s2 + $0x10] sm:$0xf]
  %v2554 = vld [vmem:[%s2 + $0x14] sm:$0xf]
  %v2559 = vunpack.c.l.b16 %v2551
  %v2560 = vunpack.c.l.b16 %v2552
  %v2561 = vunpack.c.l.b16 %v2553
  %v2562 = vunpack.c.l.b16 %v2554
  %v2563 = vpack.c.b16 %v2560, %v2559
  %v2564 = vpack.c.b16 %v2562, %v2561
  %v2568 = vsel %vm939, %v2543, 0
  %v2571 = vsel %vm939, %v2544, 0
  %v2574 = vsel %vm939, %v2545, 0
  %v2577 = vsel %vm939, %v2546, 0
  %v2580 = vsel %vm939, %v2547, 0
  %v2583 = vsel %vm939, %v2548, 0
  %v2586 = vsel %vm939, %v2549, 0
  %v2589 = vsel %vm939, %v2550, 0
  %2591 = vmatprep.subr.bf16.mxu0 0
  %2592 = vmatpush1.bf16.msra.mxu0 %v2563
  %2593 = vmatprep.subr.bf16.mxu0 0
  %2594 = vmatpush1.bf16.msra.mxu0 %v2564
  %2595 = vmatprep.subr.bf16.mxu0 0
  %2596 = vmatpush1.bf16.msra.mxu0 0
  %2597 = vmatprep.subr.bf16.mxu0 0
  %2598 = vmatpush1.bf16.msra.mxu0 0
  %2599 = vmatprep.subr.bf16.mxu0 0
  %2600 = vmatpush1.bf16.msra.mxu0 0
  %2601 = vmatprep.subr.bf16.mxu0 0
  %2602 = vmatpush1.bf16.msra.mxu0 0
  %2603 = vmatprep.subr.bf16.mxu0 0
  %2604 = vmatpush1.bf16.msra.mxu0 0
  %2605 = vmatprep.subr.bf16.mxu0 0
  %2606 = vmatpush1.bf16.msra.mxu0 0
  %2607 = vmatprep.subr.bf16.mxu0 0
  %2608 = vmatpush1.bf16.msra.mxu0 0
  %2609 = vmatprep.subr.bf16.mxu0 0
  %2610 = vmatpush1.bf16.msra.mxu0 0
  %2611 = vmatprep.subr.bf16.mxu0 0
  %2612 = vmatpush1.bf16.msra.mxu0 0
  %2613 = vmatprep.subr.bf16.mxu0 0
  %2614 = vmatpush1.bf16.msra.mxu0 0
  %2615 = vmatprep.subr.bf16.mxu0 0
  %2616 = vmatpush1.bf16.msra.mxu0 0
  %2617 = vmatprep.subr.bf16.mxu0 0
  %2618 = vmatpush1.bf16.msra.mxu0 0
  %2619 = vmatprep.subr.bf16.mxu0 0
  %2620 = vmatpush1.bf16.msra.mxu0 0
  %2621 = vmatprep.subr.bf16.mxu0 0
  %2622 = vmatpush1.bf16.msra.mxu0 0
  %2623 = vmatprep.mubr.bf16.mxu0 0
  %2624 = vmatmul.mubr.bf16.gmra.mrb[0].mxu0 %v2568
  %v2625 = vpop.f32.mrb[0].mxu0
  %v2626 = vadd.f32 %v65, %v2625
  %v2627 = vpop.f32.mrb[0].mxu0
  %v2628 = vpop.f32.mrb[0].mxu0
  %v2629 = vadd.f32 %v65, %v2628
  %v2630 = vpop.f32.mrb[0].mxu0
  %2631 = vmatprep.mubr.bf16.mxu0 0
  %2632 = vmatmul.mubr.bf16.gmra.mrb[0].mxu0 %v2571
  %v2633 = vpop.f32.mrb[0].mxu0
  %v2634 = vadd.f32 %v65, %v2633
  %v2635 = vpop.f32.mrb[0].mxu0
  %v2636 = vpop.f32.mrb[0].mxu0
  %v2637 = vadd.f32 %v65, %v2636
  %v2638 = vpop.f32.mrb[0].mxu0
  %2639 = vmatprep.mubr.bf16.mxu0 0
  %2640 = vmatmul.mubr.bf16.gmra.mrb[0].mxu0 %v2574
  %v2641 = vpop.f32.mrb[0].mxu0
  %v2642 = vadd.f32 %v65, %v2641
  %v2643 = vpop.f32.mrb[0].mxu0
  %v2644 = vpop.f32.mrb[0].mxu0
  %v2645 = vadd.f32 %v65, %v2644
  %v2646 = vpop.f32.mrb[0].mxu0
  %2647 = vmatprep.mubr.bf16.mxu0 0
  %2648 = vmatmul.mubr.bf16.gmra.mrb[0].mxu0 %v2577
  %v2649 = vpop.f32.mrb[0].mxu0
  %v2650 = vadd.f32 %v65, %v2649
  %v2651 = vpop.f32.mrb[0].mxu0
  %v2652 = vpop.f32.mrb[0].mxu0
  %v2653 = vadd.f32 %v65, %v2652
  %v2654 = vpop.f32.mrb[0].mxu0
  %2655 = vmatprep.mubr.bf16.mxu0 0
  %2656 = vmatmul.mubr.bf16.gmra.mrb[0].mxu0 %v2580
  %v2657 = vpop.f32.mrb[0].mxu0
  %v2658 = vadd.f32 %v65, %v2657
  %v2659 = vpop.f32.mrb[0].mxu0
  %v2660 = vpop.f32.mrb[0].mxu0
  %v2661 = vadd.f32 %v65, %v2660
  %v2662 = vpop.f32.mrb[0].mxu0
  %2663 = vmatprep.mubr.bf16.mxu0 0
  %2664 = vmatmul.mubr.bf16.gmra.mrb[0].mxu0 %v2583
  %v2665 = vpop.f32.mrb[0].mxu0
  %v2666 = vadd.f32 %v65, %v2665
  %v2667 = vpop.f32.mrb[0].mxu0
  %v2668 = vpop.f32.mrb[0].mxu0
  %v2669 = vadd.f32 %v65, %v2668
  %v2670 = vpop.f32.mrb[0].mxu0
  %2671 = vmatprep.mubr.bf16.mxu0 0
  %2672 = vmatmul.mubr.bf16.gmra.mrb[0].mxu0 %v2586
  %v2673 = vpop.f32.mrb[0].mxu0
  %v2674 = vadd.f32 %v65, %v2673
  %v2675 = vpop.f32.mrb[0].mxu0
  %v2676 = vpop.f32.mrb[0].mxu0
  %v2677 = vadd.f32 %v65, %v2676
  %v2678 = vpop.f32.mrb[0].mxu0
  %2679 = vmatprep.mubr.bf16.mxu0 0
  %2680 = vmatmul.mubr.bf16.gmra.mrb[0].mxu0 %v2589
  %v2681 = vpop.f32.mrb[0].mxu0
  %v2682 = vadd.f32 %v65, %v2681
  %v2683 = vpop.f32.mrb[0].mxu0
  %v2684 = vpop.f32.mrb[0].mxu0
  %v2685 = vadd.f32 %v65, %v2684
  %v2686 = vpop.f32.mrb[0].mxu0
  %2687 = vdwg.mxu0
  %v2688 = vld [vmem:[%s3 + $0x10] sm:$0xff]
  %v2689 = vld [vmem:[%s3 + $0x18] sm:$0xff]
  %v2691 = vsel %vm196, %v2688, 0
  %v2694 = vsel %vm196, %v2626, 0
  %v2697 = vsel %vm196, %v2629, 0
  %v2700 = vsel %vm196, %v2634, 0
  %v2703 = vsel %vm196, %v2637, 0
  %v2706 = vsel %vm196, %v2642, 0
  %v2709 = vsel %vm196, %v2645, 0
  %v2712 = vsel %vm196, %v2650, 0
  %v2715 = vsel %vm196, %v2653, 0
  %v2718 = vsel %vm196, %v2658, 0
  %v2721 = vsel %vm196, %v2661, 0
  %v2724 = vsel %vm196, %v2666, 0
  %v2727 = vsel %vm196, %v2669, 0
  %v2730 = vsel %vm196, %v2674, 0
  %v2733 = vsel %vm196, %v2677, 0
  %v2736 = vsel %vm196, %v2682, 0
  %v2739 = vsel %vm196, %v2685, 0
  %2741 = vmatprep.subr.mxu0 0.0
  %2742 = vmatpush1.xpose.msra.mxu0 %v2694
  %2743 = vmatprep.subr.mxu0 0.0
  %2744 = vmatpush1.xpose.msra.mxu0 %v2697
  %2745 = vmatprep.subr.mxu0 0.0
  %2746 = vmatpush1.xpose.msra.mxu0 %v2700
  %2747 = vmatprep.subr.mxu0 0.0
  %2748 = vmatpush1.xpose.msra.mxu0 %v2703
  %2749 = vmatprep.subr.mxu0 0.0
  %2750 = vmatpush1.xpose.msra.mxu0 %v2706
  %2751 = vmatprep.subr.mxu0 0.0
  %2752 = vmatpush1.xpose.msra.mxu0 %v2709
  %2753 = vmatprep.subr.mxu0 0.0
  %2754 = vmatpush1.xpose.msra.mxu0 %v2712
  %2755 = vmatprep.subr.mxu0 0.0
  %2756 = vmatpush1.xpose.msra.mxu0 %v2715
  %2757 = vmatprep.subr.mxu0 0.0
  %2758 = vmatpush1.xpose.msra.mxu0 %v2718
  %2759 = vmatprep.subr.mxu0 0.0
  %2760 = vmatpush1.xpose.msra.mxu0 %v2721
  %2761 = vmatprep.subr.mxu0 0.0
  %2762 = vmatpush1.xpose.msra.mxu0 %v2724
  %2763 = vmatprep.subr.mxu0 0.0
  %2764 = vmatpush1.xpose.msra.mxu0 %v2727
  %2765 = vmatprep.subr.mxu0 0.0
  %2766 = vmatpush1.xpose.msra.mxu0 %v2730
  %2767 = vmatprep.subr.mxu0 0.0
  %2768 = vmatpush1.xpose.msra.mxu0 %v2733
  %2769 = vmatprep.subr.mxu0 0.0
  %2770 = vmatpush1.xpose.msra.mxu0 %v2736
  %2771 = vmatprep.subr.mxu0 0.0
  %2772 = vmatpush1.xpose.msra.mxu0 %v2739
  %2773 = vmatprep.subr.mxu0 0.0
  %2774 = vmatpush1.xpose.msra.mxu0 0.0
  %2775 = vmatprep.subr.mxu0 0.0
  %2776 = vmatpush1.xpose.msra.mxu0 0.0
  %2777 = vmatprep.subr.mxu0 0.0
  %2778 = vmatpush1.xpose.msra.mxu0 0.0
  %2779 = vmatprep.subr.mxu0 0.0
  %2780 = vmatpush1.xpose.msra.mxu0 0.0
  %2781 = vmatprep.subr.mxu0 0.0
  %2782 = vmatpush1.xpose.msra.mxu0 0.0
  %2783 = vmatprep.subr.mxu0 0.0
  %2784 = vmatpush1.xpose.msra.mxu0 0.0
  %2785 = vmatprep.subr.mxu0 0.0
  %2786 = vmatpush1.xpose.msra.mxu0 0.0
  %2787 = vmatprep.subr.mxu0 0.0
  %2788 = vmatpush1.xpose.msra.mxu0 0.0
  %2789 = vmatprep.subr.mxu0 0.0
  %2790 = vmatpush1.xpose.msra.mxu0 0.0
  %2791 = vmatprep.subr.mxu0 0.0
  %2792 = vmatpush1.xpose.msra.mxu0 0.0
  %2793 = vmatprep.subr.mxu0 0.0
  %2794 = vmatpush1.xpose.msra.mxu0 0.0
  %2795 = vmatprep.subr.mxu0 0.0
  %2796 = vmatpush1.xpose.msra.mxu0 0.0
  %2797 = vmatprep.subr.mxu0 0.0
  %2798 = vmatpush1.xpose.msra.mxu0 0.0
  %2799 = vmatprep.subr.mxu0 0.0
  %2800 = vmatpush1.xpose.msra.mxu0 0.0
  %2801 = vmatprep.subr.mxu0 0.0
  %2802 = vmatpush1.xpose.msra.mxu0 0.0
  %2803 = vmatprep.subr.mxu0 0.0
  %2804 = vmatpush1.xpose.msra.mxu0 0.0
  %2805 = vmatprep.mubr.f32.mxu0 0.0
  %2806 = vmatmul.mubr.f32.gmra.mrb[0].mxu0 %v2691
  %v2807 = vpop.f32.mrb[0].mxu0
  %v2808 = vadd.f32 0.0, %v2807
  %v2809 = vpop.f32.mrb[0].mxu0
  %2810 = vdwg.mxu0
  %v2812 = vsel %vm196, %v2689, 0
  %2814 = vmatprep.subr.mxu0 0.0
  %2815 = vmatpush1.xpose.msra.mxu0 %v2812
  %2816 = vmatprep.subr.mxu0 0.0
  %2817 = vmatpush1.xpose.msra.mxu0 0.0
  %2818 = vmatprep.subr.mxu0 0.0
  %2819 = vmatpush1.xpose.msra.mxu0 0.0
  %2820 = vmatprep.subr.mxu0 0.0
  %2821 = vmatpush1.xpose.msra.mxu0 0.0
  %2822 = vmatprep.subr.mxu0 0.0
  %2823 = vmatpush1.xpose.msra.mxu0 0.0
  %2824 = vmatprep.subr.mxu0 0.0
  %2825 = vmatpush1.xpose.msra.mxu0 0.0
  %2826 = vmatprep.subr.mxu0 0.0
  %2827 = vmatpush1.xpose.msra.mxu0 0.0
  %2828 = vmatprep.subr.mxu0 0.0
  %2829 = vmatpush1.xpose.msra.mxu0 0.0
  %2830 = vmatprep.subr.mxu0 0.0
  %2831 = vmatpush1.xpose.msra.mxu0 0.0
  %2832 = vmatprep.subr.mxu0 0.0
  %2833 = vmatpush1.xpose.msra.mxu0 0.0
  %2834 = vmatprep.subr.mxu0 0.0
  %2835 = vmatpush1.xpose.msra.mxu0 0.0
  %2836 = vmatprep.subr.mxu0 0.0
  %2837 = vmatpush1.xpose.msra.mxu0 0.0
  %2838 = vmatprep.subr.mxu0 0.0
  %2839 = vmatpush1.xpose.msra.mxu0 0.0
  %2840 = vmatprep.subr.mxu0 0.0
  %2841 = vmatpush1.xpose.msra.mxu0 0.0
  %2842 = vmatprep.subr.mxu0 0.0
  %2843 = vmatpush1.xpose.msra.mxu0 0.0
  %2844 = vmatprep.subr.mxu0 0.0
  %2845 = vmatpush1.xpose.msra.mxu0 0.0
  %2846 = vmatprep.subr.mxu0 0.0
  %2847 = vmatpush1.xpose.msra.mxu0 0.0
  %2848 = vmatprep.subr.mxu0 0.0
  %2849 = vmatpush1.xpose.msra.mxu0 0.0
  %2850 = vmatprep.subr.mxu0 0.0
  %2851 = vmatpush1.xpose.msra.mxu0 0.0
  %2852 = vmatprep.subr.mxu0 0.0
  %2853 = vmatpush1.xpose.msra.mxu0 0.0
  %2854 = vmatprep.subr.mxu0 0.0
  %2855 = vmatpush1.xpose.msra.mxu0 0.0
  %2856 = vmatprep.subr.mxu0 0.0
  %2857 = vmatpush1.xpose.msra.mxu0 0.0
  %2858 = vmatprep.subr.mxu0 0.0
  %2859 = vmatpush1.xpose.msra.mxu0 0.0
  %2860 = vmatprep.subr.mxu0 0.0
  %2861 = vmatpush1.xpose.msra.mxu0 0.0
  %2862 = vmatprep.subr.mxu0 0.0
  %2863 = vmatpush1.xpose.msra.mxu0 0.0
  %2864 = vmatprep.subr.mxu0 0.0
  %2865 = vmatpush1.xpose.msra.mxu0 0.0
  %2866 = vmatprep.subr.mxu0 0.0
  %2867 = vmatpush1.xpose.msra.mxu0 0.0
  %2868 = vmatprep.subr.mxu0 0.0
  %2869 = vmatpush1.xpose.msra.mxu0 0.0
  %2870 = vmatprep.subr.mxu0 0.0
  %2871 = vmatpush1.xpose.msra.mxu0 0.0
  %2872 = vmatprep.subr.mxu0 0.0
  %2873 = vmatpush1.xpose.msra.mxu0 0.0
  %2874 = vmatprep.subr.mxu0 0.0
  %2875 = vmatpush1.xpose.msra.mxu0 0.0
  %2876 = vmatprep.subr.mxu0 0.0
  %2877 = vmatpush1.xpose.msra.mxu0 0.0
  %2878 = vmatprep.mubr.f32.mxu0 0.0
  %2879 = vmatmul.mubr.f32.gmra.mrb[0].mxu0 %v2694
  %v2880 = vpop.f32.mrb[0].mxu0
  %v2881 = vadd.f32 0.0, %v2880
  %v2882 = vpop.f32.mrb[0].mxu0
  %2883 = vmatprep.mubr.f32.mxu0 0.0
  %2884 = vmatmul.mubr.f32.gmra.mrb[0].mxu0 %v2697
  %v2885 = vpop.f32.mrb[0].mxu0
  %v2886 = vadd.f32 0.0, %v2885
  %v2887 = vpop.f32.mrb[0].mxu0
  %2888 = vmatprep.mubr.f32.mxu0 0.0
  %2889 = vmatmul.mubr.f32.gmra.mrb[0].mxu0 %v2700
  %v2890 = vpop.f32.mrb[0].mxu0
  %v2891 = vadd.f32 0.0, %v2890
  %v2892 = vpop.f32.mrb[0].mxu0
  %2893 = vmatprep.mubr.f32.mxu0 0.0
  %2894 = vmatmul.mubr.f32.gmra.mrb[0].mxu0 %v2703
  %v2895 = vpop.f32.mrb[0].mxu0
  %v2896 = vadd.f32 0.0, %v2895
  %v2897 = vpop.f32.mrb[0].mxu0
  %2898 = vmatprep.mubr.f32.mxu0 0.0
  %2899 = vmatmul.mubr.f32.gmra.mrb[0].mxu0 %v2706
  %v2900 = vpop.f32.mrb[0].mxu0
  %v2901 = vadd.f32 0.0, %v2900
  %v2902 = vpop.f32.mrb[0].mxu0
  %2903 = vmatprep.mubr.f32.mxu0 0.0
  %2904 = vmatmul.mubr.f32.gmra.mrb[0].mxu0 %v2709
  %v2905 = vpop.f32.mrb[0].mxu0
  %v2906 = vadd.f32 0.0, %v2905
  %v2907 = vpop.f32.mrb[0].mxu0
  %2908 = vmatprep.mubr.f32.mxu0 0.0
  %2909 = vmatmul.mubr.f32.gmra.mrb[0].mxu0 %v2712
  %v2910 = vpop.f32.mrb[0].mxu0
  %v2911 = vadd.f32 0.0, %v2910
  %v2912 = vpop.f32.mrb[0].mxu0
  %2913 = vmatprep.mubr.f32.mxu0 0.0
  %2914 = vmatmul.mubr.f32.gmra.mrb[0].mxu0 %v2715
  %v2915 = vpop.f32.mrb[0].mxu0
  %v2916 = vadd.f32 0.0, %v2915
  %v2917 = vpop.f32.mrb[0].mxu0
  %2918 = vmatprep.mubr.f32.mxu0 0.0
  %2919 = vmatmul.mubr.f32.gmra.mrb[0].mxu0 %v2718
  %v2920 = vpop.f32.mrb[0].mxu0
  %v2921 = vadd.f32 0.0, %v2920
  %v2922 = vpop.f32.mrb[0].mxu0
  %2923 = vmatprep.mubr.f32.mxu0 0.0
  %2924 = vmatmul.mubr.f32.gmra.mrb[0].mxu0 %v2721
  %v2925 = vpop.f32.mrb[0].mxu0
  %v2926 = vadd.f32 0.0, %v2925
  %v2927 = vpop.f32.mrb[0].mxu0
  %2928 = vmatprep.mubr.f32.mxu0 0.0
  %2929 = vmatmul.mubr.f32.gmra.mrb[0].mxu0 %v2724
  %v2930 = vpop.f32.mrb[0].mxu0
  %v2931 = vadd.f32 0.0, %v2930
  %v2932 = vpop.f32.mrb[0].mxu0
  %2933 = vmatprep.mubr.f32.mxu0 0.0
  %2934 = vmatmul.mubr.f32.gmra.mrb[0].mxu0 %v2727
  %v2935 = vpop.f32.mrb[0].mxu0
  %v2936 = vadd.f32 0.0, %v2935
  %v2937 = vpop.f32.mrb[0].mxu0
  %2938 = vmatprep.mubr.f32.mxu0 0.0
  %2939 = vmatmul.mubr.f32.gmra.mrb[0].mxu0 %v2730
  %v2940 = vpop.f32.mrb[0].mxu0
  %v2941 = vadd.f32 0.0, %v2940
  %v2942 = vpop.f32.mrb[0].mxu0
  %2943 = vmatprep.mubr.f32.mxu0 0.0
  %2944 = vmatmul.mubr.f32.gmra.mrb[0].mxu0 %v2733
  %v2945 = vpop.f32.mrb[0].mxu0
  %v2946 = vadd.f32 0.0, %v2945
  %v2947 = vpop.f32.mrb[0].mxu0
  %2948 = vmatprep.mubr.f32.mxu0 0.0
  %2949 = vmatmul.mubr.f32.gmra.mrb[0].mxu0 %v2736
  %v2950 = vpop.f32.mrb[0].mxu0
  %v2951 = vadd.f32 0.0, %v2950
  %v2952 = vpop.f32.mrb[0].mxu0
  %2953 = vmatprep.mubr.f32.mxu0 0.0
  %2954 = vmatmul.mubr.f32.gmra.mrb[0].mxu0 %v2739
  %v2955 = vpop.f32.mrb[0].mxu0
  %v2956 = vadd.f32 0.0, %v2955
  %v2957 = vpop.f32.mrb[0].mxu0
  %2958 = vdwg.mxu0
  %2960 = vset.pattern.permute.xlu0 0
  %2961 = vperm.xlu0 %2960, %v2881
  %v2962 = vpop.permute.xlu0 %2961
  %2965 = vset.pattern.permute.xlu0 0
  %2966 = vperm.xlu0 %2965, %v2886
  %v2967 = vpop.permute.xlu0 %2966
  %2970 = vset.pattern.permute.xlu0 0
  %2971 = vperm.xlu0 %2970, %v2891
  %v2972 = vpop.permute.xlu0 %2971
  %2975 = vset.pattern.permute.xlu0 0
  %2976 = vperm.xlu0 %2975, %v2896
  %v2977 = vpop.permute.xlu0 %2976
  %2980 = vset.pattern.permute.xlu0 0
  %2981 = vperm.xlu0 %2980, %v2901
  %v2982 = vpop.permute.xlu0 %2981
  %2985 = vset.pattern.permute.xlu0 0
  %2986 = vperm.xlu0 %2985, %v2906
  %v2987 = vpop.permute.xlu0 %2986
  %2990 = vset.pattern.permute.xlu0 0
  %2991 = vperm.xlu0 %2990, %v2911
  %v2992 = vpop.permute.xlu0 %2991
  %2995 = vset.pattern.permute.xlu0 0
  %2996 = vperm.xlu0 %2995, %v2916
  %v2997 = vpop.permute.xlu0 %2996
  %3000 = vset.pattern.permute.xlu0 0
  %3001 = vperm.xlu0 %3000, %v2921
  %v3002 = vpop.permute.xlu0 %3001
  %3005 = vset.pattern.permute.xlu0 0
  %3006 = vperm.xlu0 %3005, %v2926
  %v3007 = vpop.permute.xlu0 %3006
  %3010 = vset.pattern.permute.xlu0 0
  %3011 = vperm.xlu0 %3010, %v2931
  %v3012 = vpop.permute.xlu0 %3011
  %3015 = vset.pattern.permute.xlu0 0
  %3016 = vperm.xlu0 %3015, %v2936
  %v3017 = vpop.permute.xlu0 %3016
  %3020 = vset.pattern.permute.xlu0 0
  %3021 = vperm.xlu0 %3020, %v2941
  %v3022 = vpop.permute.xlu0 %3021
  %3025 = vset.pattern.permute.xlu0 0
  %3026 = vperm.xlu0 %3025, %v2946
  %v3027 = vpop.permute.xlu0 %3026
  %3030 = vset.pattern.permute.xlu0 0
  %3031 = vperm.xlu0 %3030, %v2951
  %v3032 = vpop.permute.xlu0 %3031
  %3035 = vset.pattern.permute.xlu0 0
  %3036 = vperm.xlu0 %3035, %v2956
  %v3037 = vpop.permute.xlu0 %3036
  %v3039 = vlaneseq
  %v3040 = vshrl.u32 %v3039, 7
  %v3041 = vsub.s32 0, %v3040
  %v3042 = vrot.slane %v2808, %v3041
  %v3043 = vadd.f32 %v2962, %v3042
  %v3044 = vadd.f32 %v2967, %v3042
  %v3045 = vadd.f32 %v2972, %v3042
  %v3046 = vadd.f32 %v2977, %v3042
  %v3047 = vadd.f32 %v2982, %v3042
  %v3048 = vadd.f32 %v2987, %v3042
  %v3049 = vadd.f32 %v2992, %v3042
  %v3050 = vadd.f32 %v2997, %v3042
  %v3051 = vadd.f32 %v3002, %v3042
  %v3052 = vadd.f32 %v3007, %v3042
  %v3053 = vadd.f32 %v3012, %v3042
  %v3054 = vadd.f32 %v3017, %v3042
  %v3055 = vadd.f32 %v3022, %v3042
  %v3056 = vadd.f32 %v3027, %v3042
  %v3057 = vadd.f32 %v3032, %v3042
  %v3058 = vadd.f32 %v3037, %v3042
  %v3059 = vmul.f32 %v3043, 0.2
  %v3060 = vmul.f32 %v3044, 0.2
  %v3061 = vmul.f32 %v3045, 0.2
  %v3062 = vmul.f32 %v3046, 0.2
  %v3063 = vmul.f32 %v3047, 0.2
  %v3064 = vmul.f32 %v3048, 0.2
  %v3065 = vmul.f32 %v3049, 0.2
  %v3066 = vmul.f32 %v3050, 0.2
  %v3067 = vmul.f32 %v3051, 0.2
  %v3068 = vmul.f32 %v3052, 0.2
  %v3069 = vmul.f32 %v3053, 0.2
  %v3070 = vmul.f32 %v3054, 0.2
  %v3071 = vmul.f32 %v3055, 0.2
  %v3072 = vmul.f32 %v3056, 0.2
  %v3073 = vmul.f32 %v3057, 0.2
  %v3074 = vmul.f32 %v3058, 0.2
  %v3075 = vmax.f32 %v3043, %v3059
  %v3076 = vmax.f32 %v3044, %v3060
  %v3077 = vmax.f32 %v3045, %v3061
  %v3078 = vmax.f32 %v3046, %v3062
  %v3079 = vmax.f32 %v3047, %v3063
  %v3080 = vmax.f32 %v3048, %v3064
  %v3081 = vmax.f32 %v3049, %v3065
  %v3082 = vmax.f32 %v3050, %v3066
  %v3083 = vmax.f32 %v3051, %v3067
  %v3084 = vmax.f32 %v3052, %v3068
  %v3085 = vmax.f32 %v3053, %v3069
  %v3086 = vmax.f32 %v3054, %v3070
  %v3087 = vmax.f32 %v3055, %v3071
  %v3088 = vmax.f32 %v3056, %v3072
  %v3089 = vmax.f32 %v3057, %v3073
  %v3090 = vmax.f32 %v3058, %v3074
  %v3091 = vadd.f32 %v3075, %v18
  %v3092 = vadd.f32 %v3076, %v19
  %v3093 = vadd.f32 %v3077, %v20
  %v3094 = vadd.f32 %v3078, %v21
  %v3095 = vadd.f32 %v3079, %v22
  %v3096 = vadd.f32 %v3080, %v23
  %v3097 = vadd.f32 %v3081, %v24
  %v3098 = vadd.f32 %v3082, %v25
  %v3099 = vadd.f32 %v3083, %v26
  %v3100 = vadd.f32 %v3084, %v27
  %v3101 = vadd.f32 %v3085, %v28
  %v3102 = vadd.f32 %v3086, %v29
  %v3103 = vadd.f32 %v3087, %v30
  %v3104 = vadd.f32 %v3088, %v31
  %v3105 = vadd.f32 %v3089, %v32
  %v3106 = vadd.f32 %v3090, %v33
  %3107 = vmax.xlane.f32.xlu0 %v3091
  %v3108 = vpop.xlane.xlu0 %3107
  %3109 = vmax.xlane.f32.xlu0 %v3092
  %v3110 = vpop.xlane.xlu0 %3109
  %3111 = vmax.xlane.f32.xlu0 %v3093
  %v3112 = vpop.xlane.xlu0 %3111
  %3113 = vmax.xlane.f32.xlu0 %v3094
  %v3114 = vpop.xlane.xlu0 %3113
  %3115 = vmax.xlane.f32.xlu0 %v3095
  %v3116 = vpop.xlane.xlu0 %3115
  %3117 = vmax.xlane.f32.xlu0 %v3096
  %v3118 = vpop.xlane.xlu0 %3117
  %3119 = vmax.xlane.f32.xlu0 %v3097
  %v3120 = vpop.xlane.xlu0 %3119
  %3121 = vmax.xlane.f32.xlu0 %v3098
  %v3122 = vpop.xlane.xlu0 %3121
  %3123 = vmax.xlane.f32.xlu0 %v3099
  %v3124 = vpop.xlane.xlu0 %3123
  %3125 = vmax.xlane.f32.xlu0 %v3100
  %v3126 = vpop.xlane.xlu0 %3125
  %3127 = vmax.xlane.f32.xlu0 %v3101
  %v3128 = vpop.xlane.xlu0 %3127
  %3129 = vmax.xlane.f32.xlu0 %v3102
  %v3130 = vpop.xlane.xlu0 %3129
  %3131 = vmax.xlane.f32.xlu0 %v3103
  %v3132 = vpop.xlane.xlu0 %3131
  %3133 = vmax.xlane.f32.xlu0 %v3104
  %v3134 = vpop.xlane.xlu0 %3133
  %3135 = vmax.xlane.f32.xlu0 %v3105
  %v3136 = vpop.xlane.xlu0 %3135
  %3137 = vmax.xlane.f32.xlu0 %v3106
  %v3138 = vpop.xlane.xlu0 %3137
  %v3139 = vsub.f32 %v3091, %v3108
  %v3140 = vsub.f32 %v3092, %v3110
  %v3141 = vsub.f32 %v3093, %v3112
  %v3142 = vsub.f32 %v3094, %v3114
  %v3143 = vsub.f32 %v3095, %v3116
  %v3144 = vsub.f32 %v3096, %v3118
  %v3145 = vsub.f32 %v3097, %v3120
  %v3146 = vsub.f32 %v3098, %v3122
  %v3147 = vsub.f32 %v3099, %v3124
  %v3148 = vsub.f32 %v3100, %v3126
  %v3149 = vsub.f32 %v3101, %v3128
  %v3150 = vsub.f32 %v3102, %v3130
  %v3151 = vsub.f32 %v3103, %v3132
  %v3152 = vsub.f32 %v3104, %v3134
  %v3153 = vsub.f32 %v3105, %v3136
  %v3154 = vsub.f32 %v3106, %v3138
  %v3155 = vmul.f32 %v3139, 1.442695
  %v3156 = vpow.pop %v3155
  %v3157 = vmul.f32 %v3140, 1.442695
  %v3158 = vpow.pop %v3157
  %v3159 = vmul.f32 %v3141, 1.442695
  %v3160 = vpow.pop %v3159
  %v3161 = vmul.f32 %v3142, 1.442695
  %v3162 = vpow.pop %v3161
  %v3163 = vmul.f32 %v3143, 1.442695
  %v3164 = vpow.pop %v3163
  %v3165 = vmul.f32 %v3144, 1.442695
  %v3166 = vpow.pop %v3165
  %v3167 = vmul.f32 %v3145, 1.442695
  %v3168 = vpow.pop %v3167
  %v3169 = vmul.f32 %v3146, 1.442695
  %v3170 = vpow.pop %v3169
  %v3171 = vmul.f32 %v3147, 1.442695
  %v3172 = vpow.pop %v3171
  %v3173 = vmul.f32 %v3148, 1.442695
  %v3174 = vpow.pop %v3173
  %v3175 = vmul.f32 %v3149, 1.442695
  %v3176 = vpow.pop %v3175
  %v3177 = vmul.f32 %v3150, 1.442695
  %v3178 = vpow.pop %v3177
  %v3179 = vmul.f32 %v3151, 1.442695
  %v3180 = vpow.pop %v3179
  %v3181 = vmul.f32 %v3152, 1.442695
  %v3182 = vpow.pop %v3181
  %v3183 = vmul.f32 %v3153, 1.442695
  %v3184 = vpow.pop %v3183
  %v3185 = vmul.f32 %v3154, 1.442695
  %v3186 = vpow.pop %v3185
  %v3187 = vmul.f32 %v2626, %v697
  %v3188 = vmul.f32 %v2629, %v697
  %v3189 = vmul.f32 %v2634, %v697
  %v3190 = vmul.f32 %v2637, %v697
  %v3191 = vmul.f32 %v2642, %v697
  %v3192 = vmul.f32 %v2645, %v697
  %v3193 = vmul.f32 %v2650, %v697
  %v3194 = vmul.f32 %v2653, %v697
  %v3195 = vmul.f32 %v2658, %v697
  %v3196 = vmul.f32 %v2661, %v697
  %v3197 = vmul.f32 %v2666, %v697
  %v3198 = vmul.f32 %v2669, %v697
  %v3199 = vmul.f32 %v2674, %v697
  %v3200 = vmul.f32 %v2677, %v697
  %v3201 = vmul.f32 %v2682, %v697
  %v3202 = vmul.f32 %v2685, %v697
  %v3203 = vpack.c.bf16 %v3188, %v3187
  %v3204 = vpack.c.bf16 %v3190, %v3189
  %v3205 = vpack.c.bf16 %v3192, %v3191
  %v3206 = vpack.c.bf16 %v3194, %v3193
  %v3207 = vpack.c.bf16 %v3196, %v3195
  %v3208 = vpack.c.bf16 %v3198, %v3197
  %v3209 = vpack.c.bf16 %v3200, %v3199
  %v3210 = vpack.c.bf16 %v3202, %v3201
  %v3211 = vpack.c.bf16 %v3158, %v3156
  %v3212 = vpack.c.bf16 %v3162, %v3160
  %v3213 = vpack.c.bf16 %v3166, %v3164
  %v3214 = vpack.c.bf16 %v3170, %v3168
  %v3215 = vpack.c.bf16 %v3174, %v3172
  %v3216 = vpack.c.bf16 %v3178, %v3176
  %v3217 = vpack.c.bf16 %v3182, %v3180
  %v3218 = vpack.c.bf16 %v3186, %v3184
  %3219 = vmatprep.subr.bf16.mxu0 0
  %3220 = vmatpush1.bf16.msra.mxu0 %v3203
  %3221 = vmatprep.subr.bf16.mxu0 0
  %3222 = vmatpush1.bf16.msra.mxu0 %v3204
  %3223 = vmatprep.subr.bf16.mxu0 0
  %3224 = vmatpush1.bf16.msra.mxu0 %v3205
  %3225 = vmatprep.subr.bf16.mxu0 0
  %3226 = vmatpush1.bf16.msra.mxu0 %v3206
  %3227 = vmatprep.subr.bf16.mxu0 0
  %3228 = vmatpush1.bf16.msra.mxu0 %v3207
  %3229 = vmatprep.subr.bf16.mxu0 0
  %3230 = vmatpush1.bf16.msra.mxu0 %v3208
  %3231 = vmatprep.subr.bf16.mxu0 0
  %3232 = vmatpush1.bf16.msra.mxu0 %v3209
  %3233 = vmatprep.subr.bf16.mxu0 0
  %3234 = vmatpush1.bf16.msra.mxu0 %v3210
  %3235 = vmatprep.subr.bf16.mxu0 0
  %3236 = vmatpush1.bf16.msra.mxu0 0
  %3237 = vmatprep.subr.bf16.mxu0 0
  %3238 = vmatpush1.bf16.msra.mxu0 0
  %3239 = vmatprep.subr.bf16.mxu0 0
  %3240 = vmatpush1.bf16.msra.mxu0 0
  %3241 = vmatprep.subr.bf16.mxu0 0
  %3242 = vmatpush1.bf16.msra.mxu0 0
  %3243 = vmatprep.subr.bf16.mxu0 0
  %3244 = vmatpush1.bf16.msra.mxu0 0
  %3245 = vmatprep.subr.bf16.mxu0 0
  %3246 = vmatpush1.bf16.msra.mxu0 0
  %3247 = vmatprep.subr.bf16.mxu0 0
  %3248 = vmatpush1.bf16.msra.mxu0 0
  %3249 = vmatprep.subr.bf16.mxu0 0
  %3250 = vmatpush1.bf16.msra.mxu0 0
  %3251 = vmatprep.mubr.bf16.mxu0 0
  %3252 = vmatmul.mubr.bf16.gmra.mrb[0].mxu0 %v3211
  %v3253 = vpop.f32.mrb[0].mxu0
  %v3254 = vadd.f32 0.0, %v3253
  %v3255 = vpop.f32.mrb[0].mxu0
  %v3256 = vpop.f32.mrb[0].mxu0
  %v3257 = vadd.f32 0.0, %v3256
  %v3258 = vpop.f32.mrb[0].mxu0
  %3259 = vmatprep.mubr.bf16.mxu0 0
  %3260 = vmatmul.mubr.bf16.gmra.mrb[0].mxu0 %v3212
  %v3261 = vpop.f32.mrb[0].mxu0
  %v3262 = vadd.f32 0.0, %v3261
  %v3263 = vpop.f32.mrb[0].mxu0
  %v3264 = vpop.f32.mrb[0].mxu0
  %v3265 = vadd.f32 0.0, %v3264
  %v3266 = vpop.f32.mrb[0].mxu0
  %3267 = vmatprep.mubr.bf16.mxu0 0
  %3268 = vmatmul.mubr.bf16.gmra.mrb[0].mxu0 %v3213
  %v3269 = vpop.f32.mrb[0].mxu0
  %v3270 = vadd.f32 0.0, %v3269
  %v3271 = vpop.f32.mrb[0].mxu0
  %v3272 = vpop.f32.mrb[0].mxu0
  %v3273 = vadd.f32 0.0, %v3272
  %v3274 = vpop.f32.mrb[0].mxu0
  %3275 = vmatprep.mubr.bf16.mxu0 0
  %3276 = vmatmul.mubr.bf16.gmra.mrb[0].mxu0 %v3214
  %v3277 = vpop.f32.mrb[0].mxu0
  %v3278 = vadd.f32 0.0, %v3277
  %v3279 = vpop.f32.mrb[0].mxu0
  %v3280 = vpop.f32.mrb[0].mxu0
  %v3281 = vadd.f32 0.0, %v3280
  %v3282 = vpop.f32.mrb[0].mxu0
  %3283 = vmatprep.mubr.bf16.mxu0 0
  %3284 = vmatmul.mubr.bf16.gmra.mrb[0].mxu0 %v3215
  %v3285 = vpop.f32.mrb[0].mxu0
  %v3286 = vadd.f32 0.0, %v3285
  %v3287 = vpop.f32.mrb[0].mxu0
  %v3288 = vpop.f32.mrb[0].mxu0
  %v3289 = vadd.f32 0.0, %v3288
  %v3290 = vpop.f32.mrb[0].mxu0
  %3291 = vmatprep.mubr.bf16.mxu0 0
  %3292 = vmatmul.mubr.bf16.gmra.mrb[0].mxu0 %v3216
  %v3293 = vpop.f32.mrb[0].mxu0
  %v3294 = vadd.f32 0.0, %v3293
  %v3295 = vpop.f32.mrb[0].mxu0
  %v3296 = vpop.f32.mrb[0].mxu0
  %v3297 = vadd.f32 0.0, %v3296
  %v3298 = vpop.f32.mrb[0].mxu0
  %3299 = vmatprep.mubr.bf16.mxu0 0
  %3300 = vmatmul.mubr.bf16.gmra.mrb[0].mxu0 %v3217
  %v3301 = vpop.f32.mrb[0].mxu0
  %v3302 = vadd.f32 0.0, %v3301
  %v3303 = vpop.f32.mrb[0].mxu0
  %v3304 = vpop.f32.mrb[0].mxu0
  %v3305 = vadd.f32 0.0, %v3304
  %v3306 = vpop.f32.mrb[0].mxu0
  %3307 = vmatprep.mubr.bf16.mxu0 0
  %3308 = vmatmul.mubr.bf16.gmra.mrb[0].mxu0 %v3218
  %v3309 = vpop.f32.mrb[0].mxu0
  %v3310 = vadd.f32 0.0, %v3309
  %v3311 = vpop.f32.mrb[0].mxu0
  %v3312 = vpop.f32.mrb[0].mxu0
  %v3313 = vadd.f32 0.0, %v3312
  %v3314 = vpop.f32.mrb[0].mxu0
  %3315 = vdwg.mxu0
  %v3316 = vrcp.pop %v3254
  %v3317 = vrcp.pop %v3257
  %v3318 = vrcp.pop %v3262
  %v3319 = vrcp.pop %v3265
  %v3320 = vrcp.pop %v3270
  %v3321 = vrcp.pop %v3273
  %v3322 = vrcp.pop %v3278
  %v3323 = vrcp.pop %v3281
  %v3324 = vrcp.pop %v3286
  %v3325 = vrcp.pop %v3289
  %v3326 = vrcp.pop %v3294
  %v3327 = vrcp.pop %v3297
  %v3328 = vrcp.pop %v3302
  %v3329 = vrcp.pop %v3305
  %v3330 = vrcp.pop %v3310
  %v3331 = vrcp.pop %v3313
  %3333 = vset.pattern.permute.xlu0 32
  %3334 = vperm.xlu0 %3333, %v3316
  %v3335 = vpop.permute.xlu0 %3334
  %3338 = vset.pattern.permute.xlu0 32
  %3339 = vperm.xlu0 %3338, %v3317
  %v3340 = vpop.permute.xlu0 %3339
  %3343 = vset.pattern.permute.xlu0 32
  %3344 = vperm.xlu0 %3343, %v3318
  %v3345 = vpop.permute.xlu0 %3344
  %3348 = vset.pattern.permute.xlu0 32
  %3349 = vperm.xlu0 %3348, %v3319
  %v3350 = vpop.permute.xlu0 %3349
  %3353 = vset.pattern.permute.xlu0 32
  %3354 = vperm.xlu0 %3353, %v3320
  %v3355 = vpop.permute.xlu0 %3354
  %3358 = vset.pattern.permute.xlu0 32
  %3359 = vperm.xlu0 %3358, %v3321
  %v3360 = vpop.permute.xlu0 %3359
  %3363 = vset.pattern.permute.xlu0 32
  %3364 = vperm.xlu0 %3363, %v3322
  %v3365 = vpop.permute.xlu0 %3364
  %3368 = vset.pattern.permute.xlu0 32
  %3369 = vperm.xlu0 %3368, %v3323
  %v3370 = vpop.permute.xlu0 %3369
  %3373 = vset.pattern.permute.xlu0 32
  %3374 = vperm.xlu0 %3373, %v3324
  %v3375 = vpop.permute.xlu0 %3374
  %3378 = vset.pattern.permute.xlu0 32
  %3379 = vperm.xlu0 %3378, %v3325
  %v3380 = vpop.permute.xlu0 %3379
  %3383 = vset.pattern.permute.xlu0 32
  %3384 = vperm.xlu0 %3383, %v3326
  %v3385 = vpop.permute.xlu0 %3384
  %3388 = vset.pattern.permute.xlu0 32
  %3389 = vperm.xlu0 %3388, %v3327
  %v3390 = vpop.permute.xlu0 %3389
  %3393 = vset.pattern.permute.xlu0 32
  %3394 = vperm.xlu0 %3393, %v3328
  %v3395 = vpop.permute.xlu0 %3394
  %3398 = vset.pattern.permute.xlu0 32
  %3399 = vperm.xlu0 %3398, %v3329
  %v3400 = vpop.permute.xlu0 %3399
  %3403 = vset.pattern.permute.xlu0 32
  %3404 = vperm.xlu0 %3403, %v3330
  %v3405 = vpop.permute.xlu0 %3404
  %3408 = vset.pattern.permute.xlu0 32
  %3409 = vperm.xlu0 %3408, %v3331
  %v3410 = vpop.permute.xlu0 %3409
  %v3412 = vmul.f32 %v3254, %v3335
  %v3413 = vmul.f32 %v3257, %v3340
  %v3414 = vmul.f32 %v3262, %v3345
  %v3415 = vmul.f32 %v3265, %v3350
  %v3416 = vmul.f32 %v3270, %v3355
  %v3417 = vmul.f32 %v3273, %v3360
  %v3418 = vmul.f32 %v3278, %v3365
  %v3419 = vmul.f32 %v3281, %v3370
  %v3420 = vmul.f32 %v3286, %v3375
  %v3421 = vmul.f32 %v3289, %v3380
  %v3422 = vmul.f32 %v3294, %v3385
  %v3423 = vmul.f32 %v3297, %v3390
  %v3424 = vmul.f32 %v3302, %v3395
  %v3425 = vmul.f32 %v3305, %v3400
  %v3426 = vmul.f32 %v3310, %v3405
  %v3427 = vmul.f32 %v3313, %v3410
  %3428 = vst.msk [vmem:[#allocation2] sm:$0xff] %vm939, %v3412
  %3429 = vst.msk [vmem:[#allocation2 + $0x8] sm:$0xff] %vm939, %v3413
  %3430 = vst.msk [vmem:[#allocation2 + $0x10] sm:$0xff] %vm939, %v3414
  %3431 = vst.msk [vmem:[#allocation2 + $0x18] sm:$0xff] %vm939, %v3415
  %3432 = vst.msk [vmem:[#allocation2 + $0x20] sm:$0xff] %vm939, %v3416
  %3433 = vst.msk [vmem:[#allocation2 + $0x28] sm:$0xff] %vm939, %v3417
  %3434 = vst.msk [vmem:[#allocation2 + $0x30] sm:$0xff] %vm939, %v3418
  %3435 = vst.msk [vmem:[#allocation2 + $0x38] sm:$0xff] %vm939, %v3419
  %3436 = vst.msk [vmem:[#allocation2 + $0x40] sm:$0xff] %vm939, %v3420
  %3437 = vst.msk [vmem:[#allocation2 + $0x48] sm:$0xff] %vm939, %v3421
  %3438 = vst.msk [vmem:[#allocation2 + $0x50] sm:$0xff] %vm939, %v3422
  %3439 = vst.msk [vmem:[#allocation2 + $0x58] sm:$0xff] %vm939, %v3423
  %3440 = vst.msk [vmem:[#allocation2 + $0x60] sm:$0xff] %vm939, %v3424
  %3441 = vst.msk [vmem:[#allocation2 + $0x68] sm:$0xff] %vm939, %v3425
  %3442 = vst.msk [vmem:[#allocation2 + $0x70] sm:$0xff] %vm939, %v3426
  %3443 = vst.msk [vmem:[#allocation2 + $0x78] sm:$0xff] %vm939, %v3427
  %3444 = vset.pattern.permute.xlu0 1
  %3445 = vperm.xlu0 %3444, %v2881
  %v3446 = vpop.permute.xlu0 %3445
  %3448 = vset.pattern.permute.xlu0 1
  %3449 = vperm.xlu0 %3448, %v2886
  %v3450 = vpop.permute.xlu0 %3449
  %3452 = vset.pattern.permute.xlu0 1
  %3453 = vperm.xlu0 %3452, %v2891
  %v3454 = vpop.permute.xlu0 %3453
  %3456 = vset.pattern.permute.xlu0 1
  %3457 = vperm.xlu0 %3456, %v2896
  %v3458 = vpop.permute.xlu0 %3457
  %3460 = vset.pattern.permute.xlu0 1
  %3461 = vperm.xlu0 %3460, %v2901
  %v3462 = vpop.permute.xlu0 %3461
  %3464 = vset.pattern.permute.xlu0 1
  %3465 = vperm.xlu0 %3464, %v2906
  %v3466 = vpop.permute.xlu0 %3465
  %3468 = vset.pattern.permute.xlu0 1
  %3469 = vperm.xlu0 %3468, %v2911
  %v3470 = vpop.permute.xlu0 %3469
  %3472 = vset.pattern.permute.xlu0 1
  %3473 = vperm.xlu0 %3472, %v2916
  %v3474 = vpop.permute.xlu0 %3473
  %3476 = vset.pattern.permute.xlu0 1
  %3477 = vperm.xlu0 %3476, %v2921
  %v3478 = vpop.permute.xlu0 %3477
  %3480 = vset.pattern.permute.xlu0 1
  %3481 = vperm.xlu0 %3480, %v2926
  %v3482 = vpop.permute.xlu0 %3481
  %3484 = vset.pattern.permute.xlu0 1
  %3485 = vperm.xlu0 %3484, %v2931
  %v3486 = vpop.permute.xlu0 %3485
  %3488 = vset.pattern.permute.xlu0 1
  %3489 = vperm.xlu0 %3488, %v2936
  %v3490 = vpop.permute.xlu0 %3489
  %3492 = vset.pattern.permute.xlu0 1
  %3493 = vperm.xlu0 %3492, %v2941
  %v3494 = vpop.permute.xlu0 %3493
  %3496 = vset.pattern.permute.xlu0 1
  %3497 = vperm.xlu0 %3496, %v2946
  %v3498 = vpop.permute.xlu0 %3497
  %3500 = vset.pattern.permute.xlu0 1
  %3501 = vperm.xlu0 %3500, %v2951
  %v3502 = vpop.permute.xlu0 %3501
  %3504 = vset.pattern.permute.xlu0 1
  %3505 = vperm.xlu0 %3504, %v2956
  %v3506 = vpop.permute.xlu0 %3505
  %v3508 = vlaneseq
  %v3509 = vshrl.u32 %v3508, 7
  %v3510 = vsub.s32 1, %v3509
  %v3511 = vrot.slane %v2808, %v3510
  %v3512 = vadd.f32 %v3446, %v3511
  %v3513 = vadd.f32 %v3450, %v3511
  %v3514 = vadd.f32 %v3454, %v3511
  %v3515 = vadd.f32 %v3458, %v3511
  %v3516 = vadd.f32 %v3462, %v3511
  %v3517 = vadd.f32 %v3466, %v3511
  %v3518 = vadd.f32 %v3470, %v3511
  %v3519 = vadd.f32 %v3474, %v3511
  %v3520 = vadd.f32 %v3478, %v3511
  %v3521 = vadd.f32 %v3482, %v3511
  %v3522 = vadd.f32 %v3486, %v3511
  %v3523 = vadd.f32 %v3490, %v3511
  %v3524 = vadd.f32 %v3494, %v3511
  %v3525 = vadd.f32 %v3498, %v3511
  %v3526 = vadd.f32 %v3502, %v3511
  %v3527 = vadd.f32 %v3506, %v3511
  %v3528 = vmul.f32 %v3512, 0.2
  %v3529 = vmul.f32 %v3513, 0.2
  %v3530 = vmul.f32 %v3514, 0.2
  %v3531 = vmul.f32 %v3515, 0.2
  %v3532 = vmul.f32 %v3516, 0.2
  %v3533 = vmul.f32 %v3517, 0.2
  %v3534 = vmul.f32 %v3518, 0.2
  %v3535 = vmul.f32 %v3519, 0.2
  %v3536 = vmul.f32 %v3520, 0.2
  %v3537 = vmul.f32 %v3521, 0.2
  %v3538 = vmul.f32 %v3522, 0.2
  %v3539 = vmul.f32 %v3523, 0.2
  %v3540 = vmul.f32 %v3524, 0.2
  %v3541 = vmul.f32 %v3525, 0.2
  %v3542 = vmul.f32 %v3526, 0.2
  %v3543 = vmul.f32 %v3527, 0.2
  %v3544 = vmax.f32 %v3512, %v3528
  %v3545 = vmax.f32 %v3513, %v3529
  %v3546 = vmax.f32 %v3514, %v3530
  %v3547 = vmax.f32 %v3515, %v3531
  %v3548 = vmax.f32 %v3516, %v3532
  %v3549 = vmax.f32 %v3517, %v3533
  %v3550 = vmax.f32 %v3518, %v3534
  %v3551 = vmax.f32 %v3519, %v3535
  %v3552 = vmax.f32 %v3520, %v3536
  %v3553 = vmax.f32 %v3521, %v3537
  %v3554 = vmax.f32 %v3522, %v3538
  %v3555 = vmax.f32 %v3523, %v3539
  %v3556 = vmax.f32 %v3524, %v3540
  %v3557 = vmax.f32 %v3525, %v3541
  %v3558 = vmax.f32 %v3526, %v3542
  %v3559 = vmax.f32 %v3527, %v3543
  %v3560 = vadd.f32 %v3544, %v18
  %v3561 = vadd.f32 %v3545, %v19
  %v3562 = vadd.f32 %v3546, %v20
  %v3563 = vadd.f32 %v3547, %v21
  %v3564 = vadd.f32 %v3548, %v22
  %v3565 = vadd.f32 %v3549, %v23
  %v3566 = vadd.f32 %v3550, %v24
  %v3567 = vadd.f32 %v3551, %v25
  %v3568 = vadd.f32 %v3552, %v26
  %v3569 = vadd.f32 %v3553, %v27
  %v3570 = vadd.f32 %v3554, %v28
  %v3571 = vadd.f32 %v3555, %v29
  %v3572 = vadd.f32 %v3556, %v30
  %v3573 = vadd.f32 %v3557, %v31
  %v3574 = vadd.f32 %v3558, %v32
  %v3575 = vadd.f32 %v3559, %v33
  %3576 = vmax.xlane.f32.xlu0 %v3560
  %v3577 = vpop.xlane.xlu0 %3576
  %3578 = vmax.xlane.f32.xlu0 %v3561
  %v3579 = vpop.xlane.xlu0 %3578
  %3580 = vmax.xlane.f32.xlu0 %v3562
  %v3581 = vpop.xlane.xlu0 %3580
  %3582 = vmax.xlane.f32.xlu0 %v3563
  %v3583 = vpop.xlane.xlu0 %3582
  %3584 = vmax.xlane.f32.xlu0 %v3564
  %v3585 = vpop.xlane.xlu0 %3584
  %3586 = vmax.xlane.f32.xlu0 %v3565
  %v3587 = vpop.xlane.xlu0 %3586
  %3588 = vmax.xlane.f32.xlu0 %v3566
  %v3589 = vpop.xlane.xlu0 %3588
  %3590 = vmax.xlane.f32.xlu0 %v3567
  %v3591 = vpop.xlane.xlu0 %3590
  %3592 = vmax.xlane.f32.xlu0 %v3568
  %v3593 = vpop.xlane.xlu0 %3592
  %3594 = vmax.xlane.f32.xlu0 %v3569
  %v3595 = vpop.xlane.xlu0 %3594
  %3596 = vmax.xlane.f32.xlu0 %v3570
  %v3597 = vpop.xlane.xlu0 %3596
  %3598 = vmax.xlane.f32.xlu0 %v3571
  %v3599 = vpop.xlane.xlu0 %3598
  %3600 = vmax.xlane.f32.xlu0 %v3572
  %v3601 = vpop.xlane.xlu0 %3600
  %3602 = vmax.xlane.f32.xlu0 %v3573
  %v3603 = vpop.xlane.xlu0 %3602
  %3604 = vmax.xlane.f32.xlu0 %v3574
  %v3605 = vpop.xlane.xlu0 %3604
  %3606 = vmax.xlane.f32.xlu0 %v3575
  %v3607 = vpop.xlane.xlu0 %3606
  %v3608 = vsub.f32 %v3560, %v3577
  %v3609 = vsub.f32 %v3561, %v3579
  %v3610 = vsub.f32 %v3562, %v3581
  %v3611 = vsub.f32 %v3563, %v3583
  %v3612 = vsub.f32 %v3564, %v3585
  %v3613 = vsub.f32 %v3565, %v3587
  %v3614 = vsub.f32 %v3566, %v3589
  %v3615 = vsub.f32 %v3567, %v3591
  %v3616 = vsub.f32 %v3568, %v3593
  %v3617 = vsub.f32 %v3569, %v3595
  %v3618 = vsub.f32 %v3570, %v3597
  %v3619 = vsub.f32 %v3571, %v3599
  %v3620 = vsub.f32 %v3572, %v3601
  %v3621 = vsub.f32 %v3573, %v3603
  %v3622 = vsub.f32 %v3574, %v3605
  %v3623 = vsub.f32 %v3575, %v3607
  %v3624 = vmul.f32 %v3608, 1.442695
  %v3625 = vpow.pop %v3624
  %v3626 = vmul.f32 %v3609, 1.442695
  %v3627 = vpow.pop %v3626
  %v3628 = vmul.f32 %v3610, 1.442695
  %v3629 = vpow.pop %v3628
  %v3630 = vmul.f32 %v3611, 1.442695
  %v3631 = vpow.pop %v3630
  %v3632 = vmul.f32 %v3612, 1.442695
  %v3633 = vpow.pop %v3632
  %v3634 = vmul.f32 %v3613, 1.442695
  %v3635 = vpow.pop %v3634
  %v3636 = vmul.f32 %v3614, 1.442695
  %v3637 = vpow.pop %v3636
  %v3638 = vmul.f32 %v3615, 1.442695
  %v3639 = vpow.pop %v3638
  %v3640 = vmul.f32 %v3616, 1.442695
  %v3641 = vpow.pop %v3640
  %v3642 = vmul.f32 %v3617, 1.442695
  %v3643 = vpow.pop %v3642
  %v3644 = vmul.f32 %v3618, 1.442695
  %v3645 = vpow.pop %v3644
  %v3646 = vmul.f32 %v3619, 1.442695
  %v3647 = vpow.pop %v3646
  %v3648 = vmul.f32 %v3620, 1.442695
  %v3649 = vpow.pop %v3648
  %v3650 = vmul.f32 %v3621, 1.442695
  %v3651 = vpow.pop %v3650
  %v3652 = vmul.f32 %v3622, 1.442695
  %v3653 = vpow.pop %v3652
  %v3654 = vmul.f32 %v3623, 1.442695
  %v3655 = vpow.pop %v3654
  %v3656 = vmul.f32 %v2626, %v1171
  %v3657 = vmul.f32 %v2629, %v1171
  %v3658 = vmul.f32 %v2634, %v1171
  %v3659 = vmul.f32 %v2637, %v1171
  %v3660 = vmul.f32 %v2642, %v1171
  %v3661 = vmul.f32 %v2645, %v1171
  %v3662 = vmul.f32 %v2650, %v1171
  %v3663 = vmul.f32 %v2653, %v1171
  %v3664 = vmul.f32 %v2658, %v1171
  %v3665 = vmul.f32 %v2661, %v1171
  %v3666 = vmul.f32 %v2666, %v1171
  %v3667 = vmul.f32 %v2669, %v1171
  %v3668 = vmul.f32 %v2674, %v1171
  %v3669 = vmul.f32 %v2677, %v1171
  %v3670 = vmul.f32 %v2682, %v1171
  %v3671 = vmul.f32 %v2685, %v1171
  %v3672 = vpack.c.bf16 %v3657, %v3656
  %v3673 = vpack.c.bf16 %v3659, %v3658
  %v3674 = vpack.c.bf16 %v3661, %v3660
  %v3675 = vpack.c.bf16 %v3663, %v3662
  %v3676 = vpack.c.bf16 %v3665, %v3664
  %v3677 = vpack.c.bf16 %v3667, %v3666
  %v3678 = vpack.c.bf16 %v3669, %v3668
  %v3679 = vpack.c.bf16 %v3671, %v3670
  %v3680 = vpack.c.bf16 %v3627, %v3625
  %v3681 = vpack.c.bf16 %v3631, %v3629
  %v3682 = vpack.c.bf16 %v3635, %v3633
  %v3683 = vpack.c.bf16 %v3639, %v3637
  %v3684 = vpack.c.bf16 %v3643, %v3641
  %v3685 = vpack.c.bf16 %v3647, %v3645
  %v3686 = vpack.c.bf16 %v3651, %v3649
  %v3687 = vpack.c.bf16 %v3655, %v3653
  %3688 = vmatprep.subr.bf16.mxu0 0
  %3689 = vmatpush1.bf16.msra.mxu0 %v3672
  %3690 = vmatprep.subr.bf16.mxu0 0
  %3691 = vmatpush1.bf16.msra.mxu0 %v3673
  %3692 = vmatprep.subr.bf16.mxu0 0
  %3693 = vmatpush1.bf16.msra.mxu0 %v3674
  %3694 = vmatprep.subr.bf16.mxu0 0
  %3695 = vmatpush1.bf16.msra.mxu0 %v3675
  %3696 = vmatprep.subr.bf16.mxu0 0
  %3697 = vmatpush1.bf16.msra.mxu0 %v3676
  %3698 = vmatprep.subr.bf16.mxu0 0
  %3699 = vmatpush1.bf16.msra.mxu0 %v3677
  %3700 = vmatprep.subr.bf16.mxu0 0
  %3701 = vmatpush1.bf16.msra.mxu0 %v3678
  %3702 = vmatprep.subr.bf16.mxu0 0
  %3703 = vmatpush1.bf16.msra.mxu0 %v3679
  %3704 = vmatprep.subr.bf16.mxu0 0
  %3705 = vmatpush1.bf16.msra.mxu0 0
  %3706 = vmatprep.subr.bf16.mxu0 0
  %3707 = vmatpush1.bf16.msra.mxu0 0
  %3708 = vmatprep.subr.bf16.mxu0 0
  %3709 = vmatpush1.bf16.msra.mxu0 0
  %3710 = vmatprep.subr.bf16.mxu0 0
  %3711 = vmatpush1.bf16.msra.mxu0 0
  %3712 = vmatprep.subr.bf16.mxu0 0
  %3713 = vmatpush1.bf16.msra.mxu0 0
  %3714 = vmatprep.subr.bf16.mxu0 0
  %3715 = vmatpush1.bf16.msra.mxu0 0
  %3716 = vmatprep.subr.bf16.mxu0 0
  %3717 = vmatpush1.bf16.msra.mxu0 0
  %3718 = vmatprep.subr.bf16.mxu0 0
  %3719 = vmatpush1.bf16.msra.mxu0 0
  %3720 = vmatprep.mubr.bf16.mxu0 0
  %3721 = vmatmul.mubr.bf16.gmra.mrb[0].mxu0 %v3680
  %v3722 = vpop.f32.mrb[0].mxu0
  %v3723 = vadd.f32 0.0, %v3722
  %v3724 = vpop.f32.mrb[0].mxu0
  %v3725 = vpop.f32.mrb[0].mxu0
  %v3726 = vadd.f32 0.0, %v3725
  %v3727 = vpop.f32.mrb[0].mxu0
  %3728 = vmatprep.mubr.bf16.mxu0 0
  %3729 = vmatmul.mubr.bf16.gmra.mrb[0].mxu0 %v3681
  %v3730 = vpop.f32.mrb[0].mxu0
  %v3731 = vadd.f32 0.0, %v3730
  %v3732 = vpop.f32.mrb[0].mxu0
  %v3733 = vpop.f32.mrb[0].mxu0
  %v3734 = vadd.f32 0.0, %v3733
  %v3735 = vpop.f32.mrb[0].mxu0
  %3736 = vmatprep.mubr.bf16.mxu0 0
  %3737 = vmatmul.mubr.bf16.gmra.mrb[0].mxu0 %v3682
  %v3738 = vpop.f32.mrb[0].mxu0
  %v3739 = vadd.f32 0.0, %v3738
  %v3740 = vpop.f32.mrb[0].mxu0
  %v3741 = vpop.f32.mrb[0].mxu0
  %v3742 = vadd.f32 0.0, %v3741
  %v3743 = vpop.f32.mrb[0].mxu0
  %3744 = vmatprep.mubr.bf16.mxu0 0
  %3745 = vmatmul.mubr.bf16.gmra.mrb[0].mxu0 %v3683
  %v3746 = vpop.f32.mrb[0].mxu0
  %v3747 = vadd.f32 0.0, %v3746
  %v3748 = vpop.f32.mrb[0].mxu0
  %v3749 = vpop.f32.mrb[0].mxu0
  %v3750 = vadd.f32 0.0, %v3749
  %v3751 = vpop.f32.mrb[0].mxu0
  %3752 = vmatprep.mubr.bf16.mxu0 0
  %3753 = vmatmul.mubr.bf16.gmra.mrb[0].mxu0 %v3684
  %v3754 = vpop.f32.mrb[0].mxu0
  %v3755 = vadd.f32 0.0, %v3754
  %v3756 = vpop.f32.mrb[0].mxu0
  %v3757 = vpop.f32.mrb[0].mxu0
  %v3758 = vadd.f32 0.0, %v3757
  %v3759 = vpop.f32.mrb[0].mxu0
  %3760 = vmatprep.mubr.bf16.mxu0 0
  %3761 = vmatmul.mubr.bf16.gmra.mrb[0].mxu0 %v3685
  %v3762 = vpop.f32.mrb[0].mxu0
  %v3763 = vadd.f32 0.0, %v3762
  %v3764 = vpop.f32.mrb[0].mxu0
  %v3765 = vpop.f32.mrb[0].mxu0
  %v3766 = vadd.f32 0.0, %v3765
  %v3767 = vpop.f32.mrb[0].mxu0
  %3768 = vmatprep.mubr.bf16.mxu0 0
  %3769 = vmatmul.mubr.bf16.gmra.mrb[0].mxu0 %v3686
  %v3770 = vpop.f32.mrb[0].mxu0
  %v3771 = vadd.f32 0.0, %v3770
  %v3772 = vpop.f32.mrb[0].mxu0
  %v3773 = vpop.f32.mrb[0].mxu0
  %v3774 = vadd.f32 0.0, %v3773
  %v3775 = vpop.f32.mrb[0].mxu0
  %3776 = vmatprep.mubr.bf16.mxu0 0
  %3777 = vmatmul.mubr.bf16.gmra.mrb[0].mxu0 %v3687
  %v3778 = vpop.f32.mrb[0].mxu0
  %v3779 = vadd.f32 0.0, %v3778
  %v3780 = vpop.f32.mrb[0].mxu0
  %v3781 = vpop.f32.mrb[0].mxu0
  %v3782 = vadd.f32 0.0, %v3781
  %v3783 = vpop.f32.mrb[0].mxu0
  %3784 = vdwg.mxu0
  %v3785 = vrcp.pop %v3723
  %v3786 = vrcp.pop %v3726
  %v3787 = vrcp.pop %v3731
  %v3788 = vrcp.pop %v3734
  %v3789 = vrcp.pop %v3739
  %v3790 = vrcp.pop %v3742
  %v3791 = vrcp.pop %v3747
  %v3792 = vrcp.pop %v3750
  %v3793 = vrcp.pop %v3755
  %v3794 = vrcp.pop %v3758
  %v3795 = vrcp.pop %v3763
  %v3796 = vrcp.pop %v3766
  %v3797 = vrcp.pop %v3771
  %v3798 = vrcp.pop %v3774
  %v3799 = vrcp.pop %v3779
  %v3800 = vrcp.pop %v3782
  %3802 = vset.pattern.permute.xlu0 33
  %3803 = vperm.xlu0 %3802, %v3785
  %v3804 = vpop.permute.xlu0 %3803
  %3807 = vset.pattern.permute.xlu0 33
  %3808 = vperm.xlu0 %3807, %v3786
  %v3809 = vpop.permute.xlu0 %3808
  %3812 = vset.pattern.permute.xlu0 33
  %3813 = vperm.xlu0 %3812, %v3787
  %v3814 = vpop.permute.xlu0 %3813
  %3817 = vset.pattern.permute.xlu0 33
  %3818 = vperm.xlu0 %3817, %v3788
  %v3819 = vpop.permute.xlu0 %3818
  %3822 = vset.pattern.permute.xlu0 33
  %3823 = vperm.xlu0 %3822, %v3789
  %v3824 = vpop.permute.xlu0 %3823
  %3827 = vset.pattern.permute.xlu0 33
  %3828 = vperm.xlu0 %3827, %v3790
  %v3829 = vpop.permute.xlu0 %3828
  %3832 = vset.pattern.permute.xlu0 33
  %3833 = vperm.xlu0 %3832, %v3791
  %v3834 = vpop.permute.xlu0 %3833
  %3837 = vset.pattern.permute.xlu0 33
  %3838 = vperm.xlu0 %3837, %v3792
  %v3839 = vpop.permute.xlu0 %3838
  %3842 = vset.pattern.permute.xlu0 33
  %3843 = vperm.xlu0 %3842, %v3793
  %v3844 = vpop.permute.xlu0 %3843
  %3847 = vset.pattern.permute.xlu0 33
  %3848 = vperm.xlu0 %3847, %v3794
  %v3849 = vpop.permute.xlu0 %3848
  %3852 = vset.pattern.permute.xlu0 33
  %3853 = vperm.xlu0 %3852, %v3795
  %v3854 = vpop.permute.xlu0 %3853
  %3857 = vset.pattern.permute.xlu0 33
  %3858 = vperm.xlu0 %3857, %v3796
  %v3859 = vpop.permute.xlu0 %3858
  %3862 = vset.pattern.permute.xlu0 33
  %3863 = vperm.xlu0 %3862, %v3797
  %v3864 = vpop.permute.xlu0 %3863
  %3867 = vset.pattern.permute.xlu0 33
  %3868 = vperm.xlu0 %3867, %v3798
  %v3869 = vpop.permute.xlu0 %3868
  %3872 = vset.pattern.permute.xlu0 33
  %3873 = vperm.xlu0 %3872, %v3799
  %v3874 = vpop.permute.xlu0 %3873
  %3877 = vset.pattern.permute.xlu0 33
  %3878 = vperm.xlu0 %3877, %v3800
  %v3879 = vpop.permute.xlu0 %3878
  %v3881 = vmul.f32 %v3723, %v3804
  %v3882 = vmul.f32 %v3726, %v3809
  %v3883 = vmul.f32 %v3731, %v3814
  %v3884 = vmul.f32 %v3734, %v3819
  %v3885 = vmul.f32 %v3739, %v3824
  %v3886 = vmul.f32 %v3742, %v3829
  %v3887 = vmul.f32 %v3747, %v3834
  %v3888 = vmul.f32 %v3750, %v3839
  %v3889 = vmul.f32 %v3755, %v3844
  %v3890 = vmul.f32 %v3758, %v3849
  %v3891 = vmul.f32 %v3763, %v3854
  %v3892 = vmul.f32 %v3766, %v3859
  %v3893 = vmul.f32 %v3771, %v3864
  %v3894 = vmul.f32 %v3774, %v3869
  %v3895 = vmul.f32 %v3779, %v3874
  %v3896 = vmul.f32 %v3782, %v3879
  %v3897 = vld [vmem:[#allocation2] sm:$0xff]
  %v3898 = vld [vmem:[#allocation2 + $0x8] sm:$0xff]
  %v3899 = vld [vmem:[#allocation2 + $0x10] sm:$0xff]
  %v3900 = vld [vmem:[#allocation2 + $0x18] sm:$0xff]
  %v3901 = vld [vmem:[#allocation2 + $0x20] sm:$0xff]
  %v3902 = vld [vmem:[#allocation2 + $0x28] sm:$0xff]
  %v3903 = vld [vmem:[#allocation2 + $0x30] sm:$0xff]
  %v3904 = vld [vmem:[#allocation2 + $0x38] sm:$0xff]
  %v3905 = vld [vmem:[#allocation2 + $0x40] sm:$0xff]
  %v3906 = vld [vmem:[#allocation2 + $0x48] sm:$0xff]
  %v3907 = vld [vmem:[#allocation2 + $0x50] sm:$0xff]
  %v3908 = vld [vmem:[#allocation2 + $0x58] sm:$0xff]
  %v3909 = vld [vmem:[#allocation2 + $0x60] sm:$0xff]
  %v3910 = vld [vmem:[#allocation2 + $0x68] sm:$0xff]
  %v3911 = vld [vmem:[#allocation2 + $0x70] sm:$0xff]
  %v3912 = vld [vmem:[#allocation2 + $0x78] sm:$0xff]
  %v3913 = vadd.f32 %v3897, %v3881
  %v3914 = vadd.f32 %v3898, %v3882
  %v3915 = vadd.f32 %v3899, %v3883
  %v3916 = vadd.f32 %v3900, %v3884
  %v3917 = vadd.f32 %v3901, %v3885
  %v3918 = vadd.f32 %v3902, %v3886
  %v3919 = vadd.f32 %v3903, %v3887
  %v3920 = vadd.f32 %v3904, %v3888
  %v3921 = vadd.f32 %v3905, %v3889
  %v3922 = vadd.f32 %v3906, %v3890
  %v3923 = vadd.f32 %v3907, %v3891
  %v3924 = vadd.f32 %v3908, %v3892
  %v3925 = vadd.f32 %v3909, %v3893
  %v3926 = vadd.f32 %v3910, %v3894
  %v3927 = vadd.f32 %v3911, %v3895
  %v3928 = vadd.f32 %v3912, %v3896
  %3929 = vst.msk [vmem:[#allocation2] sm:$0xff] %vm939, %v3913
  %3930 = vst.msk [vmem:[#allocation2 + $0x8] sm:$0xff] %vm939, %v3914
  %3931 = vst.msk [vmem:[#allocation2 + $0x10] sm:$0xff] %vm939, %v3915
  %3932 = vst.msk [vmem:[#allocation2 + $0x18] sm:$0xff] %vm939, %v3916
  %3933 = vst.msk [vmem:[#allocation2 + $0x20] sm:$0xff] %vm939, %v3917
  %3934 = vst.msk [vmem:[#allocation2 + $0x28] sm:$0xff] %vm939, %v3918
  %3935 = vst.msk [vmem:[#allocation2 + $0x30] sm:$0xff] %vm939, %v3919
  %3936 = vst.msk [vmem:[#allocation2 + $0x38] sm:$0xff] %vm939, %v3920
  %3937 = vst.msk [vmem:[#allocation2 + $0x40] sm:$0xff] %vm939, %v3921
  %3938 = vst.msk [vmem:[#allocation2 + $0x48] sm:$0xff] %vm939, %v3922
  %3939 = vst.msk [vmem:[#allocation2 + $0x50] sm:$0xff] %vm939, %v3923
  %3940 = vst.msk [vmem:[#allocation2 + $0x58] sm:$0xff] %vm939, %v3924
  %3941 = vst.msk [vmem:[#allocation2 + $0x60] sm:$0xff] %vm939, %v3925
  %3942 = vst.msk [vmem:[#allocation2 + $0x68] sm:$0xff] %vm939, %v3926
  %3943 = vst.msk [vmem:[#allocation2 + $0x70] sm:$0xff] %vm939, %v3927
  %3944 = vst.msk [vmem:[#allocation2 + $0x78] sm:$0xff] %vm939, %v3928
  %3945 = vset.pattern.permute.xlu0 2
  %3946 = vperm.xlu0 %3945, %v2881
  %v3947 = vpop.permute.xlu0 %3946
  %3949 = vset.pattern.permute.xlu0 2
  %3950 = vperm.xlu0 %3949, %v2886
  %v3951 = vpop.permute.xlu0 %3950
  %3953 = vset.pattern.permute.xlu0 2
  %3954 = vperm.xlu0 %3953, %v2891
  %v3955 = vpop.permute.xlu0 %3954
  %3957 = vset.pattern.permute.xlu0 2
  %3958 = vperm.xlu0 %3957, %v2896
  %v3959 = vpop.permute.xlu0 %3958
  %3961 = vset.pattern.permute.xlu0 2
  %3962 = vperm.xlu0 %3961, %v2901
  %v3963 = vpop.permute.xlu0 %3962
  %3965 = vset.pattern.permute.xlu0 2
  %3966 = vperm.xlu0 %3965, %v2906
  %v3967 = vpop.permute.xlu0 %3966
  %3969 = vset.pattern.permute.xlu0 2
  %3970 = vperm.xlu0 %3969, %v2911
  %v3971 = vpop.permute.xlu0 %3970
  %3973 = vset.pattern.permute.xlu0 2
  %3974 = vperm.xlu0 %3973, %v2916
  %v3975 = vpop.permute.xlu0 %3974
  %3977 = vset.pattern.permute.xlu0 2
  %3978 = vperm.xlu0 %3977, %v2921
  %v3979 = vpop.permute.xlu0 %3978
  %3981 = vset.pattern.permute.xlu0 2
  %3982 = vperm.xlu0 %3981, %v2926
  %v3983 = vpop.permute.xlu0 %3982
  %3985 = vset.pattern.permute.xlu0 2
  %3986 = vperm.xlu0 %3985, %v2931
  %v3987 = vpop.permute.xlu0 %3986
  %3989 = vset.pattern.permute.xlu0 2
  %3990 = vperm.xlu0 %3989, %v2936
  %v3991 = vpop.permute.xlu0 %3990
  %3993 = vset.pattern.permute.xlu0 2
  %3994 = vperm.xlu0 %3993, %v2941
  %v3995 = vpop.permute.xlu0 %3994
  %3997 = vset.pattern.permute.xlu0 2
  %3998 = vperm.xlu0 %3997, %v2946
  %v3999 = vpop.permute.xlu0 %3998
  %4001 = vset.pattern.permute.xlu0 2
  %4002 = vperm.xlu0 %4001, %v2951
  %v4003 = vpop.permute.xlu0 %4002
  %4005 = vset.pattern.permute.xlu0 2
  %4006 = vperm.xlu0 %4005, %v2956
  %v4007 = vpop.permute.xlu0 %4006
  %v4009 = vlaneseq
  %v4010 = vshrl.u32 %v4009, 7
  %v4011 = vsub.s32 2, %v4010
  %v4012 = vrot.slane %v2808, %v4011
  %v4013 = vadd.f32 %v3947, %v4012
  %v4014 = vadd.f32 %v3951, %v4012
  %v4015 = vadd.f32 %v3955, %v4012
  %v4016 = vadd.f32 %v3959, %v4012
  %v4017 = vadd.f32 %v3963, %v4012
  %v4018 = vadd.f32 %v3967, %v4012
  %v4019 = vadd.f32 %v3971, %v4012
  %v4020 = vadd.f32 %v3975, %v4012
  %v4021 = vadd.f32 %v3979, %v4012
  %v4022 = vadd.f32 %v3983, %v4012
  %v4023 = vadd.f32 %v3987, %v4012
  %v4024 = vadd.f32 %v3991, %v4012
  %v4025 = vadd.f32 %v3995, %v4012
  %v4026 = vadd.f32 %v3999, %v4012
  %v4027 = vadd.f32 %v4003, %v4012
  %v4028 = vadd.f32 %v4007, %v4012
  %v4029 = vmul.f32 %v4013, 0.2
  %v4030 = vmul.f32 %v4014, 0.2
  %v4031 = vmul.f32 %v4015, 0.2
  %v4032 = vmul.f32 %v4016, 0.2
  %v4033 = vmul.f32 %v4017, 0.2
  %v4034 = vmul.f32 %v4018, 0.2
  %v4035 = vmul.f32 %v4019, 0.2
  %v4036 = vmul.f32 %v4020, 0.2
  %v4037 = vmul.f32 %v4021, 0.2
  %v4038 = vmul.f32 %v4022, 0.2
  %v4039 = vmul.f32 %v4023, 0.2
  %v4040 = vmul.f32 %v4024, 0.2
  %v4041 = vmul.f32 %v4025, 0.2
  %v4042 = vmul.f32 %v4026, 0.2
  %v4043 = vmul.f32 %v4027, 0.2
  %v4044 = vmul.f32 %v4028, 0.2
  %v4045 = vmax.f32 %v4013, %v4029
  %v4046 = vmax.f32 %v4014, %v4030
  %v4047 = vmax.f32 %v4015, %v4031
  %v4048 = vmax.f32 %v4016, %v4032
  %v4049 = vmax.f32 %v4017, %v4033
  %v4050 = vmax.f32 %v4018, %v4034
  %v4051 = vmax.f32 %v4019, %v4035
  %v4052 = vmax.f32 %v4020, %v4036
  %v4053 = vmax.f32 %v4021, %v4037
  %v4054 = vmax.f32 %v4022, %v4038
  %v4055 = vmax.f32 %v4023, %v4039
  %v4056 = vmax.f32 %v4024, %v4040
  %v4057 = vmax.f32 %v4025, %v4041
  %v4058 = vmax.f32 %v4026, %v4042
  %v4059 = vmax.f32 %v4027, %v4043
  %v4060 = vmax.f32 %v4028, %v4044
  %v4061 = vadd.f32 %v4045, %v18
  %v4062 = vadd.f32 %v4046, %v19
  %v4063 = vadd.f32 %v4047, %v20
  %v4064 = vadd.f32 %v4048, %v21
  %v4065 = vadd.f32 %v4049, %v22
  %v4066 = vadd.f32 %v4050, %v23
  %v4067 = vadd.f32 %v4051, %v24
  %v4068 = vadd.f32 %v4052, %v25
  %v4069 = vadd.f32 %v4053, %v26
  %v4070 = vadd.f32 %v4054, %v27
  %v4071 = vadd.f32 %v4055, %v28
  %v4072 = vadd.f32 %v4056, %v29
  %v4073 = vadd.f32 %v4057, %v30
  %v4074 = vadd.f32 %v4058, %v31
  %v4075 = vadd.f32 %v4059, %v32
  %v4076 = vadd.f32 %v4060, %v33
  %4077 = vmax.xlane.f32.xlu0 %v4061
  %v4078 = vpop.xlane.xlu0 %4077
  %4079 = vmax.xlane.f32.xlu0 %v4062
  %v4080 = vpop.xlane.xlu0 %4079
  %4081 = vmax.xlane.f32.xlu0 %v4063
  %v4082 = vpop.xlane.xlu0 %4081
  %4083 = vmax.xlane.f32.xlu0 %v4064
  %v4084 = vpop.xlane.xlu0 %4083
  %4085 = vmax.xlane.f32.xlu0 %v4065
  %v4086 = vpop.xlane.xlu0 %4085
  %4087 = vmax.xlane.f32.xlu0 %v4066
  %v4088 = vpop.xlane.xlu0 %4087
  %4089 = vmax.xlane.f32.xlu0 %v4067
  %v4090 = vpop.xlane.xlu0 %4089
  %4091 = vmax.xlane.f32.xlu0 %v4068
  %v4092 = vpop.xlane.xlu0 %4091
  %4093 = vmax.xlane.f32.xlu0 %v4069
  %v4094 = vpop.xlane.xlu0 %4093
  %4095 = vmax.xlane.f32.xlu0 %v4070
  %v4096 = vpop.xlane.xlu0 %4095
  %4097 = vmax.xlane.f32.xlu0 %v4071
  %v4098 = vpop.xlane.xlu0 %4097
  %4099 = vmax.xlane.f32.xlu0 %v4072
  %v4100 = vpop.xlane.xlu0 %4099
  %4101 = vmax.xlane.f32.xlu0 %v4073
  %v4102 = vpop.xlane.xlu0 %4101
  %4103 = vmax.xlane.f32.xlu0 %v4074
  %v4104 = vpop.xlane.xlu0 %4103
  %4105 = vmax.xlane.f32.xlu0 %v4075
  %v4106 = vpop.xlane.xlu0 %4105
  %4107 = vmax.xlane.f32.xlu0 %v4076
  %v4108 = vpop.xlane.xlu0 %4107
  %v4109 = vsub.f32 %v4061, %v4078
  %v4110 = vsub.f32 %v4062, %v4080
  %v4111 = vsub.f32 %v4063, %v4082
  %v4112 = vsub.f32 %v4064, %v4084
  %v4113 = vsub.f32 %v4065, %v4086
  %v4114 = vsub.f32 %v4066, %v4088
  %v4115 = vsub.f32 %v4067, %v4090
  %v4116 = vsub.f32 %v4068, %v4092
  %v4117 = vsub.f32 %v4069, %v4094
  %v4118 = vsub.f32 %v4070, %v4096
  %v4119 = vsub.f32 %v4071, %v4098
  %v4120 = vsub.f32 %v4072, %v4100
  %v4121 = vsub.f32 %v4073, %v4102
  %v4122 = vsub.f32 %v4074, %v4104
  %v4123 = vsub.f32 %v4075, %v4106
  %v4124 = vsub.f32 %v4076, %v4108
  %v4125 = vmul.f32 %v4109, 1.442695
  %v4126 = vpow.pop %v4125
  %v4127 = vmul.f32 %v4110, 1.442695
  %v4128 = vpow.pop %v4127
  %v4129 = vmul.f32 %v4111, 1.442695
  %v4130 = vpow.pop %v4129
  %v4131 = vmul.f32 %v4112, 1.442695
  %v4132 = vpow.pop %v4131
  %v4133 = vmul.f32 %v4113, 1.442695
  %v4134 = vpow.pop %v4133
  %v4135 = vmul.f32 %v4114, 1.442695
  %v4136 = vpow.pop %v4135
  %v4137 = vmul.f32 %v4115, 1.442695
  %v4138 = vpow.pop %v4137
  %v4139 = vmul.f32 %v4116, 1.442695
  %v4140 = vpow.pop %v4139
  %v4141 = vmul.f32 %v4117, 1.442695
  %v4142 = vpow.pop %v4141
  %v4143 = vmul.f32 %v4118, 1.442695
  %v4144 = vpow.pop %v4143
  %v4145 = vmul.f32 %v4119, 1.442695
  %v4146 = vpow.pop %v4145
  %v4147 = vmul.f32 %v4120, 1.442695
  %v4148 = vpow.pop %v4147
  %v4149 = vmul.f32 %v4121, 1.442695
  %v4150 = vpow.pop %v4149
  %v4151 = vmul.f32 %v4122, 1.442695
  %v4152 = vpow.pop %v4151
  %v4153 = vmul.f32 %v4123, 1.442695
  %v4154 = vpow.pop %v4153
  %v4155 = vmul.f32 %v4124, 1.442695
  %v4156 = vpow.pop %v4155
  %v4157 = vmul.f32 %v2626, %v1676
  %v4158 = vmul.f32 %v2629, %v1676
  %v4159 = vmul.f32 %v2634, %v1676
  %v4160 = vmul.f32 %v2637, %v1676
  %v4161 = vmul.f32 %v2642, %v1676
  %v4162 = vmul.f32 %v2645, %v1676
  %v4163 = vmul.f32 %v2650, %v1676
  %v4164 = vmul.f32 %v2653, %v1676
  %v4165 = vmul.f32 %v2658, %v1676
  %v4166 = vmul.f32 %v2661, %v1676
  %v4167 = vmul.f32 %v2666, %v1676
  %v4168 = vmul.f32 %v2669, %v1676
  %v4169 = vmul.f32 %v2674, %v1676
  %v4170 = vmul.f32 %v2677, %v1676
  %v4171 = vmul.f32 %v2682, %v1676
  %v4172 = vmul.f32 %v2685, %v1676
  %v4173 = vpack.c.bf16 %v4158, %v4157
  %v4174 = vpack.c.bf16 %v4160, %v4159
  %v4175 = vpack.c.bf16 %v4162, %v4161
  %v4176 = vpack.c.bf16 %v4164, %v4163
  %v4177 = vpack.c.bf16 %v4166, %v4165
  %v4178 = vpack.c.bf16 %v4168, %v4167
  %v4179 = vpack.c.bf16 %v4170, %v4169
  %v4180 = vpack.c.bf16 %v4172, %v4171
  %v4181 = vpack.c.bf16 %v4128, %v4126
  %v4182 = vpack.c.bf16 %v4132, %v4130
  %v4183 = vpack.c.bf16 %v4136, %v4134
  %v4184 = vpack.c.bf16 %v4140, %v4138
  %v4185 = vpack.c.bf16 %v4144, %v4142
  %v4186 = vpack.c.bf16 %v4148, %v4146
  %v4187 = vpack.c.bf16 %v4152, %v4150
  %v4188 = vpack.c.bf16 %v4156, %v4154
  %4189 = vmatprep.subr.bf16.mxu0 0
  %4190 = vmatpush1.bf16.msra.mxu0 %v4173
  %4191 = vmatprep.subr.bf16.mxu0 0
  %4192 = vmatpush1.bf16.msra.mxu0 %v4174
  %4193 = vmatprep.subr.bf16.mxu0 0
  %4194 = vmatpush1.bf16.msra.mxu0 %v4175
  %4195 = vmatprep.subr.bf16.mxu0 0
  %4196 = vmatpush1.bf16.msra.mxu0 %v4176
  %4197 = vmatprep.subr.bf16.mxu0 0
  %4198 = vmatpush1.bf16.msra.mxu0 %v4177
  %4199 = vmatprep.subr.bf16.mxu0 0
  %4200 = vmatpush1.bf16.msra.mxu0 %v4178
  %4201 = vmatprep.subr.bf16.mxu0 0
  %4202 = vmatpush1.bf16.msra.mxu0 %v4179
  %4203 = vmatprep.subr.bf16.mxu0 0
  %4204 = vmatpush1.bf16.msra.mxu0 %v4180
  %4205 = vmatprep.subr.bf16.mxu0 0
  %4206 = vmatpush1.bf16.msra.mxu0 0
  %4207 = vmatprep.subr.bf16.mxu0 0
  %4208 = vmatpush1.bf16.msra.mxu0 0
  %4209 = vmatprep.subr.bf16.mxu0 0
  %4210 = vmatpush1.bf16.msra.mxu0 0
  %4211 = vmatprep.subr.bf16.mxu0 0
  %4212 = vmatpush1.bf16.msra.mxu0 0
  %4213 = vmatprep.subr.bf16.mxu0 0
  %4214 = vmatpush1.bf16.msra.mxu0 0
  %4215 = vmatprep.subr.bf16.mxu0 0
  %4216 = vmatpush1.bf16.msra.mxu0 0
  %4217 = vmatprep.subr.bf16.mxu0 0
  %4218 = vmatpush1.bf16.msra.mxu0 0
  %4219 = vmatprep.subr.bf16.mxu0 0
  %4220 = vmatpush1.bf16.msra.mxu0 0
  %4221 = vmatprep.mubr.bf16.mxu0 0
  %4222 = vmatmul.mubr.bf16.gmra.mrb[0].mxu0 %v4181
  %v4223 = vpop.f32.mrb[0].mxu0
  %v4224 = vadd.f32 0.0, %v4223
  %v4225 = vpop.f32.mrb[0].mxu0
  %v4226 = vpop.f32.mrb[0].mxu0
  %v4227 = vadd.f32 0.0, %v4226
  %v4228 = vpop.f32.mrb[0].mxu0
  %4229 = vmatprep.mubr.bf16.mxu0 0
  %4230 = vmatmul.mubr.bf16.gmra.mrb[0].mxu0 %v4182
  %v4231 = vpop.f32.mrb[0].mxu0
  %v4232 = vadd.f32 0.0, %v4231
  %v4233 = vpop.f32.mrb[0].mxu0
  %v4234 = vpop.f32.mrb[0].mxu0
  %v4235 = vadd.f32 0.0, %v4234
  %v4236 = vpop.f32.mrb[0].mxu0
  %4237 = vmatprep.mubr.bf16.mxu0 0
  %4238 = vmatmul.mubr.bf16.gmra.mrb[0].mxu0 %v4183
  %v4239 = vpop.f32.mrb[0].mxu0
  %v4240 = vadd.f32 0.0, %v4239
  %v4241 = vpop.f32.mrb[0].mxu0
  %v4242 = vpop.f32.mrb[0].mxu0
  %v4243 = vadd.f32 0.0, %v4242
  %v4244 = vpop.f32.mrb[0].mxu0
  %4245 = vmatprep.mubr.bf16.mxu0 0
  %4246 = vmatmul.mubr.bf16.gmra.mrb[0].mxu0 %v4184
  %v4247 = vpop.f32.mrb[0].mxu0
  %v4248 = vadd.f32 0.0, %v4247
  %v4249 = vpop.f32.mrb[0].mxu0
  %v4250 = vpop.f32.mrb[0].mxu0
  %v4251 = vadd.f32 0.0, %v4250
  %v4252 = vpop.f32.mrb[0].mxu0
  %4253 = vmatprep.mubr.bf16.mxu0 0
  %4254 = vmatmul.mubr.bf16.gmra.mrb[0].mxu0 %v4185
  %v4255 = vpop.f32.mrb[0].mxu0
  %v4256 = vadd.f32 0.0, %v4255
  %v4257 = vpop.f32.mrb[0].mxu0
  %v4258 = vpop.f32.mrb[0].mxu0
  %v4259 = vadd.f32 0.0, %v4258
  %v4260 = vpop.f32.mrb[0].mxu0
  %4261 = vmatprep.mubr.bf16.mxu0 0
  %4262 = vmatmul.mubr.bf16.gmra.mrb[0].mxu0 %v4186
  %v4263 = vpop.f32.mrb[0].mxu0
  %v4264 = vadd.f32 0.0, %v4263
  %v4265 = vpop.f32.mrb[0].mxu0
  %v4266 = vpop.f32.mrb[0].mxu0
  %v4267 = vadd.f32 0.0, %v4266
  %v4268 = vpop.f32.mrb[0].mxu0
  %4269 = vmatprep.mubr.bf16.mxu0 0
  %4270 = vmatmul.mubr.bf16.gmra.mrb[0].mxu0 %v4187
  %v4271 = vpop.f32.mrb[0].mxu0
  %v4272 = vadd.f32 0.0, %v4271
  %v4273 = vpop.f32.mrb[0].mxu0
  %v4274 = vpop.f32.mrb[0].mxu0
  %v4275 = vadd.f32 0.0, %v4274
  %v4276 = vpop.f32.mrb[0].mxu0
  %4277 = vmatprep.mubr.bf16.mxu0 0
  %4278 = vmatmul.mubr.bf16.gmra.mrb[0].mxu0 %v4188
  %v4279 = vpop.f32.mrb[0].mxu0
  %v4280 = vadd.f32 0.0, %v4279
  %v4281 = vpop.f32.mrb[0].mxu0
  %v4282 = vpop.f32.mrb[0].mxu0
  %v4283 = vadd.f32 0.0, %v4282
  %v4284 = vpop.f32.mrb[0].mxu0
  %4285 = vdwg.mxu0
  %v4286 = vrcp.pop %v4224
  %v4287 = vrcp.pop %v4227
  %v4288 = vrcp.pop %v4232
  %v4289 = vrcp.pop %v4235
  %v4290 = vrcp.pop %v4240
  %v4291 = vrcp.pop %v4243
  %v4292 = vrcp.pop %v4248
  %v4293 = vrcp.pop %v4251
  %v4294 = vrcp.pop %v4256
  %v4295 = vrcp.pop %v4259
  %v4296 = vrcp.pop %v4264
  %v4297 = vrcp.pop %v4267
  %v4298 = vrcp.pop %v4272
  %v4299 = vrcp.pop %v4275
  %v4300 = vrcp.pop %v4280
  %v4301 = vrcp.pop %v4283
  %4303 = vset.pattern.permute.xlu0 34
  %4304 = vperm.xlu0 %4303, %v4286
  %v4305 = vpop.permute.xlu0 %4304
  %4308 = vset.pattern.permute.xlu0 34
  %4309 = vperm.xlu0 %4308, %v4287
  %v4310 = vpop.permute.xlu0 %4309
  %4313 = vset.pattern.permute.xlu0 34
  %4314 = vperm.xlu0 %4313, %v4288
  %v4315 = vpop.permute.xlu0 %4314
  %4318 = vset.pattern.permute.xlu0 34
  %4319 = vperm.xlu0 %4318, %v4289
  %v4320 = vpop.permute.xlu0 %4319
  %4323 = vset.pattern.permute.xlu0 34
  %4324 = vperm.xlu0 %4323, %v4290
  %v4325 = vpop.permute.xlu0 %4324
  %4328 = vset.pattern.permute.xlu0 34
  %4329 = vperm.xlu0 %4328, %v4291
  %v4330 = vpop.permute.xlu0 %4329
  %4333 = vset.pattern.permute.xlu0 34
  %4334 = vperm.xlu0 %4333, %v4292
  %v4335 = vpop.permute.xlu0 %4334
  %4338 = vset.pattern.permute.xlu0 34
  %4339 = vperm.xlu0 %4338, %v4293
  %v4340 = vpop.permute.xlu0 %4339
  %4343 = vset.pattern.permute.xlu0 34
  %4344 = vperm.xlu0 %4343, %v4294
  %v4345 = vpop.permute.xlu0 %4344
  %4348 = vset.pattern.permute.xlu0 34
  %4349 = vperm.xlu0 %4348, %v4295
  %v4350 = vpop.permute.xlu0 %4349
  %4353 = vset.pattern.permute.xlu0 34
  %4354 = vperm.xlu0 %4353, %v4296
  %v4355 = vpop.permute.xlu0 %4354
  %4358 = vset.pattern.permute.xlu0 34
  %4359 = vperm.xlu0 %4358, %v4297
  %v4360 = vpop.permute.xlu0 %4359
  %4363 = vset.pattern.permute.xlu0 34
  %4364 = vperm.xlu0 %4363, %v4298
  %v4365 = vpop.permute.xlu0 %4364
  %4368 = vset.pattern.permute.xlu0 34
  %4369 = vperm.xlu0 %4368, %v4299
  %v4370 = vpop.permute.xlu0 %4369
  %4373 = vset.pattern.permute.xlu0 34
  %4374 = vperm.xlu0 %4373, %v4300
  %v4375 = vpop.permute.xlu0 %4374
  %4378 = vset.pattern.permute.xlu0 34
  %4379 = vperm.xlu0 %4378, %v4301
  %v4380 = vpop.permute.xlu0 %4379
  %v4382 = vmul.f32 %v4224, %v4305
  %v4383 = vmul.f32 %v4227, %v4310
  %v4384 = vmul.f32 %v4232, %v4315
  %v4385 = vmul.f32 %v4235, %v4320
  %v4386 = vmul.f32 %v4240, %v4325
  %v4387 = vmul.f32 %v4243, %v4330
  %v4388 = vmul.f32 %v4248, %v4335
  %v4389 = vmul.f32 %v4251, %v4340
  %v4390 = vmul.f32 %v4256, %v4345
  %v4391 = vmul.f32 %v4259, %v4350
  %v4392 = vmul.f32 %v4264, %v4355
  %v4393 = vmul.f32 %v4267, %v4360
  %v4394 = vmul.f32 %v4272, %v4365
  %v4395 = vmul.f32 %v4275, %v4370
  %v4396 = vmul.f32 %v4280, %v4375
  %v4397 = vmul.f32 %v4283, %v4380
  %v4398 = vld [vmem:[#allocation2] sm:$0xff]
  %v4399 = vld [vmem:[#allocation2 + $0x8] sm:$0xff]
  %v4400 = vld [vmem:[#allocation2 + $0x10] sm:$0xff]
  %v4401 = vld [vmem:[#allocation2 + $0x18] sm:$0xff]
  %v4402 = vld [vmem:[#allocation2 + $0x20] sm:$0xff]
  %v4403 = vld [vmem:[#allocation2 + $0x28] sm:$0xff]
  %v4404 = vld [vmem:[#allocation2 + $0x30] sm:$0xff]
  %v4405 = vld [vmem:[#allocation2 + $0x38] sm:$0xff]
  %v4406 = vld [vmem:[#allocation2 + $0x40] sm:$0xff]
  %v4407 = vld [vmem:[#allocation2 + $0x48] sm:$0xff]
  %v4408 = vld [vmem:[#allocation2 + $0x50] sm:$0xff]
  %v4409 = vld [vmem:[#allocation2 + $0x58] sm:$0xff]
  %v4410 = vld [vmem:[#allocation2 + $0x60] sm:$0xff]
  %v4411 = vld [vmem:[#allocation2 + $0x68] sm:$0xff]
  %v4412 = vld [vmem:[#allocation2 + $0x70] sm:$0xff]
  %v4413 = vld [vmem:[#allocation2 + $0x78] sm:$0xff]
  %v4414 = vadd.f32 %v4398, %v4382
  %v4415 = vadd.f32 %v4399, %v4383
  %v4416 = vadd.f32 %v4400, %v4384
  %v4417 = vadd.f32 %v4401, %v4385
  %v4418 = vadd.f32 %v4402, %v4386
  %v4419 = vadd.f32 %v4403, %v4387
  %v4420 = vadd.f32 %v4404, %v4388
  %v4421 = vadd.f32 %v4405, %v4389
  %v4422 = vadd.f32 %v4406, %v4390
  %v4423 = vadd.f32 %v4407, %v4391
  %v4424 = vadd.f32 %v4408, %v4392
  %v4425 = vadd.f32 %v4409, %v4393
  %v4426 = vadd.f32 %v4410, %v4394
  %v4427 = vadd.f32 %v4411, %v4395
  %v4428 = vadd.f32 %v4412, %v4396
  %v4429 = vadd.f32 %v4413, %v4397
  %4430 = vst.msk [vmem:[#allocation2] sm:$0xff] %vm939, %v4414
  %4431 = vst.msk [vmem:[#allocation2 + $0x8] sm:$0xff] %vm939, %v4415
  %4432 = vst.msk [vmem:[#allocation2 + $0x10] sm:$0xff] %vm939, %v4416
  %4433 = vst.msk [vmem:[#allocation2 + $0x18] sm:$0xff] %vm939, %v4417
  %4434 = vst.msk [vmem:[#allocation2 + $0x20] sm:$0xff] %vm939, %v4418
  %4435 = vst.msk [vmem:[#allocation2 + $0x28] sm:$0xff] %vm939, %v4419
  %4436 = vst.msk [vmem:[#allocation2 + $0x30] sm:$0xff] %vm939, %v4420
  %4437 = vst.msk [vmem:[#allocation2 + $0x38] sm:$0xff] %vm939, %v4421
  %4438 = vst.msk [vmem:[#allocation2 + $0x40] sm:$0xff] %vm939, %v4422
  %4439 = vst.msk [vmem:[#allocation2 + $0x48] sm:$0xff] %vm939, %v4423
  %4440 = vst.msk [vmem:[#allocation2 + $0x50] sm:$0xff] %vm939, %v4424
  %4441 = vst.msk [vmem:[#allocation2 + $0x58] sm:$0xff] %vm939, %v4425
  %4442 = vst.msk [vmem:[#allocation2 + $0x60] sm:$0xff] %vm939, %v4426
  %4443 = vst.msk [vmem:[#allocation2 + $0x68] sm:$0xff] %vm939, %v4427
  %4444 = vst.msk [vmem:[#allocation2 + $0x70] sm:$0xff] %vm939, %v4428
  %4445 = vst.msk [vmem:[#allocation2 + $0x78] sm:$0xff] %vm939, %v4429
  %4446 = vset.pattern.permute.xlu0 3
  %4447 = vperm.xlu0 %4446, %v2881
  %v4448 = vpop.permute.xlu0 %4447
  %4450 = vset.pattern.permute.xlu0 3
  %4451 = vperm.xlu0 %4450, %v2886
  %v4452 = vpop.permute.xlu0 %4451
  %4454 = vset.pattern.permute.xlu0 3
  %4455 = vperm.xlu0 %4454, %v2891
  %v4456 = vpop.permute.xlu0 %4455
  %4458 = vset.pattern.permute.xlu0 3
  %4459 = vperm.xlu0 %4458, %v2896
  %v4460 = vpop.permute.xlu0 %4459
  %4462 = vset.pattern.permute.xlu0 3
  %4463 = vperm.xlu0 %4462, %v2901
  %v4464 = vpop.permute.xlu0 %4463
  %4466 = vset.pattern.permute.xlu0 3
  %4467 = vperm.xlu0 %4466, %v2906
  %v4468 = vpop.permute.xlu0 %4467
  %4470 = vset.pattern.permute.xlu0 3
  %4471 = vperm.xlu0 %4470, %v2911
  %v4472 = vpop.permute.xlu0 %4471
  %4474 = vset.pattern.permute.xlu0 3
  %4475 = vperm.xlu0 %4474, %v2916
  %v4476 = vpop.permute.xlu0 %4475
  %4478 = vset.pattern.permute.xlu0 3
  %4479 = vperm.xlu0 %4478, %v2921
  %v4480 = vpop.permute.xlu0 %4479
  %4482 = vset.pattern.permute.xlu0 3
  %4483 = vperm.xlu0 %4482, %v2926
  %v4484 = vpop.permute.xlu0 %4483
  %4486 = vset.pattern.permute.xlu0 3
  %4487 = vperm.xlu0 %4486, %v2931
  %v4488 = vpop.permute.xlu0 %4487
  %4490 = vset.pattern.permute.xlu0 3
  %4491 = vperm.xlu0 %4490, %v2936
  %v4492 = vpop.permute.xlu0 %4491
  %4494 = vset.pattern.permute.xlu0 3
  %4495 = vperm.xlu0 %4494, %v2941
  %v4496 = vpop.permute.xlu0 %4495
  %4498 = vset.pattern.permute.xlu0 3
  %4499 = vperm.xlu0 %4498, %v2946
  %v4500 = vpop.permute.xlu0 %4499
  %4502 = vset.pattern.permute.xlu0 3
  %4503 = vperm.xlu0 %4502, %v2951
  %v4504 = vpop.permute.xlu0 %4503
  %4506 = vset.pattern.permute.xlu0 3
  %4507 = vperm.xlu0 %4506, %v2956
  %v4508 = vpop.permute.xlu0 %4507
  %v4510 = vlaneseq
  %v4511 = vshrl.u32 %v4510, 7
  %v4512 = vsub.s32 3, %v4511
  %v4513 = vrot.slane %v2808, %v4512
  %v4514 = vadd.f32 %v4448, %v4513
  %v4515 = vadd.f32 %v4452, %v4513
  %v4516 = vadd.f32 %v4456, %v4513
  %v4517 = vadd.f32 %v4460, %v4513
  %v4518 = vadd.f32 %v4464, %v4513
  %v4519 = vadd.f32 %v4468, %v4513
  %v4520 = vadd.f32 %v4472, %v4513
  %v4521 = vadd.f32 %v4476, %v4513
  %v4522 = vadd.f32 %v4480, %v4513
  %v4523 = vadd.f32 %v4484, %v4513
  %v4524 = vadd.f32 %v4488, %v4513
  %v4525 = vadd.f32 %v4492, %v4513
  %v4526 = vadd.f32 %v4496, %v4513
  %v4527 = vadd.f32 %v4500, %v4513
  %v4528 = vadd.f32 %v4504, %v4513
  %v4529 = vadd.f32 %v4508, %v4513
  %v4530 = vmul.f32 %v4514, 0.2
  %v4531 = vmul.f32 %v4515, 0.2
  %v4532 = vmul.f32 %v4516, 0.2
  %v4533 = vmul.f32 %v4517, 0.2
  %v4534 = vmul.f32 %v4518, 0.2
  %v4535 = vmul.f32 %v4519, 0.2
  %v4536 = vmul.f32 %v4520, 0.2
  %v4537 = vmul.f32 %v4521, 0.2
  %v4538 = vmul.f32 %v4522, 0.2
  %v4539 = vmul.f32 %v4523, 0.2
  %v4540 = vmul.f32 %v4524, 0.2
  %v4541 = vmul.f32 %v4525, 0.2
  %v4542 = vmul.f32 %v4526, 0.2
  %v4543 = vmul.f32 %v4527, 0.2
  %v4544 = vmul.f32 %v4528, 0.2
  %v4545 = vmul.f32 %v4529, 0.2
  %v4546 = vmax.f32 %v4514, %v4530
  %v4547 = vmax.f32 %v4515, %v4531
  %v4548 = vmax.f32 %v4516, %v4532
  %v4549 = vmax.f32 %v4517, %v4533
  %v4550 = vmax.f32 %v4518, %v4534
  %v4551 = vmax.f32 %v4519, %v4535
  %v4552 = vmax.f32 %v4520, %v4536
  %v4553 = vmax.f32 %v4521, %v4537
  %v4554 = vmax.f32 %v4522, %v4538
  %v4555 = vmax.f32 %v4523, %v4539
  %v4556 = vmax.f32 %v4524, %v4540
  %v4557 = vmax.f32 %v4525, %v4541
  %v4558 = vmax.f32 %v4526, %v4542
  %v4559 = vmax.f32 %v4527, %v4543
  %v4560 = vmax.f32 %v4528, %v4544
  %v4561 = vmax.f32 %v4529, %v4545
  %v4562 = vadd.f32 %v4546, %v18
  %v4563 = vadd.f32 %v4547, %v19
  %v4564 = vadd.f32 %v4548, %v20
  %v4565 = vadd.f32 %v4549, %v21
  %v4566 = vadd.f32 %v4550, %v22
  %v4567 = vadd.f32 %v4551, %v23
  %v4568 = vadd.f32 %v4552, %v24
  %v4569 = vadd.f32 %v4553, %v25
  %v4570 = vadd.f32 %v4554, %v26
  %v4571 = vadd.f32 %v4555, %v27
  %v4572 = vadd.f32 %v4556, %v28
  %v4573 = vadd.f32 %v4557, %v29
  %v4574 = vadd.f32 %v4558, %v30
  %v4575 = vadd.f32 %v4559, %v31
  %v4576 = vadd.f32 %v4560, %v32
  %v4577 = vadd.f32 %v4561, %v33
  %4578 = vmax.xlane.f32.xlu0 %v4562
  %v4579 = vpop.xlane.xlu0 %4578
  %4580 = vmax.xlane.f32.xlu0 %v4563
  %v4581 = vpop.xlane.xlu0 %4580
  %4582 = vmax.xlane.f32.xlu0 %v4564
  %v4583 = vpop.xlane.xlu0 %4582
  %4584 = vmax.xlane.f32.xlu0 %v4565
  %v4585 = vpop.xlane.xlu0 %4584
  %4586 = vmax.xlane.f32.xlu0 %v4566
  %v4587 = vpop.xlane.xlu0 %4586
  %4588 = vmax.xlane.f32.xlu0 %v4567
  %v4589 = vpop.xlane.xlu0 %4588
  %4590 = vmax.xlane.f32.xlu0 %v4568
  %v4591 = vpop.xlane.xlu0 %4590
  %4592 = vmax.xlane.f32.xlu0 %v4569
  %v4593 = vpop.xlane.xlu0 %4592
  %4594 = vmax.xlane.f32.xlu0 %v4570
  %v4595 = vpop.xlane.xlu0 %4594
  %4596 = vmax.xlane.f32.xlu0 %v4571
  %v4597 = vpop.xlane.xlu0 %4596
  %4598 = vmax.xlane.f32.xlu0 %v4572
  %v4599 = vpop.xlane.xlu0 %4598
  %4600 = vmax.xlane.f32.xlu0 %v4573
  %v4601 = vpop.xlane.xlu0 %4600
  %4602 = vmax.xlane.f32.xlu0 %v4574
  %v4603 = vpop.xlane.xlu0 %4602
  %4604 = vmax.xlane.f32.xlu0 %v4575
  %v4605 = vpop.xlane.xlu0 %4604
  %4606 = vmax.xlane.f32.xlu0 %v4576
  %v4607 = vpop.xlane.xlu0 %4606
  %4608 = vmax.xlane.f32.xlu0 %v4577
  %v4609 = vpop.xlane.xlu0 %4608
  %v4610 = vsub.f32 %v4562, %v4579
  %v4611 = vsub.f32 %v4563, %v4581
  %v4612 = vsub.f32 %v4564, %v4583
  %v4613 = vsub.f32 %v4565, %v4585
  %v4614 = vsub.f32 %v4566, %v4587
  %v4615 = vsub.f32 %v4567, %v4589
  %v4616 = vsub.f32 %v4568, %v4591
  %v4617 = vsub.f32 %v4569, %v4593
  %v4618 = vsub.f32 %v4570, %v4595
  %v4619 = vsub.f32 %v4571, %v4597
  %v4620 = vsub.f32 %v4572, %v4599
  %v4621 = vsub.f32 %v4573, %v4601
  %v4622 = vsub.f32 %v4574, %v4603
  %v4623 = vsub.f32 %v4575, %v4605
  %v4624 = vsub.f32 %v4576, %v4607
  %v4625 = vsub.f32 %v4577, %v4609
  %v4626 = vmul.f32 %v4610, 1.442695
  %v4627 = vpow.pop %v4626
  %v4628 = vmul.f32 %v4611, 1.442695
  %v4629 = vpow.pop %v4628
  %v4630 = vmul.f32 %v4612, 1.442695
  %v4631 = vpow.pop %v4630
  %v4632 = vmul.f32 %v4613, 1.442695
  %v4633 = vpow.pop %v4632
  %v4634 = vmul.f32 %v4614, 1.442695
  %v4635 = vpow.pop %v4634
  %v4636 = vmul.f32 %v4615, 1.442695
  %v4637 = vpow.pop %v4636
  %v4638 = vmul.f32 %v4616, 1.442695
  %v4639 = vpow.pop %v4638
  %v4640 = vmul.f32 %v4617, 1.442695
  %v4641 = vpow.pop %v4640
  %v4642 = vmul.f32 %v4618, 1.442695
  %v4643 = vpow.pop %v4642
  %v4644 = vmul.f32 %v4619, 1.442695
  %v4645 = vpow.pop %v4644
  %v4646 = vmul.f32 %v4620, 1.442695
  %v4647 = vpow.pop %v4646
  %v4648 = vmul.f32 %v4621, 1.442695
  %v4649 = vpow.pop %v4648
  %v4650 = vmul.f32 %v4622, 1.442695
  %v4651 = vpow.pop %v4650
  %v4652 = vmul.f32 %v4623, 1.442695
  %v4653 = vpow.pop %v4652
  %v4654 = vmul.f32 %v4624, 1.442695
  %v4655 = vpow.pop %v4654
  %v4656 = vmul.f32 %v4625, 1.442695
  %v4657 = vpow.pop %v4656
  %v4658 = vmul.f32 %v2626, %v2181
  %v4659 = vmul.f32 %v2629, %v2181
  %v4660 = vmul.f32 %v2634, %v2181
  %v4661 = vmul.f32 %v2637, %v2181
  %v4662 = vmul.f32 %v2642, %v2181
  %v4663 = vmul.f32 %v2645, %v2181
  %v4664 = vmul.f32 %v2650, %v2181
  %v4665 = vmul.f32 %v2653, %v2181
  %v4666 = vmul.f32 %v2658, %v2181
  %v4667 = vmul.f32 %v2661, %v2181
  %v4668 = vmul.f32 %v2666, %v2181
  %v4669 = vmul.f32 %v2669, %v2181
  %v4670 = vmul.f32 %v2674, %v2181
  %v4671 = vmul.f32 %v2677, %v2181
  %v4672 = vmul.f32 %v2682, %v2181
  %v4673 = vmul.f32 %v2685, %v2181
  %v4674 = vpack.c.bf16 %v4659, %v4658
  %v4675 = vpack.c.bf16 %v4661, %v4660
  %v4676 = vpack.c.bf16 %v4663, %v4662
  %v4677 = vpack.c.bf16 %v4665, %v4664
  %v4678 = vpack.c.bf16 %v4667, %v4666
  %v4679 = vpack.c.bf16 %v4669, %v4668
  %v4680 = vpack.c.bf16 %v4671, %v4670
  %v4681 = vpack.c.bf16 %v4673, %v4672
  %v4682 = vpack.c.bf16 %v4629, %v4627
  %v4683 = vpack.c.bf16 %v4633, %v4631
  %v4684 = vpack.c.bf16 %v4637, %v4635
  %v4685 = vpack.c.bf16 %v4641, %v4639
  %v4686 = vpack.c.bf16 %v4645, %v4643
  %v4687 = vpack.c.bf16 %v4649, %v4647
  %v4688 = vpack.c.bf16 %v4653, %v4651
  %v4689 = vpack.c.bf16 %v4657, %v4655
  %4690 = vmatprep.subr.bf16.mxu0 0
  %4691 = vmatpush1.bf16.msra.mxu0 %v4674
  %4692 = vmatprep.subr.bf16.mxu0 0
  %4693 = vmatpush1.bf16.msra.mxu0 %v4675
  %4694 = vmatprep.subr.bf16.mxu0 0
  %4695 = vmatpush1.bf16.msra.mxu0 %v4676
  %4696 = vmatprep.subr.bf16.mxu0 0
  %4697 = vmatpush1.bf16.msra.mxu0 %v4677
  %4698 = vmatprep.subr.bf16.mxu0 0
  %4699 = vmatpush1.bf16.msra.mxu0 %v4678
  %4700 = vmatprep.subr.bf16.mxu0 0
  %4701 = vmatpush1.bf16.msra.mxu0 %v4679
  %4702 = vmatprep.subr.bf16.mxu0 0
  %4703 = vmatpush1.bf16.msra.mxu0 %v4680
  %4704 = vmatprep.subr.bf16.mxu0 0
  %4705 = vmatpush1.bf16.msra.mxu0 %v4681
  %4706 = vmatprep.subr.bf16.mxu0 0
  %4707 = vmatpush1.bf16.msra.mxu0 0
  %4708 = vmatprep.subr.bf16.mxu0 0
  %4709 = vmatpush1.bf16.msra.mxu0 0
  %4710 = vmatprep.subr.bf16.mxu0 0
  %4711 = vmatpush1.bf16.msra.mxu0 0
  %4712 = vmatprep.subr.bf16.mxu0 0
  %4713 = vmatpush1.bf16.msra.mxu0 0
  %4714 = vmatprep.subr.bf16.mxu0 0
  %4715 = vmatpush1.bf16.msra.mxu0 0
  %4716 = vmatprep.subr.bf16.mxu0 0
  %4717 = vmatpush1.bf16.msra.mxu0 0
  %4718 = vmatprep.subr.bf16.mxu0 0
  %4719 = vmatpush1.bf16.msra.mxu0 0
  %4720 = vmatprep.subr.bf16.mxu0 0
  %4721 = vmatpush1.bf16.msra.mxu0 0
  %4722 = vmatprep.mubr.bf16.mxu0 0
  %4723 = vmatmul.mubr.bf16.gmra.mrb[0].mxu0 %v4682
  %v4724 = vpop.f32.mrb[0].mxu0
  %v4725 = vadd.f32 0.0, %v4724
  %v4726 = vpop.f32.mrb[0].mxu0
  %v4727 = vpop.f32.mrb[0].mxu0
  %v4728 = vadd.f32 0.0, %v4727
  %v4729 = vpop.f32.mrb[0].mxu0
  %4730 = vmatprep.mubr.bf16.mxu0 0
  %4731 = vmatmul.mubr.bf16.gmra.mrb[0].mxu0 %v4683
  %v4732 = vpop.f32.mrb[0].mxu0
  %v4733 = vadd.f32 0.0, %v4732
  %v4734 = vpop.f32.mrb[0].mxu0
  %v4735 = vpop.f32.mrb[0].mxu0
  %v4736 = vadd.f32 0.0, %v4735
  %v4737 = vpop.f32.mrb[0].mxu0
  %4738 = vmatprep.mubr.bf16.mxu0 0
  %4739 = vmatmul.mubr.bf16.gmra.mrb[0].mxu0 %v4684
  %v4740 = vpop.f32.mrb[0].mxu0
  %v4741 = vadd.f32 0.0, %v4740
  %v4742 = vpop.f32.mrb[0].mxu0
  %v4743 = vpop.f32.mrb[0].mxu0
  %v4744 = vadd.f32 0.0, %v4743
  %v4745 = vpop.f32.mrb[0].mxu0
  %4746 = vmatprep.mubr.bf16.mxu0 0
  %4747 = vmatmul.mubr.bf16.gmra.mrb[0].mxu0 %v4685
  %v4748 = vpop.f32.mrb[0].mxu0
  %v4749 = vadd.f32 0.0, %v4748
  %v4750 = vpop.f32.mrb[0].mxu0
  %v4751 = vpop.f32.mrb[0].mxu0
  %v4752 = vadd.f32 0.0, %v4751
  %v4753 = vpop.f32.mrb[0].mxu0
  %4754 = vmatprep.mubr.bf16.mxu0 0
  %4755 = vmatmul.mubr.bf16.gmra.mrb[0].mxu0 %v4686
  %v4756 = vpop.f32.mrb[0].mxu0
  %v4757 = vadd.f32 0.0, %v4756
  %v4758 = vpop.f32.mrb[0].mxu0
  %v4759 = vpop.f32.mrb[0].mxu0
  %v4760 = vadd.f32 0.0, %v4759
  %v4761 = vpop.f32.mrb[0].mxu0
  %4762 = vmatprep.mubr.bf16.mxu0 0
  %4763 = vmatmul.mubr.bf16.gmra.mrb[0].mxu0 %v4687
  %v4764 = vpop.f32.mrb[0].mxu0
  %v4765 = vadd.f32 0.0, %v4764
  %v4766 = vpop.f32.mrb[0].mxu0
  %v4767 = vpop.f32.mrb[0].mxu0
  %v4768 = vadd.f32 0.0, %v4767
  %v4769 = vpop.f32.mrb[0].mxu0
  %4770 = vmatprep.mubr.bf16.mxu0 0
  %4771 = vmatmul.mubr.bf16.gmra.mrb[0].mxu0 %v4688
  %v4772 = vpop.f32.mrb[0].mxu0
  %v4773 = vadd.f32 0.0, %v4772
  %v4774 = vpop.f32.mrb[0].mxu0
  %v4775 = vpop.f32.mrb[0].mxu0
  %v4776 = vadd.f32 0.0, %v4775
  %v4777 = vpop.f32.mrb[0].mxu0
  %4778 = vmatprep.mubr.bf16.mxu0 0
  %4779 = vmatmul.mubr.bf16.gmra.mrb[0].mxu0 %v4689
  %v4780 = vpop.f32.mrb[0].mxu0
  %v4781 = vadd.f32 0.0, %v4780
  %v4782 = vpop.f32.mrb[0].mxu0
  %v4783 = vpop.f32.mrb[0].mxu0
  %v4784 = vadd.f32 0.0, %v4783
  %v4785 = vpop.f32.mrb[0].mxu0
  %4786 = vdwg.mxu0
  %v4787 = vrcp.pop %v4725
  %v4788 = vrcp.pop %v4728
  %v4789 = vrcp.pop %v4733
  %v4790 = vrcp.pop %v4736
  %v4791 = vrcp.pop %v4741
  %v4792 = vrcp.pop %v4744
  %v4793 = vrcp.pop %v4749
  %v4794 = vrcp.pop %v4752
  %v4795 = vrcp.pop %v4757
  %v4796 = vrcp.pop %v4760
  %v4797 = vrcp.pop %v4765
  %v4798 = vrcp.pop %v4768
  %v4799 = vrcp.pop %v4773
  %v4800 = vrcp.pop %v4776
  %v4801 = vrcp.pop %v4781
  %v4802 = vrcp.pop %v4784
  %4804 = vset.pattern.permute.xlu0 35
  %4805 = vperm.xlu0 %4804, %v4787
  %v4806 = vpop.permute.xlu0 %4805
  %4809 = vset.pattern.permute.xlu0 35
  %4810 = vperm.xlu0 %4809, %v4788
  %v4811 = vpop.permute.xlu0 %4810
  %4814 = vset.pattern.permute.xlu0 35
  %4815 = vperm.xlu0 %4814, %v4789
  %v4816 = vpop.permute.xlu0 %4815
  %4819 = vset.pattern.permute.xlu0 35
  %4820 = vperm.xlu0 %4819, %v4790
  %v4821 = vpop.permute.xlu0 %4820
  %4824 = vset.pattern.permute.xlu0 35
  %4825 = vperm.xlu0 %4824, %v4791
  %v4826 = vpop.permute.xlu0 %4825
  %4829 = vset.pattern.permute.xlu0 35
  %4830 = vperm.xlu0 %4829, %v4792
  %v4831 = vpop.permute.xlu0 %4830
  %4834 = vset.pattern.permute.xlu0 35
  %4835 = vperm.xlu0 %4834, %v4793
  %v4836 = vpop.permute.xlu0 %4835
  %4839 = vset.pattern.permute.xlu0 35
  %4840 = vperm.xlu0 %4839, %v4794
  %v4841 = vpop.permute.xlu0 %4840
  %4844 = vset.pattern.permute.xlu0 35
  %4845 = vperm.xlu0 %4844, %v4795
  %v4846 = vpop.permute.xlu0 %4845
  %4849 = vset.pattern.permute.xlu0 35
  %4850 = vperm.xlu0 %4849, %v4796
  %v4851 = vpop.permute.xlu0 %4850
  %4854 = vset.pattern.permute.xlu0 35
  %4855 = vperm.xlu0 %4854, %v4797
  %v4856 = vpop.permute.xlu0 %4855
  %4859 = vset.pattern.permute.xlu0 35
  %4860 = vperm.xlu0 %4859, %v4798
  %v4861 = vpop.permute.xlu0 %4860
  %4864 = vset.pattern.permute.xlu0 35
  %4865 = vperm.xlu0 %4864, %v4799
  %v4866 = vpop.permute.xlu0 %4865
  %4869 = vset.pattern.permute.xlu0 35
  %4870 = vperm.xlu0 %4869, %v4800
  %v4871 = vpop.permute.xlu0 %4870
  %4874 = vset.pattern.permute.xlu0 35
  %4875 = vperm.xlu0 %4874, %v4801
  %v4876 = vpop.permute.xlu0 %4875
  %4879 = vset.pattern.permute.xlu0 35
  %4880 = vperm.xlu0 %4879, %v4802
  %v4881 = vpop.permute.xlu0 %4880
  %v4883 = vmul.f32 %v4725, %v4806
  %v4884 = vmul.f32 %v4728, %v4811
  %v4885 = vmul.f32 %v4733, %v4816
  %v4886 = vmul.f32 %v4736, %v4821
  %v4887 = vmul.f32 %v4741, %v4826
  %v4888 = vmul.f32 %v4744, %v4831
  %v4889 = vmul.f32 %v4749, %v4836
  %v4890 = vmul.f32 %v4752, %v4841
  %v4891 = vmul.f32 %v4757, %v4846
  %v4892 = vmul.f32 %v4760, %v4851
  %v4893 = vmul.f32 %v4765, %v4856
  %v4894 = vmul.f32 %v4768, %v4861
  %v4895 = vmul.f32 %v4773, %v4866
  %v4896 = vmul.f32 %v4776, %v4871
  %v4897 = vmul.f32 %v4781, %v4876
  %v4898 = vmul.f32 %v4784, %v4881
  %v4899 = vld [vmem:[#allocation2] sm:$0xff]
  %v4900 = vld [vmem:[#allocation2 + $0x8] sm:$0xff]
  %v4901 = vld [vmem:[#allocation2 + $0x10] sm:$0xff]
  %v4902 = vld [vmem:[#allocation2 + $0x18] sm:$0xff]
  %v4903 = vld [vmem:[#allocation2 + $0x20] sm:$0xff]
  %v4904 = vld [vmem:[#allocation2 + $0x28] sm:$0xff]
  %v4905 = vld [vmem:[#allocation2 + $0x30] sm:$0xff]
  %v4906 = vld [vmem:[#allocation2 + $0x38] sm:$0xff]
  %v4907 = vld [vmem:[#allocation2 + $0x40] sm:$0xff]
  %v4908 = vld [vmem:[#allocation2 + $0x48] sm:$0xff]
  %v4909 = vld [vmem:[#allocation2 + $0x50] sm:$0xff]
  %v4910 = vld [vmem:[#allocation2 + $0x58] sm:$0xff]
  %v4911 = vld [vmem:[#allocation2 + $0x60] sm:$0xff]
  %v4912 = vld [vmem:[#allocation2 + $0x68] sm:$0xff]
  %v4913 = vld [vmem:[#allocation2 + $0x70] sm:$0xff]
  %v4914 = vld [vmem:[#allocation2 + $0x78] sm:$0xff]
  %v4915 = vadd.f32 %v4899, %v4883
  %v4916 = vadd.f32 %v4900, %v4884
  %v4917 = vadd.f32 %v4901, %v4885
  %v4918 = vadd.f32 %v4902, %v4886
  %v4919 = vadd.f32 %v4903, %v4887
  %v4920 = vadd.f32 %v4904, %v4888
  %v4921 = vadd.f32 %v4905, %v4889
  %v4922 = vadd.f32 %v4906, %v4890
  %v4923 = vadd.f32 %v4907, %v4891
  %v4924 = vadd.f32 %v4908, %v4892
  %v4925 = vadd.f32 %v4909, %v4893
  %v4926 = vadd.f32 %v4910, %v4894
  %v4927 = vadd.f32 %v4911, %v4895
  %v4928 = vadd.f32 %v4912, %v4896
  %v4929 = vadd.f32 %v4913, %v4897
  %v4930 = vadd.f32 %v4914, %v4898
  %4931 = vst.msk [vmem:[#allocation2] sm:$0xff] %vm939, %v4915
  %4932 = vst.msk [vmem:[#allocation2 + $0x8] sm:$0xff] %vm939, %v4916
  %4933 = vst.msk [vmem:[#allocation2 + $0x10] sm:$0xff] %vm939, %v4917
  %4934 = vst.msk [vmem:[#allocation2 + $0x18] sm:$0xff] %vm939, %v4918
  %4935 = vst.msk [vmem:[#allocation2 + $0x20] sm:$0xff] %vm939, %v4919
  %4936 = vst.msk [vmem:[#allocation2 + $0x28] sm:$0xff] %vm939, %v4920
  %4937 = vst.msk [vmem:[#allocation2 + $0x30] sm:$0xff] %vm939, %v4921
  %4938 = vst.msk [vmem:[#allocation2 + $0x38] sm:$0xff] %vm939, %v4922
  %4939 = vst.msk [vmem:[#allocation2 + $0x40] sm:$0xff] %vm939, %v4923
  %4940 = vst.msk [vmem:[#allocation2 + $0x48] sm:$0xff] %vm939, %v4924
  %4941 = vst.msk [vmem:[#allocation2 + $0x50] sm:$0xff] %vm939, %v4925
  %4942 = vst.msk [vmem:[#allocation2 + $0x58] sm:$0xff] %vm939, %v4926
  %4943 = vst.msk [vmem:[#allocation2 + $0x60] sm:$0xff] %vm939, %v4927
  %4944 = vst.msk [vmem:[#allocation2 + $0x68] sm:$0xff] %vm939, %v4928
  %4945 = vst.msk [vmem:[#allocation2 + $0x70] sm:$0xff] %vm939, %v4929
  %4946 = vst.msk [vmem:[#allocation2 + $0x78] sm:$0xff] %vm939, %v4930
  %v4947 = vld [vmem:[#allocation2] sm:$0xff]
  %v4948 = vld [vmem:[#allocation2 + $0x8] sm:$0xff]
  %v4949 = vld [vmem:[#allocation2 + $0x10] sm:$0xff]
  %v4950 = vld [vmem:[#allocation2 + $0x18] sm:$0xff]
  %v4951 = vld [vmem:[#allocation2 + $0x20] sm:$0xff]
  %v4952 = vld [vmem:[#allocation2 + $0x28] sm:$0xff]
  %v4953 = vld [vmem:[#allocation2 + $0x30] sm:$0xff]
  %v4954 = vld [vmem:[#allocation2 + $0x38] sm:$0xff]
  %v4955 = vld [vmem:[#allocation2 + $0x40] sm:$0xff]
  %v4956 = vld [vmem:[#allocation2 + $0x48] sm:$0xff]
  %v4957 = vld [vmem:[#allocation2 + $0x50] sm:$0xff]
  %v4958 = vld [vmem:[#allocation2 + $0x58] sm:$0xff]
  %v4959 = vld [vmem:[#allocation2 + $0x60] sm:$0xff]
  %v4960 = vld [vmem:[#allocation2 + $0x68] sm:$0xff]
  %v4961 = vld [vmem:[#allocation2 + $0x70] sm:$0xff]
  %v4962 = vld [vmem:[#allocation2 + $0x78] sm:$0xff]
  %v4963 = vlaneseq
  %v4964 = vshrl.u32 %v4963, 7
  %v4965 = vsub.s32 7, %v4964
  %v4966 = vrot.slane %v34, %v4965
  %v4967 = vmul.f32 %v4947, %v4966
  %v4968 = vmul.f32 %v4948, %v4966
  %v4969 = vmul.f32 %v4949, %v4966
  %v4970 = vmul.f32 %v4950, %v4966
  %v4971 = vmul.f32 %v4951, %v4966
  %v4972 = vmul.f32 %v4952, %v4966
  %v4973 = vmul.f32 %v4953, %v4966
  %v4974 = vmul.f32 %v4954, %v4966
  %v4975 = vmul.f32 %v4955, %v4966
  %v4976 = vmul.f32 %v4956, %v4966
  %v4977 = vmul.f32 %v4957, %v4966
  %v4978 = vmul.f32 %v4958, %v4966
  %v4979 = vmul.f32 %v4959, %v4966
  %v4980 = vmul.f32 %v4960, %v4966
  %v4981 = vmul.f32 %v4961, %v4966
  %v4982 = vmul.f32 %v4962, %v4966
  %v4983 = vlaneseq
  %v4984 = vshrl.u32 %v4983, 7
  %v4985 = vsub.s32 0, %v4984
  %v4986 = vrot.slane %v35, %v4985
  %v4987 = vadd.f32 %v4967, %v4986
  %v4988 = vadd.f32 %v4968, %v4986
  %v4989 = vadd.f32 %v4969, %v4986
  %v4990 = vadd.f32 %v4970, %v4986
  %v4991 = vadd.f32 %v4971, %v4986
  %v4992 = vadd.f32 %v4972, %v4986
  %v4993 = vadd.f32 %v4973, %v4986
  %v4994 = vadd.f32 %v4974, %v4986
  %v4995 = vadd.f32 %v4975, %v4986
  %v4996 = vadd.f32 %v4976, %v4986
  %v4997 = vadd.f32 %v4977, %v4986
  %v4998 = vadd.f32 %v4978, %v4986
  %v4999 = vadd.f32 %v4979, %v4986
  %v5000 = vadd.f32 %v4980, %v4986
  %v5001 = vadd.f32 %v4981, %v4986
  %v5002 = vadd.f32 %v4982, %v4986
  %v5003 = vmax.f32 %v4987, 0.0
  %v5004 = vmax.f32 %v4988, 0.0
  %v5005 = vmax.f32 %v4989, 0.0
  %v5006 = vmax.f32 %v4990, 0.0
  %v5007 = vmax.f32 %v4991, 0.0
  %v5008 = vmax.f32 %v4992, 0.0
  %v5009 = vmax.f32 %v4993, 0.0
  %v5010 = vmax.f32 %v4994, 0.0
  %v5011 = vmax.f32 %v4995, 0.0
  %v5012 = vmax.f32 %v4996, 0.0
  %v5013 = vmax.f32 %v4997, 0.0
  %v5014 = vmax.f32 %v4998, 0.0
  %v5015 = vmax.f32 %v4999, 0.0
  %v5016 = vmax.f32 %v5000, 0.0
  %v5017 = vmax.f32 %v5001, 0.0
  %v5018 = vmax.f32 %v5002, 0.0
  %v5019 = vpack.c.bf16 %v5004, %v5003
  %v5020 = vpack.c.bf16 %v5006, %v5005
  %v5021 = vpack.c.bf16 %v5008, %v5007
  %v5022 = vpack.c.bf16 %v5010, %v5009
  %v5023 = vpack.c.bf16 %v5012, %v5011
  %v5024 = vpack.c.bf16 %v5014, %v5013
  %v5025 = vpack.c.bf16 %v5016, %v5015
  %v5026 = vpack.c.bf16 %v5018, %v5017
  %v5027 = vld [vmem:[%s2 + $0x18] sm:$0xf]
  %v5028 = vld [vmem:[%s2 + $0x1c] sm:$0xf]
  %v5029 = vld [vmem:[%s2 + $0x20] sm:$0xf]
  %v5030 = vld [vmem:[%s2 + $0x24] sm:$0xf]
  %v5035 = vunpack.c.l.b16 %v5027
  %v5036 = vunpack.c.l.b16 %v5028
  %v5037 = vunpack.c.l.b16 %v5029
  %v5038 = vunpack.c.l.b16 %v5030
  %v5039 = vpack.c.b16 %v5036, %v5035
  %v5040 = vpack.c.b16 %v5038, %v5037
  %v5044 = vsel %vm939, %v5019, 0
  %v5047 = vsel %vm939, %v5020, 0
  %v5050 = vsel %vm939, %v5021, 0
  %v5053 = vsel %vm939, %v5022, 0
  %v5056 = vsel %vm939, %v5023, 0
  %v5059 = vsel %vm939, %v5024, 0
  %v5062 = vsel %vm939, %v5025, 0
  %v5065 = vsel %vm939, %v5026, 0
  %5067 = vmatprep.subr.bf16.mxu0 0
  %5068 = vmatpush1.bf16.msra.mxu0 %v5039
  %5069 = vmatprep.subr.bf16.mxu0 0
  %5070 = vmatpush1.bf16.msra.mxu0 %v5040
  %5071 = vmatprep.subr.bf16.mxu0 0
  %5072 = vmatpush1.bf16.msra.mxu0 0
  %5073 = vmatprep.subr.bf16.mxu0 0
  %5074 = vmatpush1.bf16.msra.mxu0 0
  %5075 = vmatprep.subr.bf16.mxu0 0
  %5076 = vmatpush1.bf16.msra.mxu0 0
  %5077 = vmatprep.subr.bf16.mxu0 0
  %5078 = vmatpush1.bf16.msra.mxu0 0
  %5079 = vmatprep.subr.bf16.mxu0 0
  %5080 = vmatpush1.bf16.msra.mxu0 0
  %5081 = vmatprep.subr.bf16.mxu0 0
  %5082 = vmatpush1.bf16.msra.mxu0 0
  %5083 = vmatprep.subr.bf16.mxu0 0
  %5084 = vmatpush1.bf16.msra.mxu0 0
  %5085 = vmatprep.subr.bf16.mxu0 0
  %5086 = vmatpush1.bf16.msra.mxu0 0
  %5087 = vmatprep.subr.bf16.mxu0 0
  %5088 = vmatpush1.bf16.msra.mxu0 0
  %5089 = vmatprep.subr.bf16.mxu0 0
  %5090 = vmatpush1.bf16.msra.mxu0 0
  %5091 = vmatprep.subr.bf16.mxu0 0
  %5092 = vmatpush1.bf16.msra.mxu0 0
  %5093 = vmatprep.subr.bf16.mxu0 0
  %5094 = vmatpush1.bf16.msra.mxu0 0
  %5095 = vmatprep.subr.bf16.mxu0 0
  %5096 = vmatpush1.bf16.msra.mxu0 0
  %5097 = vmatprep.subr.bf16.mxu0 0
  %5098 = vmatpush1.bf16.msra.mxu0 0
  %5099 = vmatprep.mubr.bf16.mxu0 0
  %5100 = vmatmul.mubr.bf16.gmra.mrb[0].mxu0 %v5044
  %v5101 = vpop.f32.mrb[0].mxu0
  %v5102 = vadd.f32 %v65, %v5101
  %v5103 = vpop.f32.mrb[0].mxu0
  %v5104 = vpop.f32.mrb[0].mxu0
  %v5105 = vadd.f32 %v65, %v5104
  %v5106 = vpop.f32.mrb[0].mxu0
  %5107 = vmatprep.mubr.bf16.mxu0 0
  %5108 = vmatmul.mubr.bf16.gmra.mrb[0].mxu0 %v5047
  %v5109 = vpop.f32.mrb[0].mxu0
  %v5110 = vadd.f32 %v65, %v5109
  %v5111 = vpop.f32.mrb[0].mxu0
  %v5112 = vpop.f32.mrb[0].mxu0
  %v5113 = vadd.f32 %v65, %v5112
  %v5114 = vpop.f32.mrb[0].mxu0
  %5115 = vmatprep.mubr.bf16.mxu0 0
  %5116 = vmatmul.mubr.bf16.gmra.mrb[0].mxu0 %v5050
  %v5117 = vpop.f32.mrb[0].mxu0
  %v5118 = vadd.f32 %v65, %v5117
  %v5119 = vpop.f32.mrb[0].mxu0
  %v5120 = vpop.f32.mrb[0].mxu0
  %v5121 = vadd.f32 %v65, %v5120
  %v5122 = vpop.f32.mrb[0].mxu0
  %5123 = vmatprep.mubr.bf16.mxu0 0
  %5124 = vmatmul.mubr.bf16.gmra.mrb[0].mxu0 %v5053
  %v5125 = vpop.f32.mrb[0].mxu0
  %v5126 = vadd.f32 %v65, %v5125
  %v5127 = vpop.f32.mrb[0].mxu0
  %v5128 = vpop.f32.mrb[0].mxu0
  %v5129 = vadd.f32 %v65, %v5128
  %v5130 = vpop.f32.mrb[0].mxu0
  %5131 = vmatprep.mubr.bf16.mxu0 0
  %5132 = vmatmul.mubr.bf16.gmra.mrb[0].mxu0 %v5056
  %v5133 = vpop.f32.mrb[0].mxu0
  %v5134 = vadd.f32 %v65, %v5133
  %v5135 = vpop.f32.mrb[0].mxu0
  %v5136 = vpop.f32.mrb[0].mxu0
  %v5137 = vadd.f32 %v65, %v5136
  %v5138 = vpop.f32.mrb[0].mxu0
  %5139 = vmatprep.mubr.bf16.mxu0 0
  %5140 = vmatmul.mubr.bf16.gmra.mrb[0].mxu0 %v5059
  %v5141 = vpop.f32.mrb[0].mxu0
  %v5142 = vadd.f32 %v65, %v5141
  %v5143 = vpop.f32.mrb[0].mxu0
  %v5144 = vpop.f32.mrb[0].mxu0
  %v5145 = vadd.f32 %v65, %v5144
  %v5146 = vpop.f32.mrb[0].mxu0
  %5147 = vmatprep.mubr.bf16.mxu0 0
  %5148 = vmatmul.mubr.bf16.gmra.mrb[0].mxu0 %v5062
  %v5149 = vpop.f32.mrb[0].mxu0
  %v5150 = vadd.f32 %v65, %v5149
  %v5151 = vpop.f32.mrb[0].mxu0
  %v5152 = vpop.f32.mrb[0].mxu0
  %v5153 = vadd.f32 %v65, %v5152
  %v5154 = vpop.f32.mrb[0].mxu0
  %5155 = vmatprep.mubr.bf16.mxu0 0
  %5156 = vmatmul.mubr.bf16.gmra.mrb[0].mxu0 %v5065
  %v5157 = vpop.f32.mrb[0].mxu0
  %v5158 = vadd.f32 %v65, %v5157
  %v5159 = vpop.f32.mrb[0].mxu0
  %v5160 = vpop.f32.mrb[0].mxu0
  %v5161 = vadd.f32 %v65, %v5160
  %v5162 = vpop.f32.mrb[0].mxu0
  %5163 = vdwg.mxu0
  %v5164 = vld [vmem:[%s3 + $0x20] sm:$0xff]
  %v5165 = vld [vmem:[%s3 + $0x28] sm:$0xff]
  %v5167 = vsel %vm196, %v5164, 0
  %v5170 = vsel %vm196, %v5102, 0
  %v5173 = vsel %vm196, %v5105, 0
  %v5176 = vsel %vm196, %v5110, 0
  %v5179 = vsel %vm196, %v5113, 0
  %v5182 = vsel %vm196, %v5118, 0
  %v5185 = vsel %vm196, %v5121, 0
  %v5188 = vsel %vm196, %v5126, 0
  %v5191 = vsel %vm196, %v5129, 0
  %v5194 = vsel %vm196, %v5134, 0
  %v5197 = vsel %vm196, %v5137, 0
  %v5200 = vsel %vm196, %v5142, 0
  %v5203 = vsel %vm196, %v5145, 0
  %v5206 = vsel %vm196, %v5150, 0
  %v5209 = vsel %vm196, %v5153, 0
  %v5212 = vsel %vm196, %v5158, 0
  %v5215 = vsel %vm196, %v5161, 0
  %5217 = vmatprep.subr.mxu0 0.0
  %5218 = vmatpush1.xpose.msra.mxu0 %v5170
  %5219 = vmatprep.subr.mxu0 0.0
  %5220 = vmatpush1.xpose.msra.mxu0 %v5173
  %5221 = vmatprep.subr.mxu0 0.0
  %5222 = vmatpush1.xpose.msra.mxu0 %v5176
  %5223 = vmatprep.subr.mxu0 0.0
  %5224 = vmatpush1.xpose.msra.mxu0 %v5179
  %5225 = vmatprep.subr.mxu0 0.0
  %5226 = vmatpush1.xpose.msra.mxu0 %v5182
  %5227 = vmatprep.subr.mxu0 0.0
  %5228 = vmatpush1.xpose.msra.mxu0 %v5185
  %5229 = vmatprep.subr.mxu0 0.0
  %5230 = vmatpush1.xpose.msra.mxu0 %v5188
  %5231 = vmatprep.subr.mxu0 0.0
  %5232 = vmatpush1.xpose.msra.mxu0 %v5191
  %5233 = vmatprep.subr.mxu0 0.0
  %5234 = vmatpush1.xpose.msra.mxu0 %v5194
  %5235 = vmatprep.subr.mxu0 0.0
  %5236 = vmatpush1.xpose.msra.mxu0 %v5197
  %5237 = vmatprep.subr.mxu0 0.0
  %5238 = vmatpush1.xpose.msra.mxu0 %v5200
  %5239 = vmatprep.subr.mxu0 0.0
  %5240 = vmatpush1.xpose.msra.mxu0 %v5203
  %5241 = vmatprep.subr.mxu0 0.0
  %5242 = vmatpush1.xpose.msra.mxu0 %v5206
  %5243 = vmatprep.subr.mxu0 0.0
  %5244 = vmatpush1.xpose.msra.mxu0 %v5209
  %5245 = vmatprep.subr.mxu0 0.0
  %5246 = vmatpush1.xpose.msra.mxu0 %v5212
  %5247 = vmatprep.subr.mxu0 0.0
  %5248 = vmatpush1.xpose.msra.mxu0 %v5215
  %5249 = vmatprep.subr.mxu0 0.0
  %5250 = vmatpush1.xpose.msra.mxu0 0.0
  %5251 = vmatprep.subr.mxu0 0.0
  %5252 = vmatpush1.xpose.msra.mxu0 0.0
  %5253 = vmatprep.subr.mxu0 0.0
  %5254 = vmatpush1.xpose.msra.mxu0 0.0
  %5255 = vmatprep.subr.mxu0 0.0
  %5256 = vmatpush1.xpose.msra.mxu0 0.0
  %5257 = vmatprep.subr.mxu0 0.0
  %5258 = vmatpush1.xpose.msra.mxu0 0.0
  %5259 = vmatprep.subr.mxu0 0.0
  %5260 = vmatpush1.xpose.msra.mxu0 0.0
  %5261 = vmatprep.subr.mxu0 0.0
  %5262 = vmatpush1.xpose.msra.mxu0 0.0
  %5263 = vmatprep.subr.mxu0 0.0
  %5264 = vmatpush1.xpose.msra.mxu0 0.0
  %5265 = vmatprep.subr.mxu0 0.0
  %5266 = vmatpush1.xpose.msra.mxu0 0.0
  %5267 = vmatprep.subr.mxu0 0.0
  %5268 = vmatpush1.xpose.msra.mxu0 0.0
  %5269 = vmatprep.subr.mxu0 0.0
  %5270 = vmatpush1.xpose.msra.mxu0 0.0
  %5271 = vmatprep.subr.mxu0 0.0
  %5272 = vmatpush1.xpose.msra.mxu0 0.0
  %5273 = vmatprep.subr.mxu0 0.0
  %5274 = vmatpush1.xpose.msra.mxu0 0.0
  %5275 = vmatprep.subr.mxu0 0.0
  %5276 = vmatpush1.xpose.msra.mxu0 0.0
  %5277 = vmatprep.subr.mxu0 0.0
  %5278 = vmatpush1.xpose.msra.mxu0 0.0
  %5279 = vmatprep.subr.mxu0 0.0
  %5280 = vmatpush1.xpose.msra.mxu0 0.0
  %5281 = vmatprep.mubr.f32.mxu0 0.0
  %5282 = vmatmul.mubr.f32.gmra.mrb[0].mxu0 %v5167
  %v5283 = vpop.f32.mrb[0].mxu0
  %v5284 = vadd.f32 0.0, %v5283
  %v5285 = vpop.f32.mrb[0].mxu0
  %5286 = vdwg.mxu0
  %v5288 = vsel %vm196, %v5165, 0
  %5290 = vmatprep.subr.mxu0 0.0
  %5291 = vmatpush1.xpose.msra.mxu0 %v5288
  %5292 = vmatprep.subr.mxu0 0.0
  %5293 = vmatpush1.xpose.msra.mxu0 0.0
  %5294 = vmatprep.subr.mxu0 0.0
  %5295 = vmatpush1.xpose.msra.mxu0 0.0
  %5296 = vmatprep.subr.mxu0 0.0
  %5297 = vmatpush1.xpose.msra.mxu0 0.0
  %5298 = vmatprep.subr.mxu0 0.0
  %5299 = vmatpush1.xpose.msra.mxu0 0.0
  %5300 = vmatprep.subr.mxu0 0.0
  %5301 = vmatpush1.xpose.msra.mxu0 0.0
  %5302 = vmatprep.subr.mxu0 0.0
  %5303 = vmatpush1.xpose.msra.mxu0 0.0
  %5304 = vmatprep.subr.mxu0 0.0
  %5305 = vmatpush1.xpose.msra.mxu0 0.0
  %5306 = vmatprep.subr.mxu0 0.0
  %5307 = vmatpush1.xpose.msra.mxu0 0.0
  %5308 = vmatprep.subr.mxu0 0.0
  %5309 = vmatpush1.xpose.msra.mxu0 0.0
  %5310 = vmatprep.subr.mxu0 0.0
  %5311 = vmatpush1.xpose.msra.mxu0 0.0
  %5312 = vmatprep.subr.mxu0 0.0
  %5313 = vmatpush1.xpose.msra.mxu0 0.0
  %5314 = vmatprep.subr.mxu0 0.0
  %5315 = vmatpush1.xpose.msra.mxu0 0.0
  %5316 = vmatprep.subr.mxu0 0.0
  %5317 = vmatpush1.xpose.msra.mxu0 0.0
  %5318 = vmatprep.subr.mxu0 0.0
  %5319 = vmatpush1.xpose.msra.mxu0 0.0
  %5320 = vmatprep.subr.mxu0 0.0
  %5321 = vmatpush1.xpose.msra.mxu0 0.0
  %5322 = vmatprep.subr.mxu0 0.0
  %5323 = vmatpush1.xpose.msra.mxu0 0.0
  %5324 = vmatprep.subr.mxu0 0.0
  %5325 = vmatpush1.xpose.msra.mxu0 0.0
  %5326 = vmatprep.subr.mxu0 0.0
  %5327 = vmatpush1.xpose.msra.mxu0 0.0
  %5328 = vmatprep.subr.mxu0 0.0
  %5329 = vmatpush1.xpose.msra.mxu0 0.0
  %5330 = vmatprep.subr.mxu0 0.0
  %5331 = vmatpush1.xpose.msra.mxu0 0.0
  %5332 = vmatprep.subr.mxu0 0.0
  %5333 = vmatpush1.xpose.msra.mxu0 0.0
  %5334 = vmatprep.subr.mxu0 0.0
  %5335 = vmatpush1.xpose.msra.mxu0 0.0
  %5336 = vmatprep.subr.mxu0 0.0
  %5337 = vmatpush1.xpose.msra.mxu0 0.0
  %5338 = vmatprep.subr.mxu0 0.0
  %5339 = vmatpush1.xpose.msra.mxu0 0.0
  %5340 = vmatprep.subr.mxu0 0.0
  %5341 = vmatpush1.xpose.msra.mxu0 0.0
  %5342 = vmatprep.subr.mxu0 0.0
  %5343 = vmatpush1.xpose.msra.mxu0 0.0
  %5344 = vmatprep.subr.mxu0 0.0
  %5345 = vmatpush1.xpose.msra.mxu0 0.0
  %5346 = vmatprep.subr.mxu0 0.0
  %5347 = vmatpush1.xpose.msra.mxu0 0.0
  %5348 = vmatprep.subr.mxu0 0.0
  %5349 = vmatpush1.xpose.msra.mxu0 0.0
  %5350 = vmatprep.subr.mxu0 0.0
  %5351 = vmatpush1.xpose.msra.mxu0 0.0
  %5352 = vmatprep.subr.mxu0 0.0
  %5353 = vmatpush1.xpose.msra.mxu0 0.0
  %5354 = vmatprep.mubr.f32.mxu0 0.0
  %5355 = vmatmul.mubr.f32.gmra.mrb[0].mxu0 %v5170
  %v5356 = vpop.f32.mrb[0].mxu0
  %v5357 = vadd.f32 0.0, %v5356
  %v5358 = vpop.f32.mrb[0].mxu0
  %5359 = vmatprep.mubr.f32.mxu0 0.0
  %5360 = vmatmul.mubr.f32.gmra.mrb[0].mxu0 %v5173
  %v5361 = vpop.f32.mrb[0].mxu0
  %v5362 = vadd.f32 0.0, %v5361
  %v5363 = vpop.f32.mrb[0].mxu0
  %5364 = vmatprep.mubr.f32.mxu0 0.0
  %5365 = vmatmul.mubr.f32.gmra.mrb[0].mxu0 %v5176
  %v5366 = vpop.f32.mrb[0].mxu0
  %v5367 = vadd.f32 0.0, %v5366
  %v5368 = vpop.f32.mrb[0].mxu0
  %5369 = vmatprep.mubr.f32.mxu0 0.0
  %5370 = vmatmul.mubr.f32.gmra.mrb[0].mxu0 %v5179
  %v5371 = vpop.f32.mrb[0].mxu0
  %v5372 = vadd.f32 0.0, %v5371
  %v5373 = vpop.f32.mrb[0].mxu0
  %5374 = vmatprep.mubr.f32.mxu0 0.0
  %5375 = vmatmul.mubr.f32.gmra.mrb[0].mxu0 %v5182
  %v5376 = vpop.f32.mrb[0].mxu0
  %v5377 = vadd.f32 0.0, %v5376
  %v5378 = vpop.f32.mrb[0].mxu0
  %5379 = vmatprep.mubr.f32.mxu0 0.0
  %5380 = vmatmul.mubr.f32.gmra.mrb[0].mxu0 %v5185
  %v5381 = vpop.f32.mrb[0].mxu0
  %v5382 = vadd.f32 0.0, %v5381
  %v5383 = vpop.f32.mrb[0].mxu0
  %5384 = vmatprep.mubr.f32.mxu0 0.0
  %5385 = vmatmul.mubr.f32.gmra.mrb[0].mxu0 %v5188
  %v5386 = vpop.f32.mrb[0].mxu0
  %v5387 = vadd.f32 0.0, %v5386
  %v5388 = vpop.f32.mrb[0].mxu0
  %5389 = vmatprep.mubr.f32.mxu0 0.0
  %5390 = vmatmul.mubr.f32.gmra.mrb[0].mxu0 %v5191
  %v5391 = vpop.f32.mrb[0].mxu0
  %v5392 = vadd.f32 0.0, %v5391
  %v5393 = vpop.f32.mrb[0].mxu0
  %5394 = vmatprep.mubr.f32.mxu0 0.0
  %5395 = vmatmul.mubr.f32.gmra.mrb[0].mxu0 %v5194
  %v5396 = vpop.f32.mrb[0].mxu0
  %v5397 = vadd.f32 0.0, %v5396
  %v5398 = vpop.f32.mrb[0].mxu0
  %5399 = vmatprep.mubr.f32.mxu0 0.0
  %5400 = vmatmul.mubr.f32.gmra.mrb[0].mxu0 %v5197
  %v5401 = vpop.f32.mrb[0].mxu0
  %v5402 = vadd.f32 0.0, %v5401
  %v5403 = vpop.f32.mrb[0].mxu0
  %5404 = vmatprep.mubr.f32.mxu0 0.0
  %5405 = vmatmul.mubr.f32.gmra.mrb[0].mxu0 %v5200
  %v5406 = vpop.f32.mrb[0].mxu0
  %v5407 = vadd.f32 0.0, %v5406
  %v5408 = vpop.f32.mrb[0].mxu0
  %5409 = vmatprep.mubr.f32.mxu0 0.0
  %5410 = vmatmul.mubr.f32.gmra.mrb[0].mxu0 %v5203
  %v5411 = vpop.f32.mrb[0].mxu0
  %v5412 = vadd.f32 0.0, %v5411
  %v5413 = vpop.f32.mrb[0].mxu0
  %5414 = vmatprep.mubr.f32.mxu0 0.0
  %5415 = vmatmul.mubr.f32.gmra.mrb[0].mxu0 %v5206
  %v5416 = vpop.f32.mrb[0].mxu0
  %v5417 = vadd.f32 0.0, %v5416
  %v5418 = vpop.f32.mrb[0].mxu0
  %5419 = vmatprep.mubr.f32.mxu0 0.0
  %5420 = vmatmul.mubr.f32.gmra.mrb[0].mxu0 %v5209
  %v5421 = vpop.f32.mrb[0].mxu0
  %v5422 = vadd.f32 0.0, %v5421
  %v5423 = vpop.f32.mrb[0].mxu0
  %5424 = vmatprep.mubr.f32.mxu0 0.0
  %5425 = vmatmul.mubr.f32.gmra.mrb[0].mxu0 %v5212
  %v5426 = vpop.f32.mrb[0].mxu0
  %v5427 = vadd.f32 0.0, %v5426
  %v5428 = vpop.f32.mrb[0].mxu0
  %5429 = vmatprep.mubr.f32.mxu0 0.0
  %5430 = vmatmul.mubr.f32.gmra.mrb[0].mxu0 %v5215
  %v5431 = vpop.f32.mrb[0].mxu0
  %v5432 = vadd.f32 0.0, %v5431
  %v5433 = vpop.f32.mrb[0].mxu0
  %5434 = vdwg.mxu0
  %5436 = vset.pattern.permute.xlu0 0
  %5437 = vperm.xlu0 %5436, %v5357
  %v5438 = vpop.permute.xlu0 %5437
  %5441 = vset.pattern.permute.xlu0 0
  %5442 = vperm.xlu0 %5441, %v5362
  %v5443 = vpop.permute.xlu0 %5442
  %5446 = vset.pattern.permute.xlu0 0
  %5447 = vperm.xlu0 %5446, %v5367
  %v5448 = vpop.permute.xlu0 %5447
  %5451 = vset.pattern.permute.xlu0 0
  %5452 = vperm.xlu0 %5451, %v5372
  %v5453 = vpop.permute.xlu0 %5452
  %5456 = vset.pattern.permute.xlu0 0
  %5457 = vperm.xlu0 %5456, %v5377
  %v5458 = vpop.permute.xlu0 %5457
  %5461 = vset.pattern.permute.xlu0 0
  %5462 = vperm.xlu0 %5461, %v5382
  %v5463 = vpop.permute.xlu0 %5462
  %5466 = vset.pattern.permute.xlu0 0
  %5467 = vperm.xlu0 %5466, %v5387
  %v5468 = vpop.permute.xlu0 %5467
  %5471 = vset.pattern.permute.xlu0 0
  %5472 = vperm.xlu0 %5471, %v5392
  %v5473 = vpop.permute.xlu0 %5472
  %5476 = vset.pattern.permute.xlu0 0
  %5477 = vperm.xlu0 %5476, %v5397
  %v5478 = vpop.permute.xlu0 %5477
  %5481 = vset.pattern.permute.xlu0 0
  %5482 = vperm.xlu0 %5481, %v5402
  %v5483 = vpop.permute.xlu0 %5482
  %5486 = vset.pattern.permute.xlu0 0
  %5487 = vperm.xlu0 %5486, %v5407
  %v5488 = vpop.permute.xlu0 %5487
  %5491 = vset.pattern.permute.xlu0 0
  %5492 = vperm.xlu0 %5491, %v5412
  %v5493 = vpop.permute.xlu0 %5492
  %5496 = vset.pattern.permute.xlu0 0
  %5497 = vperm.xlu0 %5496, %v5417
  %v5498 = vpop.permute.xlu0 %5497
  %5501 = vset.pattern.permute.xlu0 0
  %5502 = vperm.xlu0 %5501, %v5422
  %v5503 = vpop.permute.xlu0 %5502
  %5506 = vset.pattern.permute.xlu0 0
  %5507 = vperm.xlu0 %5506, %v5427
  %v5508 = vpop.permute.xlu0 %5507
  %5511 = vset.pattern.permute.xlu0 0
  %5512 = vperm.xlu0 %5511, %v5432
  %v5513 = vpop.permute.xlu0 %5512
  %v5515 = vlaneseq
  %v5516 = vshrl.u32 %v5515, 7
  %v5517 = vsub.s32 0, %v5516
  %v5518 = vrot.slane %v5284, %v5517
  %v5519 = vadd.f32 %v5438, %v5518
  %v5520 = vadd.f32 %v5443, %v5518
  %v5521 = vadd.f32 %v5448, %v5518
  %v5522 = vadd.f32 %v5453, %v5518
  %v5523 = vadd.f32 %v5458, %v5518
  %v5524 = vadd.f32 %v5463, %v5518
  %v5525 = vadd.f32 %v5468, %v5518
  %v5526 = vadd.f32 %v5473, %v5518
  %v5527 = vadd.f32 %v5478, %v5518
  %v5528 = vadd.f32 %v5483, %v5518
  %v5529 = vadd.f32 %v5488, %v5518
  %v5530 = vadd.f32 %v5493, %v5518
  %v5531 = vadd.f32 %v5498, %v5518
  %v5532 = vadd.f32 %v5503, %v5518
  %v5533 = vadd.f32 %v5508, %v5518
  %v5534 = vadd.f32 %v5513, %v5518
  %v5535 = vmul.f32 %v5519, 0.2
  %v5536 = vmul.f32 %v5520, 0.2
  %v5537 = vmul.f32 %v5521, 0.2
  %v5538 = vmul.f32 %v5522, 0.2
  %v5539 = vmul.f32 %v5523, 0.2
  %v5540 = vmul.f32 %v5524, 0.2
  %v5541 = vmul.f32 %v5525, 0.2
  %v5542 = vmul.f32 %v5526, 0.2
  %v5543 = vmul.f32 %v5527, 0.2
  %v5544 = vmul.f32 %v5528, 0.2
  %v5545 = vmul.f32 %v5529, 0.2
  %v5546 = vmul.f32 %v5530, 0.2
  %v5547 = vmul.f32 %v5531, 0.2
  %v5548 = vmul.f32 %v5532, 0.2
  %v5549 = vmul.f32 %v5533, 0.2
  %v5550 = vmul.f32 %v5534, 0.2
  %v5551 = vmax.f32 %v5519, %v5535
  %v5552 = vmax.f32 %v5520, %v5536
  %v5553 = vmax.f32 %v5521, %v5537
  %v5554 = vmax.f32 %v5522, %v5538
  %v5555 = vmax.f32 %v5523, %v5539
  %v5556 = vmax.f32 %v5524, %v5540
  %v5557 = vmax.f32 %v5525, %v5541
  %v5558 = vmax.f32 %v5526, %v5542
  %v5559 = vmax.f32 %v5527, %v5543
  %v5560 = vmax.f32 %v5528, %v5544
  %v5561 = vmax.f32 %v5529, %v5545
  %v5562 = vmax.f32 %v5530, %v5546
  %v5563 = vmax.f32 %v5531, %v5547
  %v5564 = vmax.f32 %v5532, %v5548
  %v5565 = vmax.f32 %v5533, %v5549
  %v5566 = vmax.f32 %v5534, %v5550
  %v5567 = vadd.f32 %v5551, %v18
  %v5568 = vadd.f32 %v5552, %v19
  %v5569 = vadd.f32 %v5553, %v20
  %v5570 = vadd.f32 %v5554, %v21
  %v5571 = vadd.f32 %v5555, %v22
  %v5572 = vadd.f32 %v5556, %v23
  %v5573 = vadd.f32 %v5557, %v24
  %v5574 = vadd.f32 %v5558, %v25
  %v5575 = vadd.f32 %v5559, %v26
  %v5576 = vadd.f32 %v5560, %v27
  %v5577 = vadd.f32 %v5561, %v28
  %v5578 = vadd.f32 %v5562, %v29
  %v5579 = vadd.f32 %v5563, %v30
  %v5580 = vadd.f32 %v5564, %v31
  %v5581 = vadd.f32 %v5565, %v32
  %v5582 = vadd.f32 %v5566, %v33
  %5583 = vmax.xlane.f32.xlu0 %v5567
  %v5584 = vpop.xlane.xlu0 %5583
  %5585 = vmax.xlane.f32.xlu0 %v5568
  %v5586 = vpop.xlane.xlu0 %5585
  %5587 = vmax.xlane.f32.xlu0 %v5569
  %v5588 = vpop.xlane.xlu0 %5587
  %5589 = vmax.xlane.f32.xlu0 %v5570
  %v5590 = vpop.xlane.xlu0 %5589
  %5591 = vmax.xlane.f32.xlu0 %v5571
  %v5592 = vpop.xlane.xlu0 %5591
  %5593 = vmax.xlane.f32.xlu0 %v5572
  %v5594 = vpop.xlane.xlu0 %5593
  %5595 = vmax.xlane.f32.xlu0 %v5573
  %v5596 = vpop.xlane.xlu0 %5595
  %5597 = vmax.xlane.f32.xlu0 %v5574
  %v5598 = vpop.xlane.xlu0 %5597
  %5599 = vmax.xlane.f32.xlu0 %v5575
  %v5600 = vpop.xlane.xlu0 %5599
  %5601 = vmax.xlane.f32.xlu0 %v5576
  %v5602 = vpop.xlane.xlu0 %5601
  %5603 = vmax.xlane.f32.xlu0 %v5577
  %v5604 = vpop.xlane.xlu0 %5603
  %5605 = vmax.xlane.f32.xlu0 %v5578
  %v5606 = vpop.xlane.xlu0 %5605
  %5607 = vmax.xlane.f32.xlu0 %v5579
  %v5608 = vpop.xlane.xlu0 %5607
  %5609 = vmax.xlane.f32.xlu0 %v5580
  %v5610 = vpop.xlane.xlu0 %5609
  %5611 = vmax.xlane.f32.xlu0 %v5581
  %v5612 = vpop.xlane.xlu0 %5611
  %5613 = vmax.xlane.f32.xlu0 %v5582
  %v5614 = vpop.xlane.xlu0 %5613
  %v5615 = vsub.f32 %v5567, %v5584
  %v5616 = vsub.f32 %v5568, %v5586
  %v5617 = vsub.f32 %v5569, %v5588
  %v5618 = vsub.f32 %v5570, %v5590
  %v5619 = vsub.f32 %v5571, %v5592
  %v5620 = vsub.f32 %v5572, %v5594
  %v5621 = vsub.f32 %v5573, %v5596
  %v5622 = vsub.f32 %v5574, %v5598
  %v5623 = vsub.f32 %v5575, %v5600
  %v5624 = vsub.f32 %v5576, %v5602
  %v5625 = vsub.f32 %v5577, %v5604
  %v5626 = vsub.f32 %v5578, %v5606
  %v5627 = vsub.f32 %v5579, %v5608
  %v5628 = vsub.f32 %v5580, %v5610
  %v5629 = vsub.f32 %v5581, %v5612
  %v5630 = vsub.f32 %v5582, %v5614
  %v5631 = vmul.f32 %v5615, 1.442695
  %v5632 = vpow.pop %v5631
  %v5633 = vmul.f32 %v5616, 1.442695
  %v5634 = vpow.pop %v5633
  %v5635 = vmul.f32 %v5617, 1.442695
  %v5636 = vpow.pop %v5635
  %v5637 = vmul.f32 %v5618, 1.442695
  %v5638 = vpow.pop %v5637
  %v5639 = vmul.f32 %v5619, 1.442695
  %v5640 = vpow.pop %v5639
  %v5641 = vmul.f32 %v5620, 1.442695
  %v5642 = vpow.pop %v5641
  %v5643 = vmul.f32 %v5621, 1.442695
  %v5644 = vpow.pop %v5643
  %v5645 = vmul.f32 %v5622, 1.442695
  %v5646 = vpow.pop %v5645
  %v5647 = vmul.f32 %v5623, 1.442695
  %v5648 = vpow.pop %v5647
  %v5649 = vmul.f32 %v5624, 1.442695
  %v5650 = vpow.pop %v5649
  %v5651 = vmul.f32 %v5625, 1.442695
  %v5652 = vpow.pop %v5651
  %v5653 = vmul.f32 %v5626, 1.442695
  %v5654 = vpow.pop %v5653
  %v5655 = vmul.f32 %v5627, 1.442695
  %v5656 = vpow.pop %v5655
  %v5657 = vmul.f32 %v5628, 1.442695
  %v5658 = vpow.pop %v5657
  %v5659 = vmul.f32 %v5629, 1.442695
  %v5660 = vpow.pop %v5659
  %v5661 = vmul.f32 %v5630, 1.442695
  %v5662 = vpow.pop %v5661
  %v5663 = vmul.f32 %v5102, %v697
  %v5664 = vmul.f32 %v5105, %v697
  %v5665 = vmul.f32 %v5110, %v697
  %v5666 = vmul.f32 %v5113, %v697
  %v5667 = vmul.f32 %v5118, %v697
  %v5668 = vmul.f32 %v5121, %v697
  %v5669 = vmul.f32 %v5126, %v697
  %v5670 = vmul.f32 %v5129, %v697
  %v5671 = vmul.f32 %v5134, %v697
  %v5672 = vmul.f32 %v5137, %v697
  %v5673 = vmul.f32 %v5142, %v697
  %v5674 = vmul.f32 %v5145, %v697
  %v5675 = vmul.f32 %v5150, %v697
  %v5676 = vmul.f32 %v5153, %v697
  %v5677 = vmul.f32 %v5158, %v697
  %v5678 = vmul.f32 %v5161, %v697
  %v5679 = vpack.c.bf16 %v5664, %v5663
  %v5680 = vpack.c.bf16 %v5666, %v5665
  %v5681 = vpack.c.bf16 %v5668, %v5667
  %v5682 = vpack.c.bf16 %v5670, %v5669
  %v5683 = vpack.c.bf16 %v5672, %v5671
  %v5684 = vpack.c.bf16 %v5674, %v5673
  %v5685 = vpack.c.bf16 %v5676, %v5675
  %v5686 = vpack.c.bf16 %v5678, %v5677
  %v5687 = vpack.c.bf16 %v5634, %v5632
  %v5688 = vpack.c.bf16 %v5638, %v5636
  %v5689 = vpack.c.bf16 %v5642, %v5640
  %v5690 = vpack.c.bf16 %v5646, %v5644
  %v5691 = vpack.c.bf16 %v5650, %v5648
  %v5692 = vpack.c.bf16 %v5654, %v5652
  %v5693 = vpack.c.bf16 %v5658, %v5656
  %v5694 = vpack.c.bf16 %v5662, %v5660
  %5695 = vmatprep.subr.bf16.mxu0 0
  %5696 = vmatpush1.bf16.msra.mxu0 %v5679
  %5697 = vmatprep.subr.bf16.mxu0 0
  %5698 = vmatpush1.bf16.msra.mxu0 %v5680
  %5699 = vmatprep.subr.bf16.mxu0 0
  %5700 = vmatpush1.bf16.msra.mxu0 %v5681
  %5701 = vmatprep.subr.bf16.mxu0 0
  %5702 = vmatpush1.bf16.msra.mxu0 %v5682
  %5703 = vmatprep.subr.bf16.mxu0 0
  %5704 = vmatpush1.bf16.msra.mxu0 %v5683
  %5705 = vmatprep.subr.bf16.mxu0 0
  %5706 = vmatpush1.bf16.msra.mxu0 %v5684
  %5707 = vmatprep.subr.bf16.mxu0 0
  %5708 = vmatpush1.bf16.msra.mxu0 %v5685
  %5709 = vmatprep.subr.bf16.mxu0 0
  %5710 = vmatpush1.bf16.msra.mxu0 %v5686
  %5711 = vmatprep.subr.bf16.mxu0 0
  %5712 = vmatpush1.bf16.msra.mxu0 0
  %5713 = vmatprep.subr.bf16.mxu0 0
  %5714 = vmatpush1.bf16.msra.mxu0 0
  %5715 = vmatprep.subr.bf16.mxu0 0
  %5716 = vmatpush1.bf16.msra.mxu0 0
  %5717 = vmatprep.subr.bf16.mxu0 0
  %5718 = vmatpush1.bf16.msra.mxu0 0
  %5719 = vmatprep.subr.bf16.mxu0 0
  %5720 = vmatpush1.bf16.msra.mxu0 0
  %5721 = vmatprep.subr.bf16.mxu0 0
  %5722 = vmatpush1.bf16.msra.mxu0 0
  %5723 = vmatprep.subr.bf16.mxu0 0
  %5724 = vmatpush1.bf16.msra.mxu0 0
  %5725 = vmatprep.subr.bf16.mxu0 0
  %5726 = vmatpush1.bf16.msra.mxu0 0
  %5727 = vmatprep.mubr.bf16.mxu0 0
  %5728 = vmatmul.mubr.bf16.gmra.mrb[0].mxu0 %v5687
  %v5729 = vpop.f32.mrb[0].mxu0
  %v5730 = vadd.f32 0.0, %v5729
  %v5731 = vpop.f32.mrb[0].mxu0
  %v5732 = vpop.f32.mrb[0].mxu0
  %v5733 = vadd.f32 0.0, %v5732
  %v5734 = vpop.f32.mrb[0].mxu0
  %5735 = vmatprep.mubr.bf16.mxu0 0
  %5736 = vmatmul.mubr.bf16.gmra.mrb[0].mxu0 %v5688
  %v5737 = vpop.f32.mrb[0].mxu0
  %v5738 = vadd.f32 0.0, %v5737
  %v5739 = vpop.f32.mrb[0].mxu0
  %v5740 = vpop.f32.mrb[0].mxu0
  %v5741 = vadd.f32 0.0, %v5740
  %v5742 = vpop.f32.mrb[0].mxu0
  %5743 = vmatprep.mubr.bf16.mxu0 0
  %5744 = vmatmul.mubr.bf16.gmra.mrb[0].mxu0 %v5689
  %v5745 = vpop.f32.mrb[0].mxu0
  %v5746 = vadd.f32 0.0, %v5745
  %v5747 = vpop.f32.mrb[0].mxu0
  %v5748 = vpop.f32.mrb[0].mxu0
  %v5749 = vadd.f32 0.0, %v5748
  %v5750 = vpop.f32.mrb[0].mxu0
  %5751 = vmatprep.mubr.bf16.mxu0 0
  %5752 = vmatmul.mubr.bf16.gmra.mrb[0].mxu0 %v5690
  %v5753 = vpop.f32.mrb[0].mxu0
  %v5754 = vadd.f32 0.0, %v5753
  %v5755 = vpop.f32.mrb[0].mxu0
  %v5756 = vpop.f32.mrb[0].mxu0
  %v5757 = vadd.f32 0.0, %v5756
  %v5758 = vpop.f32.mrb[0].mxu0
  %5759 = vmatprep.mubr.bf16.mxu0 0
  %5760 = vmatmul.mubr.bf16.gmra.mrb[0].mxu0 %v5691
  %v5761 = vpop.f32.mrb[0].mxu0
  %v5762 = vadd.f32 0.0, %v5761
  %v5763 = vpop.f32.mrb[0].mxu0
  %v5764 = vpop.f32.mrb[0].mxu0
  %v5765 = vadd.f32 0.0, %v5764
  %v5766 = vpop.f32.mrb[0].mxu0
  %5767 = vmatprep.mubr.bf16.mxu0 0
  %5768 = vmatmul.mubr.bf16.gmra.mrb[0].mxu0 %v5692
  %v5769 = vpop.f32.mrb[0].mxu0
  %v5770 = vadd.f32 0.0, %v5769
  %v5771 = vpop.f32.mrb[0].mxu0
  %v5772 = vpop.f32.mrb[0].mxu0
  %v5773 = vadd.f32 0.0, %v5772
  %v5774 = vpop.f32.mrb[0].mxu0
  %5775 = vmatprep.mubr.bf16.mxu0 0
  %5776 = vmatmul.mubr.bf16.gmra.mrb[0].mxu0 %v5693
  %v5777 = vpop.f32.mrb[0].mxu0
  %v5778 = vadd.f32 0.0, %v5777
  %v5779 = vpop.f32.mrb[0].mxu0
  %v5780 = vpop.f32.mrb[0].mxu0
  %v5781 = vadd.f32 0.0, %v5780
  %v5782 = vpop.f32.mrb[0].mxu0
  %5783 = vmatprep.mubr.bf16.mxu0 0
  %5784 = vmatmul.mubr.bf16.gmra.mrb[0].mxu0 %v5694
  %v5785 = vpop.f32.mrb[0].mxu0
  %v5786 = vadd.f32 0.0, %v5785
  %v5787 = vpop.f32.mrb[0].mxu0
  %v5788 = vpop.f32.mrb[0].mxu0
  %v5789 = vadd.f32 0.0, %v5788
  %v5790 = vpop.f32.mrb[0].mxu0
  %5791 = vdwg.mxu0
  %v5792 = vrcp.pop %v5730
  %v5793 = vrcp.pop %v5733
  %v5794 = vrcp.pop %v5738
  %v5795 = vrcp.pop %v5741
  %v5796 = vrcp.pop %v5746
  %v5797 = vrcp.pop %v5749
  %v5798 = vrcp.pop %v5754
  %v5799 = vrcp.pop %v5757
  %v5800 = vrcp.pop %v5762
  %v5801 = vrcp.pop %v5765
  %v5802 = vrcp.pop %v5770
  %v5803 = vrcp.pop %v5773
  %v5804 = vrcp.pop %v5778
  %v5805 = vrcp.pop %v5781
  %v5806 = vrcp.pop %v5786
  %v5807 = vrcp.pop %v5789
  %5809 = vset.pattern.permute.xlu0 32
  %5810 = vperm.xlu0 %5809, %v5792
  %v5811 = vpop.permute.xlu0 %5810
  %5814 = vset.pattern.permute.xlu0 32
  %5815 = vperm.xlu0 %5814, %v5793
  %v5816 = vpop.permute.xlu0 %5815
  %5819 = vset.pattern.permute.xlu0 32
  %5820 = vperm.xlu0 %5819, %v5794
  %v5821 = vpop.permute.xlu0 %5820
  %5824 = vset.pattern.permute.xlu0 32
  %5825 = vperm.xlu0 %5824, %v5795
  %v5826 = vpop.permute.xlu0 %5825
  %5829 = vset.pattern.permute.xlu0 32
  %5830 = vperm.xlu0 %5829, %v5796
  %v5831 = vpop.permute.xlu0 %5830
  %5834 = vset.pattern.permute.xlu0 32
  %5835 = vperm.xlu0 %5834, %v5797
  %v5836 = vpop.permute.xlu0 %5835
  %5839 = vset.pattern.permute.xlu0 32
  %5840 = vperm.xlu0 %5839, %v5798
  %v5841 = vpop.permute.xlu0 %5840
  %5844 = vset.pattern.permute.xlu0 32
  %5845 = vperm.xlu0 %5844, %v5799
  %v5846 = vpop.permute.xlu0 %5845
  %5849 = vset.pattern.permute.xlu0 32
  %5850 = vperm.xlu0 %5849, %v5800
  %v5851 = vpop.permute.xlu0 %5850
  %5854 = vset.pattern.permute.xlu0 32
  %5855 = vperm.xlu0 %5854, %v5801
  %v5856 = vpop.permute.xlu0 %5855
  %5859 = vset.pattern.permute.xlu0 32
  %5860 = vperm.xlu0 %5859, %v5802
  %v5861 = vpop.permute.xlu0 %5860
  %5864 = vset.pattern.permute.xlu0 32
  %5865 = vperm.xlu0 %5864, %v5803
  %v5866 = vpop.permute.xlu0 %5865
  %5869 = vset.pattern.permute.xlu0 32
  %5870 = vperm.xlu0 %5869, %v5804
  %v5871 = vpop.permute.xlu0 %5870
  %5874 = vset.pattern.permute.xlu0 32
  %5875 = vperm.xlu0 %5874, %v5805
  %v5876 = vpop.permute.xlu0 %5875
  %5879 = vset.pattern.permute.xlu0 32
  %5880 = vperm.xlu0 %5879, %v5806
  %v5881 = vpop.permute.xlu0 %5880
  %5884 = vset.pattern.permute.xlu0 32
  %5885 = vperm.xlu0 %5884, %v5807
  %v5886 = vpop.permute.xlu0 %5885
  %v5888 = vmul.f32 %v5730, %v5811
  %v5889 = vmul.f32 %v5733, %v5816
  %v5890 = vmul.f32 %v5738, %v5821
  %v5891 = vmul.f32 %v5741, %v5826
  %v5892 = vmul.f32 %v5746, %v5831
  %v5893 = vmul.f32 %v5749, %v5836
  %v5894 = vmul.f32 %v5754, %v5841
  %v5895 = vmul.f32 %v5757, %v5846
  %v5896 = vmul.f32 %v5762, %v5851
  %v5897 = vmul.f32 %v5765, %v5856
  %v5898 = vmul.f32 %v5770, %v5861
  %v5899 = vmul.f32 %v5773, %v5866
  %v5900 = vmul.f32 %v5778, %v5871
  %v5901 = vmul.f32 %v5781, %v5876
  %v5902 = vmul.f32 %v5786, %v5881
  %v5903 = vmul.f32 %v5789, %v5886
  %5904 = vst.msk [vmem:[#allocation2] sm:$0xff] %vm939, %v5888
  %5905 = vst.msk [vmem:[#allocation2 + $0x8] sm:$0xff] %vm939, %v5889
  %5906 = vst.msk [vmem:[#allocation2 + $0x10] sm:$0xff] %vm939, %v5890
  %5907 = vst.msk [vmem:[#allocation2 + $0x18] sm:$0xff] %vm939, %v5891
  %5908 = vst.msk [vmem:[#allocation2 + $0x20] sm:$0xff] %vm939, %v5892
  %5909 = vst.msk [vmem:[#allocation2 + $0x28] sm:$0xff] %vm939, %v5893
  %5910 = vst.msk [vmem:[#allocation2 + $0x30] sm:$0xff] %vm939, %v5894
  %5911 = vst.msk [vmem:[#allocation2 + $0x38] sm:$0xff] %vm939, %v5895
  %5912 = vst.msk [vmem:[#allocation2 + $0x40] sm:$0xff] %vm939, %v5896
  %5913 = vst.msk [vmem:[#allocation2 + $0x48] sm:$0xff] %vm939, %v5897
  %5914 = vst.msk [vmem:[#allocation2 + $0x50] sm:$0xff] %vm939, %v5898
  %5915 = vst.msk [vmem:[#allocation2 + $0x58] sm:$0xff] %vm939, %v5899
  %5916 = vst.msk [vmem:[#allocation2 + $0x60] sm:$0xff] %vm939, %v5900
  %5917 = vst.msk [vmem:[#allocation2 + $0x68] sm:$0xff] %vm939, %v5901
  %5918 = vst.msk [vmem:[#allocation2 + $0x70] sm:$0xff] %vm939, %v5902
  %5919 = vst.msk [vmem:[#allocation2 + $0x78] sm:$0xff] %vm939, %v5903
  %5920 = vset.pattern.permute.xlu0 1
  %5921 = vperm.xlu0 %5920, %v5357
  %v5922 = vpop.permute.xlu0 %5921
  %5924 = vset.pattern.permute.xlu0 1
  %5925 = vperm.xlu0 %5924, %v5362
  %v5926 = vpop.permute.xlu0 %5925
  %5928 = vset.pattern.permute.xlu0 1
  %5929 = vperm.xlu0 %5928, %v5367
  %v5930 = vpop.permute.xlu0 %5929
  %5932 = vset.pattern.permute.xlu0 1
  %5933 = vperm.xlu0 %5932, %v5372
  %v5934 = vpop.permute.xlu0 %5933
  %5936 = vset.pattern.permute.xlu0 1
  %5937 = vperm.xlu0 %5936, %v5377
  %v5938 = vpop.permute.xlu0 %5937
  %5940 = vset.pattern.permute.xlu0 1
  %5941 = vperm.xlu0 %5940, %v5382
  %v5942 = vpop.permute.xlu0 %5941
  %5944 = vset.pattern.permute.xlu0 1
  %5945 = vperm.xlu0 %5944, %v5387
  %v5946 = vpop.permute.xlu0 %5945
  %5948 = vset.pattern.permute.xlu0 1
  %5949 = vperm.xlu0 %5948, %v5392
  %v5950 = vpop.permute.xlu0 %5949
  %5952 = vset.pattern.permute.xlu0 1
  %5953 = vperm.xlu0 %5952, %v5397
  %v5954 = vpop.permute.xlu0 %5953
  %5956 = vset.pattern.permute.xlu0 1
  %5957 = vperm.xlu0 %5956, %v5402
  %v5958 = vpop.permute.xlu0 %5957
  %5960 = vset.pattern.permute.xlu0 1
  %5961 = vperm.xlu0 %5960, %v5407
  %v5962 = vpop.permute.xlu0 %5961
  %5964 = vset.pattern.permute.xlu0 1
  %5965 = vperm.xlu0 %5964, %v5412
  %v5966 = vpop.permute.xlu0 %5965
  %5968 = vset.pattern.permute.xlu0 1
  %5969 = vperm.xlu0 %5968, %v5417
  %v5970 = vpop.permute.xlu0 %5969
  %5972 = vset.pattern.permute.xlu0 1
  %5973 = vperm.xlu0 %5972, %v5422
  %v5974 = vpop.permute.xlu0 %5973
  %5976 = vset.pattern.permute.xlu0 1
  %5977 = vperm.xlu0 %5976, %v5427
  %v5978 = vpop.permute.xlu0 %5977
  %5980 = vset.pattern.permute.xlu0 1
  %5981 = vperm.xlu0 %5980, %v5432
  %v5982 = vpop.permute.xlu0 %5981
  %v5984 = vlaneseq
  %v5985 = vshrl.u32 %v5984, 7
  %v5986 = vsub.s32 1, %v5985
  %v5987 = vrot.slane %v5284, %v5986
  %v5988 = vadd.f32 %v5922, %v5987
  %v5989 = vadd.f32 %v5926, %v5987
  %v5990 = vadd.f32 %v5930, %v5987
  %v5991 = vadd.f32 %v5934, %v5987
  %v5992 = vadd.f32 %v5938, %v5987
  %v5993 = vadd.f32 %v5942, %v5987
  %v5994 = vadd.f32 %v5946, %v5987
  %v5995 = vadd.f32 %v5950, %v5987
  %v5996 = vadd.f32 %v5954, %v5987
  %v5997 = vadd.f32 %v5958, %v5987
  %v5998 = vadd.f32 %v5962, %v5987
  %v5999 = vadd.f32 %v5966, %v5987
  %v6000 = vadd.f32 %v5970, %v5987
  %v6001 = vadd.f32 %v5974, %v5987
  %v6002 = vadd.f32 %v5978, %v5987
  %v6003 = vadd.f32 %v5982, %v5987
  %v6004 = vmul.f32 %v5988, 0.2
  %v6005 = vmul.f32 %v5989, 0.2
  %v6006 = vmul.f32 %v5990, 0.2
  %v6007 = vmul.f32 %v5991, 0.2
  %v6008 = vmul.f32 %v5992, 0.2
  %v6009 = vmul.f32 %v5993, 0.2
  %v6010 = vmul.f32 %v5994, 0.2
  %v6011 = vmul.f32 %v5995, 0.2
  %v6012 = vmul.f32 %v5996, 0.2
  %v6013 = vmul.f32 %v5997, 0.2
  %v6014 = vmul.f32 %v5998, 0.2
  %v6015 = vmul.f32 %v5999, 0.2
  %v6016 = vmul.f32 %v6000, 0.2
  %v6017 = vmul.f32 %v6001, 0.2
  %v6018 = vmul.f32 %v6002, 0.2
  %v6019 = vmul.f32 %v6003, 0.2
  %v6020 = vmax.f32 %v5988, %v6004
  %v6021 = vmax.f32 %v5989, %v6005
  %v6022 = vmax.f32 %v5990, %v6006
  %v6023 = vmax.f32 %v5991, %v6007
  %v6024 = vmax.f32 %v5992, %v6008
  %v6025 = vmax.f32 %v5993, %v6009
  %v6026 = vmax.f32 %v5994, %v6010
  %v6027 = vmax.f32 %v5995, %v6011
  %v6028 = vmax.f32 %v5996, %v6012
  %v6029 = vmax.f32 %v5997, %v6013
  %v6030 = vmax.f32 %v5998, %v6014
  %v6031 = vmax.f32 %v5999, %v6015
  %v6032 = vmax.f32 %v6000, %v6016
  %v6033 = vmax.f32 %v6001, %v6017
  %v6034 = vmax.f32 %v6002, %v6018
  %v6035 = vmax.f32 %v6003, %v6019
  %v6036 = vadd.f32 %v6020, %v18
  %v6037 = vadd.f32 %v6021, %v19
  %v6038 = vadd.f32 %v6022, %v20
  %v6039 = vadd.f32 %v6023, %v21
  %v6040 = vadd.f32 %v6024, %v22
  %v6041 = vadd.f32 %v6025, %v23
  %v6042 = vadd.f32 %v6026, %v24
  %v6043 = vadd.f32 %v6027, %v25
  %v6044 = vadd.f32 %v6028, %v26
  %v6045 = vadd.f32 %v6029, %v27
  %v6046 = vadd.f32 %v6030, %v28
  %v6047 = vadd.f32 %v6031, %v29
  %v6048 = vadd.f32 %v6032, %v30
  %v6049 = vadd.f32 %v6033, %v31
  %v6050 = vadd.f32 %v6034, %v32
  %v6051 = vadd.f32 %v6035, %v33
  %6052 = vmax.xlane.f32.xlu0 %v6036
  %v6053 = vpop.xlane.xlu0 %6052
  %6054 = vmax.xlane.f32.xlu0 %v6037
  %v6055 = vpop.xlane.xlu0 %6054
  %6056 = vmax.xlane.f32.xlu0 %v6038
  %v6057 = vpop.xlane.xlu0 %6056
  %6058 = vmax.xlane.f32.xlu0 %v6039
  %v6059 = vpop.xlane.xlu0 %6058
  %6060 = vmax.xlane.f32.xlu0 %v6040
  %v6061 = vpop.xlane.xlu0 %6060
  %6062 = vmax.xlane.f32.xlu0 %v6041
  %v6063 = vpop.xlane.xlu0 %6062
  %6064 = vmax.xlane.f32.xlu0 %v6042
  %v6065 = vpop.xlane.xlu0 %6064
  %6066 = vmax.xlane.f32.xlu0 %v6043
  %v6067 = vpop.xlane.xlu0 %6066
  %6068 = vmax.xlane.f32.xlu0 %v6044
  %v6069 = vpop.xlane.xlu0 %6068
  %6070 = vmax.xlane.f32.xlu0 %v6045
  %v6071 = vpop.xlane.xlu0 %6070
  %6072 = vmax.xlane.f32.xlu0 %v6046
  %v6073 = vpop.xlane.xlu0 %6072
  %6074 = vmax.xlane.f32.xlu0 %v6047
  %v6075 = vpop.xlane.xlu0 %6074
  %6076 = vmax.xlane.f32.xlu0 %v6048
  %v6077 = vpop.xlane.xlu0 %6076
  %6078 = vmax.xlane.f32.xlu0 %v6049
  %v6079 = vpop.xlane.xlu0 %6078
  %6080 = vmax.xlane.f32.xlu0 %v6050
  %v6081 = vpop.xlane.xlu0 %6080
  %6082 = vmax.xlane.f32.xlu0 %v6051
  %v6083 = vpop.xlane.xlu0 %6082
  %v6084 = vsub.f32 %v6036, %v6053
  %v6085 = vsub.f32 %v6037, %v6055
  %v6086 = vsub.f32 %v6038, %v6057
  %v6087 = vsub.f32 %v6039, %v6059
  %v6088 = vsub.f32 %v6040, %v6061
  %v6089 = vsub.f32 %v6041, %v6063
  %v6090 = vsub.f32 %v6042, %v6065
  %v6091 = vsub.f32 %v6043, %v6067
  %v6092 = vsub.f32 %v6044, %v6069
  %v6093 = vsub.f32 %v6045, %v6071
  %v6094 = vsub.f32 %v6046, %v6073
  %v6095 = vsub.f32 %v6047, %v6075
  %v6096 = vsub.f32 %v6048, %v6077
  %v6097 = vsub.f32 %v6049, %v6079
  %v6098 = vsub.f32 %v6050, %v6081
  %v6099 = vsub.f32 %v6051, %v6083
  %v6100 = vmul.f32 %v6084, 1.442695
  %v6101 = vpow.pop %v6100
  %v6102 = vmul.f32 %v6085, 1.442695
  %v6103 = vpow.pop %v6102
  %v6104 = vmul.f32 %v6086, 1.442695
  %v6105 = vpow.pop %v6104
  %v6106 = vmul.f32 %v6087, 1.442695
  %v6107 = vpow.pop %v6106
  %v6108 = vmul.f32 %v6088, 1.442695
  %v6109 = vpow.pop %v6108
  %v6110 = vmul.f32 %v6089, 1.442695
  %v6111 = vpow.pop %v6110
  %v6112 = vmul.f32 %v6090, 1.442695
  %v6113 = vpow.pop %v6112
  %v6114 = vmul.f32 %v6091, 1.442695
  %v6115 = vpow.pop %v6114
  %v6116 = vmul.f32 %v6092, 1.442695
  %v6117 = vpow.pop %v6116
  %v6118 = vmul.f32 %v6093, 1.442695
  %v6119 = vpow.pop %v6118
  %v6120 = vmul.f32 %v6094, 1.442695
  %v6121 = vpow.pop %v6120
  %v6122 = vmul.f32 %v6095, 1.442695
  %v6123 = vpow.pop %v6122
  %v6124 = vmul.f32 %v6096, 1.442695
  %v6125 = vpow.pop %v6124
  %v6126 = vmul.f32 %v6097, 1.442695
  %v6127 = vpow.pop %v6126
  %v6128 = vmul.f32 %v6098, 1.442695
  %v6129 = vpow.pop %v6128
  %v6130 = vmul.f32 %v6099, 1.442695
  %v6131 = vpow.pop %v6130
  %v6132 = vmul.f32 %v5102, %v1171
  %v6133 = vmul.f32 %v5105, %v1171
  %v6134 = vmul.f32 %v5110, %v1171
  %v6135 = vmul.f32 %v5113, %v1171
  %v6136 = vmul.f32 %v5118, %v1171
  %v6137 = vmul.f32 %v5121, %v1171
  %v6138 = vmul.f32 %v5126, %v1171
  %v6139 = vmul.f32 %v5129, %v1171
  %v6140 = vmul.f32 %v5134, %v1171
  %v6141 = vmul.f32 %v5137, %v1171
  %v6142 = vmul.f32 %v5142, %v1171
  %v6143 = vmul.f32 %v5145, %v1171
  %v6144 = vmul.f32 %v5150, %v1171
  %v6145 = vmul.f32 %v5153, %v1171
  %v6146 = vmul.f32 %v5158, %v1171
  %v6147 = vmul.f32 %v5161, %v1171
  %v6148 = vpack.c.bf16 %v6133, %v6132
  %v6149 = vpack.c.bf16 %v6135, %v6134
  %v6150 = vpack.c.bf16 %v6137, %v6136
  %v6151 = vpack.c.bf16 %v6139, %v6138
  %v6152 = vpack.c.bf16 %v6141, %v6140
  %v6153 = vpack.c.bf16 %v6143, %v6142
  %v6154 = vpack.c.bf16 %v6145, %v6144
  %v6155 = vpack.c.bf16 %v6147, %v6146
  %v6156 = vpack.c.bf16 %v6103, %v6101
  %v6157 = vpack.c.bf16 %v6107, %v6105
  %v6158 = vpack.c.bf16 %v6111, %v6109
  %v6159 = vpack.c.bf16 %v6115, %v6113
  %v6160 = vpack.c.bf16 %v6119, %v6117
  %v6161 = vpack.c.bf16 %v6123, %v6121
  %v6162 = vpack.c.bf16 %v6127, %v6125
  %v6163 = vpack.c.bf16 %v6131, %v6129
  %6164 = vmatprep.subr.bf16.mxu0 0
  %6165 = vmatpush1.bf16.msra.mxu0 %v6148
  %6166 = vmatprep.subr.bf16.mxu0 0
  %6167 = vmatpush1.bf16.msra.mxu0 %v6149
  %6168 = vmatprep.subr.bf16.mxu0 0
  %6169 = vmatpush1.bf16.msra.mxu0 %v6150
  %6170 = vmatprep.subr.bf16.mxu0 0
  %6171 = vmatpush1.bf16.msra.mxu0 %v6151
  %6172 = vmatprep.subr.bf16.mxu0 0
  %6173 = vmatpush1.bf16.msra.mxu0 %v6152
  %6174 = vmatprep.subr.bf16.mxu0 0
  %6175 = vmatpush1.bf16.msra.mxu0 %v6153
  %6176 = vmatprep.subr.bf16.mxu0 0
  %6177 = vmatpush1.bf16.msra.mxu0 %v6154
  %6178 = vmatprep.subr.bf16.mxu0 0
  %6179 = vmatpush1.bf16.msra.mxu0 %v6155
  %6180 = vmatprep.subr.bf16.mxu0 0
  %6181 = vmatpush1.bf16.msra.mxu0 0
  %6182 = vmatprep.subr.bf16.mxu0 0
  %6183 = vmatpush1.bf16.msra.mxu0 0
  %6184 = vmatprep.subr.bf16.mxu0 0
  %6185 = vmatpush1.bf16.msra.mxu0 0
  %6186 = vmatprep.subr.bf16.mxu0 0
  %6187 = vmatpush1.bf16.msra.mxu0 0
  %6188 = vmatprep.subr.bf16.mxu0 0
  %6189 = vmatpush1.bf16.msra.mxu0 0
  %6190 = vmatprep.subr.bf16.mxu0 0
  %6191 = vmatpush1.bf16.msra.mxu0 0
  %6192 = vmatprep.subr.bf16.mxu0 0
  %6193 = vmatpush1.bf16.msra.mxu0 0
  %6194 = vmatprep.subr.bf16.mxu0 0
  %6195 = vmatpush1.bf16.msra.mxu0 0
  %6196 = vmatprep.mubr.bf16.mxu0 0
  %6197 = vmatmul.mubr.bf16.gmra.mrb[0].mxu0 %v6156
  %v6198 = vpop.f32.mrb[0].mxu0
  %v6199 = vadd.f32 0.0, %v6198
  %v6200 = vpop.f32.mrb[0].mxu0
  %v6201 = vpop.f32.mrb[0].mxu0
  %v6202 = vadd.f32 0.0, %v6201
  %v6203 = vpop.f32.mrb[0].mxu0
  %6204 = vmatprep.mubr.bf16.mxu0 0
  %6205 = vmatmul.mubr.bf16.gmra.mrb[0].mxu0 %v6157
  %v6206 = vpop.f32.mrb[0].mxu0
  %v6207 = vadd.f32 0.0, %v6206
  %v6208 = vpop.f32.mrb[0].mxu0
  %v6209 = vpop.f32.mrb[0].mxu0
  %v6210 = vadd.f32 0.0, %v6209
  %v6211 = vpop.f32.mrb[0].mxu0
  %6212 = vmatprep.mubr.bf16.mxu0 0
  %6213 = vmatmul.mubr.bf16.gmra.mrb[0].mxu0 %v6158
  %v6214 = vpop.f32.mrb[0].mxu0
  %v6215 = vadd.f32 0.0, %v6214
  %v6216 = vpop.f32.mrb[0].mxu0
  %v6217 = vpop.f32.mrb[0].mxu0
  %v6218 = vadd.f32 0.0, %v6217
  %v6219 = vpop.f32.mrb[0].mxu0
  %6220 = vmatprep.mubr.bf16.mxu0 0
  %6221 = vmatmul.mubr.bf16.gmra.mrb[0].mxu0 %v6159
  %v6222 = vpop.f32.mrb[0].mxu0
  %v6223 = vadd.f32 0.0, %v6222
  %v6224 = vpop.f32.mrb[0].mxu0
  %v6225 = vpop.f32.mrb[0].mxu0
  %v6226 = vadd.f32 0.0, %v6225
  %v6227 = vpop.f32.mrb[0].mxu0
  %6228 = vmatprep.mubr.bf16.mxu0 0
  %6229 = vmatmul.mubr.bf16.gmra.mrb[0].mxu0 %v6160
  %v6230 = vpop.f32.mrb[0].mxu0
  %v6231 = vadd.f32 0.0, %v6230
  %v6232 = vpop.f32.mrb[0].mxu0
  %v6233 = vpop.f32.mrb[0].mxu0
  %v6234 = vadd.f32 0.0, %v6233
  %v6235 = vpop.f32.mrb[0].mxu0
  %6236 = vmatprep.mubr.bf16.mxu0 0
  %6237 = vmatmul.mubr.bf16.gmra.mrb[0].mxu0 %v6161
  %v6238 = vpop.f32.mrb[0].mxu0
  %v6239 = vadd.f32 0.0, %v6238
  %v6240 = vpop.f32.mrb[0].mxu0
  %v6241 = vpop.f32.mrb[0].mxu0
  %v6242 = vadd.f32 0.0, %v6241
  %v6243 = vpop.f32.mrb[0].mxu0
  %6244 = vmatprep.mubr.bf16.mxu0 0
  %6245 = vmatmul.mubr.bf16.gmra.mrb[0].mxu0 %v6162
  %v6246 = vpop.f32.mrb[0].mxu0
  %v6247 = vadd.f32 0.0, %v6246
  %v6248 = vpop.f32.mrb[0].mxu0
  %v6249 = vpop.f32.mrb[0].mxu0
  %v6250 = vadd.f32 0.0, %v6249
  %v6251 = vpop.f32.mrb[0].mxu0
  %6252 = vmatprep.mubr.bf16.mxu0 0
  %6253 = vmatmul.mubr.bf16.gmra.mrb[0].mxu0 %v6163
  %v6254 = vpop.f32.mrb[0].mxu0
  %v6255 = vadd.f32 0.0, %v6254
  %v6256 = vpop.f32.mrb[0].mxu0
  %v6257 = vpop.f32.mrb[0].mxu0
  %v6258 = vadd.f32 0.0, %v6257
  %v6259 = vpop.f32.mrb[0].mxu0
  %6260 = vdwg.mxu0
  %v6261 = vrcp.pop %v6199
  %v6262 = vrcp.pop %v6202
  %v6263 = vrcp.pop %v6207
  %v6264 = vrcp.pop %v6210
  %v6265 = vrcp.pop %v6215
  %v6266 = vrcp.pop %v6218
  %v6267 = vrcp.pop %v6223
  %v6268 = vrcp.pop %v6226
  %v6269 = vrcp.pop %v6231
  %v6270 = vrcp.pop %v6234
  %v6271 = vrcp.pop %v6239
  %v6272 = vrcp.pop %v6242
  %v6273 = vrcp.pop %v6247
  %v6274 = vrcp.pop %v6250
  %v6275 = vrcp.pop %v6255
  %v6276 = vrcp.pop %v6258
  %6278 = vset.pattern.permute.xlu0 33
  %6279 = vperm.xlu0 %6278, %v6261
  %v6280 = vpop.permute.xlu0 %6279
  %6283 = vset.pattern.permute.xlu0 33
  %6284 = vperm.xlu0 %6283, %v6262
  %v6285 = vpop.permute.xlu0 %6284
  %6288 = vset.pattern.permute.xlu0 33
  %6289 = vperm.xlu0 %6288, %v6263
  %v6290 = vpop.permute.xlu0 %6289
  %6293 = vset.pattern.permute.xlu0 33
  %6294 = vperm.xlu0 %6293, %v6264
  %v6295 = vpop.permute.xlu0 %6294
  %6298 = vset.pattern.permute.xlu0 33
  %6299 = vperm.xlu0 %6298, %v6265
  %v6300 = vpop.permute.xlu0 %6299
  %6303 = vset.pattern.permute.xlu0 33
  %6304 = vperm.xlu0 %6303, %v6266
  %v6305 = vpop.permute.xlu0 %6304
  %6308 = vset.pattern.permute.xlu0 33
  %6309 = vperm.xlu0 %6308, %v6267
  %v6310 = vpop.permute.xlu0 %6309
  %6313 = vset.pattern.permute.xlu0 33
  %6314 = vperm.xlu0 %6313, %v6268
  %v6315 = vpop.permute.xlu0 %6314
  %6318 = vset.pattern.permute.xlu0 33
  %6319 = vperm.xlu0 %6318, %v6269
  %v6320 = vpop.permute.xlu0 %6319
  %6323 = vset.pattern.permute.xlu0 33
  %6324 = vperm.xlu0 %6323, %v6270
  %v6325 = vpop.permute.xlu0 %6324
  %6328 = vset.pattern.permute.xlu0 33
  %6329 = vperm.xlu0 %6328, %v6271
  %v6330 = vpop.permute.xlu0 %6329
  %6333 = vset.pattern.permute.xlu0 33
  %6334 = vperm.xlu0 %6333, %v6272
  %v6335 = vpop.permute.xlu0 %6334
  %6338 = vset.pattern.permute.xlu0 33
  %6339 = vperm.xlu0 %6338, %v6273
  %v6340 = vpop.permute.xlu0 %6339
  %6343 = vset.pattern.permute.xlu0 33
  %6344 = vperm.xlu0 %6343, %v6274
  %v6345 = vpop.permute.xlu0 %6344
  %6348 = vset.pattern.permute.xlu0 33
  %6349 = vperm.xlu0 %6348, %v6275
  %v6350 = vpop.permute.xlu0 %6349
  %6353 = vset.pattern.permute.xlu0 33
  %6354 = vperm.xlu0 %6353, %v6276
  %v6355 = vpop.permute.xlu0 %6354
  %v6357 = vmul.f32 %v6199, %v6280
  %v6358 = vmul.f32 %v6202, %v6285
  %v6359 = vmul.f32 %v6207, %v6290
  %v6360 = vmul.f32 %v6210, %v6295
  %v6361 = vmul.f32 %v6215, %v6300
  %v6362 = vmul.f32 %v6218, %v6305
  %v6363 = vmul.f32 %v6223, %v6310
  %v6364 = vmul.f32 %v6226, %v6315
  %v6365 = vmul.f32 %v6231, %v6320
  %v6366 = vmul.f32 %v6234, %v6325
  %v6367 = vmul.f32 %v6239, %v6330
  %v6368 = vmul.f32 %v6242, %v6335
  %v6369 = vmul.f32 %v6247, %v6340
  %v6370 = vmul.f32 %v6250, %v6345
  %v6371 = vmul.f32 %v6255, %v6350
  %v6372 = vmul.f32 %v6258, %v6355
  %v6373 = vld [vmem:[#allocation2] sm:$0xff]
  %v6374 = vld [vmem:[#allocation2 + $0x8] sm:$0xff]
  %v6375 = vld [vmem:[#allocation2 + $0x10] sm:$0xff]
  %v6376 = vld [vmem:[#allocation2 + $0x18] sm:$0xff]
  %v6377 = vld [vmem:[#allocation2 + $0x20] sm:$0xff]
  %v6378 = vld [vmem:[#allocation2 + $0x28] sm:$0xff]
  %v6379 = vld [vmem:[#allocation2 + $0x30] sm:$0xff]
  %v6380 = vld [vmem:[#allocation2 + $0x38] sm:$0xff]
  %v6381 = vld [vmem:[#allocation2 + $0x40] sm:$0xff]
  %v6382 = vld [vmem:[#allocation2 + $0x48] sm:$0xff]
  %v6383 = vld [vmem:[#allocation2 + $0x50] sm:$0xff]
  %v6384 = vld [vmem:[#allocation2 + $0x58] sm:$0xff]
  %v6385 = vld [vmem:[#allocation2 + $0x60] sm:$0xff]
  %v6386 = vld [vmem:[#allocation2 + $0x68] sm:$0xff]
  %v6387 = vld [vmem:[#allocation2 + $0x70] sm:$0xff]
  %v6388 = vld [vmem:[#allocation2 + $0x78] sm:$0xff]
  %v6389 = vadd.f32 %v6373, %v6357
  %v6390 = vadd.f32 %v6374, %v6358
  %v6391 = vadd.f32 %v6375, %v6359
  %v6392 = vadd.f32 %v6376, %v6360
  %v6393 = vadd.f32 %v6377, %v6361
  %v6394 = vadd.f32 %v6378, %v6362
  %v6395 = vadd.f32 %v6379, %v6363
  %v6396 = vadd.f32 %v6380, %v6364
  %v6397 = vadd.f32 %v6381, %v6365
  %v6398 = vadd.f32 %v6382, %v6366
  %v6399 = vadd.f32 %v6383, %v6367
  %v6400 = vadd.f32 %v6384, %v6368
  %v6401 = vadd.f32 %v6385, %v6369
  %v6402 = vadd.f32 %v6386, %v6370
  %v6403 = vadd.f32 %v6387, %v6371
  %v6404 = vadd.f32 %v6388, %v6372
  %6405 = vst.msk [vmem:[#allocation2] sm:$0xff] %vm939, %v6389
  %6406 = vst.msk [vmem:[#allocation2 + $0x8] sm:$0xff] %vm939, %v6390
  %6407 = vst.msk [vmem:[#allocation2 + $0x10] sm:$0xff] %vm939, %v6391
  %6408 = vst.msk [vmem:[#allocation2 + $0x18] sm:$0xff] %vm939, %v6392
  %6409 = vst.msk [vmem:[#allocation2 + $0x20] sm:$0xff] %vm939, %v6393
  %6410 = vst.msk [vmem:[#allocation2 + $0x28] sm:$0xff] %vm939, %v6394
  %6411 = vst.msk [vmem:[#allocation2 + $0x30] sm:$0xff] %vm939, %v6395
  %6412 = vst.msk [vmem:[#allocation2 + $0x38] sm:$0xff] %vm939, %v6396
  %6413 = vst.msk [vmem:[#allocation2 + $0x40] sm:$0xff] %vm939, %v6397
  %6414 = vst.msk [vmem:[#allocation2 + $0x48] sm:$0xff] %vm939, %v6398
  %6415 = vst.msk [vmem:[#allocation2 + $0x50] sm:$0xff] %vm939, %v6399
  %6416 = vst.msk [vmem:[#allocation2 + $0x58] sm:$0xff] %vm939, %v6400
  %6417 = vst.msk [vmem:[#allocation2 + $0x60] sm:$0xff] %vm939, %v6401
  %6418 = vst.msk [vmem:[#allocation2 + $0x68] sm:$0xff] %vm939, %v6402
  %6419 = vst.msk [vmem:[#allocation2 + $0x70] sm:$0xff] %vm939, %v6403
  %6420 = vst.msk [vmem:[#allocation2 + $0x78] sm:$0xff] %vm939, %v6404
  %6421 = vset.pattern.permute.xlu0 2
  %6422 = vperm.xlu0 %6421, %v5357
  %v6423 = vpop.permute.xlu0 %6422
  %6425 = vset.pattern.permute.xlu0 2
  %6426 = vperm.xlu0 %6425, %v5362
  %v6427 = vpop.permute.xlu0 %6426
  %6429 = vset.pattern.permute.xlu0 2
  %6430 = vperm.xlu0 %6429, %v5367
  %v6431 = vpop.permute.xlu0 %6430
  %6433 = vset.pattern.permute.xlu0 2
  %6434 = vperm.xlu0 %6433, %v5372
  %v6435 = vpop.permute.xlu0 %6434
  %6437 = vset.pattern.permute.xlu0 2
  %6438 = vperm.xlu0 %6437, %v5377
  %v6439 = vpop.permute.xlu0 %6438
  %6441 = vset.pattern.permute.xlu0 2
  %6442 = vperm.xlu0 %6441, %v5382
  %v6443 = vpop.permute.xlu0 %6442
  %6445 = vset.pattern.permute.xlu0 2
  %6446 = vperm.xlu0 %6445, %v5387
  %v6447 = vpop.permute.xlu0 %6446
  %6449 = vset.pattern.permute.xlu0 2
  %6450 = vperm.xlu0 %6449, %v5392
  %v6451 = vpop.permute.xlu0 %6450
  %6453 = vset.pattern.permute.xlu0 2
  %6454 = vperm.xlu0 %6453, %v5397
  %v6455 = vpop.permute.xlu0 %6454
  %6457 = vset.pattern.permute.xlu0 2
  %6458 = vperm.xlu0 %6457, %v5402
  %v6459 = vpop.permute.xlu0 %6458
  %6461 = vset.pattern.permute.xlu0 2
  %6462 = vperm.xlu0 %6461, %v5407
  %v6463 = vpop.permute.xlu0 %6462
  %6465 = vset.pattern.permute.xlu0 2
  %6466 = vperm.xlu0 %6465, %v5412
  %v6467 = vpop.permute.xlu0 %6466
  %6469 = vset.pattern.permute.xlu0 2
  %6470 = vperm.xlu0 %6469, %v5417
  %v6471 = vpop.permute.xlu0 %6470
  %6473 = vset.pattern.permute.xlu0 2
  %6474 = vperm.xlu0 %6473, %v5422
  %v6475 = vpop.permute.xlu0 %6474
  %6477 = vset.pattern.permute.xlu0 2
  %6478 = vperm.xlu0 %6477, %v5427
  %v6479 = vpop.permute.xlu0 %6478
  %6481 = vset.pattern.permute.xlu0 2
  %6482 = vperm.xlu0 %6481, %v5432
  %v6483 = vpop.permute.xlu0 %6482
  %v6485 = vlaneseq
  %v6486 = vshrl.u32 %v6485, 7
  %v6487 = vsub.s32 2, %v6486
  %v6488 = vrot.slane %v5284, %v6487
  %v6489 = vadd.f32 %v6423, %v6488
  %v6490 = vadd.f32 %v6427, %v6488
  %v6491 = vadd.f32 %v6431, %v6488
  %v6492 = vadd.f32 %v6435, %v6488
  %v6493 = vadd.f32 %v6439, %v6488
  %v6494 = vadd.f32 %v6443, %v6488
  %v6495 = vadd.f32 %v6447, %v6488
  %v6496 = vadd.f32 %v6451, %v6488
  %v6497 = vadd.f32 %v6455, %v6488
  %v6498 = vadd.f32 %v6459, %v6488
  %v6499 = vadd.f32 %v6463, %v6488
  %v6500 = vadd.f32 %v6467, %v6488
  %v6501 = vadd.f32 %v6471, %v6488
  %v6502 = vadd.f32 %v6475, %v6488
  %v6503 = vadd.f32 %v6479, %v6488
  %v6504 = vadd.f32 %v6483, %v6488
  %v6505 = vmul.f32 %v6489, 0.2
  %v6506 = vmul.f32 %v6490, 0.2
  %v6507 = vmul.f32 %v6491, 0.2
  %v6508 = vmul.f32 %v6492, 0.2
  %v6509 = vmul.f32 %v6493, 0.2
  %v6510 = vmul.f32 %v6494, 0.2
  %v6511 = vmul.f32 %v6495, 0.2
  %v6512 = vmul.f32 %v6496, 0.2
  %v6513 = vmul.f32 %v6497, 0.2
  %v6514 = vmul.f32 %v6498, 0.2
  %v6515 = vmul.f32 %v6499, 0.2
  %v6516 = vmul.f32 %v6500, 0.2
  %v6517 = vmul.f32 %v6501, 0.2
  %v6518 = vmul.f32 %v6502, 0.2
  %v6519 = vmul.f32 %v6503, 0.2
  %v6520 = vmul.f32 %v6504, 0.2
  %v6521 = vmax.f32 %v6489, %v6505
  %v6522 = vmax.f32 %v6490, %v6506
  %v6523 = vmax.f32 %v6491, %v6507
  %v6524 = vmax.f32 %v6492, %v6508
  %v6525 = vmax.f32 %v6493, %v6509
  %v6526 = vmax.f32 %v6494, %v6510
  %v6527 = vmax.f32 %v6495, %v6511
  %v6528 = vmax.f32 %v6496, %v6512
  %v6529 = vmax.f32 %v6497, %v6513
  %v6530 = vmax.f32 %v6498, %v6514
  %v6531 = vmax.f32 %v6499, %v6515
  %v6532 = vmax.f32 %v6500, %v6516
  %v6533 = vmax.f32 %v6501, %v6517
  %v6534 = vmax.f32 %v6502, %v6518
  %v6535 = vmax.f32 %v6503, %v6519
  %v6536 = vmax.f32 %v6504, %v6520
  %v6537 = vadd.f32 %v6521, %v18
  %v6538 = vadd.f32 %v6522, %v19
  %v6539 = vadd.f32 %v6523, %v20
  %v6540 = vadd.f32 %v6524, %v21
  %v6541 = vadd.f32 %v6525, %v22
  %v6542 = vadd.f32 %v6526, %v23
  %v6543 = vadd.f32 %v6527, %v24
  %v6544 = vadd.f32 %v6528, %v25
  %v6545 = vadd.f32 %v6529, %v26
  %v6546 = vadd.f32 %v6530, %v27
  %v6547 = vadd.f32 %v6531, %v28
  %v6548 = vadd.f32 %v6532, %v29
  %v6549 = vadd.f32 %v6533, %v30
  %v6550 = vadd.f32 %v6534, %v31
  %v6551 = vadd.f32 %v6535, %v32
  %v6552 = vadd.f32 %v6536, %v33
  %6553 = vmax.xlane.f32.xlu0 %v6537
  %v6554 = vpop.xlane.xlu0 %6553
  %6555 = vmax.xlane.f32.xlu0 %v6538
  %v6556 = vpop.xlane.xlu0 %6555
  %6557 = vmax.xlane.f32.xlu0 %v6539
  %v6558 = vpop.xlane.xlu0 %6557
  %6559 = vmax.xlane.f32.xlu0 %v6540
  %v6560 = vpop.xlane.xlu0 %6559
  %6561 = vmax.xlane.f32.xlu0 %v6541
  %v6562 = vpop.xlane.xlu0 %6561
  %6563 = vmax.xlane.f32.xlu0 %v6542
  %v6564 = vpop.xlane.xlu0 %6563
  %6565 = vmax.xlane.f32.xlu0 %v6543
  %v6566 = vpop.xlane.xlu0 %6565
  %6567 = vmax.xlane.f32.xlu0 %v6544
  %v6568 = vpop.xlane.xlu0 %6567
  %6569 = vmax.xlane.f32.xlu0 %v6545
  %v6570 = vpop.xlane.xlu0 %6569
  %6571 = vmax.xlane.f32.xlu0 %v6546
  %v6572 = vpop.xlane.xlu0 %6571
  %6573 = vmax.xlane.f32.xlu0 %v6547
  %v6574 = vpop.xlane.xlu0 %6573
  %6575 = vmax.xlane.f32.xlu0 %v6548
  %v6576 = vpop.xlane.xlu0 %6575
  %6577 = vmax.xlane.f32.xlu0 %v6549
  %v6578 = vpop.xlane.xlu0 %6577
  %6579 = vmax.xlane.f32.xlu0 %v6550
  %v6580 = vpop.xlane.xlu0 %6579
  %6581 = vmax.xlane.f32.xlu0 %v6551
  %v6582 = vpop.xlane.xlu0 %6581
  %6583 = vmax.xlane.f32.xlu0 %v6552
  %v6584 = vpop.xlane.xlu0 %6583
  %v6585 = vsub.f32 %v6537, %v6554
  %v6586 = vsub.f32 %v6538, %v6556
  %v6587 = vsub.f32 %v6539, %v6558
  %v6588 = vsub.f32 %v6540, %v6560
  %v6589 = vsub.f32 %v6541, %v6562
  %v6590 = vsub.f32 %v6542, %v6564
  %v6591 = vsub.f32 %v6543, %v6566
  %v6592 = vsub.f32 %v6544, %v6568
  %v6593 = vsub.f32 %v6545, %v6570
  %v6594 = vsub.f32 %v6546, %v6572
  %v6595 = vsub.f32 %v6547, %v6574
  %v6596 = vsub.f32 %v6548, %v6576
  %v6597 = vsub.f32 %v6549, %v6578
  %v6598 = vsub.f32 %v6550, %v6580
  %v6599 = vsub.f32 %v6551, %v6582
  %v6600 = vsub.f32 %v6552, %v6584
  %v6601 = vmul.f32 %v6585, 1.442695
  %v6602 = vpow.pop %v6601
  %v6603 = vmul.f32 %v6586, 1.442695
  %v6604 = vpow.pop %v6603
  %v6605 = vmul.f32 %v6587, 1.442695
  %v6606 = vpow.pop %v6605
  %v6607 = vmul.f32 %v6588, 1.442695
  %v6608 = vpow.pop %v6607
  %v6609 = vmul.f32 %v6589, 1.442695
  %v6610 = vpow.pop %v6609
  %v6611 = vmul.f32 %v6590, 1.442695
  %v6612 = vpow.pop %v6611
  %v6613 = vmul.f32 %v6591, 1.442695
  %v6614 = vpow.pop %v6613
  %v6615 = vmul.f32 %v6592, 1.442695
  %v6616 = vpow.pop %v6615
  %v6617 = vmul.f32 %v6593, 1.442695
  %v6618 = vpow.pop %v6617
  %v6619 = vmul.f32 %v6594, 1.442695
  %v6620 = vpow.pop %v6619
  %v6621 = vmul.f32 %v6595, 1.442695
  %v6622 = vpow.pop %v6621
  %v6623 = vmul.f32 %v6596, 1.442695
  %v6624 = vpow.pop %v6623
  %v6625 = vmul.f32 %v6597, 1.442695
  %v6626 = vpow.pop %v6625
  %v6627 = vmul.f32 %v6598, 1.442695
  %v6628 = vpow.pop %v6627
  %v6629 = vmul.f32 %v6599, 1.442695
  %v6630 = vpow.pop %v6629
  %v6631 = vmul.f32 %v6600, 1.442695
  %v6632 = vpow.pop %v6631
  %v6633 = vmul.f32 %v5102, %v1676
  %v6634 = vmul.f32 %v5105, %v1676
  %v6635 = vmul.f32 %v5110, %v1676
  %v6636 = vmul.f32 %v5113, %v1676
  %v6637 = vmul.f32 %v5118, %v1676
  %v6638 = vmul.f32 %v5121, %v1676
  %v6639 = vmul.f32 %v5126, %v1676
  %v6640 = vmul.f32 %v5129, %v1676
  %v6641 = vmul.f32 %v5134, %v1676
  %v6642 = vmul.f32 %v5137, %v1676
  %v6643 = vmul.f32 %v5142, %v1676
  %v6644 = vmul.f32 %v5145, %v1676
  %v6645 = vmul.f32 %v5150, %v1676
  %v6646 = vmul.f32 %v5153, %v1676
  %v6647 = vmul.f32 %v5158, %v1676
  %v6648 = vmul.f32 %v5161, %v1676
  %v6649 = vpack.c.bf16 %v6634, %v6633
  %v6650 = vpack.c.bf16 %v6636, %v6635
  %v6651 = vpack.c.bf16 %v6638, %v6637
  %v6652 = vpack.c.bf16 %v6640, %v6639
  %v6653 = vpack.c.bf16 %v6642, %v6641
  %v6654 = vpack.c.bf16 %v6644, %v6643
  %v6655 = vpack.c.bf16 %v6646, %v6645
  %v6656 = vpack.c.bf16 %v6648, %v6647
  %v6657 = vpack.c.bf16 %v6604, %v6602
  %v6658 = vpack.c.bf16 %v6608, %v6606
  %v6659 = vpack.c.bf16 %v6612, %v6610
  %v6660 = vpack.c.bf16 %v6616, %v6614
  %v6661 = vpack.c.bf16 %v6620, %v6618
  %v6662 = vpack.c.bf16 %v6624, %v6622
  %v6663 = vpack.c.bf16 %v6628, %v6626
  %v6664 = vpack.c.bf16 %v6632, %v6630
  %6665 = vmatprep.subr.bf16.mxu0 0
  %6666 = vmatpush1.bf16.msra.mxu0 %v6649
  %6667 = vmatprep.subr.bf16.mxu0 0
  %6668 = vmatpush1.bf16.msra.mxu0 %v6650
  %6669 = vmatprep.subr.bf16.mxu0 0
  %6670 = vmatpush1.bf16.msra.mxu0 %v6651
  %6671 = vmatprep.subr.bf16.mxu0 0
  %6672 = vmatpush1.bf16.msra.mxu0 %v6652
  %6673 = vmatprep.subr.bf16.mxu0 0
  %6674 = vmatpush1.bf16.msra.mxu0 %v6653
  %6675 = vmatprep.subr.bf16.mxu0 0
  %6676 = vmatpush1.bf16.msra.mxu0 %v6654
  %6677 = vmatprep.subr.bf16.mxu0 0
  %6678 = vmatpush1.bf16.msra.mxu0 %v6655
  %6679 = vmatprep.subr.bf16.mxu0 0
  %6680 = vmatpush1.bf16.msra.mxu0 %v6656
  %6681 = vmatprep.subr.bf16.mxu0 0
  %6682 = vmatpush1.bf16.msra.mxu0 0
  %6683 = vmatprep.subr.bf16.mxu0 0
  %6684 = vmatpush1.bf16.msra.mxu0 0
  %6685 = vmatprep.subr.bf16.mxu0 0
  %6686 = vmatpush1.bf16.msra.mxu0 0
  %6687 = vmatprep.subr.bf16.mxu0 0
  %6688 = vmatpush1.bf16.msra.mxu0 0
  %6689 = vmatprep.subr.bf16.mxu0 0
  %6690 = vmatpush1.bf16.msra.mxu0 0
  %6691 = vmatprep.subr.bf16.mxu0 0
  %6692 = vmatpush1.bf16.msra.mxu0 0
  %6693 = vmatprep.subr.bf16.mxu0 0
  %6694 = vmatpush1.bf16.msra.mxu0 0
  %6695 = vmatprep.subr.bf16.mxu0 0
  %6696 = vmatpush1.bf16.msra.mxu0 0
  %6697 = vmatprep.mubr.bf16.mxu0 0
  %6698 = vmatmul.mubr.bf16.gmra.mrb[0].mxu0 %v6657
  %v6699 = vpop.f32.mrb[0].mxu0
  %v6700 = vadd.f32 0.0, %v6699
  %v6701 = vpop.f32.mrb[0].mxu0
  %v6702 = vpop.f32.mrb[0].mxu0
  %v6703 = vadd.f32 0.0, %v6702
  %v6704 = vpop.f32.mrb[0].mxu0
  %6705 = vmatprep.mubr.bf16.mxu0 0
  %6706 = vmatmul.mubr.bf16.gmra.mrb[0].mxu0 %v6658
  %v6707 = vpop.f32.mrb[0].mxu0
  %v6708 = vadd.f32 0.0, %v6707
  %v6709 = vpop.f32.mrb[0].mxu0
  %v6710 = vpop.f32.mrb[0].mxu0
  %v6711 = vadd.f32 0.0, %v6710
  %v6712 = vpop.f32.mrb[0].mxu0
  %6713 = vmatprep.mubr.bf16.mxu0 0
  %6714 = vmatmul.mubr.bf16.gmra.mrb[0].mxu0 %v6659
  %v6715 = vpop.f32.mrb[0].mxu0
  %v6716 = vadd.f32 0.0, %v6715
  %v6717 = vpop.f32.mrb[0].mxu0
  %v6718 = vpop.f32.mrb[0].mxu0
  %v6719 = vadd.f32 0.0, %v6718
  %v6720 = vpop.f32.mrb[0].mxu0
  %6721 = vmatprep.mubr.bf16.mxu0 0
  %6722 = vmatmul.mubr.bf16.gmra.mrb[0].mxu0 %v6660
  %v6723 = vpop.f32.mrb[0].mxu0
  %v6724 = vadd.f32 0.0, %v6723
  %v6725 = vpop.f32.mrb[0].mxu0
  %v6726 = vpop.f32.mrb[0].mxu0
  %v6727 = vadd.f32 0.0, %v6726
  %v6728 = vpop.f32.mrb[0].mxu0
  %6729 = vmatprep.mubr.bf16.mxu0 0
  %6730 = vmatmul.mubr.bf16.gmra.mrb[0].mxu0 %v6661
  %v6731 = vpop.f32.mrb[0].mxu0
  %v6732 = vadd.f32 0.0, %v6731
  %v6733 = vpop.f32.mrb[0].mxu0
  %v6734 = vpop.f32.mrb[0].mxu0
  %v6735 = vadd.f32 0.0, %v6734
  %v6736 = vpop.f32.mrb[0].mxu0
  %6737 = vmatprep.mubr.bf16.mxu0 0
  %6738 = vmatmul.mubr.bf16.gmra.mrb[0].mxu0 %v6662
  %v6739 = vpop.f32.mrb[0].mxu0
  %v6740 = vadd.f32 0.0, %v6739
  %v6741 = vpop.f32.mrb[0].mxu0
  %v6742 = vpop.f32.mrb[0].mxu0
  %v6743 = vadd.f32 0.0, %v6742
  %v6744 = vpop.f32.mrb[0].mxu0
  %6745 = vmatprep.mubr.bf16.mxu0 0
  %6746 = vmatmul.mubr.bf16.gmra.mrb[0].mxu0 %v6663
  %v6747 = vpop.f32.mrb[0].mxu0
  %v6748 = vadd.f32 0.0, %v6747
  %v6749 = vpop.f32.mrb[0].mxu0
  %v6750 = vpop.f32.mrb[0].mxu0
  %v6751 = vadd.f32 0.0, %v6750
  %v6752 = vpop.f32.mrb[0].mxu0
  %6753 = vmatprep.mubr.bf16.mxu0 0
  %6754 = vmatmul.mubr.bf16.gmra.mrb[0].mxu0 %v6664
  %v6755 = vpop.f32.mrb[0].mxu0
  %v6756 = vadd.f32 0.0, %v6755
  %v6757 = vpop.f32.mrb[0].mxu0
  %v6758 = vpop.f32.mrb[0].mxu0
  %v6759 = vadd.f32 0.0, %v6758
  %v6760 = vpop.f32.mrb[0].mxu0
  %6761 = vdwg.mxu0
  %v6762 = vrcp.pop %v6700
  %v6763 = vrcp.pop %v6703
  %v6764 = vrcp.pop %v6708
  %v6765 = vrcp.pop %v6711
  %v6766 = vrcp.pop %v6716
  %v6767 = vrcp.pop %v6719
  %v6768 = vrcp.pop %v6724
  %v6769 = vrcp.pop %v6727
  %v6770 = vrcp.pop %v6732
  %v6771 = vrcp.pop %v6735
  %v6772 = vrcp.pop %v6740
  %v6773 = vrcp.pop %v6743
  %v6774 = vrcp.pop %v6748
  %v6775 = vrcp.pop %v6751
  %v6776 = vrcp.pop %v6756
  %v6777 = vrcp.pop %v6759
  %6779 = vset.pattern.permute.xlu0 34
  %6780 = vperm.xlu0 %6779, %v6762
  %v6781 = vpop.permute.xlu0 %6780
  %6784 = vset.pattern.permute.xlu0 34
  %6785 = vperm.xlu0 %6784, %v6763
  %v6786 = vpop.permute.xlu0 %6785
  %6789 = vset.pattern.permute.xlu0 34
  %6790 = vperm.xlu0 %6789, %v6764
  %v6791 = vpop.permute.xlu0 %6790
  %6794 = vset.pattern.permute.xlu0 34
  %6795 = vperm.xlu0 %6794, %v6765
  %v6796 = vpop.permute.xlu0 %6795
  %6799 = vset.pattern.permute.xlu0 34
  %6800 = vperm.xlu0 %6799, %v6766
  %v6801 = vpop.permute.xlu0 %6800
  %6804 = vset.pattern.permute.xlu0 34
  %6805 = vperm.xlu0 %6804, %v6767
  %v6806 = vpop.permute.xlu0 %6805
  %6809 = vset.pattern.permute.xlu0 34
  %6810 = vperm.xlu0 %6809, %v6768
  %v6811 = vpop.permute.xlu0 %6810
  %6814 = vset.pattern.permute.xlu0 34
  %6815 = vperm.xlu0 %6814, %v6769
  %v6816 = vpop.permute.xlu0 %6815
  %6819 = vset.pattern.permute.xlu0 34
  %6820 = vperm.xlu0 %6819, %v6770
  %v6821 = vpop.permute.xlu0 %6820
  %6824 = vset.pattern.permute.xlu0 34
  %6825 = vperm.xlu0 %6824, %v6771
  %v6826 = vpop.permute.xlu0 %6825
  %6829 = vset.pattern.permute.xlu0 34
  %6830 = vperm.xlu0 %6829, %v6772
  %v6831 = vpop.permute.xlu0 %6830
  %6834 = vset.pattern.permute.xlu0 34
  %6835 = vperm.xlu0 %6834, %v6773
  %v6836 = vpop.permute.xlu0 %6835
  %6839 = vset.pattern.permute.xlu0 34
  %6840 = vperm.xlu0 %6839, %v6774
  %v6841 = vpop.permute.xlu0 %6840
  %6844 = vset.pattern.permute.xlu0 34
  %6845 = vperm.xlu0 %6844, %v6775
  %v6846 = vpop.permute.xlu0 %6845
  %6849 = vset.pattern.permute.xlu0 34
  %6850 = vperm.xlu0 %6849, %v6776
  %v6851 = vpop.permute.xlu0 %6850
  %6854 = vset.pattern.permute.xlu0 34
  %6855 = vperm.xlu0 %6854, %v6777
  %v6856 = vpop.permute.xlu0 %6855
  %v6858 = vmul.f32 %v6700, %v6781
  %v6859 = vmul.f32 %v6703, %v6786
  %v6860 = vmul.f32 %v6708, %v6791
  %v6861 = vmul.f32 %v6711, %v6796
  %v6862 = vmul.f32 %v6716, %v6801
  %v6863 = vmul.f32 %v6719, %v6806
  %v6864 = vmul.f32 %v6724, %v6811
  %v6865 = vmul.f32 %v6727, %v6816
  %v6866 = vmul.f32 %v6732, %v6821
  %v6867 = vmul.f32 %v6735, %v6826
  %v6868 = vmul.f32 %v6740, %v6831
  %v6869 = vmul.f32 %v6743, %v6836
  %v6870 = vmul.f32 %v6748, %v6841
  %v6871 = vmul.f32 %v6751, %v6846
  %v6872 = vmul.f32 %v6756, %v6851
  %v6873 = vmul.f32 %v6759, %v6856
  %v6874 = vld [vmem:[#allocation2] sm:$0xff]
  %v6875 = vld [vmem:[#allocation2 + $0x8] sm:$0xff]
  %v6876 = vld [vmem:[#allocation2 + $0x10] sm:$0xff]
  %v6877 = vld [vmem:[#allocation2 + $0x18] sm:$0xff]
  %v6878 = vld [vmem:[#allocation2 + $0x20] sm:$0xff]
  %v6879 = vld [vmem:[#allocation2 + $0x28] sm:$0xff]
  %v6880 = vld [vmem:[#allocation2 + $0x30] sm:$0xff]
  %v6881 = vld [vmem:[#allocation2 + $0x38] sm:$0xff]
  %v6882 = vld [vmem:[#allocation2 + $0x40] sm:$0xff]
  %v6883 = vld [vmem:[#allocation2 + $0x48] sm:$0xff]
  %v6884 = vld [vmem:[#allocation2 + $0x50] sm:$0xff]
  %v6885 = vld [vmem:[#allocation2 + $0x58] sm:$0xff]
  %v6886 = vld [vmem:[#allocation2 + $0x60] sm:$0xff]
  %v6887 = vld [vmem:[#allocation2 + $0x68] sm:$0xff]
  %v6888 = vld [vmem:[#allocation2 + $0x70] sm:$0xff]
  %v6889 = vld [vmem:[#allocation2 + $0x78] sm:$0xff]
  %v6890 = vadd.f32 %v6874, %v6858
  %v6891 = vadd.f32 %v6875, %v6859
  %v6892 = vadd.f32 %v6876, %v6860
  %v6893 = vadd.f32 %v6877, %v6861
  %v6894 = vadd.f32 %v6878, %v6862
  %v6895 = vadd.f32 %v6879, %v6863
  %v6896 = vadd.f32 %v6880, %v6864
  %v6897 = vadd.f32 %v6881, %v6865
  %v6898 = vadd.f32 %v6882, %v6866
  %v6899 = vadd.f32 %v6883, %v6867
  %v6900 = vadd.f32 %v6884, %v6868
  %v6901 = vadd.f32 %v6885, %v6869
  %v6902 = vadd.f32 %v6886, %v6870
  %v6903 = vadd.f32 %v6887, %v6871
  %v6904 = vadd.f32 %v6888, %v6872
  %v6905 = vadd.f32 %v6889, %v6873
  %6906 = vst.msk [vmem:[#allocation2] sm:$0xff] %vm939, %v6890
  %6907 = vst.msk [vmem:[#allocation2 + $0x8] sm:$0xff] %vm939, %v6891
  %6908 = vst.msk [vmem:[#allocation2 + $0x10] sm:$0xff] %vm939, %v6892
  %6909 = vst.msk [vmem:[#allocation2 + $0x18] sm:$0xff] %vm939, %v6893
  %6910 = vst.msk [vmem:[#allocation2 + $0x20] sm:$0xff] %vm939, %v6894
  %6911 = vst.msk [vmem:[#allocation2 + $0x28] sm:$0xff] %vm939, %v6895
  %6912 = vst.msk [vmem:[#allocation2 + $0x30] sm:$0xff] %vm939, %v6896
  %6913 = vst.msk [vmem:[#allocation2 + $0x38] sm:$0xff] %vm939, %v6897
  %6914 = vst.msk [vmem:[#allocation2 + $0x40] sm:$0xff] %vm939, %v6898
  %6915 = vst.msk [vmem:[#allocation2 + $0x48] sm:$0xff] %vm939, %v6899
  %6916 = vst.msk [vmem:[#allocation2 + $0x50] sm:$0xff] %vm939, %v6900
  %6917 = vst.msk [vmem:[#allocation2 + $0x58] sm:$0xff] %vm939, %v6901
  %6918 = vst.msk [vmem:[#allocation2 + $0x60] sm:$0xff] %vm939, %v6902
  %6919 = vst.msk [vmem:[#allocation2 + $0x68] sm:$0xff] %vm939, %v6903
  %6920 = vst.msk [vmem:[#allocation2 + $0x70] sm:$0xff] %vm939, %v6904
  %6921 = vst.msk [vmem:[#allocation2 + $0x78] sm:$0xff] %vm939, %v6905
  %6922 = vset.pattern.permute.xlu0 3
  %6923 = vperm.xlu0 %6922, %v5357
  %v6924 = vpop.permute.xlu0 %6923
  %6926 = vset.pattern.permute.xlu0 3
  %6927 = vperm.xlu0 %6926, %v5362
  %v6928 = vpop.permute.xlu0 %6927
  %6930 = vset.pattern.permute.xlu0 3
  %6931 = vperm.xlu0 %6930, %v5367
  %v6932 = vpop.permute.xlu0 %6931
  %6934 = vset.pattern.permute.xlu0 3
  %6935 = vperm.xlu0 %6934, %v5372
  %v6936 = vpop.permute.xlu0 %6935
  %6938 = vset.pattern.permute.xlu0 3
  %6939 = vperm.xlu0 %6938, %v5377
  %v6940 = vpop.permute.xlu0 %6939
  %6942 = vset.pattern.permute.xlu0 3
  %6943 = vperm.xlu0 %6942, %v5382
  %v6944 = vpop.permute.xlu0 %6943
  %6946 = vset.pattern.permute.xlu0 3
  %6947 = vperm.xlu0 %6946, %v5387
  %v6948 = vpop.permute.xlu0 %6947
  %6950 = vset.pattern.permute.xlu0 3
  %6951 = vperm.xlu0 %6950, %v5392
  %v6952 = vpop.permute.xlu0 %6951
  %6954 = vset.pattern.permute.xlu0 3
  %6955 = vperm.xlu0 %6954, %v5397
  %v6956 = vpop.permute.xlu0 %6955
  %6958 = vset.pattern.permute.xlu0 3
  %6959 = vperm.xlu0 %6958, %v5402
  %v6960 = vpop.permute.xlu0 %6959
  %6962 = vset.pattern.permute.xlu0 3
  %6963 = vperm.xlu0 %6962, %v5407
  %v6964 = vpop.permute.xlu0 %6963
  %6966 = vset.pattern.permute.xlu0 3
  %6967 = vperm.xlu0 %6966, %v5412
  %v6968 = vpop.permute.xlu0 %6967
  %6970 = vset.pattern.permute.xlu0 3
  %6971 = vperm.xlu0 %6970, %v5417
  %v6972 = vpop.permute.xlu0 %6971
  %6974 = vset.pattern.permute.xlu0 3
  %6975 = vperm.xlu0 %6974, %v5422
  %v6976 = vpop.permute.xlu0 %6975
  %6978 = vset.pattern.permute.xlu0 3
  %6979 = vperm.xlu0 %6978, %v5427
  %v6980 = vpop.permute.xlu0 %6979
  %6982 = vset.pattern.permute.xlu0 3
  %6983 = vperm.xlu0 %6982, %v5432
  %v6984 = vpop.permute.xlu0 %6983
  %v6986 = vlaneseq
  %v6987 = vshrl.u32 %v6986, 7
  %v6988 = vsub.s32 3, %v6987
  %v6989 = vrot.slane %v5284, %v6988
  %v6990 = vadd.f32 %v6924, %v6989
  %v6991 = vadd.f32 %v6928, %v6989
  %v6992 = vadd.f32 %v6932, %v6989
  %v6993 = vadd.f32 %v6936, %v6989
  %v6994 = vadd.f32 %v6940, %v6989
  %v6995 = vadd.f32 %v6944, %v6989
  %v6996 = vadd.f32 %v6948, %v6989
  %v6997 = vadd.f32 %v6952, %v6989
  %v6998 = vadd.f32 %v6956, %v6989
  %v6999 = vadd.f32 %v6960, %v6989
  %v7000 = vadd.f32 %v6964, %v6989
  %v7001 = vadd.f32 %v6968, %v6989
  %v7002 = vadd.f32 %v6972, %v6989
  %v7003 = vadd.f32 %v6976, %v6989
  %v7004 = vadd.f32 %v6980, %v6989
  %v7005 = vadd.f32 %v6984, %v6989
  %v7006 = vmul.f32 %v6990, 0.2
  %v7007 = vmul.f32 %v6991, 0.2
  %v7008 = vmul.f32 %v6992, 0.2
  %v7009 = vmul.f32 %v6993, 0.2
  %v7010 = vmul.f32 %v6994, 0.2
  %v7011 = vmul.f32 %v6995, 0.2
  %v7012 = vmul.f32 %v6996, 0.2
  %v7013 = vmul.f32 %v6997, 0.2
  %v7014 = vmul.f32 %v6998, 0.2
  %v7015 = vmul.f32 %v6999, 0.2
  %v7016 = vmul.f32 %v7000, 0.2
  %v7017 = vmul.f32 %v7001, 0.2
  %v7018 = vmul.f32 %v7002, 0.2
  %v7019 = vmul.f32 %v7003, 0.2
  %v7020 = vmul.f32 %v7004, 0.2
  %v7021 = vmul.f32 %v7005, 0.2
  %v7022 = vmax.f32 %v6990, %v7006
  %v7023 = vmax.f32 %v6991, %v7007
  %v7024 = vmax.f32 %v6992, %v7008
  %v7025 = vmax.f32 %v6993, %v7009
  %v7026 = vmax.f32 %v6994, %v7010
  %v7027 = vmax.f32 %v6995, %v7011
  %v7028 = vmax.f32 %v6996, %v7012
  %v7029 = vmax.f32 %v6997, %v7013
  %v7030 = vmax.f32 %v6998, %v7014
  %v7031 = vmax.f32 %v6999, %v7015
  %v7032 = vmax.f32 %v7000, %v7016
  %v7033 = vmax.f32 %v7001, %v7017
  %v7034 = vmax.f32 %v7002, %v7018
  %v7035 = vmax.f32 %v7003, %v7019
  %v7036 = vmax.f32 %v7004, %v7020
  %v7037 = vmax.f32 %v7005, %v7021
  %v7038 = vadd.f32 %v7022, %v18
  %v7039 = vadd.f32 %v7023, %v19
  %v7040 = vadd.f32 %v7024, %v20
  %v7041 = vadd.f32 %v7025, %v21
  %v7042 = vadd.f32 %v7026, %v22
  %v7043 = vadd.f32 %v7027, %v23
  %v7044 = vadd.f32 %v7028, %v24
  %v7045 = vadd.f32 %v7029, %v25
  %v7046 = vadd.f32 %v7030, %v26
  %v7047 = vadd.f32 %v7031, %v27
  %v7048 = vadd.f32 %v7032, %v28
  %v7049 = vadd.f32 %v7033, %v29
  %v7050 = vadd.f32 %v7034, %v30
  %v7051 = vadd.f32 %v7035, %v31
  %v7052 = vadd.f32 %v7036, %v32
  %v7053 = vadd.f32 %v7037, %v33
  %7054 = vmax.xlane.f32.xlu0 %v7038
  %v7055 = vpop.xlane.xlu0 %7054
  %7056 = vmax.xlane.f32.xlu0 %v7039
  %v7057 = vpop.xlane.xlu0 %7056
  %7058 = vmax.xlane.f32.xlu0 %v7040
  %v7059 = vpop.xlane.xlu0 %7058
  %7060 = vmax.xlane.f32.xlu0 %v7041
  %v7061 = vpop.xlane.xlu0 %7060
  %7062 = vmax.xlane.f32.xlu0 %v7042
  %v7063 = vpop.xlane.xlu0 %7062
  %7064 = vmax.xlane.f32.xlu0 %v7043
  %v7065 = vpop.xlane.xlu0 %7064
  %7066 = vmax.xlane.f32.xlu0 %v7044
  %v7067 = vpop.xlane.xlu0 %7066
  %7068 = vmax.xlane.f32.xlu0 %v7045
  %v7069 = vpop.xlane.xlu0 %7068
  %7070 = vmax.xlane.f32.xlu0 %v7046
  %v7071 = vpop.xlane.xlu0 %7070
  %7072 = vmax.xlane.f32.xlu0 %v7047
  %v7073 = vpop.xlane.xlu0 %7072
  %7074 = vmax.xlane.f32.xlu0 %v7048
  %v7075 = vpop.xlane.xlu0 %7074
  %7076 = vmax.xlane.f32.xlu0 %v7049
  %v7077 = vpop.xlane.xlu0 %7076
  %7078 = vmax.xlane.f32.xlu0 %v7050
  %v7079 = vpop.xlane.xlu0 %7078
  %7080 = vmax.xlane.f32.xlu0 %v7051
  %v7081 = vpop.xlane.xlu0 %7080
  %7082 = vmax.xlane.f32.xlu0 %v7052
  %v7083 = vpop.xlane.xlu0 %7082
  %7084 = vmax.xlane.f32.xlu0 %v7053
  %v7085 = vpop.xlane.xlu0 %7084
  %v7086 = vsub.f32 %v7038, %v7055
  %v7087 = vsub.f32 %v7039, %v7057
  %v7088 = vsub.f32 %v7040, %v7059
  %v7089 = vsub.f32 %v7041, %v7061
  %v7090 = vsub.f32 %v7042, %v7063
  %v7091 = vsub.f32 %v7043, %v7065
  %v7092 = vsub.f32 %v7044, %v7067
  %v7093 = vsub.f32 %v7045, %v7069
  %v7094 = vsub.f32 %v7046, %v7071
  %v7095 = vsub.f32 %v7047, %v7073
  %v7096 = vsub.f32 %v7048, %v7075
  %v7097 = vsub.f32 %v7049, %v7077
  %v7098 = vsub.f32 %v7050, %v7079
  %v7099 = vsub.f32 %v7051, %v7081
  %v7100 = vsub.f32 %v7052, %v7083
  %v7101 = vsub.f32 %v7053, %v7085
  %v7102 = vmul.f32 %v7086, 1.442695
  %v7103 = vpow.pop %v7102
  %v7104 = vmul.f32 %v7087, 1.442695
  %v7105 = vpow.pop %v7104
  %v7106 = vmul.f32 %v7088, 1.442695
  %v7107 = vpow.pop %v7106
  %v7108 = vmul.f32 %v7089, 1.442695
  %v7109 = vpow.pop %v7108
  %v7110 = vmul.f32 %v7090, 1.442695
  %v7111 = vpow.pop %v7110
  %v7112 = vmul.f32 %v7091, 1.442695
  %v7113 = vpow.pop %v7112
  %v7114 = vmul.f32 %v7092, 1.442695
  %v7115 = vpow.pop %v7114
  %v7116 = vmul.f32 %v7093, 1.442695
  %v7117 = vpow.pop %v7116
  %v7118 = vmul.f32 %v7094, 1.442695
  %v7119 = vpow.pop %v7118
  %v7120 = vmul.f32 %v7095, 1.442695
  %v7121 = vpow.pop %v7120
  %v7122 = vmul.f32 %v7096, 1.442695
  %v7123 = vpow.pop %v7122
  %v7124 = vmul.f32 %v7097, 1.442695
  %v7125 = vpow.pop %v7124
  %v7126 = vmul.f32 %v7098, 1.442695
  %v7127 = vpow.pop %v7126
  %v7128 = vmul.f32 %v7099, 1.442695
  %v7129 = vpow.pop %v7128
  %v7130 = vmul.f32 %v7100, 1.442695
  %v7131 = vpow.pop %v7130
  %v7132 = vmul.f32 %v7101, 1.442695
  %v7133 = vpow.pop %v7132
  %v7134 = vmul.f32 %v5102, %v2181
  %v7135 = vmul.f32 %v5105, %v2181
  %v7136 = vmul.f32 %v5110, %v2181
  %v7137 = vmul.f32 %v5113, %v2181
  %v7138 = vmul.f32 %v5118, %v2181
  %v7139 = vmul.f32 %v5121, %v2181
  %v7140 = vmul.f32 %v5126, %v2181
  %v7141 = vmul.f32 %v5129, %v2181
  %v7142 = vmul.f32 %v5134, %v2181
  %v7143 = vmul.f32 %v5137, %v2181
  %v7144 = vmul.f32 %v5142, %v2181
  %v7145 = vmul.f32 %v5145, %v2181
  %v7146 = vmul.f32 %v5150, %v2181
  %v7147 = vmul.f32 %v5153, %v2181
  %v7148 = vmul.f32 %v5158, %v2181
  %v7149 = vmul.f32 %v5161, %v2181
  %v7150 = vpack.c.bf16 %v7135, %v7134
  %v7151 = vpack.c.bf16 %v7137, %v7136
  %v7152 = vpack.c.bf16 %v7139, %v7138
  %v7153 = vpack.c.bf16 %v7141, %v7140
  %v7154 = vpack.c.bf16 %v7143, %v7142
  %v7155 = vpack.c.bf16 %v7145, %v7144
  %v7156 = vpack.c.bf16 %v7147, %v7146
  %v7157 = vpack.c.bf16 %v7149, %v7148
  %v7158 = vpack.c.bf16 %v7105, %v7103
  %v7159 = vpack.c.bf16 %v7109, %v7107
  %v7160 = vpack.c.bf16 %v7113, %v7111
  %v7161 = vpack.c.bf16 %v7117, %v7115
  %v7162 = vpack.c.bf16 %v7121, %v7119
  %v7163 = vpack.c.bf16 %v7125, %v7123
  %v7164 = vpack.c.bf16 %v7129, %v7127
  %v7165 = vpack.c.bf16 %v7133, %v7131
  %7166 = vmatprep.subr.bf16.mxu0 0
  %7167 = vmatpush1.bf16.msra.mxu0 %v7150
  %7168 = vmatprep.subr.bf16.mxu0 0
  %7169 = vmatpush1.bf16.msra.mxu0 %v7151
  %7170 = vmatprep.subr.bf16.mxu0 0
  %7171 = vmatpush1.bf16.msra.mxu0 %v7152
  %7172 = vmatprep.subr.bf16.mxu0 0
  %7173 = vmatpush1.bf16.msra.mxu0 %v7153
  %7174 = vmatprep.subr.bf16.mxu0 0
  %7175 = vmatpush1.bf16.msra.mxu0 %v7154
  %7176 = vmatprep.subr.bf16.mxu0 0
  %7177 = vmatpush1.bf16.msra.mxu0 %v7155
  %7178 = vmatprep.subr.bf16.mxu0 0
  %7179 = vmatpush1.bf16.msra.mxu0 %v7156
  %7180 = vmatprep.subr.bf16.mxu0 0
  %7181 = vmatpush1.bf16.msra.mxu0 %v7157
  %7182 = vmatprep.subr.bf16.mxu0 0
  %7183 = vmatpush1.bf16.msra.mxu0 0
  %7184 = vmatprep.subr.bf16.mxu0 0
  %7185 = vmatpush1.bf16.msra.mxu0 0
  %7186 = vmatprep.subr.bf16.mxu0 0
  %7187 = vmatpush1.bf16.msra.mxu0 0
  %7188 = vmatprep.subr.bf16.mxu0 0
  %7189 = vmatpush1.bf16.msra.mxu0 0
  %7190 = vmatprep.subr.bf16.mxu0 0
  %7191 = vmatpush1.bf16.msra.mxu0 0
  %7192 = vmatprep.subr.bf16.mxu0 0
  %7193 = vmatpush1.bf16.msra.mxu0 0
  %7194 = vmatprep.subr.bf16.mxu0 0
  %7195 = vmatpush1.bf16.msra.mxu0 0
  %7196 = vmatprep.subr.bf16.mxu0 0
  %7197 = vmatpush1.bf16.msra.mxu0 0
  %7198 = vmatprep.mubr.bf16.mxu0 0
  %7199 = vmatmul.mubr.bf16.gmra.mrb[0].mxu0 %v7158
  %v7200 = vpop.f32.mrb[0].mxu0
  %v7201 = vadd.f32 0.0, %v7200
  %v7202 = vpop.f32.mrb[0].mxu0
  %v7203 = vpop.f32.mrb[0].mxu0
  %v7204 = vadd.f32 0.0, %v7203
  %v7205 = vpop.f32.mrb[0].mxu0
  %7206 = vmatprep.mubr.bf16.mxu0 0
  %7207 = vmatmul.mubr.bf16.gmra.mrb[0].mxu0 %v7159
  %v7208 = vpop.f32.mrb[0].mxu0
  %v7209 = vadd.f32 0.0, %v7208
  %v7210 = vpop.f32.mrb[0].mxu0
  %v7211 = vpop.f32.mrb[0].mxu0
  %v7212 = vadd.f32 0.0, %v7211
  %v7213 = vpop.f32.mrb[0].mxu0
  %7214 = vmatprep.mubr.bf16.mxu0 0
  %7215 = vmatmul.mubr.bf16.gmra.mrb[0].mxu0 %v7160
  %v7216 = vpop.f32.mrb[0].mxu0
  %v7217 = vadd.f32 0.0, %v7216
  %v7218 = vpop.f32.mrb[0].mxu0
  %v7219 = vpop.f32.mrb[0].mxu0
  %v7220 = vadd.f32 0.0, %v7219
  %v7221 = vpop.f32.mrb[0].mxu0
  %7222 = vmatprep.mubr.bf16.mxu0 0
  %7223 = vmatmul.mubr.bf16.gmra.mrb[0].mxu0 %v7161
  %v7224 = vpop.f32.mrb[0].mxu0
  %v7225 = vadd.f32 0.0, %v7224
  %v7226 = vpop.f32.mrb[0].mxu0
  %v7227 = vpop.f32.mrb[0].mxu0
  %v7228 = vadd.f32 0.0, %v7227
  %v7229 = vpop.f32.mrb[0].mxu0
  %7230 = vmatprep.mubr.bf16.mxu0 0
  %7231 = vmatmul.mubr.bf16.gmra.mrb[0].mxu0 %v7162
  %v7232 = vpop.f32.mrb[0].mxu0
  %v7233 = vadd.f32 0.0, %v7232
  %v7234 = vpop.f32.mrb[0].mxu0
  %v7235 = vpop.f32.mrb[0].mxu0
  %v7236 = vadd.f32 0.0, %v7235
  %v7237 = vpop.f32.mrb[0].mxu0
  %7238 = vmatprep.mubr.bf16.mxu0 0
  %7239 = vmatmul.mubr.bf16.gmra.mrb[0].mxu0 %v7163
  %v7240 = vpop.f32.mrb[0].mxu0
  %v7241 = vadd.f32 0.0, %v7240
  %v7242 = vpop.f32.mrb[0].mxu0
  %v7243 = vpop.f32.mrb[0].mxu0
  %v7244 = vadd.f32 0.0, %v7243
  %v7245 = vpop.f32.mrb[0].mxu0
  %7246 = vmatprep.mubr.bf16.mxu0 0
  %7247 = vmatmul.mubr.bf16.gmra.mrb[0].mxu0 %v7164
  %v7248 = vpop.f32.mrb[0].mxu0
  %v7249 = vadd.f32 0.0, %v7248
  %v7250 = vpop.f32.mrb[0].mxu0
  %v7251 = vpop.f32.mrb[0].mxu0
  %v7252 = vadd.f32 0.0, %v7251
  %v7253 = vpop.f32.mrb[0].mxu0
  %7254 = vmatprep.mubr.bf16.mxu0 0
  %7255 = vmatmul.mubr.bf16.gmra.mrb[0].mxu0 %v7165
  %v7256 = vpop.f32.mrb[0].mxu0
  %v7257 = vadd.f32 0.0, %v7256
  %v7258 = vpop.f32.mrb[0].mxu0
  %v7259 = vpop.f32.mrb[0].mxu0
  %v7260 = vadd.f32 0.0, %v7259
  %v7261 = vpop.f32.mrb[0].mxu0
  %7262 = vdwg.mxu0
  %v7263 = vrcp.pop %v7201
  %v7264 = vrcp.pop %v7204
  %v7265 = vrcp.pop %v7209
  %v7266 = vrcp.pop %v7212
  %v7267 = vrcp.pop %v7217
  %v7268 = vrcp.pop %v7220
  %v7269 = vrcp.pop %v7225
  %v7270 = vrcp.pop %v7228
  %v7271 = vrcp.pop %v7233
  %v7272 = vrcp.pop %v7236
  %v7273 = vrcp.pop %v7241
  %v7274 = vrcp.pop %v7244
  %v7275 = vrcp.pop %v7249
  %v7276 = vrcp.pop %v7252
  %v7277 = vrcp.pop %v7257
  %v7278 = vrcp.pop %v7260
  %7280 = vset.pattern.permute.xlu0 35
  %7281 = vperm.xlu0 %7280, %v7263
  %v7282 = vpop.permute.xlu0 %7281
  %7285 = vset.pattern.permute.xlu0 35
  %7286 = vperm.xlu0 %7285, %v7264
  %v7287 = vpop.permute.xlu0 %7286
  %7290 = vset.pattern.permute.xlu0 35
  %7291 = vperm.xlu0 %7290, %v7265
  %v7292 = vpop.permute.xlu0 %7291
  %7295 = vset.pattern.permute.xlu0 35
  %7296 = vperm.xlu0 %7295, %v7266
  %v7297 = vpop.permute.xlu0 %7296
  %7300 = vset.pattern.permute.xlu0 35
  %7301 = vperm.xlu0 %7300, %v7267
  %v7302 = vpop.permute.xlu0 %7301
  %7305 = vset.pattern.permute.xlu0 35
  %7306 = vperm.xlu0 %7305, %v7268
  %v7307 = vpop.permute.xlu0 %7306
  %7310 = vset.pattern.permute.xlu0 35
  %7311 = vperm.xlu0 %7310, %v7269
  %v7312 = vpop.permute.xlu0 %7311
  %7315 = vset.pattern.permute.xlu0 35
  %7316 = vperm.xlu0 %7315, %v7270
  %v7317 = vpop.permute.xlu0 %7316
  %7320 = vset.pattern.permute.xlu0 35
  %7321 = vperm.xlu0 %7320, %v7271
  %v7322 = vpop.permute.xlu0 %7321
  %7325 = vset.pattern.permute.xlu0 35
  %7326 = vperm.xlu0 %7325, %v7272
  %v7327 = vpop.permute.xlu0 %7326
  %7330 = vset.pattern.permute.xlu0 35
  %7331 = vperm.xlu0 %7330, %v7273
  %v7332 = vpop.permute.xlu0 %7331
  %7335 = vset.pattern.permute.xlu0 35
  %7336 = vperm.xlu0 %7335, %v7274
  %v7337 = vpop.permute.xlu0 %7336
  %7340 = vset.pattern.permute.xlu0 35
  %7341 = vperm.xlu0 %7340, %v7275
  %v7342 = vpop.permute.xlu0 %7341
  %7345 = vset.pattern.permute.xlu0 35
  %7346 = vperm.xlu0 %7345, %v7276
  %v7347 = vpop.permute.xlu0 %7346
  %7350 = vset.pattern.permute.xlu0 35
  %7351 = vperm.xlu0 %7350, %v7277
  %v7352 = vpop.permute.xlu0 %7351
  %7355 = vset.pattern.permute.xlu0 35
  %7356 = vperm.xlu0 %7355, %v7278
  %v7357 = vpop.permute.xlu0 %7356
  %v7359 = vmul.f32 %v7201, %v7282
  %v7360 = vmul.f32 %v7204, %v7287
  %v7361 = vmul.f32 %v7209, %v7292
  %v7362 = vmul.f32 %v7212, %v7297
  %v7363 = vmul.f32 %v7217, %v7302
  %v7364 = vmul.f32 %v7220, %v7307
  %v7365 = vmul.f32 %v7225, %v7312
  %v7366 = vmul.f32 %v7228, %v7317
  %v7367 = vmul.f32 %v7233, %v7322
  %v7368 = vmul.f32 %v7236, %v7327
  %v7369 = vmul.f32 %v7241, %v7332
  %v7370 = vmul.f32 %v7244, %v7337
  %v7371 = vmul.f32 %v7249, %v7342
  %v7372 = vmul.f32 %v7252, %v7347
  %v7373 = vmul.f32 %v7257, %v7352
  %v7374 = vmul.f32 %v7260, %v7357
  %v7375 = vld [vmem:[#allocation2] sm:$0xff]
  %v7376 = vld [vmem:[#allocation2 + $0x8] sm:$0xff]
  %v7377 = vld [vmem:[#allocation2 + $0x10] sm:$0xff]
  %v7378 = vld [vmem:[#allocation2 + $0x18] sm:$0xff]
  %v7379 = vld [vmem:[#allocation2 + $0x20] sm:$0xff]
  %v7380 = vld [vmem:[#allocation2 + $0x28] sm:$0xff]
  %v7381 = vld [vmem:[#allocation2 + $0x30] sm:$0xff]
  %v7382 = vld [vmem:[#allocation2 + $0x38] sm:$0xff]
  %v7383 = vld [vmem:[#allocation2 + $0x40] sm:$0xff]
  %v7384 = vld [vmem:[#allocation2 + $0x48] sm:$0xff]
  %v7385 = vld [vmem:[#allocation2 + $0x50] sm:$0xff]
  %v7386 = vld [vmem:[#allocation2 + $0x58] sm:$0xff]
  %v7387 = vld [vmem:[#allocation2 + $0x60] sm:$0xff]
  %v7388 = vld [vmem:[#allocation2 + $0x68] sm:$0xff]
  %v7389 = vld [vmem:[#allocation2 + $0x70] sm:$0xff]
  %v7390 = vld [vmem:[#allocation2 + $0x78] sm:$0xff]
  %v7391 = vadd.f32 %v7375, %v7359
  %v7392 = vadd.f32 %v7376, %v7360
  %v7393 = vadd.f32 %v7377, %v7361
  %v7394 = vadd.f32 %v7378, %v7362
  %v7395 = vadd.f32 %v7379, %v7363
  %v7396 = vadd.f32 %v7380, %v7364
  %v7397 = vadd.f32 %v7381, %v7365
  %v7398 = vadd.f32 %v7382, %v7366
  %v7399 = vadd.f32 %v7383, %v7367
  %v7400 = vadd.f32 %v7384, %v7368
  %v7401 = vadd.f32 %v7385, %v7369
  %v7402 = vadd.f32 %v7386, %v7370
  %v7403 = vadd.f32 %v7387, %v7371
  %v7404 = vadd.f32 %v7388, %v7372
  %v7405 = vadd.f32 %v7389, %v7373
  %v7406 = vadd.f32 %v7390, %v7374
  %7407 = vst.msk [vmem:[#allocation2] sm:$0xff] %vm939, %v7391
  %7408 = vst.msk [vmem:[#allocation2 + $0x8] sm:$0xff] %vm939, %v7392
  %7409 = vst.msk [vmem:[#allocation2 + $0x10] sm:$0xff] %vm939, %v7393
  %7410 = vst.msk [vmem:[#allocation2 + $0x18] sm:$0xff] %vm939, %v7394
  %7411 = vst.msk [vmem:[#allocation2 + $0x20] sm:$0xff] %vm939, %v7395
  %7412 = vst.msk [vmem:[#allocation2 + $0x28] sm:$0xff] %vm939, %v7396
  %7413 = vst.msk [vmem:[#allocation2 + $0x30] sm:$0xff] %vm939, %v7397
  %7414 = vst.msk [vmem:[#allocation2 + $0x38] sm:$0xff] %vm939, %v7398
  %7415 = vst.msk [vmem:[#allocation2 + $0x40] sm:$0xff] %vm939, %v7399
  %7416 = vst.msk [vmem:[#allocation2 + $0x48] sm:$0xff] %vm939, %v7400
  %7417 = vst.msk [vmem:[#allocation2 + $0x50] sm:$0xff] %vm939, %v7401
  %7418 = vst.msk [vmem:[#allocation2 + $0x58] sm:$0xff] %vm939, %v7402
  %7419 = vst.msk [vmem:[#allocation2 + $0x60] sm:$0xff] %vm939, %v7403
  %7420 = vst.msk [vmem:[#allocation2 + $0x68] sm:$0xff] %vm939, %v7404
  %7421 = vst.msk [vmem:[#allocation2 + $0x70] sm:$0xff] %vm939, %v7405
  %7422 = vst.msk [vmem:[#allocation2 + $0x78] sm:$0xff] %vm939, %v7406
  %v7423 = vld [vmem:[#allocation2] sm:$0xff]
  %v7424 = vld [vmem:[#allocation2 + $0x8] sm:$0xff]
  %v7425 = vld [vmem:[#allocation2 + $0x10] sm:$0xff]
  %v7426 = vld [vmem:[#allocation2 + $0x18] sm:$0xff]
  %v7427 = vld [vmem:[#allocation2 + $0x20] sm:$0xff]
  %v7428 = vld [vmem:[#allocation2 + $0x28] sm:$0xff]
  %v7429 = vld [vmem:[#allocation2 + $0x30] sm:$0xff]
  %v7430 = vld [vmem:[#allocation2 + $0x38] sm:$0xff]
  %v7431 = vld [vmem:[#allocation2 + $0x40] sm:$0xff]
  %v7432 = vld [vmem:[#allocation2 + $0x48] sm:$0xff]
  %v7433 = vld [vmem:[#allocation2 + $0x50] sm:$0xff]
  %v7434 = vld [vmem:[#allocation2 + $0x58] sm:$0xff]
  %v7435 = vld [vmem:[#allocation2 + $0x60] sm:$0xff]
  %v7436 = vld [vmem:[#allocation2 + $0x68] sm:$0xff]
  %v7437 = vld [vmem:[#allocation2 + $0x70] sm:$0xff]
  %v7438 = vld [vmem:[#allocation2 + $0x78] sm:$0xff]
  %v7439 = vlaneseq
  %v7440 = vshrl.u32 %v7439, 7
  %v7441 = vsub.s32 1, %v7440
  %v7442 = vrot.slane %v35, %v7441
  %v7443 = vmul.f32 %v7423, %v7442
  %v7444 = vmul.f32 %v7424, %v7442
  %v7445 = vmul.f32 %v7425, %v7442
  %v7446 = vmul.f32 %v7426, %v7442
  %v7447 = vmul.f32 %v7427, %v7442
  %v7448 = vmul.f32 %v7428, %v7442
  %v7449 = vmul.f32 %v7429, %v7442
  %v7450 = vmul.f32 %v7430, %v7442
  %v7451 = vmul.f32 %v7431, %v7442
  %v7452 = vmul.f32 %v7432, %v7442
  %v7453 = vmul.f32 %v7433, %v7442
  %v7454 = vmul.f32 %v7434, %v7442
  %v7455 = vmul.f32 %v7435, %v7442
  %v7456 = vmul.f32 %v7436, %v7442
  %v7457 = vmul.f32 %v7437, %v7442
  %v7458 = vmul.f32 %v7438, %v7442
  %v7459 = vlaneseq
  %v7460 = vshrl.u32 %v7459, 7
  %v7461 = vsub.s32 2, %v7460
  %v7462 = vrot.slane %v35, %v7461
  %v7463 = vadd.f32 %v7443, %v7462
  %v7464 = vadd.f32 %v7444, %v7462
  %v7465 = vadd.f32 %v7445, %v7462
  %v7466 = vadd.f32 %v7446, %v7462
  %v7467 = vadd.f32 %v7447, %v7462
  %v7468 = vadd.f32 %v7448, %v7462
  %v7469 = vadd.f32 %v7449, %v7462
  %v7470 = vadd.f32 %v7450, %v7462
  %v7471 = vadd.f32 %v7451, %v7462
  %v7472 = vadd.f32 %v7452, %v7462
  %v7473 = vadd.f32 %v7453, %v7462
  %v7474 = vadd.f32 %v7454, %v7462
  %v7475 = vadd.f32 %v7455, %v7462
  %v7476 = vadd.f32 %v7456, %v7462
  %v7477 = vadd.f32 %v7457, %v7462
  %v7478 = vadd.f32 %v7458, %v7462
  %v7479 = vmul.f32 %v2527, 0.5
  %v7480 = vmul.f32 %v2528, 0.5
  %v7481 = vmul.f32 %v2529, 0.5
  %v7482 = vmul.f32 %v2530, 0.5
  %v7483 = vmul.f32 %v2531, 0.5
  %v7484 = vmul.f32 %v2532, 0.5
  %v7485 = vmul.f32 %v2533, 0.5
  %v7486 = vmul.f32 %v2534, 0.5
  %v7487 = vmul.f32 %v2535, 0.5
  %v7488 = vmul.f32 %v2536, 0.5
  %v7489 = vmul.f32 %v2537, 0.5
  %v7490 = vmul.f32 %v2538, 0.5
  %v7491 = vmul.f32 %v2539, 0.5
  %v7492 = vmul.f32 %v2540, 0.5
  %v7493 = vmul.f32 %v2541, 0.5
  %v7494 = vmul.f32 %v2542, 0.5
  %v7495 = vadd.f32 %v7463, %v7479
  %v7496 = vadd.f32 %v7464, %v7480
  %v7497 = vadd.f32 %v7465, %v7481
  %v7498 = vadd.f32 %v7466, %v7482
  %v7499 = vadd.f32 %v7467, %v7483
  %v7500 = vadd.f32 %v7468, %v7484
  %v7501 = vadd.f32 %v7469, %v7485
  %v7502 = vadd.f32 %v7470, %v7486
  %v7503 = vadd.f32 %v7471, %v7487
  %v7504 = vadd.f32 %v7472, %v7488
  %v7505 = vadd.f32 %v7473, %v7489
  %v7506 = vadd.f32 %v7474, %v7490
  %v7507 = vadd.f32 %v7475, %v7491
  %v7508 = vadd.f32 %v7476, %v7492
  %v7509 = vadd.f32 %v7477, %v7493
  %v7510 = vadd.f32 %v7478, %v7494
  %v7511 = vmax.f32 %v7495, 0.0
  %v7512 = vmax.f32 %v7496, 0.0
  %v7513 = vmax.f32 %v7497, 0.0
  %v7514 = vmax.f32 %v7498, 0.0
  %v7515 = vmax.f32 %v7499, 0.0
  %v7516 = vmax.f32 %v7500, 0.0
  %v7517 = vmax.f32 %v7501, 0.0
  %v7518 = vmax.f32 %v7502, 0.0
  %v7519 = vmax.f32 %v7503, 0.0
  %v7520 = vmax.f32 %v7504, 0.0
  %v7521 = vmax.f32 %v7505, 0.0
  %v7522 = vmax.f32 %v7506, 0.0
  %v7523 = vmax.f32 %v7507, 0.0
  %v7524 = vmax.f32 %v7508, 0.0
  %v7525 = vmax.f32 %v7509, 0.0
  %v7526 = vmax.f32 %v7510, 0.0
  %v7527 = vpack.c.bf16 %v7512, %v7511
  %v7528 = vpack.c.bf16 %v7514, %v7513
  %v7529 = vpack.c.bf16 %v7516, %v7515
  %v7530 = vpack.c.bf16 %v7518, %v7517
  %v7531 = vpack.c.bf16 %v7520, %v7519
  %v7532 = vpack.c.bf16 %v7522, %v7521
  %v7533 = vpack.c.bf16 %v7524, %v7523
  %v7534 = vpack.c.bf16 %v7526, %v7525
  %v7535 = vld [vmem:[%s2 + $0x28] sm:$0xf]
  %v7536 = vld [vmem:[%s2 + $0x2c] sm:$0xf]
  %v7537 = vld [vmem:[%s2 + $0x30] sm:$0xf]
  %v7538 = vld [vmem:[%s2 + $0x34] sm:$0xf]
  %v7543 = vunpack.c.l.b16 %v7535
  %v7544 = vunpack.c.l.b16 %v7536
  %v7545 = vunpack.c.l.b16 %v7537
  %v7546 = vunpack.c.l.b16 %v7538
  %v7547 = vpack.c.b16 %v7544, %v7543
  %v7548 = vpack.c.b16 %v7546, %v7545
  %v7552 = vsel %vm939, %v7527, 0
  %v7555 = vsel %vm939, %v7528, 0
  %v7558 = vsel %vm939, %v7529, 0
  %v7561 = vsel %vm939, %v7530, 0
  %v7564 = vsel %vm939, %v7531, 0
  %v7567 = vsel %vm939, %v7532, 0
  %v7570 = vsel %vm939, %v7533, 0
  %v7573 = vsel %vm939, %v7534, 0
  %7575 = vmatprep.subr.bf16.mxu0 0
  %7576 = vmatpush1.bf16.msra.mxu0 %v7547
  %7577 = vmatprep.subr.bf16.mxu0 0
  %7578 = vmatpush1.bf16.msra.mxu0 %v7548
  %7579 = vmatprep.subr.bf16.mxu0 0
  %7580 = vmatpush1.bf16.msra.mxu0 0
  %7581 = vmatprep.subr.bf16.mxu0 0
  %7582 = vmatpush1.bf16.msra.mxu0 0
  %7583 = vmatprep.subr.bf16.mxu0 0
  %7584 = vmatpush1.bf16.msra.mxu0 0
  %7585 = vmatprep.subr.bf16.mxu0 0
  %7586 = vmatpush1.bf16.msra.mxu0 0
  %7587 = vmatprep.subr.bf16.mxu0 0
  %7588 = vmatpush1.bf16.msra.mxu0 0
  %7589 = vmatprep.subr.bf16.mxu0 0
  %7590 = vmatpush1.bf16.msra.mxu0 0
  %7591 = vmatprep.subr.bf16.mxu0 0
  %7592 = vmatpush1.bf16.msra.mxu0 0
  %7593 = vmatprep.subr.bf16.mxu0 0
  %7594 = vmatpush1.bf16.msra.mxu0 0
  %7595 = vmatprep.subr.bf16.mxu0 0
  %7596 = vmatpush1.bf16.msra.mxu0 0
  %7597 = vmatprep.subr.bf16.mxu0 0
  %7598 = vmatpush1.bf16.msra.mxu0 0
  %7599 = vmatprep.subr.bf16.mxu0 0
  %7600 = vmatpush1.bf16.msra.mxu0 0
  %7601 = vmatprep.subr.bf16.mxu0 0
  %7602 = vmatpush1.bf16.msra.mxu0 0
  %7603 = vmatprep.subr.bf16.mxu0 0
  %7604 = vmatpush1.bf16.msra.mxu0 0
  %7605 = vmatprep.subr.bf16.mxu0 0
  %7606 = vmatpush1.bf16.msra.mxu0 0
  %7607 = vmatprep.mubr.bf16.mxu0 0
  %7608 = vmatmul.mubr.bf16.gmra.mrb[0].mxu0 %v7552
  %v7609 = vpop.f32.mrb[0].mxu0
  %v7610 = vadd.f32 %v65, %v7609
  %v7611 = vpop.f32.mrb[0].mxu0
  %v7612 = vpop.f32.mrb[0].mxu0
  %v7613 = vadd.f32 %v65, %v7612
  %v7614 = vpop.f32.mrb[0].mxu0
  %7615 = vmatprep.mubr.bf16.mxu0 0
  %7616 = vmatmul.mubr.bf16.gmra.mrb[0].mxu0 %v7555
  %v7617 = vpop.f32.mrb[0].mxu0
  %v7618 = vadd.f32 %v65, %v7617
  %v7619 = vpop.f32.mrb[0].mxu0
  %v7620 = vpop.f32.mrb[0].mxu0
  %v7621 = vadd.f32 %v65, %v7620
  %v7622 = vpop.f32.mrb[0].mxu0
  %7623 = vmatprep.mubr.bf16.mxu0 0
  %7624 = vmatmul.mubr.bf16.gmra.mrb[0].mxu0 %v7558
  %v7625 = vpop.f32.mrb[0].mxu0
  %v7626 = vadd.f32 %v65, %v7625
  %v7627 = vpop.f32.mrb[0].mxu0
  %v7628 = vpop.f32.mrb[0].mxu0
  %v7629 = vadd.f32 %v65, %v7628
  %v7630 = vpop.f32.mrb[0].mxu0
  %7631 = vmatprep.mubr.bf16.mxu0 0
  %7632 = vmatmul.mubr.bf16.gmra.mrb[0].mxu0 %v7561
  %v7633 = vpop.f32.mrb[0].mxu0
  %v7634 = vadd.f32 %v65, %v7633
  %v7635 = vpop.f32.mrb[0].mxu0
  %v7636 = vpop.f32.mrb[0].mxu0
  %v7637 = vadd.f32 %v65, %v7636
  %v7638 = vpop.f32.mrb[0].mxu0
  %7639 = vmatprep.mubr.bf16.mxu0 0
  %7640 = vmatmul.mubr.bf16.gmra.mrb[0].mxu0 %v7564
  %v7641 = vpop.f32.mrb[0].mxu0
  %v7642 = vadd.f32 %v65, %v7641
  %v7643 = vpop.f32.mrb[0].mxu0
  %v7644 = vpop.f32.mrb[0].mxu0
  %v7645 = vadd.f32 %v65, %v7644
  %v7646 = vpop.f32.mrb[0].mxu0
  %7647 = vmatprep.mubr.bf16.mxu0 0
  %7648 = vmatmul.mubr.bf16.gmra.mrb[0].mxu0 %v7567
  %v7649 = vpop.f32.mrb[0].mxu0
  %v7650 = vadd.f32 %v65, %v7649
  %v7651 = vpop.f32.mrb[0].mxu0
  %v7652 = vpop.f32.mrb[0].mxu0
  %v7653 = vadd.f32 %v65, %v7652
  %v7654 = vpop.f32.mrb[0].mxu0
  %7655 = vmatprep.mubr.bf16.mxu0 0
  %7656 = vmatmul.mubr.bf16.gmra.mrb[0].mxu0 %v7570
  %v7657 = vpop.f32.mrb[0].mxu0
  %v7658 = vadd.f32 %v65, %v7657
  %v7659 = vpop.f32.mrb[0].mxu0
  %v7660 = vpop.f32.mrb[0].mxu0
  %v7661 = vadd.f32 %v65, %v7660
  %v7662 = vpop.f32.mrb[0].mxu0
  %7663 = vmatprep.mubr.bf16.mxu0 0
  %7664 = vmatmul.mubr.bf16.gmra.mrb[0].mxu0 %v7573
  %v7665 = vpop.f32.mrb[0].mxu0
  %v7666 = vadd.f32 %v65, %v7665
  %v7667 = vpop.f32.mrb[0].mxu0
  %v7668 = vpop.f32.mrb[0].mxu0
  %v7669 = vadd.f32 %v65, %v7668
  %v7670 = vpop.f32.mrb[0].mxu0
  %7671 = vdwg.mxu0
  %v7672 = vld [vmem:[%s3 + $0x30] sm:$0xff]
  %v7673 = vld [vmem:[%s3 + $0x38] sm:$0xff]
  %v7675 = vsel %vm196, %v7672, 0
  %v7678 = vsel %vm196, %v7610, 0
  %v7681 = vsel %vm196, %v7613, 0
  %v7684 = vsel %vm196, %v7618, 0
  %v7687 = vsel %vm196, %v7621, 0
  %v7690 = vsel %vm196, %v7626, 0
  %v7693 = vsel %vm196, %v7629, 0
  %v7696 = vsel %vm196, %v7634, 0
  %v7699 = vsel %vm196, %v7637, 0
  %v7702 = vsel %vm196, %v7642, 0
  %v7705 = vsel %vm196, %v7645, 0
  %v7708 = vsel %vm196, %v7650, 0
  %v7711 = vsel %vm196, %v7653, 0
  %v7714 = vsel %vm196, %v7658, 0
  %v7717 = vsel %vm196, %v7661, 0
  %v7720 = vsel %vm196, %v7666, 0
  %v7723 = vsel %vm196, %v7669, 0
  %7725 = vmatprep.subr.mxu0 0.0
  %7726 = vmatpush1.xpose.msra.mxu0 %v7678
  %7727 = vmatprep.subr.mxu0 0.0
  %7728 = vmatpush1.xpose.msra.mxu0 %v7681
  %7729 = vmatprep.subr.mxu0 0.0
  %7730 = vmatpush1.xpose.msra.mxu0 %v7684
  %7731 = vmatprep.subr.mxu0 0.0
  %7732 = vmatpush1.xpose.msra.mxu0 %v7687
  %7733 = vmatprep.subr.mxu0 0.0
  %7734 = vmatpush1.xpose.msra.mxu0 %v7690
  %7735 = vmatprep.subr.mxu0 0.0
  %7736 = vmatpush1.xpose.msra.mxu0 %v7693
  %7737 = vmatprep.subr.mxu0 0.0
  %7738 = vmatpush1.xpose.msra.mxu0 %v7696
  %7739 = vmatprep.subr.mxu0 0.0
  %7740 = vmatpush1.xpose.msra.mxu0 %v7699
  %7741 = vmatprep.subr.mxu0 0.0
  %7742 = vmatpush1.xpose.msra.mxu0 %v7702
  %7743 = vmatprep.subr.mxu0 0.0
  %7744 = vmatpush1.xpose.msra.mxu0 %v7705
  %7745 = vmatprep.subr.mxu0 0.0
  %7746 = vmatpush1.xpose.msra.mxu0 %v7708
  %7747 = vmatprep.subr.mxu0 0.0
  %7748 = vmatpush1.xpose.msra.mxu0 %v7711
  %7749 = vmatprep.subr.mxu0 0.0
  %7750 = vmatpush1.xpose.msra.mxu0 %v7714
  %7751 = vmatprep.subr.mxu0 0.0
  %7752 = vmatpush1.xpose.msra.mxu0 %v7717
  %7753 = vmatprep.subr.mxu0 0.0
  %7754 = vmatpush1.xpose.msra.mxu0 %v7720
  %7755 = vmatprep.subr.mxu0 0.0
  %7756 = vmatpush1.xpose.msra.mxu0 %v7723
  %7757 = vmatprep.subr.mxu0 0.0
  %7758 = vmatpush1.xpose.msra.mxu0 0.0
  %7759 = vmatprep.subr.mxu0 0.0
  %7760 = vmatpush1.xpose.msra.mxu0 0.0
  %7761 = vmatprep.subr.mxu0 0.0
  %7762 = vmatpush1.xpose.msra.mxu0 0.0
  %7763 = vmatprep.subr.mxu0 0.0
  %7764 = vmatpush1.xpose.msra.mxu0 0.0
  %7765 = vmatprep.subr.mxu0 0.0
  %7766 = vmatpush1.xpose.msra.mxu0 0.0
  %7767 = vmatprep.subr.mxu0 0.0
  %7768 = vmatpush1.xpose.msra.mxu0 0.0
  %7769 = vmatprep.subr.mxu0 0.0
  %7770 = vmatpush1.xpose.msra.mxu0 0.0
  %7771 = vmatprep.subr.mxu0 0.0
  %7772 = vmatpush1.xpose.msra.mxu0 0.0
  %7773 = vmatprep.subr.mxu0 0.0
  %7774 = vmatpush1.xpose.msra.mxu0 0.0
  %7775 = vmatprep.subr.mxu0 0.0
  %7776 = vmatpush1.xpose.msra.mxu0 0.0
  %7777 = vmatprep.subr.mxu0 0.0
  %7778 = vmatpush1.xpose.msra.mxu0 0.0
  %7779 = vmatprep.subr.mxu0 0.0
  %7780 = vmatpush1.xpose.msra.mxu0 0.0
  %7781 = vmatprep.subr.mxu0 0.0
  %7782 = vmatpush1.xpose.msra.mxu0 0.0
  %7783 = vmatprep.subr.mxu0 0.0
  %7784 = vmatpush1.xpose.msra.mxu0 0.0
  %7785 = vmatprep.subr.mxu0 0.0
  %7786 = vmatpush1.xpose.msra.mxu0 0.0
  %7787 = vmatprep.subr.mxu0 0.0
  %7788 = vmatpush1.xpose.msra.mxu0 0.0
  %7789 = vmatprep.mubr.f32.mxu0 0.0
  %7790 = vmatmul.mubr.f32.gmra.mrb[0].mxu0 %v7675
  %v7791 = vpop.f32.mrb[0].mxu0
  %v7792 = vadd.f32 0.0, %v7791
  %v7793 = vpop.f32.mrb[0].mxu0
  %7794 = vdwg.mxu0
  %v7796 = vsel %vm196, %v7673, 0
  %7798 = vmatprep.subr.mxu0 0.0
  %7799 = vmatpush1.xpose.msra.mxu0 %v7796
  %7800 = vmatprep.subr.mxu0 0.0
  %7801 = vmatpush1.xpose.msra.mxu0 0.0
  %7802 = vmatprep.subr.mxu0 0.0
  %7803 = vmatpush1.xpose.msra.mxu0 0.0
  %7804 = vmatprep.subr.mxu0 0.0
  %7805 = vmatpush1.xpose.msra.mxu0 0.0
  %7806 = vmatprep.subr.mxu0 0.0
  %7807 = vmatpush1.xpose.msra.mxu0 0.0
  %7808 = vmatprep.subr.mxu0 0.0
  %7809 = vmatpush1.xpose.msra.mxu0 0.0
  %7810 = vmatprep.subr.mxu0 0.0
  %7811 = vmatpush1.xpose.msra.mxu0 0.0
  %7812 = vmatprep.subr.mxu0 0.0
  %7813 = vmatpush1.xpose.msra.mxu0 0.0
  %7814 = vmatprep.subr.mxu0 0.0
  %7815 = vmatpush1.xpose.msra.mxu0 0.0
  %7816 = vmatprep.subr.mxu0 0.0
  %7817 = vmatpush1.xpose.msra.mxu0 0.0
  %7818 = vmatprep.subr.mxu0 0.0
  %7819 = vmatpush1.xpose.msra.mxu0 0.0
  %7820 = vmatprep.subr.mxu0 0.0
  %7821 = vmatpush1.xpose.msra.mxu0 0.0
  %7822 = vmatprep.subr.mxu0 0.0
  %7823 = vmatpush1.xpose.msra.mxu0 0.0
  %7824 = vmatprep.subr.mxu0 0.0
  %7825 = vmatpush1.xpose.msra.mxu0 0.0
  %7826 = vmatprep.subr.mxu0 0.0
  %7827 = vmatpush1.xpose.msra.mxu0 0.0
  %7828 = vmatprep.subr.mxu0 0.0
  %7829 = vmatpush1.xpose.msra.mxu0 0.0
  %7830 = vmatprep.subr.mxu0 0.0
  %7831 = vmatpush1.xpose.msra.mxu0 0.0
  %7832 = vmatprep.subr.mxu0 0.0
  %7833 = vmatpush1.xpose.msra.mxu0 0.0
  %7834 = vmatprep.subr.mxu0 0.0
  %7835 = vmatpush1.xpose.msra.mxu0 0.0
  %7836 = vmatprep.subr.mxu0 0.0
  %7837 = vmatpush1.xpose.msra.mxu0 0.0
  %7838 = vmatprep.subr.mxu0 0.0
  %7839 = vmatpush1.xpose.msra.mxu0 0.0
  %7840 = vmatprep.subr.mxu0 0.0
  %7841 = vmatpush1.xpose.msra.mxu0 0.0
  %7842 = vmatprep.subr.mxu0 0.0
  %7843 = vmatpush1.xpose.msra.mxu0 0.0
  %7844 = vmatprep.subr.mxu0 0.0
  %7845 = vmatpush1.xpose.msra.mxu0 0.0
  %7846 = vmatprep.subr.mxu0 0.0
  %7847 = vmatpush1.xpose.msra.mxu0 0.0
  %7848 = vmatprep.subr.mxu0 0.0
  %7849 = vmatpush1.xpose.msra.mxu0 0.0
  %7850 = vmatprep.subr.mxu0 0.0
  %7851 = vmatpush1.xpose.msra.mxu0 0.0
  %7852 = vmatprep.subr.mxu0 0.0
  %7853 = vmatpush1.xpose.msra.mxu0 0.0
  %7854 = vmatprep.subr.mxu0 0.0
  %7855 = vmatpush1.xpose.msra.mxu0 0.0
  %7856 = vmatprep.subr.mxu0 0.0
  %7857 = vmatpush1.xpose.msra.mxu0 0.0
  %7858 = vmatprep.subr.mxu0 0.0
  %7859 = vmatpush1.xpose.msra.mxu0 0.0
  %7860 = vmatprep.subr.mxu0 0.0
  %7861 = vmatpush1.xpose.msra.mxu0 0.0
  %7862 = vmatprep.mubr.f32.mxu0 0.0
  %7863 = vmatmul.mubr.f32.gmra.mrb[0].mxu0 %v7678
  %v7864 = vpop.f32.mrb[0].mxu0
  %v7865 = vadd.f32 0.0, %v7864
  %v7866 = vpop.f32.mrb[0].mxu0
  %7867 = vmatprep.mubr.f32.mxu0 0.0
  %7868 = vmatmul.mubr.f32.gmra.mrb[0].mxu0 %v7681
  %v7869 = vpop.f32.mrb[0].mxu0
  %v7870 = vadd.f32 0.0, %v7869
  %v7871 = vpop.f32.mrb[0].mxu0
  %7872 = vmatprep.mubr.f32.mxu0 0.0
  %7873 = vmatmul.mubr.f32.gmra.mrb[0].mxu0 %v7684
  %v7874 = vpop.f32.mrb[0].mxu0
  %v7875 = vadd.f32 0.0, %v7874
  %v7876 = vpop.f32.mrb[0].mxu0
  %7877 = vmatprep.mubr.f32.mxu0 0.0
  %7878 = vmatmul.mubr.f32.gmra.mrb[0].mxu0 %v7687
  %v7879 = vpop.f32.mrb[0].mxu0
  %v7880 = vadd.f32 0.0, %v7879
  %v7881 = vpop.f32.mrb[0].mxu0
  %7882 = vmatprep.mubr.f32.mxu0 0.0
  %7883 = vmatmul.mubr.f32.gmra.mrb[0].mxu0 %v7690
  %v7884 = vpop.f32.mrb[0].mxu0
  %v7885 = vadd.f32 0.0, %v7884
  %v7886 = vpop.f32.mrb[0].mxu0
  %7887 = vmatprep.mubr.f32.mxu0 0.0
  %7888 = vmatmul.mubr.f32.gmra.mrb[0].mxu0 %v7693
  %v7889 = vpop.f32.mrb[0].mxu0
  %v7890 = vadd.f32 0.0, %v7889
  %v7891 = vpop.f32.mrb[0].mxu0
  %7892 = vmatprep.mubr.f32.mxu0 0.0
  %7893 = vmatmul.mubr.f32.gmra.mrb[0].mxu0 %v7696
  %v7894 = vpop.f32.mrb[0].mxu0
  %v7895 = vadd.f32 0.0, %v7894
  %v7896 = vpop.f32.mrb[0].mxu0
  %7897 = vmatprep.mubr.f32.mxu0 0.0
  %7898 = vmatmul.mubr.f32.gmra.mrb[0].mxu0 %v7699
  %v7899 = vpop.f32.mrb[0].mxu0
  %v7900 = vadd.f32 0.0, %v7899
  %v7901 = vpop.f32.mrb[0].mxu0
  %7902 = vmatprep.mubr.f32.mxu0 0.0
  %7903 = vmatmul.mubr.f32.gmra.mrb[0].mxu0 %v7702
  %v7904 = vpop.f32.mrb[0].mxu0
  %v7905 = vadd.f32 0.0, %v7904
  %v7906 = vpop.f32.mrb[0].mxu0
  %7907 = vmatprep.mubr.f32.mxu0 0.0
  %7908 = vmatmul.mubr.f32.gmra.mrb[0].mxu0 %v7705
  %v7909 = vpop.f32.mrb[0].mxu0
  %v7910 = vadd.f32 0.0, %v7909
  %v7911 = vpop.f32.mrb[0].mxu0
  %7912 = vmatprep.mubr.f32.mxu0 0.0
  %7913 = vmatmul.mubr.f32.gmra.mrb[0].mxu0 %v7708
  %v7914 = vpop.f32.mrb[0].mxu0
  %v7915 = vadd.f32 0.0, %v7914
  %v7916 = vpop.f32.mrb[0].mxu0
  %7917 = vmatprep.mubr.f32.mxu0 0.0
  %7918 = vmatmul.mubr.f32.gmra.mrb[0].mxu0 %v7711
  %v7919 = vpop.f32.mrb[0].mxu0
  %v7920 = vadd.f32 0.0, %v7919
  %v7921 = vpop.f32.mrb[0].mxu0
  %7922 = vmatprep.mubr.f32.mxu0 0.0
  %7923 = vmatmul.mubr.f32.gmra.mrb[0].mxu0 %v7714
  %v7924 = vpop.f32.mrb[0].mxu0
  %v7925 = vadd.f32 0.0, %v7924
  %v7926 = vpop.f32.mrb[0].mxu0
  %7927 = vmatprep.mubr.f32.mxu0 0.0
  %7928 = vmatmul.mubr.f32.gmra.mrb[0].mxu0 %v7717
  %v7929 = vpop.f32.mrb[0].mxu0
  %v7930 = vadd.f32 0.0, %v7929
  %v7931 = vpop.f32.mrb[0].mxu0
  %7932 = vmatprep.mubr.f32.mxu0 0.0
  %7933 = vmatmul.mubr.f32.gmra.mrb[0].mxu0 %v7720
  %v7934 = vpop.f32.mrb[0].mxu0
  %v7935 = vadd.f32 0.0, %v7934
  %v7936 = vpop.f32.mrb[0].mxu0
  %7937 = vmatprep.mubr.f32.mxu0 0.0
  %7938 = vmatmul.mubr.f32.gmra.mrb[0].mxu0 %v7723
  %v7939 = vpop.f32.mrb[0].mxu0
  %v7940 = vadd.f32 0.0, %v7939
  %v7941 = vpop.f32.mrb[0].mxu0
  %7942 = vdwg.mxu0
  %7944 = vset.pattern.permute.xlu0 0
  %7945 = vperm.xlu0 %7944, %v7865
  %v7946 = vpop.permute.xlu0 %7945
  %7949 = vset.pattern.permute.xlu0 0
  %7950 = vperm.xlu0 %7949, %v7870
  %v7951 = vpop.permute.xlu0 %7950
  %7954 = vset.pattern.permute.xlu0 0
  %7955 = vperm.xlu0 %7954, %v7875
  %v7956 = vpop.permute.xlu0 %7955
  %7959 = vset.pattern.permute.xlu0 0
  %7960 = vperm.xlu0 %7959, %v7880
  %v7961 = vpop.permute.xlu0 %7960
  %7964 = vset.pattern.permute.xlu0 0
  %7965 = vperm.xlu0 %7964, %v7885
  %v7966 = vpop.permute.xlu0 %7965
  %7969 = vset.pattern.permute.xlu0 0
  %7970 = vperm.xlu0 %7969, %v7890
  %v7971 = vpop.permute.xlu0 %7970
  %7974 = vset.pattern.permute.xlu0 0
  %7975 = vperm.xlu0 %7974, %v7895
  %v7976 = vpop.permute.xlu0 %7975
  %7979 = vset.pattern.permute.xlu0 0
  %7980 = vperm.xlu0 %7979, %v7900
  %v7981 = vpop.permute.xlu0 %7980
  %7984 = vset.pattern.permute.xlu0 0
  %7985 = vperm.xlu0 %7984, %v7905
  %v7986 = vpop.permute.xlu0 %7985
  %7989 = vset.pattern.permute.xlu0 0
  %7990 = vperm.xlu0 %7989, %v7910
  %v7991 = vpop.permute.xlu0 %7990
  %7994 = vset.pattern.permute.xlu0 0
  %7995 = vperm.xlu0 %7994, %v7915
  %v7996 = vpop.permute.xlu0 %7995
  %7999 = vset.pattern.permute.xlu0 0
  %8000 = vperm.xlu0 %7999, %v7920
  %v8001 = vpop.permute.xlu0 %8000
  %8004 = vset.pattern.permute.xlu0 0
  %8005 = vperm.xlu0 %8004, %v7925
  %v8006 = vpop.permute.xlu0 %8005
  %8009 = vset.pattern.permute.xlu0 0
  %8010 = vperm.xlu0 %8009, %v7930
  %v8011 = vpop.permute.xlu0 %8010
  %8014 = vset.pattern.permute.xlu0 0
  %8015 = vperm.xlu0 %8014, %v7935
  %v8016 = vpop.permute.xlu0 %8015
  %8019 = vset.pattern.permute.xlu0 0
  %8020 = vperm.xlu0 %8019, %v7940
  %v8021 = vpop.permute.xlu0 %8020
  %v8023 = vlaneseq
  %v8024 = vshrl.u32 %v8023, 7
  %v8025 = vsub.s32 0, %v8024
  %v8026 = vrot.slane %v7792, %v8025
  %v8027 = vadd.f32 %v7946, %v8026
  %v8028 = vadd.f32 %v7951, %v8026
  %v8029 = vadd.f32 %v7956, %v8026
  %v8030 = vadd.f32 %v7961, %v8026
  %v8031 = vadd.f32 %v7966, %v8026
  %v8032 = vadd.f32 %v7971, %v8026
  %v8033 = vadd.f32 %v7976, %v8026
  %v8034 = vadd.f32 %v7981, %v8026
  %v8035 = vadd.f32 %v7986, %v8026
  %v8036 = vadd.f32 %v7991, %v8026
  %v8037 = vadd.f32 %v7996, %v8026
  %v8038 = vadd.f32 %v8001, %v8026
  %v8039 = vadd.f32 %v8006, %v8026
  %v8040 = vadd.f32 %v8011, %v8026
  %v8041 = vadd.f32 %v8016, %v8026
  %v8042 = vadd.f32 %v8021, %v8026
  %v8043 = vmul.f32 %v8027, 0.2
  %v8044 = vmul.f32 %v8028, 0.2
  %v8045 = vmul.f32 %v8029, 0.2
  %v8046 = vmul.f32 %v8030, 0.2
  %v8047 = vmul.f32 %v8031, 0.2
  %v8048 = vmul.f32 %v8032, 0.2
  %v8049 = vmul.f32 %v8033, 0.2
  %v8050 = vmul.f32 %v8034, 0.2
  %v8051 = vmul.f32 %v8035, 0.2
  %v8052 = vmul.f32 %v8036, 0.2
  %v8053 = vmul.f32 %v8037, 0.2
  %v8054 = vmul.f32 %v8038, 0.2
  %v8055 = vmul.f32 %v8039, 0.2
  %v8056 = vmul.f32 %v8040, 0.2
  %v8057 = vmul.f32 %v8041, 0.2
  %v8058 = vmul.f32 %v8042, 0.2
  %v8059 = vmax.f32 %v8027, %v8043
  %v8060 = vmax.f32 %v8028, %v8044
  %v8061 = vmax.f32 %v8029, %v8045
  %v8062 = vmax.f32 %v8030, %v8046
  %v8063 = vmax.f32 %v8031, %v8047
  %v8064 = vmax.f32 %v8032, %v8048
  %v8065 = vmax.f32 %v8033, %v8049
  %v8066 = vmax.f32 %v8034, %v8050
  %v8067 = vmax.f32 %v8035, %v8051
  %v8068 = vmax.f32 %v8036, %v8052
  %v8069 = vmax.f32 %v8037, %v8053
  %v8070 = vmax.f32 %v8038, %v8054
  %v8071 = vmax.f32 %v8039, %v8055
  %v8072 = vmax.f32 %v8040, %v8056
  %v8073 = vmax.f32 %v8041, %v8057
  %v8074 = vmax.f32 %v8042, %v8058
  %v8075 = vadd.f32 %v8059, %v18
  %v8076 = vadd.f32 %v8060, %v19
  %v8077 = vadd.f32 %v8061, %v20
  %v8078 = vadd.f32 %v8062, %v21
  %v8079 = vadd.f32 %v8063, %v22
  %v8080 = vadd.f32 %v8064, %v23
  %v8081 = vadd.f32 %v8065, %v24
  %v8082 = vadd.f32 %v8066, %v25
  %v8083 = vadd.f32 %v8067, %v26
  %v8084 = vadd.f32 %v8068, %v27
  %v8085 = vadd.f32 %v8069, %v28
  %v8086 = vadd.f32 %v8070, %v29
  %v8087 = vadd.f32 %v8071, %v30
  %v8088 = vadd.f32 %v8072, %v31
  %v8089 = vadd.f32 %v8073, %v32
  %v8090 = vadd.f32 %v8074, %v33
  %8091 = vmax.xlane.f32.xlu0 %v8075
  %v8092 = vpop.xlane.xlu0 %8091
  %8093 = vmax.xlane.f32.xlu0 %v8076
  %v8094 = vpop.xlane.xlu0 %8093
  %8095 = vmax.xlane.f32.xlu0 %v8077
  %v8096 = vpop.xlane.xlu0 %8095
  %8097 = vmax.xlane.f32.xlu0 %v8078
  %v8098 = vpop.xlane.xlu0 %8097
  %8099 = vmax.xlane.f32.xlu0 %v8079
  %v8100 = vpop.xlane.xlu0 %8099
  %8101 = vmax.xlane.f32.xlu0 %v8080
  %v8102 = vpop.xlane.xlu0 %8101
  %8103 = vmax.xlane.f32.xlu0 %v8081
  %v8104 = vpop.xlane.xlu0 %8103
  %8105 = vmax.xlane.f32.xlu0 %v8082
  %v8106 = vpop.xlane.xlu0 %8105
  %8107 = vmax.xlane.f32.xlu0 %v8083
  %v8108 = vpop.xlane.xlu0 %8107
  %8109 = vmax.xlane.f32.xlu0 %v8084
  %v8110 = vpop.xlane.xlu0 %8109
  %8111 = vmax.xlane.f32.xlu0 %v8085
  %v8112 = vpop.xlane.xlu0 %8111
  %8113 = vmax.xlane.f32.xlu0 %v8086
  %v8114 = vpop.xlane.xlu0 %8113
  %8115 = vmax.xlane.f32.xlu0 %v8087
  %v8116 = vpop.xlane.xlu0 %8115
  %8117 = vmax.xlane.f32.xlu0 %v8088
  %v8118 = vpop.xlane.xlu0 %8117
  %8119 = vmax.xlane.f32.xlu0 %v8089
  %v8120 = vpop.xlane.xlu0 %8119
  %8121 = vmax.xlane.f32.xlu0 %v8090
  %v8122 = vpop.xlane.xlu0 %8121
  %v8123 = vsub.f32 %v8075, %v8092
  %v8124 = vsub.f32 %v8076, %v8094
  %v8125 = vsub.f32 %v8077, %v8096
  %v8126 = vsub.f32 %v8078, %v8098
  %v8127 = vsub.f32 %v8079, %v8100
  %v8128 = vsub.f32 %v8080, %v8102
  %v8129 = vsub.f32 %v8081, %v8104
  %v8130 = vsub.f32 %v8082, %v8106
  %v8131 = vsub.f32 %v8083, %v8108
  %v8132 = vsub.f32 %v8084, %v8110
  %v8133 = vsub.f32 %v8085, %v8112
  %v8134 = vsub.f32 %v8086, %v8114
  %v8135 = vsub.f32 %v8087, %v8116
  %v8136 = vsub.f32 %v8088, %v8118
  %v8137 = vsub.f32 %v8089, %v8120
  %v8138 = vsub.f32 %v8090, %v8122
  %v8139 = vmul.f32 %v8123, 1.442695
  %v8140 = vpow.pop %v8139
  %v8141 = vmul.f32 %v8124, 1.442695
  %v8142 = vpow.pop %v8141
  %v8143 = vmul.f32 %v8125, 1.442695
  %v8144 = vpow.pop %v8143
  %v8145 = vmul.f32 %v8126, 1.442695
  %v8146 = vpow.pop %v8145
  %v8147 = vmul.f32 %v8127, 1.442695
  %v8148 = vpow.pop %v8147
  %v8149 = vmul.f32 %v8128, 1.442695
  %v8150 = vpow.pop %v8149
  %v8151 = vmul.f32 %v8129, 1.442695
  %v8152 = vpow.pop %v8151
  %v8153 = vmul.f32 %v8130, 1.442695
  %v8154 = vpow.pop %v8153
  %v8155 = vmul.f32 %v8131, 1.442695
  %v8156 = vpow.pop %v8155
  %v8157 = vmul.f32 %v8132, 1.442695
  %v8158 = vpow.pop %v8157
  %v8159 = vmul.f32 %v8133, 1.442695
  %v8160 = vpow.pop %v8159
  %v8161 = vmul.f32 %v8134, 1.442695
  %v8162 = vpow.pop %v8161
  %v8163 = vmul.f32 %v8135, 1.442695
  %v8164 = vpow.pop %v8163
  %v8165 = vmul.f32 %v8136, 1.442695
  %v8166 = vpow.pop %v8165
  %v8167 = vmul.f32 %v8137, 1.442695
  %v8168 = vpow.pop %v8167
  %v8169 = vmul.f32 %v8138, 1.442695
  %v8170 = vpow.pop %v8169
  %v8171 = vmul.f32 %v7610, %v697
  %v8172 = vmul.f32 %v7613, %v697
  %v8173 = vmul.f32 %v7618, %v697
  %v8174 = vmul.f32 %v7621, %v697
  %v8175 = vmul.f32 %v7626, %v697
  %v8176 = vmul.f32 %v7629, %v697
  %v8177 = vmul.f32 %v7634, %v697
  %v8178 = vmul.f32 %v7637, %v697
  %v8179 = vmul.f32 %v7642, %v697
  %v8180 = vmul.f32 %v7645, %v697
  %v8181 = vmul.f32 %v7650, %v697
  %v8182 = vmul.f32 %v7653, %v697
  %v8183 = vmul.f32 %v7658, %v697
  %v8184 = vmul.f32 %v7661, %v697
  %v8185 = vmul.f32 %v7666, %v697
  %v8186 = vmul.f32 %v7669, %v697
  %v8187 = vpack.c.bf16 %v8172, %v8171
  %v8188 = vpack.c.bf16 %v8174, %v8173
  %v8189 = vpack.c.bf16 %v8176, %v8175
  %v8190 = vpack.c.bf16 %v8178, %v8177
  %v8191 = vpack.c.bf16 %v8180, %v8179
  %v8192 = vpack.c.bf16 %v8182, %v8181
  %v8193 = vpack.c.bf16 %v8184, %v8183
  %v8194 = vpack.c.bf16 %v8186, %v8185
  %v8195 = vpack.c.bf16 %v8142, %v8140
  %v8196 = vpack.c.bf16 %v8146, %v8144
  %v8197 = vpack.c.bf16 %v8150, %v8148
  %v8198 = vpack.c.bf16 %v8154, %v8152
  %v8199 = vpack.c.bf16 %v8158, %v8156
  %v8200 = vpack.c.bf16 %v8162, %v8160
  %v8201 = vpack.c.bf16 %v8166, %v8164
  %v8202 = vpack.c.bf16 %v8170, %v8168
  %8203 = vmatprep.subr.bf16.mxu0 0
  %8204 = vmatpush1.bf16.msra.mxu0 %v8187
  %8205 = vmatprep.subr.bf16.mxu0 0
  %8206 = vmatpush1.bf16.msra.mxu0 %v8188
  %8207 = vmatprep.subr.bf16.mxu0 0
  %8208 = vmatpush1.bf16.msra.mxu0 %v8189
  %8209 = vmatprep.subr.bf16.mxu0 0
  %8210 = vmatpush1.bf16.msra.mxu0 %v8190
  %8211 = vmatprep.subr.bf16.mxu0 0
  %8212 = vmatpush1.bf16.msra.mxu0 %v8191
  %8213 = vmatprep.subr.bf16.mxu0 0
  %8214 = vmatpush1.bf16.msra.mxu0 %v8192
  %8215 = vmatprep.subr.bf16.mxu0 0
  %8216 = vmatpush1.bf16.msra.mxu0 %v8193
  %8217 = vmatprep.subr.bf16.mxu0 0
  %8218 = vmatpush1.bf16.msra.mxu0 %v8194
  %8219 = vmatprep.subr.bf16.mxu0 0
  %8220 = vmatpush1.bf16.msra.mxu0 0
  %8221 = vmatprep.subr.bf16.mxu0 0
  %8222 = vmatpush1.bf16.msra.mxu0 0
  %8223 = vmatprep.subr.bf16.mxu0 0
  %8224 = vmatpush1.bf16.msra.mxu0 0
  %8225 = vmatprep.subr.bf16.mxu0 0
  %8226 = vmatpush1.bf16.msra.mxu0 0
  %8227 = vmatprep.subr.bf16.mxu0 0
  %8228 = vmatpush1.bf16.msra.mxu0 0
  %8229 = vmatprep.subr.bf16.mxu0 0
  %8230 = vmatpush1.bf16.msra.mxu0 0
  %8231 = vmatprep.subr.bf16.mxu0 0
  %8232 = vmatpush1.bf16.msra.mxu0 0
  %8233 = vmatprep.subr.bf16.mxu0 0
  %8234 = vmatpush1.bf16.msra.mxu0 0
  %8235 = vmatprep.mubr.bf16.mxu0 0
  %8236 = vmatmul.mubr.bf16.gmra.mrb[0].mxu0 %v8195
  %v8237 = vpop.f32.mrb[0].mxu0
  %v8238 = vadd.f32 0.0, %v8237
  %v8239 = vpop.f32.mrb[0].mxu0
  %v8240 = vpop.f32.mrb[0].mxu0
  %v8241 = vadd.f32 0.0, %v8240
  %v8242 = vpop.f32.mrb[0].mxu0
  %8243 = vmatprep.mubr.bf16.mxu0 0
  %8244 = vmatmul.mubr.bf16.gmra.mrb[0].mxu0 %v8196
  %v8245 = vpop.f32.mrb[0].mxu0
  %v8246 = vadd.f32 0.0, %v8245
  %v8247 = vpop.f32.mrb[0].mxu0
  %v8248 = vpop.f32.mrb[0].mxu0
  %v8249 = vadd.f32 0.0, %v8248
  %v8250 = vpop.f32.mrb[0].mxu0
  %8251 = vmatprep.mubr.bf16.mxu0 0
  %8252 = vmatmul.mubr.bf16.gmra.mrb[0].mxu0 %v8197
  %v8253 = vpop.f32.mrb[0].mxu0
  %v8254 = vadd.f32 0.0, %v8253
  %v8255 = vpop.f32.mrb[0].mxu0
  %v8256 = vpop.f32.mrb[0].mxu0
  %v8257 = vadd.f32 0.0, %v8256
  %v8258 = vpop.f32.mrb[0].mxu0
  %8259 = vmatprep.mubr.bf16.mxu0 0
  %8260 = vmatmul.mubr.bf16.gmra.mrb[0].mxu0 %v8198
  %v8261 = vpop.f32.mrb[0].mxu0
  %v8262 = vadd.f32 0.0, %v8261
  %v8263 = vpop.f32.mrb[0].mxu0
  %v8264 = vpop.f32.mrb[0].mxu0
  %v8265 = vadd.f32 0.0, %v8264
  %v8266 = vpop.f32.mrb[0].mxu0
  %8267 = vmatprep.mubr.bf16.mxu0 0
  %8268 = vmatmul.mubr.bf16.gmra.mrb[0].mxu0 %v8199
  %v8269 = vpop.f32.mrb[0].mxu0
  %v8270 = vadd.f32 0.0, %v8269
  %v8271 = vpop.f32.mrb[0].mxu0
  %v8272 = vpop.f32.mrb[0].mxu0
  %v8273 = vadd.f32 0.0, %v8272
  %v8274 = vpop.f32.mrb[0].mxu0
  %8275 = vmatprep.mubr.bf16.mxu0 0
  %8276 = vmatmul.mubr.bf16.gmra.mrb[0].mxu0 %v8200
  %v8277 = vpop.f32.mrb[0].mxu0
  %v8278 = vadd.f32 0.0, %v8277
  %v8279 = vpop.f32.mrb[0].mxu0
  %v8280 = vpop.f32.mrb[0].mxu0
  %v8281 = vadd.f32 0.0, %v8280
  %v8282 = vpop.f32.mrb[0].mxu0
  %8283 = vmatprep.mubr.bf16.mxu0 0
  %8284 = vmatmul.mubr.bf16.gmra.mrb[0].mxu0 %v8201
  %v8285 = vpop.f32.mrb[0].mxu0
  %v8286 = vadd.f32 0.0, %v8285
  %v8287 = vpop.f32.mrb[0].mxu0
  %v8288 = vpop.f32.mrb[0].mxu0
  %v8289 = vadd.f32 0.0, %v8288
  %v8290 = vpop.f32.mrb[0].mxu0
  %8291 = vmatprep.mubr.bf16.mxu0 0
  %8292 = vmatmul.mubr.bf16.gmra.mrb[0].mxu0 %v8202
  %v8293 = vpop.f32.mrb[0].mxu0
  %v8294 = vadd.f32 0.0, %v8293
  %v8295 = vpop.f32.mrb[0].mxu0
  %v8296 = vpop.f32.mrb[0].mxu0
  %v8297 = vadd.f32 0.0, %v8296
  %v8298 = vpop.f32.mrb[0].mxu0
  %8299 = vdwg.mxu0
  %v8300 = vrcp.pop %v8238
  %v8301 = vrcp.pop %v8241
  %v8302 = vrcp.pop %v8246
  %v8303 = vrcp.pop %v8249
  %v8304 = vrcp.pop %v8254
  %v8305 = vrcp.pop %v8257
  %v8306 = vrcp.pop %v8262
  %v8307 = vrcp.pop %v8265
  %v8308 = vrcp.pop %v8270
  %v8309 = vrcp.pop %v8273
  %v8310 = vrcp.pop %v8278
  %v8311 = vrcp.pop %v8281
  %v8312 = vrcp.pop %v8286
  %v8313 = vrcp.pop %v8289
  %v8314 = vrcp.pop %v8294
  %v8315 = vrcp.pop %v8297
  %8317 = vset.pattern.permute.xlu0 32
  %8318 = vperm.xlu0 %8317, %v8300
  %v8319 = vpop.permute.xlu0 %8318
  %8322 = vset.pattern.permute.xlu0 32
  %8323 = vperm.xlu0 %8322, %v8301
  %v8324 = vpop.permute.xlu0 %8323
  %8327 = vset.pattern.permute.xlu0 32
  %8328 = vperm.xlu0 %8327, %v8302
  %v8329 = vpop.permute.xlu0 %8328
  %8332 = vset.pattern.permute.xlu0 32
  %8333 = vperm.xlu0 %8332, %v8303
  %v8334 = vpop.permute.xlu0 %8333
  %8337 = vset.pattern.permute.xlu0 32
  %8338 = vperm.xlu0 %8337, %v8304
  %v8339 = vpop.permute.xlu0 %8338
  %8342 = vset.pattern.permute.xlu0 32
  %8343 = vperm.xlu0 %8342, %v8305
  %v8344 = vpop.permute.xlu0 %8343
  %8347 = vset.pattern.permute.xlu0 32
  %8348 = vperm.xlu0 %8347, %v8306
  %v8349 = vpop.permute.xlu0 %8348
  %8352 = vset.pattern.permute.xlu0 32
  %8353 = vperm.xlu0 %8352, %v8307
  %v8354 = vpop.permute.xlu0 %8353
  %8357 = vset.pattern.permute.xlu0 32
  %8358 = vperm.xlu0 %8357, %v8308
  %v8359 = vpop.permute.xlu0 %8358
  %8362 = vset.pattern.permute.xlu0 32
  %8363 = vperm.xlu0 %8362, %v8309
  %v8364 = vpop.permute.xlu0 %8363
  %8367 = vset.pattern.permute.xlu0 32
  %8368 = vperm.xlu0 %8367, %v8310
  %v8369 = vpop.permute.xlu0 %8368
  %8372 = vset.pattern.permute.xlu0 32
  %8373 = vperm.xlu0 %8372, %v8311
  %v8374 = vpop.permute.xlu0 %8373
  %8377 = vset.pattern.permute.xlu0 32
  %8378 = vperm.xlu0 %8377, %v8312
  %v8379 = vpop.permute.xlu0 %8378
  %8382 = vset.pattern.permute.xlu0 32
  %8383 = vperm.xlu0 %8382, %v8313
  %v8384 = vpop.permute.xlu0 %8383
  %8387 = vset.pattern.permute.xlu0 32
  %8388 = vperm.xlu0 %8387, %v8314
  %v8389 = vpop.permute.xlu0 %8388
  %8392 = vset.pattern.permute.xlu0 32
  %8393 = vperm.xlu0 %8392, %v8315
  %v8394 = vpop.permute.xlu0 %8393
  %v8396 = vmul.f32 %v8238, %v8319
  %v8397 = vmul.f32 %v8241, %v8324
  %v8398 = vmul.f32 %v8246, %v8329
  %v8399 = vmul.f32 %v8249, %v8334
  %v8400 = vmul.f32 %v8254, %v8339
  %v8401 = vmul.f32 %v8257, %v8344
  %v8402 = vmul.f32 %v8262, %v8349
  %v8403 = vmul.f32 %v8265, %v8354
  %v8404 = vmul.f32 %v8270, %v8359
  %v8405 = vmul.f32 %v8273, %v8364
  %v8406 = vmul.f32 %v8278, %v8369
  %v8407 = vmul.f32 %v8281, %v8374
  %v8408 = vmul.f32 %v8286, %v8379
  %v8409 = vmul.f32 %v8289, %v8384
  %v8410 = vmul.f32 %v8294, %v8389
  %v8411 = vmul.f32 %v8297, %v8394
  %8412 = vst.msk [vmem:[#allocation2] sm:$0xff] %vm939, %v8396
  %8413 = vst.msk [vmem:[#allocation2 + $0x8] sm:$0xff] %vm939, %v8397
  %8414 = vst.msk [vmem:[#allocation2 + $0x10] sm:$0xff] %vm939, %v8398
  %8415 = vst.msk [vmem:[#allocation2 + $0x18] sm:$0xff] %vm939, %v8399
  %8416 = vst.msk [vmem:[#allocation2 + $0x20] sm:$0xff] %vm939, %v8400
  %8417 = vst.msk [vmem:[#allocation2 + $0x28] sm:$0xff] %vm939, %v8401
  %8418 = vst.msk [vmem:[#allocation2 + $0x30] sm:$0xff] %vm939, %v8402
  %8419 = vst.msk [vmem:[#allocation2 + $0x38] sm:$0xff] %vm939, %v8403
  %8420 = vst.msk [vmem:[#allocation2 + $0x40] sm:$0xff] %vm939, %v8404
  %8421 = vst.msk [vmem:[#allocation2 + $0x48] sm:$0xff] %vm939, %v8405
  %8422 = vst.msk [vmem:[#allocation2 + $0x50] sm:$0xff] %vm939, %v8406
  %8423 = vst.msk [vmem:[#allocation2 + $0x58] sm:$0xff] %vm939, %v8407
  %8424 = vst.msk [vmem:[#allocation2 + $0x60] sm:$0xff] %vm939, %v8408
  %8425 = vst.msk [vmem:[#allocation2 + $0x68] sm:$0xff] %vm939, %v8409
  %8426 = vst.msk [vmem:[#allocation2 + $0x70] sm:$0xff] %vm939, %v8410
  %8427 = vst.msk [vmem:[#allocation2 + $0x78] sm:$0xff] %vm939, %v8411
  %v8428 = vld [vmem:[#allocation2] sm:$0xff]
  %v8429 = vld [vmem:[#allocation2 + $0x8] sm:$0xff]
  %v8430 = vld [vmem:[#allocation2 + $0x10] sm:$0xff]
  %v8431 = vld [vmem:[#allocation2 + $0x18] sm:$0xff]
  %v8432 = vld [vmem:[#allocation2 + $0x20] sm:$0xff]
  %v8433 = vld [vmem:[#allocation2 + $0x28] sm:$0xff]
  %v8434 = vld [vmem:[#allocation2 + $0x30] sm:$0xff]
  %v8435 = vld [vmem:[#allocation2 + $0x38] sm:$0xff]
  %v8436 = vld [vmem:[#allocation2 + $0x40] sm:$0xff]
  %v8437 = vld [vmem:[#allocation2 + $0x48] sm:$0xff]
  %v8438 = vld [vmem:[#allocation2 + $0x50] sm:$0xff]
  %v8439 = vld [vmem:[#allocation2 + $0x58] sm:$0xff]
  %v8440 = vld [vmem:[#allocation2 + $0x60] sm:$0xff]
  %v8441 = vld [vmem:[#allocation2 + $0x68] sm:$0xff]
  %v8442 = vld [vmem:[#allocation2 + $0x70] sm:$0xff]
  %v8443 = vld [vmem:[#allocation2 + $0x78] sm:$0xff]
  %v8444 = vlaneseq
  %v8445 = vshrl.u32 %v8444, 7
  %v8446 = vsub.s32 3, %v8445
  %v8447 = vrot.slane %v35, %v8446
  %v8448 = vadd.f32 %v8428, %v8447
  %v8449 = vadd.f32 %v8429, %v8447
  %v8450 = vadd.f32 %v8430, %v8447
  %v8451 = vadd.f32 %v8431, %v8447
  %v8452 = vadd.f32 %v8432, %v8447
  %v8453 = vadd.f32 %v8433, %v8447
  %v8454 = vadd.f32 %v8434, %v8447
  %v8455 = vadd.f32 %v8435, %v8447
  %v8456 = vadd.f32 %v8436, %v8447
  %v8457 = vadd.f32 %v8437, %v8447
  %v8458 = vadd.f32 %v8438, %v8447
  %v8459 = vadd.f32 %v8439, %v8447
  %v8460 = vadd.f32 %v8440, %v8447
  %v8461 = vadd.f32 %v8441, %v8447
  %v8462 = vadd.f32 %v8442, %v8447
  %v8463 = vadd.f32 %v8443, %v8447
  %vm8464 = vcmask 64512
  %8465 = vst.msk [vmem:[%s4] sm:$0xff] %vm8464, %v8448
  %8466 = vst.msk [vmem:[%s4 + $0x8] sm:$0xff] %vm8464, %v8449
  %8467 = vst.msk [vmem:[%s4 + $0x10] sm:$0xff] %vm8464, %v8450
  %8468 = vst.msk [vmem:[%s4 + $0x18] sm:$0xff] %vm8464, %v8451
  %8469 = vst.msk [vmem:[%s4 + $0x20] sm:$0xff] %vm8464, %v8452
  %8470 = vst.msk [vmem:[%s4 + $0x28] sm:$0xff] %vm8464, %v8453
  %8471 = vst.msk [vmem:[%s4 + $0x30] sm:$0xff] %vm8464, %v8454
  %8472 = vst.msk [vmem:[%s4 + $0x38] sm:$0xff] %vm8464, %v8455
  %8473 = vst.msk [vmem:[%s4 + $0x40] sm:$0xff] %vm8464, %v8456
  %8474 = vst.msk [vmem:[%s4 + $0x48] sm:$0xff] %vm8464, %v8457
  %8475 = vst.msk [vmem:[%s4 + $0x50] sm:$0xff] %vm8464, %v8458
  %8476 = vst.msk [vmem:[%s4 + $0x58] sm:$0xff] %vm8464, %v8459
  %8477 = vst.msk [vmem:[%s4 + $0x60] sm:$0xff] %vm8464, %v8460
  %8478 = vst.msk [vmem:[%s4 + $0x68] sm:$0xff] %vm8464, %v8461
  %8479 = vst.msk [vmem:[%s4 + $0x70] sm:$0xff] %vm8464, %v8462
  %8480 = vst.msk [vmem:[%s4 + $0x78] sm:$0xff] %vm8464, %v8463
  // Predicated region
  $region18: #{forward.1} parent=0 // pred_check
    _
  $region19: #{forward.1} parent=0 // pred_check_branch
    %8482 = sbr.rel (0) target = $region21
  $region20: #{forward.1} parent=0 // pred_region
    _
  $region21: #{forward.1} parent=0 // pred_fallthru
    _
  // Predicated region
  $region22: #{forward.1} parent=0 // pred_check
    _
  $region23: #{forward.1} parent=0 // pred_check_branch
    %8484 = sbr.rel (0) target = $region25
  $region24: #{forward.1} parent=0 // pred_region
    _
  $region25: #{forward.1} parent=0 // pred_fallthru
    _

</llo_original>
